<compile_context>
chip_gen: v7x
topology: tpu7x:2x2x1
jax: 0.10.0
libtpu: 0.0.40
codegen_flags: <defaults>
</compile_context>

<pallas_src>
import functools

import jax
import jax.numpy as jnp
from jax.experimental import pallas as pl
from jax.experimental.pallas import tpu as pltpu

# ---- small synthetic stand-in config for 'clue/albert_chinese_tiny' ----
VOCAB      = 64
MAX_POS    = 16
TYPE_VOCAB = 2
EMBED      = 16      # albert embedding_size
HIDDEN     = 32      # albert hidden_size
HEADS      = 4
HEAD_DIM   = HIDDEN // HEADS
INTER      = 64      # intermediate_size
LAYERS     = 2       # num_hidden_layers (ALBERT: weights shared across layers)
NUM_LABELS = 3
PAD_LABELS = 128     # classifier output padded to a full lane width
LN_EPS     = 1e-12
MASK_NEG   = -30000.0


# ---------------------------- weight slab packing ----------------------------

def _pack_slab(entries, width=128):
  """Stack 2-D weight blocks / 1-D vectors into one (rows, width) f32 slab.

  Every block starts at lane 0; multi-row blocks start at sublane offsets that
  are multiples of 8, so in-kernel static slices never cross (8,128) layout
  boundaries.  Returns (slab, {name: (row0, nrows, ncols)}).
  """
  rows, offs, r = [], {}, 0
  for name, a in entries:
    a = jnp.asarray(a, jnp.float32)
    if a.ndim == 1:
      a = a[None, :]
    nr, nc = a.shape
    assert nc <= width, name
    if nr > 1:
      assert r % 8 == 0 and nr % 8 == 0, name
    rows.append(jnp.pad(a, ((0, 0), (0, width - nc))))
    offs[name] = (r, nr, nc)
    r += nr
  pad = (-r) % 8
  if pad:
    rows.append(jnp.zeros((pad, width), jnp.float32))
  return jnp.concatenate(rows, axis=0), offs


# ---------------------------- fused Pallas kernel ----------------------------

def _albert_fused_kernel(emb_ref, mask_ref, w_ref, out_ref, *,
                         batch, seq, heads, head_dim, layers, eps, offs):
  hidden = heads * head_dim

  def mat(name):
    r0, nr, nc = offs[name]
    return w_ref[r0:r0 + nr, 0:nc]                 # (nr, nc) block, lane offset 0

  def vec(name):
    r0, _, nc = offs[name]
    return w_ref[r0:r0 + 1, 0:nc]                  # (1, nc) row, broadcasts over tokens

  def dense(x, w, b=None):
    y = jnp.dot(x, w, preferred_element_type=jnp.float32)
    return y if b is None else y + b

  def ln(x, g, b):
    mu = jnp.mean(x, axis=-1, keepdims=True)
    xc = x - mu
    var = jnp.mean(xc * xc, axis=-1, keepdims=True)
    return xc * jax.lax.rsqrt(var + eps) * g + b

  # ---- embeddings: LayerNorm (affine folded into projection) + EMBED->HIDDEN ----
  x = emb_ref[...]                                              # (B*S, EMBED)
  mu = jnp.mean(x, axis=-1, keepdims=True)
  xc = x - mu
  var = jnp.mean(xc * xc, axis=-1, keepdims=True)
  xn = xc * jax.lax.rsqrt(var + eps)
  h = dense(xn, mat("emb_proj_w"), vec("emb_proj_b"))           # (B*S, HIDDEN)

  # ---- hoisted: mask broadcast once; all shared weights/biases loaded once ----
  mask_b = jnp.broadcast_to(mask_ref[...], (batch, seq, seq))   # (B, S, S)
  wq = [mat(f"wq{i}") for i in range(heads)]                    # (HIDDEN, dh), pre-scaled
  wk = [mat(f"wk{i}") for i in range(heads)]
  wv = [mat(f"wv{i}") for i in range(heads)]
  wo = [mat(f"wo{i}") for i in range(heads)]                    # (dh, HIDDEN)
  bq = [vec(f"bq{i}") for i in range(heads)]
  b_ao  = vec("attn_out_b")
  aln_g, aln_b = vec("attn_ln_g"), vec("attn_ln_b")
  w_ffn, b_ffn = mat("ffn_w"), vec("ffn_b")
  w_ffo, b_ffo = mat("ffn_out_w"), vec("ffn_out_b")
  fln_g, fln_b = vec("ffn_ln_g"), vec("ffn_ln_b")

  # ---- ALBERT encoder: one shared layer applied `layers` times (unrolled) ----
  for _ in range(layers):
    attn = None
    for i in range(heads):
      # per-head projections via host-sliced weights: no in-kernel lane slicing
      q = dense(h, wq[i], bq[i]).reshape(batch, seq, head_dim)  # scale folded in
      k = dense(h, wk[i]).reshape(batch, seq, head_dim)         # K bias dropped (exact)
      v = dense(h, wv[i]).reshape(batch, seq, head_dim)         # V bias folded into b_ao
      s = jnp.einsum('bqd,bkd->bqk', q, k,
                     preferred_element_type=jnp.float32) + mask_b
      p = jnp.exp(s)                                            # no max-sub: pre-scaled Q
      p = p / jnp.sum(p, axis=-1, keepdims=True)
      ctx = jnp.einsum('bqk,bkd->bqd', p, v,
                       preferred_element_type=jnp.float32)
      contrib = dense(ctx.reshape(batch * seq, head_dim), wo[i])
      attn = contrib if attn is None else attn + contrib        # accumulate, no concat
    h1 = ln(attn + b_ao + h, aln_g, aln_b)
    f = dense(h1, w_ffn, b_ffn)
    # TODO(synk): HF ALBERT "gelu" is the exact erf-gelu; tanh approximation used here.
    f = jax.nn.gelu(f, approximate=True)
    h = ln(dense(f, w_ffo, b_ffo) + h1, fln_g, fln_b)

  # ---- pooler + pre_cls + cls on ALL token rows (lane+sublane dense store) ----
  pooled = jnp.tanh(dense(h, mat("pooler_w"), vec("pooler_b")))
  pooled = dense(pooled, mat("pre_cls_w"), vec("pre_cls_b"))
  logits = dense(pooled, mat("cls_w"), vec("cls_b"))            # (B*S, PAD_LABELS)
  out_ref[...] = logits.astype(out_ref.dtype)


# ---------------------------- parameters ----------------------------

def init_params(key):
  keys = jax.random.split(key, 16)
  n = lambda k, shape: (0.02 * jax.random.normal(k, shape, jnp.float32))
  dense = lambda k, fi, fo: {"w": n(k, (fi, fo)), "b": jnp.zeros((fo,), jnp.float32)}
  ln = lambda d: {"g": jnp.ones((d,), jnp.float32), "b": jnp.zeros((d,), jnp.float32)}
  return {
      "word_emb": n(keys[0], (VOCAB, EMBED)),
      "pos_emb":  n(keys[1], (MAX_POS, EMBED)),
      "type_emb": n(keys[2], (TYPE_VOCAB, EMBED)),
      "emb_ln":   ln(EMBED),
      "emb_proj": dense(keys[3], EMBED, HIDDEN),
      # single shared ALBERT layer
      "q":        dense(keys[4], HIDDEN, HIDDEN),
      "k":        dense(keys[5], HIDDEN, HIDDEN),
      "v":        dense(keys[6], HIDDEN, HIDDEN),
      "attn_out": dense(keys[7], HIDDEN, HIDDEN),
      "attn_ln":  ln(HIDDEN),
      "ffn":      dense(keys[8], HIDDEN, INTER),
      "ffn_out":  dense(keys[9], INTER, HIDDEN),
      "ffn_ln":   ln(HIDDEN),
      # pooler (part of AlbertModel: outputs[1] = tanh(W @ seq_out[:, 0] + b))
      "pooler":   dense(keys[10], HIDDEN, HIDDEN),
      # classifier head from AlbertClassifier
      "pre_cls":  dense(keys[11], HIDDEN, HIDDEN),
      "cls":      dense(keys[12], HIDDEN, NUM_LABELS),
  }


# ---------------------------- forward pass ----------------------------

def albert_classifier_forward(params, input_ids, attention_mask):
  B, S = input_ids.shape

  # embeddings (gather is glue; everything downstream is one fused Pallas kernel)
  we = jnp.take(params["word_emb"], input_ids, axis=0)          # (B, S, E)
  pe = params["pos_emb"][:S][None, :, :]                        # (1, S, E)
  te = params["type_emb"][0][None, None, :]                     # token_type_ids = 0
  emb = (we + pe + te).reshape(B * S, EMBED)

  # additive attention mask (shared across heads and layers): (B, 1, S)
  mask_add = ((1.0 - attention_mask.astype(jnp.float32)) * MASK_NEG).reshape(B, 1, S)

  # --- host-side weight folding ---
  scale = 1.0 / (HEAD_DIM ** 0.5)
  wq = params["q"]["w"] * scale                                 # fold 1/sqrt(dh) into Q
  bq = params["q"]["b"] * scale
  wk = params["k"]["w"]                                         # K bias dropped (softmax row-shift invariant)
  wv = params["v"]["w"]
  wo = params["attn_out"]["w"]
  # V bias folded through attn_out (softmax rows sum to 1): b_ao' = b_ao + b_v @ W_ao
  b_ao_eff = params["attn_out"]["b"] + params["v"]["b"] @ wo
  # embedding LayerNorm affine folded into the EMBED->HIDDEN projection
  w_proj_eff = params["emb_ln"]["g"][:, None] * params["emb_proj"]["w"]
  b_proj_eff = params["emb_ln"]["b"] @ params["emb_proj"]["w"] + params["emb_proj"]["b"]
  # classifier padded to a full 128-lane output (sliced back after the kernel)
  cls_w = jnp.zeros((HIDDEN, PAD_LABELS), jnp.float32).at[:, :NUM_LABELS].set(params["cls"]["w"])
  cls_b = jnp.zeros((PAD_LABELS,), jnp.float32).at[:NUM_LABELS].set(params["cls"]["b"])

  # --- pack everything into one (rows, 128) slab: matrices first (8-row aligned) ---
  entries = [("emb_proj_w", w_proj_eff)]
  for i in range(HEADS):
    lo = i * HEAD_DIM
    entries += [(f"wq{i}", wq[:, lo:lo + HEAD_DIM]),
                (f"wk{i}", wk[:, lo:lo + HEAD_DIM]),
                (f"wv{i}", wv[:, lo:lo + HEAD_DIM])]
  for i in range(HEADS):
    lo = i * HEAD_DIM
    entries += [(f"wo{i}", wo[lo:lo + HEAD_DIM, :])]
  entries += [("ffn_w", params["ffn"]["w"]), ("ffn_out_w", params["ffn_out"]["w"]),
              ("pooler_w", params["pooler"]["w"]), ("pre_cls_w", params["pre_cls"]["w"]),
              ("cls_w", cls_w)]
  entries += [("emb_proj_b", b_proj_eff)]
  for i in range(HEADS):
    lo = i * HEAD_DIM
    entries += [(f"bq{i}", bq[lo:lo + HEAD_DIM])]
  entries += [("attn_out_b", b_ao_eff),
              ("attn_ln_g", params["attn_ln"]["g"]), ("attn_ln_b", params["attn_ln"]["b"]),
              ("ffn_b", params["ffn"]["b"]), ("ffn_out_b", params["ffn_out"]["b"]),
              ("ffn_ln_g", params["ffn_ln"]["g"]), ("ffn_ln_b", params["ffn_ln"]["b"]),
              ("pooler_b", params["pooler"]["b"]), ("pre_cls_b", params["pre_cls"]["b"]),
              ("cls_b", cls_b)]
  slab, offs = _pack_slab(entries)

  kernel = functools.partial(
      _albert_fused_kernel,
      batch=B, seq=S, heads=HEADS, head_dim=HEAD_DIM, layers=LAYERS,
      eps=LN_EPS, offs=offs)

  # Note: B*S = 16 here is a multiple of 8, so the (B*S, 128) output is a fully
  # unmasked (sublane- and lane-dense) store.
  logits_all = pl.pallas_call(
      kernel,
      out_shape=jax.ShapeDtypeStruct((B * S, PAD_LABELS), jnp.float32),
      grid=(1,),
      in_specs=[pl.BlockSpec(emb.shape, lambda i: (0, 0)),
                pl.BlockSpec(mask_add.shape, lambda i: (0, 0, 0)),
                pl.BlockSpec(slab.shape, lambda i: (0, 0))],
      out_specs=pl.BlockSpec((B * S, PAD_LABELS), lambda i: (0, 0)),
      compiler_params=pltpu.CompilerParams(dimension_semantics=("arbitrary",)),
  )(emb, mask_add, slab)

  # take the CLS (position 0) logits and drop the lane padding
  return logits_all.reshape(B, S, PAD_LABELS)[:, 0, :NUM_LABELS]  # (B, NUM_LABELS)


if __name__ == "__main__":
  key = jax.random.PRNGKey(0)
  pkey, ikey = jax.random.split(key)
  params = init_params(pkey)

  B, S = 2, 8
  input_ids = jax.random.randint(ikey, (B, S), 0, VOCAB, dtype=jnp.int32)
  attention_mask = jnp.ones((B, S), jnp.int32).at[1, 6:].set(0)

  logits = jax.jit(albert_classifier_forward)(params, input_ids, attention_mask)
  jax.block_until_ready(logits)
  assert logits.shape == (B, NUM_LABELS) and logits.dtype == jnp.float32
  print("KERNEL_OK")
</pallas_src>

<mosaic_0001>
module attributes {stable_mosaic.version = 11 : i64} {
  func.func @_albert_fused_kernel(%arg0: i32, %arg1: memref<16x16xf32, #tpu.memory_space<vmem>>, %arg2: memref<2x1x8xf32, #tpu.memory_space<vmem>>, %arg3: memref<640x128xf32, #tpu.memory_space<vmem>>, %arg4: memref<16x128xf32, #tpu.memory_space<vmem>>) attributes {dimension_semantics = [#tpu.dimension_semantics<arbitrary>], iteration_bounds = array<i64: 1>, scalar_prefetch = 0 : i64, scratch_operands = 0 : i64, tpu.core_type = #tpu.core_type<tc>, window_params = [{pipeline_mode = #tpu.pipeline_mode<synchronous>, transform_indices = @transform_0, window_bounds = array<i64: 16, 16>}, {pipeline_mode = #tpu.pipeline_mode<synchronous>, transform_indices = @transform_1, window_bounds = array<i64: 2, 1, 8>}, {pipeline_mode = #tpu.pipeline_mode<synchronous>, transform_indices = @transform_2, window_bounds = array<i64: 640, 128>}, {pipeline_mode = #tpu.pipeline_mode<synchronous>, transform_indices = @transform_3, window_bounds = array<i64: 16, 128>}]} {
    %c0 = arith.constant 0 : index
    %c0_0 = arith.constant 0 : index
    %0 = vector.load %arg1[%c0, %c0_0] : memref<16x16xf32, #tpu.memory_space<vmem>>, vector<16x16xf32>
    %cst = arith.constant dense<0.000000e+00> : vector<16xf32>
    %1 = vector.multi_reduction <add>, %0, %cst [1] : vector<16x16xf32> to vector<16xf32>
    %2 = vector.shape_cast %1 : vector<16xf32> to vector<16x1xf32>
    %cst_1 = arith.constant 1.600000e+01 : f32
    %3 = vector.broadcast %cst_1 : f32 to vector<16x1xf32>
    %4 = arith.divf %2, %3 : vector<16x1xf32>
    %5 = vector.broadcast %4 : vector<16x1xf32> to vector<16x16xf32>
    %6 = arith.subf %0, %5 : vector<16x16xf32>
    %7 = arith.mulf %6, %6 : vector<16x16xf32>
    %cst_2 = arith.constant dense<0.000000e+00> : vector<16xf32>
    %8 = vector.multi_reduction <add>, %7, %cst_2 [1] : vector<16x16xf32> to vector<16xf32>
    %9 = vector.shape_cast %8 : vector<16xf32> to vector<16x1xf32>
    %cst_3 = arith.constant 1.600000e+01 : f32
    %10 = vector.broadcast %cst_3 : f32 to vector<16x1xf32>
    %11 = arith.divf %9, %10 : vector<16x1xf32>
    %cst_4 = arith.constant 9.99999996E-13 : f32
    %12 = vector.broadcast %cst_4 : f32 to vector<16x1xf32>
    %13 = arith.addf %11, %12 : vector<16x1xf32>
    %14 = math.rsqrt %13 : vector<16x1xf32>
    %15 = vector.broadcast %14 : vector<16x1xf32> to vector<16x16xf32>
    %16 = arith.mulf %6, %15 : vector<16x16xf32>
    %c0_5 = arith.constant 0 : index
    %c0_6 = arith.constant 0 : index
    %17 = vector.load %arg3[%c0_5, %c0_6] : memref<640x128xf32, #tpu.memory_space<vmem>>, vector<16x32xf32>
    %c624 = arith.constant 624 : index
    %c0_7 = arith.constant 0 : index
    %18 = vector.load %arg3[%c624, %c0_7] : memref<640x128xf32, #tpu.memory_space<vmem>>, vector<1x32xf32>
    %cst_8 = arith.constant dense<0.000000e+00> : vector<16x32xf32>
    %19 = tpu.matmul %16, %17, %cst_8 {dimension_numbers = #tpu.dot_dimension_numbers<[1], [0], [0], [1], [0, 0, 1, 1], [], []>} : vector<16x16xf32>, vector<16x32xf32>, vector<16x32xf32> -> vector<16x32xf32>
    %20 = vector.broadcast %18 : vector<1x32xf32> to vector<16x32xf32>
    %21 = arith.addf %19, %20 : vector<16x32xf32>
    %c0_9 = arith.constant 0 : index
    %c0_10 = arith.constant 0 : index
    %c0_11 = arith.constant 0 : index
    %22 = vector.load %arg2[%c0_9, %c0_10, %c0_11] : memref<2x1x8xf32, #tpu.memory_space<vmem>>, vector<2x1x8xf32>
    %23 = vector.shape_cast %22 : vector<2x1x8xf32> to vector<2x1x8xf32>
    %24 = vector.broadcast %23 : vector<2x1x8xf32> to vector<2x8x8xf32>
    %c16 = arith.constant 16 : index
    %c0_12 = arith.constant 0 : index
    %25 = vector.load %arg3[%c16, %c0_12] : memref<640x128xf32, #tpu.memory_space<vmem>>, vector<32x8xf32>
    %c112 = arith.constant 112 : index
    %c0_13 = arith.constant 0 : index
    %26 = vector.load %arg3[%c112, %c0_13] : memref<640x128xf32, #tpu.memory_space<vmem>>, vector<32x8xf32>
    %c208 = arith.constant 208 : index
    %c0_14 = arith.constant 0 : index
    %27 = vector.load %arg3[%c208, %c0_14] : memref<640x128xf32, #tpu.memory_space<vmem>>, vector<32x8xf32>
    %c304 = arith.constant 304 : index
    %c0_15 = arith.constant 0 : index
    %28 = vector.load %arg3[%c304, %c0_15] : memref<640x128xf32, #tpu.memory_space<vmem>>, vector<32x8xf32>
    %c48 = arith.constant 48 : index
    %c0_16 = arith.constant 0 : index
    %29 = vector.load %arg3[%c48, %c0_16] : memref<640x128xf32, #tpu.memory_space<vmem>>, vector<32x8xf32>
    %c144 = arith.constant 144 : index
    %c0_17 = arith.constant 0 : index
    %30 = vector.load %arg3[%c144, %c0_17] : memref<640x128xf32, #tpu.memory_space<vmem>>, vector<32x8xf32>
    %c240 = arith.constant 240 : index
    %c0_18 = arith.constant 0 : index
    %31 = vector.load %arg3[%c240, %c0_18] : memref<640x128xf32, #tpu.memory_space<vmem>>, vector<32x8xf32>
    %c336 = arith.constant 336 : index
    %c0_19 = arith.constant 0 : index
    %32 = vector.load %arg3[%c336, %c0_19] : memref<640x128xf32, #tpu.memory_space<vmem>>, vector<32x8xf32>
    %c80 = arith.constant 80 : index
    %c0_20 = arith.constant 0 : index
    %33 = vector.load %arg3[%c80, %c0_20] : memref<640x128xf32, #tpu.memory_space<vmem>>, vector<32x8xf32>
    %c176 = arith.constant 176 : index
    %c0_21 = arith.constant 0 : index
    %34 = vector.load %arg3[%c176, %c0_21] : memref<640x128xf32, #tpu.memory_space<vmem>>, vector<32x8xf32>
    %c272 = arith.constant 272 : index
    %c0_22 = arith.constant 0 : index
    %35 = vector.load %arg3[%c272, %c0_22] : memref<640x128xf32, #tpu.memory_space<vmem>>, vector<32x8xf32>
    %c368 = arith.constant 368 : index
    %c0_23 = arith.constant 0 : index
    %36 = vector.load %arg3[%c368, %c0_23] : memref<640x128xf32, #tpu.memory_space<vmem>>, vector<32x8xf32>
    %c400 = arith.constant 400 : index
    %c0_24 = arith.constant 0 : index
    %37 = vector.load %arg3[%c400, %c0_24] : memref<640x128xf32, #tpu.memory_space<vmem>>, vector<8x32xf32>
    %c408 = arith.constant 408 : index
    %c0_25 = arith.constant 0 : index
    %38 = vector.load %arg3[%c408, %c0_25] : memref<640x128xf32, #tpu.memory_space<vmem>>, vector<8x32xf32>
    %c416 = arith.constant 416 : index
    %c0_26 = arith.constant 0 : index
    %39 = vector.load %arg3[%c416, %c0_26] : memref<640x128xf32, #tpu.memory_space<vmem>>, vector<8x32xf32>
    %c424 = arith.constant 424 : index
    %c0_27 = arith.constant 0 : index
    %40 = vector.load %arg3[%c424, %c0_27] : memref<640x128xf32, #tpu.memory_space<vmem>>, vector<8x32xf32>
    %c625 = arith.constant 625 : index
    %c0_28 = arith.constant 0 : index
    %41 = vector.load %arg3[%c625, %c0_28] : memref<640x128xf32, #tpu.memory_space<vmem>>, vector<1x8xf32>
    %c626 = arith.constant 626 : index
    %c0_29 = arith.constant 0 : index
    %42 = vector.load %arg3[%c626, %c0_29] : memref<640x128xf32, #tpu.memory_space<vmem>>, vector<1x8xf32>
    %c627 = arith.constant 627 : index
    %c0_30 = arith.constant 0 : index
    %43 = vector.load %arg3[%c627, %c0_30] : memref<640x128xf32, #tpu.memory_space<vmem>>, vector<1x8xf32>
    %c628 = arith.constant 628 : index
    %c0_31 = arith.constant 0 : index
    %44 = vector.load %arg3[%c628, %c0_31] : memref<640x128xf32, #tpu.memory_space<vmem>>, vector<1x8xf32>
    %c629 = arith.constant 629 : index
    %c0_32 = arith.constant 0 : index
    %45 = vector.load %arg3[%c629, %c0_32] : memref<640x128xf32, #tpu.memory_space<vmem>>, vector<1x32xf32>
    %c630 = arith.constant 630 : index
    %c0_33 = arith.constant 0 : index
    %46 = vector.load %arg3[%c630, %c0_33] : memref<640x128xf32, #tpu.memory_space<vmem>>, vector<1x32xf32>
    %c631 = arith.constant 631 : index
    %c0_34 = arith.constant 0 : index
    %47 = vector.load %arg3[%c631, %c0_34] : memref<640x128xf32, #tpu.memory_space<vmem>>, vector<1x32xf32>
    %c432 = arith.constant 432 : index
    %c0_35 = arith.constant 0 : index
    %48 = vector.load %arg3[%c432, %c0_35] : memref<640x128xf32, #tpu.memory_space<vmem>>, vector<32x64xf32>
    %c632 = arith.constant 632 : index
    %c0_36 = arith.constant 0 : index
    %49 = vector.load %arg3[%c632, %c0_36] : memref<640x128xf32, #tpu.memory_space<vmem>>, vector<1x64xf32>
    %c464 = arith.constant 464 : index
    %c0_37 = arith.constant 0 : index
    %50 = vector.load %arg3[%c464, %c0_37] : memref<640x128xf32, #tpu.memory_space<vmem>>, vector<64x32xf32>
    %c633 = arith.constant 633 : index
    %c0_38 = arith.constant 0 : index
    %51 = vector.load %arg3[%c633, %c0_38] : memref<640x128xf32, #tpu.memory_space<vmem>>, vector<1x32xf32>
    %c634 = arith.constant 634 : index
    %c0_39 = arith.constant 0 : index
    %52 = vector.load %arg3[%c634, %c0_39] : memref<640x128xf32, #tpu.memory_space<vmem>>, vector<1x32xf32>
    %c635 = arith.constant 635 : index
    %c0_40 = arith.constant 0 : index
    %53 = vector.load %arg3[%c635, %c0_40] : memref<640x128xf32, #tpu.memory_space<vmem>>, vector<1x32xf32>
    %cst_41 = arith.constant dense<0.000000e+00> : vector<16x8xf32>
    %54 = tpu.matmul %21, %25, %cst_41 {dimension_numbers = #tpu.dot_dimension_numbers<[1], [0], [0], [1], [0, 0, 1, 1], [], []>} : vector<16x32xf32>, vector<32x8xf32>, vector<16x8xf32> -> vector<16x8xf32>
    %55 = vector.broadcast %41 : vector<1x8xf32> to vector<16x8xf32>
    %56 = arith.addf %54, %55 : vector<16x8xf32>
    %57 = vector.shape_cast %56 : vector<16x8xf32> to vector<2x8x8xf32>
    %cst_42 = arith.constant dense<0.000000e+00> : vector<16x8xf32>
    %58 = tpu.matmul %21, %29, %cst_42 {dimension_numbers = #tpu.dot_dimension_numbers<[1], [0], [0], [1], [0, 0, 1, 1], [], []>} : vector<16x32xf32>, vector<32x8xf32>, vector<16x8xf32> -> vector<16x8xf32>
    %59 = vector.shape_cast %58 : vector<16x8xf32> to vector<2x8x8xf32>
    %cst_43 = arith.constant dense<0.000000e+00> : vector<16x8xf32>
    %60 = tpu.matmul %21, %33, %cst_43 {dimension_numbers = #tpu.dot_dimension_numbers<[1], [0], [0], [1], [0, 0, 1, 1], [], []>} : vector<16x32xf32>, vector<32x8xf32>, vector<16x8xf32> -> vector<16x8xf32>
    %61 = vector.shape_cast %60 : vector<16x8xf32> to vector<2x8x8xf32>
    "tpu.trace_start"() <{level = 10 : i32, message = "bqd,bkd->bqk"}> : () -> ()
    %cst_44 = arith.constant dense<0.000000e+00> : vector<2x8x8xf32>
    %62 = tpu.matmul %57, %59, %cst_44 {dimension_numbers = #tpu.dot_dimension_numbers<[2], [2], [1], [1], [0, 0, 0, 1, 1, 1], [0], [0]>} : vector<2x8x8xf32>, vector<2x8x8xf32>, vector<2x8x8xf32> -> vector<2x8x8xf32>
    "tpu.trace_stop"() : () -> ()
    %63 = arith.addf %62, %24 : vector<2x8x8xf32>
    %64 = math.exp %63 : vector<2x8x8xf32>
    %cst_45 = arith.constant dense<0.000000e+00> : vector<2x8xf32>
    %65 = vector.multi_reduction <add>, %64, %cst_45 [2] : vector<2x8x8xf32> to vector<2x8xf32>
    %66 = vector.shape_cast %65 : vector<2x8xf32> to vector<2x8x1xf32>
    %67 = vector.broadcast %66 : vector<2x8x1xf32> to vector<2x8x8xf32>
    %68 = arith.divf %64, %67 : vector<2x8x8xf32>
    "tpu.trace_start"() <{level = 10 : i32, message = "bqk,bkd->bqd"}> : () -> ()
    %cst_46 = arith.constant dense<0.000000e+00> : vector<2x8x8xf32>
    %69 = tpu.matmul %68, %61, %cst_46 {dimension_numbers = #tpu.dot_dimension_numbers<[2], [1], [1], [2], [0, 0, 0, 1, 1, 2], [0], [0]>} : vector<2x8x8xf32>, vector<2x8x8xf32>, vector<2x8x8xf32> -> vector<2x8x8xf32>
    "tpu.trace_stop"() : () -> ()
    %70 = vector.shape_cast %69 : vector<2x8x8xf32> to vector<16x8xf32>
    %cst_47 = arith.constant dense<0.000000e+00> : vector<16x32xf32>
    %71 = tpu.matmul %70, %37, %cst_47 {dimension_numbers = #tpu.dot_dimension_numbers<[1], [0], [0], [1], [0, 0, 1, 1], [], []>} : vector<16x8xf32>, vector<8x32xf32>, vector<16x32xf32> -> vector<16x32xf32>
    %cst_48 = arith.constant dense<0.000000e+00> : vector<16x8xf32>
    %72 = tpu.matmul %21, %26, %cst_48 {dimension_numbers = #tpu.dot_dimension_numbers<[1], [0], [0], [1], [0, 0, 1, 1], [], []>} : vector<16x32xf32>, vector<32x8xf32>, vector<16x8xf32> -> vector<16x8xf32>
    %73 = vector.broadcast %42 : vector<1x8xf32> to vector<16x8xf32>
    %74 = arith.addf %72, %73 : vector<16x8xf32>
    %75 = vector.shape_cast %74 : vector<16x8xf32> to vector<2x8x8xf32>
    %cst_49 = arith.constant dense<0.000000e+00> : vector<16x8xf32>
    %76 = tpu.matmul %21, %30, %cst_49 {dimension_numbers = #tpu.dot_dimension_numbers<[1], [0], [0], [1], [0, 0, 1, 1], [], []>} : vector<16x32xf32>, vector<32x8xf32>, vector<16x8xf32> -> vector<16x8xf32>
    %77 = vector.shape_cast %76 : vector<16x8xf32> to vector<2x8x8xf32>
    %cst_50 = arith.constant dense<0.000000e+00> : vector<16x8xf32>
    %78 = tpu.matmul %21, %34, %cst_50 {dimension_numbers = #tpu.dot_dimension_numbers<[1], [0], [0], [1], [0, 0, 1, 1], [], []>} : vector<16x32xf32>, vector<32x8xf32>, vector<16x8xf32> -> vector<16x8xf32>
    %79 = vector.shape_cast %78 : vector<16x8xf32> to vector<2x8x8xf32>
    "tpu.trace_start"() <{level = 10 : i32, message = "bqd,bkd->bqk"}> : () -> ()
    %cst_51 = arith.constant dense<0.000000e+00> : vector<2x8x8xf32>
    %80 = tpu.matmul %75, %77, %cst_51 {dimension_numbers = #tpu.dot_dimension_numbers<[2], [2], [1], [1], [0, 0, 0, 1, 1, 1], [0], [0]>} : vector<2x8x8xf32>, vector<2x8x8xf32>, vector<2x8x8xf32> -> vector<2x8x8xf32>
    "tpu.trace_stop"() : () -> ()
    %81 = arith.addf %80, %24 : vector<2x8x8xf32>
    %82 = math.exp %81 : vector<2x8x8xf32>
    %cst_52 = arith.constant dense<0.000000e+00> : vector<2x8xf32>
    %83 = vector.multi_reduction <add>, %82, %cst_52 [2] : vector<2x8x8xf32> to vector<2x8xf32>
    %84 = vector.shape_cast %83 : vector<2x8xf32> to vector<2x8x1xf32>
    %85 = vector.broadcast %84 : vector<2x8x1xf32> to vector<2x8x8xf32>
    %86 = arith.divf %82, %85 : vector<2x8x8xf32>
    "tpu.trace_start"() <{level = 10 : i32, message = "bqk,bkd->bqd"}> : () -> ()
    %cst_53 = arith.constant dense<0.000000e+00> : vector<2x8x8xf32>
    %87 = tpu.matmul %86, %79, %cst_53 {dimension_numbers = #tpu.dot_dimension_numbers<[2], [1], [1], [2], [0, 0, 0, 1, 1, 2], [0], [0]>} : vector<2x8x8xf32>, vector<2x8x8xf32>, vector<2x8x8xf32> -> vector<2x8x8xf32>
    "tpu.trace_stop"() : () -> ()
    %88 = vector.shape_cast %87 : vector<2x8x8xf32> to vector<16x8xf32>
    %cst_54 = arith.constant dense<0.000000e+00> : vector<16x32xf32>
    %89 = tpu.matmul %88, %38, %cst_54 {dimension_numbers = #tpu.dot_dimension_numbers<[1], [0], [0], [1], [0, 0, 1, 1], [], []>} : vector<16x8xf32>, vector<8x32xf32>, vector<16x32xf32> -> vector<16x32xf32>
    %90 = arith.addf %71, %89 : vector<16x32xf32>
    %cst_55 = arith.constant dense<0.000000e+00> : vector<16x8xf32>
    %91 = tpu.matmul %21, %27, %cst_55 {dimension_numbers = #tpu.dot_dimension_numbers<[1], [0], [0], [1], [0, 0, 1, 1], [], []>} : vector<16x32xf32>, vector<32x8xf32>, vector<16x8xf32> -> vector<16x8xf32>
    %92 = vector.broadcast %43 : vector<1x8xf32> to vector<16x8xf32>
    %93 = arith.addf %91, %92 : vector<16x8xf32>
    %94 = vector.shape_cast %93 : vector<16x8xf32> to vector<2x8x8xf32>
    %cst_56 = arith.constant dense<0.000000e+00> : vector<16x8xf32>
    %95 = tpu.matmul %21, %31, %cst_56 {dimension_numbers = #tpu.dot_dimension_numbers<[1], [0], [0], [1], [0, 0, 1, 1], [], []>} : vector<16x32xf32>, vector<32x8xf32>, vector<16x8xf32> -> vector<16x8xf32>
    %96 = vector.shape_cast %95 : vector<16x8xf32> to vector<2x8x8xf32>
    %cst_57 = arith.constant dense<0.000000e+00> : vector<16x8xf32>
    %97 = tpu.matmul %21, %35, %cst_57 {dimension_numbers = #tpu.dot_dimension_numbers<[1], [0], [0], [1], [0, 0, 1, 1], [], []>} : vector<16x32xf32>, vector<32x8xf32>, vector<16x8xf32> -> vector<16x8xf32>
    %98 = vector.shape_cast %97 : vector<16x8xf32> to vector<2x8x8xf32>
    "tpu.trace_start"() <{level = 10 : i32, message = "bqd,bkd->bqk"}> : () -> ()
    %cst_58 = arith.constant dense<0.000000e+00> : vector<2x8x8xf32>
    %99 = tpu.matmul %94, %96, %cst_58 {dimension_numbers = #tpu.dot_dimension_numbers<[2], [2], [1], [1], [0, 0, 0, 1, 1, 1], [0], [0]>} : vector<2x8x8xf32>, vector<2x8x8xf32>, vector<2x8x8xf32> -> vector<2x8x8xf32>
    "tpu.trace_stop"() : () -> ()
    %100 = arith.addf %99, %24 : vector<2x8x8xf32>
    %101 = math.exp %100 : vector<2x8x8xf32>
    %cst_59 = arith.constant dense<0.000000e+00> : vector<2x8xf32>
    %102 = vector.multi_reduction <add>, %101, %cst_59 [2] : vector<2x8x8xf32> to vector<2x8xf32>
    %103 = vector.shape_cast %102 : vector<2x8xf32> to vector<2x8x1xf32>
    %104 = vector.broadcast %103 : vector<2x8x1xf32> to vector<2x8x8xf32>
    %105 = arith.divf %101, %104 : vector<2x8x8xf32>
    "tpu.trace_start"() <{level = 10 : i32, message = "bqk,bkd->bqd"}> : () -> ()
    %cst_60 = arith.constant dense<0.000000e+00> : vector<2x8x8xf32>
    %106 = tpu.matmul %105, %98, %cst_60 {dimension_numbers = #tpu.dot_dimension_numbers<[2], [1], [1], [2], [0, 0, 0, 1, 1, 2], [0], [0]>} : vector<2x8x8xf32>, vector<2x8x8xf32>, vector<2x8x8xf32> -> vector<2x8x8xf32>
    "tpu.trace_stop"() : () -> ()
    %107 = vector.shape_cast %106 : vector<2x8x8xf32> to vector<16x8xf32>
    %cst_61 = arith.constant dense<0.000000e+00> : vector<16x32xf32>
    %108 = tpu.matmul %107, %39, %cst_61 {dimension_numbers = #tpu.dot_dimension_numbers<[1], [0], [0], [1], [0, 0, 1, 1], [], []>} : vector<16x8xf32>, vector<8x32xf32>, vector<16x32xf32> -> vector<16x32xf32>
    %109 = arith.addf %90, %108 : vector<16x32xf32>
    %cst_62 = arith.constant dense<0.000000e+00> : vector<16x8xf32>
    %110 = tpu.matmul %21, %28, %cst_62 {dimension_numbers = #tpu.dot_dimension_numbers<[1], [0], [0], [1], [0, 0, 1, 1], [], []>} : vector<16x32xf32>, vector<32x8xf32>, vector<16x8xf32> -> vector<16x8xf32>
    %111 = vector.broadcast %44 : vector<1x8xf32> to vector<16x8xf32>
    %112 = arith.addf %110, %111 : vector<16x8xf32>
    %113 = vector.shape_cast %112 : vector<16x8xf32> to vector<2x8x8xf32>
    %cst_63 = arith.constant dense<0.000000e+00> : vector<16x8xf32>
    %114 = tpu.matmul %21, %32, %cst_63 {dimension_numbers = #tpu.dot_dimension_numbers<[1], [0], [0], [1], [0, 0, 1, 1], [], []>} : vector<16x32xf32>, vector<32x8xf32>, vector<16x8xf32> -> vector<16x8xf32>
    %115 = vector.shape_cast %114 : vector<16x8xf32> to vector<2x8x8xf32>
    %cst_64 = arith.constant dense<0.000000e+00> : vector<16x8xf32>
    %116 = tpu.matmul %21, %36, %cst_64 {dimension_numbers = #tpu.dot_dimension_numbers<[1], [0], [0], [1], [0, 0, 1, 1], [], []>} : vector<16x32xf32>, vector<32x8xf32>, vector<16x8xf32> -> vector<16x8xf32>
    %117 = vector.shape_cast %116 : vector<16x8xf32> to vector<2x8x8xf32>
    "tpu.trace_start"() <{level = 10 : i32, message = "bqd,bkd->bqk"}> : () -> ()
    %cst_65 = arith.constant dense<0.000000e+00> : vector<2x8x8xf32>
    %118 = tpu.matmul %113, %115, %cst_65 {dimension_numbers = #tpu.dot_dimension_numbers<[2], [2], [1], [1], [0, 0, 0, 1, 1, 1], [0], [0]>} : vector<2x8x8xf32>, vector<2x8x8xf32>, vector<2x8x8xf32> -> vector<2x8x8xf32>
    "tpu.trace_stop"() : () -> ()
    %119 = arith.addf %118, %24 : vector<2x8x8xf32>
    %120 = math.exp %119 : vector<2x8x8xf32>
    %cst_66 = arith.constant dense<0.000000e+00> : vector<2x8xf32>
    %121 = vector.multi_reduction <add>, %120, %cst_66 [2] : vector<2x8x8xf32> to vector<2x8xf32>
    %122 = vector.shape_cast %121 : vector<2x8xf32> to vector<2x8x1xf32>
    %123 = vector.broadcast %122 : vector<2x8x1xf32> to vector<2x8x8xf32>
    %124 = arith.divf %120, %123 : vector<2x8x8xf32>
    "tpu.trace_start"() <{level = 10 : i32, message = "bqk,bkd->bqd"}> : () -> ()
    %cst_67 = arith.constant dense<0.000000e+00> : vector<2x8x8xf32>
    %125 = tpu.matmul %124, %117, %cst_67 {dimension_numbers = #tpu.dot_dimension_numbers<[2], [1], [1], [2], [0, 0, 0, 1, 1, 2], [0], [0]>} : vector<2x8x8xf32>, vector<2x8x8xf32>, vector<2x8x8xf32> -> vector<2x8x8xf32>
    "tpu.trace_stop"() : () -> ()
    %126 = vector.shape_cast %125 : vector<2x8x8xf32> to vector<16x8xf32>
    %cst_68 = arith.constant dense<0.000000e+00> : vector<16x32xf32>
    %127 = tpu.matmul %126, %40, %cst_68 {dimension_numbers = #tpu.dot_dimension_numbers<[1], [0], [0], [1], [0, 0, 1, 1], [], []>} : vector<16x8xf32>, vector<8x32xf32>, vector<16x32xf32> -> vector<16x32xf32>
    %128 = arith.addf %109, %127 : vector<16x32xf32>
    %129 = vector.broadcast %45 : vector<1x32xf32> to vector<16x32xf32>
    %130 = arith.addf %128, %129 : vector<16x32xf32>
    %131 = arith.addf %130, %21 : vector<16x32xf32>
    %cst_69 = arith.constant dense<0.000000e+00> : vector<16xf32>
    %132 = vector.multi_reduction <add>, %131, %cst_69 [1] : vector<16x32xf32> to vector<16xf32>
    %133 = vector.shape_cast %132 : vector<16xf32> to vector<16x1xf32>
    %cst_70 = arith.constant 3.200000e+01 : f32
    %134 = vector.broadcast %cst_70 : f32 to vector<16x1xf32>
    %135 = arith.divf %133, %134 : vector<16x1xf32>
    %136 = vector.broadcast %135 : vector<16x1xf32> to vector<16x32xf32>
    %137 = arith.subf %131, %136 : vector<16x32xf32>
    %138 = arith.mulf %137, %137 : vector<16x32xf32>
    %cst_71 = arith.constant dense<0.000000e+00> : vector<16xf32>
    %139 = vector.multi_reduction <add>, %138, %cst_71 [1] : vector<16x32xf32> to vector<16xf32>
    %140 = vector.shape_cast %139 : vector<16xf32> to vector<16x1xf32>
    %cst_72 = arith.constant 3.200000e+01 : f32
    %141 = vector.broadcast %cst_72 : f32 to vector<16x1xf32>
    %142 = arith.divf %140, %141 : vector<16x1xf32>
    %cst_73 = arith.constant 9.99999996E-13 : f32
    %143 = vector.broadcast %cst_73 : f32 to vector<16x1xf32>
    %144 = arith.addf %142, %143 : vector<16x1xf32>
    %145 = math.rsqrt %144 : vector<16x1xf32>
    %146 = vector.broadcast %145 : vector<16x1xf32> to vector<16x32xf32>
    %147 = arith.mulf %137, %146 : vector<16x32xf32>
    %148 = vector.broadcast %46 : vector<1x32xf32> to vector<16x32xf32>
    %149 = arith.mulf %147, %148 : vector<16x32xf32>
    %150 = vector.broadcast %47 : vector<1x32xf32> to vector<16x32xf32>
    %151 = arith.addf %149, %150 : vector<16x32xf32>
    %cst_74 = arith.constant dense<0.000000e+00> : vector<16x64xf32>
    %152 = tpu.matmul %151, %48, %cst_74 {dimension_numbers = #tpu.dot_dimension_numbers<[1], [0], [0], [1], [0, 0, 1, 1], [], []>} : vector<16x32xf32>, vector<32x64xf32>, vector<16x64xf32> -> vector<16x64xf32>
    %153 = vector.broadcast %49 : vector<1x64xf32> to vector<16x64xf32>
    %154 = arith.addf %152, %153 : vector<16x64xf32>
    %155 = arith.mulf %154, %154 : vector<16x64xf32>
    %156 = arith.mulf %154, %155 : vector<16x64xf32>
    %cst_75 = arith.constant 4.471500e-02 : f32
    %157 = vector.broadcast %cst_75 : f32 to vector<16x64xf32>
    %158 = arith.mulf %157, %156 : vector<16x64xf32>
    %159 = arith.addf %154, %158 : vector<16x64xf32>
    %cst_76 = arith.constant 0.797884583 : f32
    %160 = vector.broadcast %cst_76 : f32 to vector<16x64xf32>
    %161 = arith.mulf %160, %159 : vector<16x64xf32>
    %162 = math.tanh %161 : vector<16x64xf32>
    %cst_77 = arith.constant 1.000000e+00 : f32
    %163 = vector.broadcast %cst_77 : f32 to vector<16x64xf32>
    %164 = arith.addf %163, %162 : vector<16x64xf32>
    %cst_78 = arith.constant 5.000000e-01 : f32
    %165 = vector.broadcast %cst_78 : f32 to vector<16x64xf32>
    %166 = arith.mulf %165, %164 : vector<16x64xf32>
    %167 = arith.mulf %154, %166 : vector<16x64xf32>
    %cst_79 = arith.constant dense<0.000000e+00> : vector<16x32xf32>
    %168 = tpu.matmul %167, %50, %cst_79 {dimension_numbers = #tpu.dot_dimension_numbers<[1], [0], [0], [1], [0, 0, 1, 1], [], []>} : vector<16x64xf32>, vector<64x32xf32>, vector<16x32xf32> -> vector<16x32xf32>
    %169 = vector.broadcast %51 : vector<1x32xf32> to vector<16x32xf32>
    %170 = arith.addf %168, %169 : vector<16x32xf32>
    %171 = arith.addf %170, %151 : vector<16x32xf32>
    %cst_80 = arith.constant dense<0.000000e+00> : vector<16xf32>
    %172 = vector.multi_reduction <add>, %171, %cst_80 [1] : vector<16x32xf32> to vector<16xf32>
    %173 = vector.shape_cast %172 : vector<16xf32> to vector<16x1xf32>
    %cst_81 = arith.constant 3.200000e+01 : f32
    %174 = vector.broadcast %cst_81 : f32 to vector<16x1xf32>
    %175 = arith.divf %173, %174 : vector<16x1xf32>
    %176 = vector.broadcast %175 : vector<16x1xf32> to vector<16x32xf32>
    %177 = arith.subf %171, %176 : vector<16x32xf32>
    %178 = arith.mulf %177, %177 : vector<16x32xf32>
    %cst_82 = arith.constant dense<0.000000e+00> : vector<16xf32>
    %179 = vector.multi_reduction <add>, %178, %cst_82 [1] : vector<16x32xf32> to vector<16xf32>
    %180 = vector.shape_cast %179 : vector<16xf32> to vector<16x1xf32>
    %cst_83 = arith.constant 3.200000e+01 : f32
    %181 = vector.broadcast %cst_83 : f32 to vector<16x1xf32>
    %182 = arith.divf %180, %181 : vector<16x1xf32>
    %cst_84 = arith.constant 9.99999996E-13 : f32
    %183 = vector.broadcast %cst_84 : f32 to vector<16x1xf32>
    %184 = arith.addf %182, %183 : vector<16x1xf32>
    %185 = math.rsqrt %184 : vector<16x1xf32>
    %186 = vector.broadcast %185 : vector<16x1xf32> to vector<16x32xf32>
    %187 = arith.mulf %177, %186 : vector<16x32xf32>
    %188 = vector.broadcast %52 : vector<1x32xf32> to vector<16x32xf32>
    %189 = arith.mulf %187, %188 : vector<16x32xf32>
    %190 = vector.broadcast %53 : vector<1x32xf32> to vector<16x32xf32>
    %191 = arith.addf %189, %190 : vector<16x32xf32>
    %cst_85 = arith.constant dense<0.000000e+00> : vector<16x8xf32>
    %192 = tpu.matmul %191, %25, %cst_85 {dimension_numbers = #tpu.dot_dimension_numbers<[1], [0], [0], [1], [0, 0, 1, 1], [], []>} : vector<16x32xf32>, vector<32x8xf32>, vector<16x8xf32> -> vector<16x8xf32>
    %193 = vector.broadcast %41 : vector<1x8xf32> to vector<16x8xf32>
    %194 = arith.addf %192, %193 : vector<16x8xf32>
    %195 = vector.shape_cast %194 : vector<16x8xf32> to vector<2x8x8xf32>
    %cst_86 = arith.constant dense<0.000000e+00> : vector<16x8xf32>
    %196 = tpu.matmul %191, %29, %cst_86 {dimension_numbers = #tpu.dot_dimension_numbers<[1], [0], [0], [1], [0, 0, 1, 1], [], []>} : vector<16x32xf32>, vector<32x8xf32>, vector<16x8xf32> -> vector<16x8xf32>
    %197 = vector.shape_cast %196 : vector<16x8xf32> to vector<2x8x8xf32>
    %cst_87 = arith.constant dense<0.000000e+00> : vector<16x8xf32>
    %198 = tpu.matmul %191, %33, %cst_87 {dimension_numbers = #tpu.dot_dimension_numbers<[1], [0], [0], [1], [0, 0, 1, 1], [], []>} : vector<16x32xf32>, vector<32x8xf32>, vector<16x8xf32> -> vector<16x8xf32>
    %199 = vector.shape_cast %198 : vector<16x8xf32> to vector<2x8x8xf32>
    "tpu.trace_start"() <{level = 10 : i32, message = "bqd,bkd->bqk"}> : () -> ()
    %cst_88 = arith.constant dense<0.000000e+00> : vector<2x8x8xf32>
    %200 = tpu.matmul %195, %197, %cst_88 {dimension_numbers = #tpu.dot_dimension_numbers<[2], [2], [1], [1], [0, 0, 0, 1, 1, 1], [0], [0]>} : vector<2x8x8xf32>, vector<2x8x8xf32>, vector<2x8x8xf32> -> vector<2x8x8xf32>
    "tpu.trace_stop"() : () -> ()
    %201 = arith.addf %200, %24 : vector<2x8x8xf32>
    %202 = math.exp %201 : vector<2x8x8xf32>
    %cst_89 = arith.constant dense<0.000000e+00> : vector<2x8xf32>
    %203 = vector.multi_reduction <add>, %202, %cst_89 [2] : vector<2x8x8xf32> to vector<2x8xf32>
    %204 = vector.shape_cast %203 : vector<2x8xf32> to vector<2x8x1xf32>
    %205 = vector.broadcast %204 : vector<2x8x1xf32> to vector<2x8x8xf32>
    %206 = arith.divf %202, %205 : vector<2x8x8xf32>
    "tpu.trace_start"() <{level = 10 : i32, message = "bqk,bkd->bqd"}> : () -> ()
    %cst_90 = arith.constant dense<0.000000e+00> : vector<2x8x8xf32>
    %207 = tpu.matmul %206, %199, %cst_90 {dimension_numbers = #tpu.dot_dimension_numbers<[2], [1], [1], [2], [0, 0, 0, 1, 1, 2], [0], [0]>} : vector<2x8x8xf32>, vector<2x8x8xf32>, vector<2x8x8xf32> -> vector<2x8x8xf32>
    "tpu.trace_stop"() : () -> ()
    %208 = vector.shape_cast %207 : vector<2x8x8xf32> to vector<16x8xf32>
    %cst_91 = arith.constant dense<0.000000e+00> : vector<16x32xf32>
    %209 = tpu.matmul %208, %37, %cst_91 {dimension_numbers = #tpu.dot_dimension_numbers<[1], [0], [0], [1], [0, 0, 1, 1], [], []>} : vector<16x8xf32>, vector<8x32xf32>, vector<16x32xf32> -> vector<16x32xf32>
    %cst_92 = arith.constant dense<0.000000e+00> : vector<16x8xf32>
    %210 = tpu.matmul %191, %26, %cst_92 {dimension_numbers = #tpu.dot_dimension_numbers<[1], [0], [0], [1], [0, 0, 1, 1], [], []>} : vector<16x32xf32>, vector<32x8xf32>, vector<16x8xf32> -> vector<16x8xf32>
    %211 = vector.broadcast %42 : vector<1x8xf32> to vector<16x8xf32>
    %212 = arith.addf %210, %211 : vector<16x8xf32>
    %213 = vector.shape_cast %212 : vector<16x8xf32> to vector<2x8x8xf32>
    %cst_93 = arith.constant dense<0.000000e+00> : vector<16x8xf32>
    %214 = tpu.matmul %191, %30, %cst_93 {dimension_numbers = #tpu.dot_dimension_numbers<[1], [0], [0], [1], [0, 0, 1, 1], [], []>} : vector<16x32xf32>, vector<32x8xf32>, vector<16x8xf32> -> vector<16x8xf32>
    %215 = vector.shape_cast %214 : vector<16x8xf32> to vector<2x8x8xf32>
    %cst_94 = arith.constant dense<0.000000e+00> : vector<16x8xf32>
    %216 = tpu.matmul %191, %34, %cst_94 {dimension_numbers = #tpu.dot_dimension_numbers<[1], [0], [0], [1], [0, 0, 1, 1], [], []>} : vector<16x32xf32>, vector<32x8xf32>, vector<16x8xf32> -> vector<16x8xf32>
    %217 = vector.shape_cast %216 : vector<16x8xf32> to vector<2x8x8xf32>
    "tpu.trace_start"() <{level = 10 : i32, message = "bqd,bkd->bqk"}> : () -> ()
    %cst_95 = arith.constant dense<0.000000e+00> : vector<2x8x8xf32>
    %218 = tpu.matmul %213, %215, %cst_95 {dimension_numbers = #tpu.dot_dimension_numbers<[2], [2], [1], [1], [0, 0, 0, 1, 1, 1], [0], [0]>} : vector<2x8x8xf32>, vector<2x8x8xf32>, vector<2x8x8xf32> -> vector<2x8x8xf32>
    "tpu.trace_stop"() : () -> ()
    %219 = arith.addf %218, %24 : vector<2x8x8xf32>
    %220 = math.exp %219 : vector<2x8x8xf32>
    %cst_96 = arith.constant dense<0.000000e+00> : vector<2x8xf32>
    %221 = vector.multi_reduction <add>, %220, %cst_96 [2] : vector<2x8x8xf32> to vector<2x8xf32>
    %222 = vector.shape_cast %221 : vector<2x8xf32> to vector<2x8x1xf32>
    %223 = vector.broadcast %222 : vector<2x8x1xf32> to vector<2x8x8xf32>
    %224 = arith.divf %220, %223 : vector<2x8x8xf32>
    "tpu.trace_start"() <{level = 10 : i32, message = "bqk,bkd->bqd"}> : () -> ()
    %cst_97 = arith.constant dense<0.000000e+00> : vector<2x8x8xf32>
    %225 = tpu.matmul %224, %217, %cst_97 {dimension_numbers = #tpu.dot_dimension_numbers<[2], [1], [1], [2], [0, 0, 0, 1, 1, 2], [0], [0]>} : vector<2x8x8xf32>, vector<2x8x8xf32>, vector<2x8x8xf32> -> vector<2x8x8xf32>
    "tpu.trace_stop"() : () -> ()
    %226 = vector.shape_cast %225 : vector<2x8x8xf32> to vector<16x8xf32>
    %cst_98 = arith.constant dense<0.000000e+00> : vector<16x32xf32>
    %227 = tpu.matmul %226, %38, %cst_98 {dimension_numbers = #tpu.dot_dimension_numbers<[1], [0], [0], [1], [0, 0, 1, 1], [], []>} : vector<16x8xf32>, vector<8x32xf32>, vector<16x32xf32> -> vector<16x32xf32>
    %228 = arith.addf %209, %227 : vector<16x32xf32>
    %cst_99 = arith.constant dense<0.000000e+00> : vector<16x8xf32>
    %229 = tpu.matmul %191, %27, %cst_99 {dimension_numbers = #tpu.dot_dimension_numbers<[1], [0], [0], [1], [0, 0, 1, 1], [], []>} : vector<16x32xf32>, vector<32x8xf32>, vector<16x8xf32> -> vector<16x8xf32>
    %230 = vector.broadcast %43 : vector<1x8xf32> to vector<16x8xf32>
    %231 = arith.addf %229, %230 : vector<16x8xf32>
    %232 = vector.shape_cast %231 : vector<16x8xf32> to vector<2x8x8xf32>
    %cst_100 = arith.constant dense<0.000000e+00> : vector<16x8xf32>
    %233 = tpu.matmul %191, %31, %cst_100 {dimension_numbers = #tpu.dot_dimension_numbers<[1], [0], [0], [1], [0, 0, 1, 1], [], []>} : vector<16x32xf32>, vector<32x8xf32>, vector<16x8xf32> -> vector<16x8xf32>
    %234 = vector.shape_cast %233 : vector<16x8xf32> to vector<2x8x8xf32>
    %cst_101 = arith.constant dense<0.000000e+00> : vector<16x8xf32>
    %235 = tpu.matmul %191, %35, %cst_101 {dimension_numbers = #tpu.dot_dimension_numbers<[1], [0], [0], [1], [0, 0, 1, 1], [], []>} : vector<16x32xf32>, vector<32x8xf32>, vector<16x8xf32> -> vector<16x8xf32>
    %236 = vector.shape_cast %235 : vector<16x8xf32> to vector<2x8x8xf32>
    "tpu.trace_start"() <{level = 10 : i32, message = "bqd,bkd->bqk"}> : () -> ()
    %cst_102 = arith.constant dense<0.000000e+00> : vector<2x8x8xf32>
    %237 = tpu.matmul %232, %234, %cst_102 {dimension_numbers = #tpu.dot_dimension_numbers<[2], [2], [1], [1], [0, 0, 0, 1, 1, 1], [0], [0]>} : vector<2x8x8xf32>, vector<2x8x8xf32>, vector<2x8x8xf32> -> vector<2x8x8xf32>
    "tpu.trace_stop"() : () -> ()
    %238 = arith.addf %237, %24 : vector<2x8x8xf32>
    %239 = math.exp %238 : vector<2x8x8xf32>
    %cst_103 = arith.constant dense<0.000000e+00> : vector<2x8xf32>
    %240 = vector.multi_reduction <add>, %239, %cst_103 [2] : vector<2x8x8xf32> to vector<2x8xf32>
    %241 = vector.shape_cast %240 : vector<2x8xf32> to vector<2x8x1xf32>
    %242 = vector.broadcast %241 : vector<2x8x1xf32> to vector<2x8x8xf32>
    %243 = arith.divf %239, %242 : vector<2x8x8xf32>
    "tpu.trace_start"() <{level = 10 : i32, message = "bqk,bkd->bqd"}> : () -> ()
    %cst_104 = arith.constant dense<0.000000e+00> : vector<2x8x8xf32>
    %244 = tpu.matmul %243, %236, %cst_104 {dimension_numbers = #tpu.dot_dimension_numbers<[2], [1], [1], [2], [0, 0, 0, 1, 1, 2], [0], [0]>} : vector<2x8x8xf32>, vector<2x8x8xf32>, vector<2x8x8xf32> -> vector<2x8x8xf32>
    "tpu.trace_stop"() : () -> ()
    %245 = vector.shape_cast %244 : vector<2x8x8xf32> to vector<16x8xf32>
    %cst_105 = arith.constant dense<0.000000e+00> : vector<16x32xf32>
    %246 = tpu.matmul %245, %39, %cst_105 {dimension_numbers = #tpu.dot_dimension_numbers<[1], [0], [0], [1], [0, 0, 1, 1], [], []>} : vector<16x8xf32>, vector<8x32xf32>, vector<16x32xf32> -> vector<16x32xf32>
    %247 = arith.addf %228, %246 : vector<16x32xf32>
    %cst_106 = arith.constant dense<0.000000e+00> : vector<16x8xf32>
    %248 = tpu.matmul %191, %28, %cst_106 {dimension_numbers = #tpu.dot_dimension_numbers<[1], [0], [0], [1], [0, 0, 1, 1], [], []>} : vector<16x32xf32>, vector<32x8xf32>, vector<16x8xf32> -> vector<16x8xf32>
    %249 = vector.broadcast %44 : vector<1x8xf32> to vector<16x8xf32>
    %250 = arith.addf %248, %249 : vector<16x8xf32>
    %251 = vector.shape_cast %250 : vector<16x8xf32> to vector<2x8x8xf32>
    %cst_107 = arith.constant dense<0.000000e+00> : vector<16x8xf32>
    %252 = tpu.matmul %191, %32, %cst_107 {dimension_numbers = #tpu.dot_dimension_numbers<[1], [0], [0], [1], [0, 0, 1, 1], [], []>} : vector<16x32xf32>, vector<32x8xf32>, vector<16x8xf32> -> vector<16x8xf32>
    %253 = vector.shape_cast %252 : vector<16x8xf32> to vector<2x8x8xf32>
    %cst_108 = arith.constant dense<0.000000e+00> : vector<16x8xf32>
    %254 = tpu.matmul %191, %36, %cst_108 {dimension_numbers = #tpu.dot_dimension_numbers<[1], [0], [0], [1], [0, 0, 1, 1], [], []>} : vector<16x32xf32>, vector<32x8xf32>, vector<16x8xf32> -> vector<16x8xf32>
    %255 = vector.shape_cast %254 : vector<16x8xf32> to vector<2x8x8xf32>
    "tpu.trace_start"() <{level = 10 : i32, message = "bqd,bkd->bqk"}> : () -> ()
    %cst_109 = arith.constant dense<0.000000e+00> : vector<2x8x8xf32>
    %256 = tpu.matmul %251, %253, %cst_109 {dimension_numbers = #tpu.dot_dimension_numbers<[2], [2], [1], [1], [0, 0, 0, 1, 1, 1], [0], [0]>} : vector<2x8x8xf32>, vector<2x8x8xf32>, vector<2x8x8xf32> -> vector<2x8x8xf32>
    "tpu.trace_stop"() : () -> ()
    %257 = arith.addf %256, %24 : vector<2x8x8xf32>
    %258 = math.exp %257 : vector<2x8x8xf32>
    %cst_110 = arith.constant dense<0.000000e+00> : vector<2x8xf32>
    %259 = vector.multi_reduction <add>, %258, %cst_110 [2] : vector<2x8x8xf32> to vector<2x8xf32>
    %260 = vector.shape_cast %259 : vector<2x8xf32> to vector<2x8x1xf32>
    %261 = vector.broadcast %260 : vector<2x8x1xf32> to vector<2x8x8xf32>
    %262 = arith.divf %258, %261 : vector<2x8x8xf32>
    "tpu.trace_start"() <{level = 10 : i32, message = "bqk,bkd->bqd"}> : () -> ()
    %cst_111 = arith.constant dense<0.000000e+00> : vector<2x8x8xf32>
    %263 = tpu.matmul %262, %255, %cst_111 {dimension_numbers = #tpu.dot_dimension_numbers<[2], [1], [1], [2], [0, 0, 0, 1, 1, 2], [0], [0]>} : vector<2x8x8xf32>, vector<2x8x8xf32>, vector<2x8x8xf32> -> vector<2x8x8xf32>
    "tpu.trace_stop"() : () -> ()
    %264 = vector.shape_cast %263 : vector<2x8x8xf32> to vector<16x8xf32>
    %cst_112 = arith.constant dense<0.000000e+00> : vector<16x32xf32>
    %265 = tpu.matmul %264, %40, %cst_112 {dimension_numbers = #tpu.dot_dimension_numbers<[1], [0], [0], [1], [0, 0, 1, 1], [], []>} : vector<16x8xf32>, vector<8x32xf32>, vector<16x32xf32> -> vector<16x32xf32>
    %266 = arith.addf %247, %265 : vector<16x32xf32>
    %267 = vector.broadcast %45 : vector<1x32xf32> to vector<16x32xf32>
    %268 = arith.addf %266, %267 : vector<16x32xf32>
    %269 = arith.addf %268, %191 : vector<16x32xf32>
    %cst_113 = arith.constant dense<0.000000e+00> : vector<16xf32>
    %270 = vector.multi_reduction <add>, %269, %cst_113 [1] : vector<16x32xf32> to vector<16xf32>
    %271 = vector.shape_cast %270 : vector<16xf32> to vector<16x1xf32>
    %cst_114 = arith.constant 3.200000e+01 : f32
    %272 = vector.broadcast %cst_114 : f32 to vector<16x1xf32>
    %273 = arith.divf %271, %272 : vector<16x1xf32>
    %274 = vector.broadcast %273 : vector<16x1xf32> to vector<16x32xf32>
    %275 = arith.subf %269, %274 : vector<16x32xf32>
    %276 = arith.mulf %275, %275 : vector<16x32xf32>
    %cst_115 = arith.constant dense<0.000000e+00> : vector<16xf32>
    %277 = vector.multi_reduction <add>, %276, %cst_115 [1] : vector<16x32xf32> to vector<16xf32>
    %278 = vector.shape_cast %277 : vector<16xf32> to vector<16x1xf32>
    %cst_116 = arith.constant 3.200000e+01 : f32
    %279 = vector.broadcast %cst_116 : f32 to vector<16x1xf32>
    %280 = arith.divf %278, %279 : vector<16x1xf32>
    %cst_117 = arith.constant 9.99999996E-13 : f32
    %281 = vector.broadcast %cst_117 : f32 to vector<16x1xf32>
    %282 = arith.addf %280, %281 : vector<16x1xf32>
    %283 = math.rsqrt %282 : vector<16x1xf32>
    %284 = vector.broadcast %283 : vector<16x1xf32> to vector<16x32xf32>
    %285 = arith.mulf %275, %284 : vector<16x32xf32>
    %286 = vector.broadcast %46 : vector<1x32xf32> to vector<16x32xf32>
    %287 = arith.mulf %285, %286 : vector<16x32xf32>
    %288 = vector.broadcast %47 : vector<1x32xf32> to vector<16x32xf32>
    %289 = arith.addf %287, %288 : vector<16x32xf32>
    %cst_118 = arith.constant dense<0.000000e+00> : vector<16x64xf32>
    %290 = tpu.matmul %289, %48, %cst_118 {dimension_numbers = #tpu.dot_dimension_numbers<[1], [0], [0], [1], [0, 0, 1, 1], [], []>} : vector<16x32xf32>, vector<32x64xf32>, vector<16x64xf32> -> vector<16x64xf32>
    %291 = vector.broadcast %49 : vector<1x64xf32> to vector<16x64xf32>
    %292 = arith.addf %290, %291 : vector<16x64xf32>
    %293 = arith.mulf %292, %292 : vector<16x64xf32>
    %294 = arith.mulf %292, %293 : vector<16x64xf32>
    %cst_119 = arith.constant 4.471500e-02 : f32
    %295 = vector.broadcast %cst_119 : f32 to vector<16x64xf32>
    %296 = arith.mulf %295, %294 : vector<16x64xf32>
    %297 = arith.addf %292, %296 : vector<16x64xf32>
    %cst_120 = arith.constant 0.797884583 : f32
    %298 = vector.broadcast %cst_120 : f32 to vector<16x64xf32>
    %299 = arith.mulf %298, %297 : vector<16x64xf32>
    %300 = math.tanh %299 : vector<16x64xf32>
    %cst_121 = arith.constant 1.000000e+00 : f32
    %301 = vector.broadcast %cst_121 : f32 to vector<16x64xf32>
    %302 = arith.addf %301, %300 : vector<16x64xf32>
    %cst_122 = arith.constant 5.000000e-01 : f32
    %303 = vector.broadcast %cst_122 : f32 to vector<16x64xf32>
    %304 = arith.mulf %303, %302 : vector<16x64xf32>
    %305 = arith.mulf %292, %304 : vector<16x64xf32>
    %cst_123 = arith.constant dense<0.000000e+00> : vector<16x32xf32>
    %306 = tpu.matmul %305, %50, %cst_123 {dimension_numbers = #tpu.dot_dimension_numbers<[1], [0], [0], [1], [0, 0, 1, 1], [], []>} : vector<16x64xf32>, vector<64x32xf32>, vector<16x32xf32> -> vector<16x32xf32>
    %307 = vector.broadcast %51 : vector<1x32xf32> to vector<16x32xf32>
    %308 = arith.addf %306, %307 : vector<16x32xf32>
    %309 = arith.addf %308, %289 : vector<16x32xf32>
    %cst_124 = arith.constant dense<0.000000e+00> : vector<16xf32>
    %310 = vector.multi_reduction <add>, %309, %cst_124 [1] : vector<16x32xf32> to vector<16xf32>
    %311 = vector.shape_cast %310 : vector<16xf32> to vector<16x1xf32>
    %cst_125 = arith.constant 3.200000e+01 : f32
    %312 = vector.broadcast %cst_125 : f32 to vector<16x1xf32>
    %313 = arith.divf %311, %312 : vector<16x1xf32>
    %314 = vector.broadcast %313 : vector<16x1xf32> to vector<16x32xf32>
    %315 = arith.subf %309, %314 : vector<16x32xf32>
    %316 = arith.mulf %315, %315 : vector<16x32xf32>
    %cst_126 = arith.constant dense<0.000000e+00> : vector<16xf32>
    %317 = vector.multi_reduction <add>, %316, %cst_126 [1] : vector<16x32xf32> to vector<16xf32>
    %318 = vector.shape_cast %317 : vector<16xf32> to vector<16x1xf32>
    %cst_127 = arith.constant 3.200000e+01 : f32
    %319 = vector.broadcast %cst_127 : f32 to vector<16x1xf32>
    %320 = arith.divf %318, %319 : vector<16x1xf32>
    %cst_128 = arith.constant 9.99999996E-13 : f32
    %321 = vector.broadcast %cst_128 : f32 to vector<16x1xf32>
    %322 = arith.addf %320, %321 : vector<16x1xf32>
    %323 = math.rsqrt %322 : vector<16x1xf32>
    %324 = vector.broadcast %323 : vector<16x1xf32> to vector<16x32xf32>
    %325 = arith.mulf %315, %324 : vector<16x32xf32>
    %326 = vector.broadcast %52 : vector<1x32xf32> to vector<16x32xf32>
    %327 = arith.mulf %325, %326 : vector<16x32xf32>
    %328 = vector.broadcast %53 : vector<1x32xf32> to vector<16x32xf32>
    %329 = arith.addf %327, %328 : vector<16x32xf32>
    %c528 = arith.constant 528 : index
    %c0_129 = arith.constant 0 : index
    %330 = vector.load %arg3[%c528, %c0_129] : memref<640x128xf32, #tpu.memory_space<vmem>>, vector<32x32xf32>
    %c636 = arith.constant 636 : index
    %c0_130 = arith.constant 0 : index
    %331 = vector.load %arg3[%c636, %c0_130] : memref<640x128xf32, #tpu.memory_space<vmem>>, vector<1x32xf32>
    %cst_131 = arith.constant dense<0.000000e+00> : vector<16x32xf32>
    %332 = tpu.matmul %329, %330, %cst_131 {dimension_numbers = #tpu.dot_dimension_numbers<[1], [0], [0], [1], [0, 0, 1, 1], [], []>} : vector<16x32xf32>, vector<32x32xf32>, vector<16x32xf32> -> vector<16x32xf32>
    %333 = vector.broadcast %331 : vector<1x32xf32> to vector<16x32xf32>
    %334 = arith.addf %332, %333 : vector<16x32xf32>
    %335 = math.tanh %334 : vector<16x32xf32>
    %c560 = arith.constant 560 : index
    %c0_132 = arith.constant 0 : index
    %336 = vector.load %arg3[%c560, %c0_132] : memref<640x128xf32, #tpu.memory_space<vmem>>, vector<32x32xf32>
    %c637 = arith.constant 637 : index
    %c0_133 = arith.constant 0 : index
    %337 = vector.load %arg3[%c637, %c0_133] : memref<640x128xf32, #tpu.memory_space<vmem>>, vector<1x32xf32>
    %cst_134 = arith.constant dense<0.000000e+00> : vector<16x32xf32>
    %338 = tpu.matmul %335, %336, %cst_134 {dimension_numbers = #tpu.dot_dimension_numbers<[1], [0], [0], [1], [0, 0, 1, 1], [], []>} : vector<16x32xf32>, vector<32x32xf32>, vector<16x32xf32> -> vector<16x32xf32>
    %339 = vector.broadcast %337 : vector<1x32xf32> to vector<16x32xf32>
    %340 = arith.addf %338, %339 : vector<16x32xf32>
    %c592 = arith.constant 592 : index
    %c0_135 = arith.constant 0 : index
    %341 = vector.load %arg3[%c592, %c0_135] : memref<640x128xf32, #tpu.memory_space<vmem>>, vector<32x128xf32>
    %c638 = arith.constant 638 : index
    %c0_136 = arith.constant 0 : index
    %342 = vector.load %arg3[%c638, %c0_136] : memref<640x128xf32, #tpu.memory_space<vmem>>, vector<1x128xf32>
    %cst_137 = arith.constant dense<0.000000e+00> : vector<16x128xf32>
    %343 = tpu.matmul %340, %341, %cst_137 {dimension_numbers = #tpu.dot_dimension_numbers<[1], [0], [0], [1], [0, 0, 1, 1], [], []>} : vector<16x32xf32>, vector<32x128xf32>, vector<16x128xf32> -> vector<16x128xf32>
    %344 = vector.broadcast %342 : vector<1x128xf32> to vector<16x128xf32>
    %345 = arith.addf %343, %344 : vector<16x128xf32>
    %c0_138 = arith.constant 0 : index
    %c0_139 = arith.constant 0 : index
    %346 = vector.load %arg4[%c0_138, %c0_139] : memref<16x128xf32, #tpu.memory_space<vmem>>, vector<16x128xf32>
    tpu.vector_store %arg4[%c0_138, %c0_139], %345 {strides = array<i32>} : memref<16x128xf32, #tpu.memory_space<vmem>>, vector<16x128xf32>,
    return
  }
  func.func @transform_0(%arg0: i32) -> (i32, i32) {
    %c0_i32 = arith.constant 0 : i32
    %c0_i32_0 = arith.constant 0 : i32
    %c0_i32_1 = arith.constant 0 : i32
    return %c0_i32, %c0_i32_0 : i32, i32
  }
  func.func @transform_1(%arg0: i32) -> (i32, i32, i32) {
    %c0_i32 = arith.constant 0 : i32
    %c0_i32_0 = arith.constant 0 : i32
    %c0_i32_1 = arith.constant 0 : i32
    %c0_i32_2 = arith.constant 0 : i32
    return %c0_i32, %c0_i32_0, %c0_i32_1 : i32, i32, i32
  }
  func.func @transform_2(%arg0: i32) -> (i32, i32) {
    %c0_i32 = arith.constant 0 : i32
    %c0_i32_0 = arith.constant 0 : i32
    %c0_i32_1 = arith.constant 0 : i32
    return %c0_i32, %c0_i32_0 : i32, i32
  }
  func.func @transform_3(%arg0: i32) -> (i32, i32) {
    %c0_i32 = arith.constant 0 : i32
    %c0_i32_0 = arith.constant 0 : i32
    %c0_i32_1 = arith.constant 0 : i32
    return %c0_i32, %c0_i32_0 : i32, i32
  }
}

</mosaic_0001>

<llo_original>
// kernel: albert_classifier_forward.1
$region0: #{albert_classifier_forward.1}
  #allocation0 [shape = 'u32[]', space=smem, size = 0x4, offset = 0x4, fixed_abs, tag = 'smem constant byte address 0x4 - core index']
  #allocation1 [shape = 'u32[144,128]{1,0:T(1,128)}', space=vmem, size = 0x12000, scoped, tag = 'internal scratch']
  %s0 = inlined_call_operand.vmem [shape: f32[16,16], index: 0, kind: input, shape index: {}]
  %s1 = inlined_call_operand.vmem [shape: f32[2,1,8], index: 1, kind: input, shape index: {}]
  %s2 = inlined_call_operand.vmem [shape: f32[640,128], index: 2, kind: input, shape index: {}]
  %s3 = inlined_call_operand.vmem [shape: f32[16,128], index: 3, kind: output, shape index: {}]
  %s4 = sld [smem:[#allocation0]]
  $region22: #{albert_classifier_forward.1} parent=0
    _
  %s6 = ssub.s32 1, %s4
  %s7 = scalar_select 0, %s6, %s4
  // Predicated region
  $region2: #{albert_classifier_forward.1} parent=0 // pred_check
    _
  $region3: #{albert_classifier_forward.1} parent=0 // pred_check_branch
    %9 = sbr.rel (0) target = $region5
  $region4: #{albert_classifier_forward.1} parent=0 // pred_region
    _
  $region5: #{albert_classifier_forward.1} parent=0 // pred_fallthru
    _
  // Predicated region
  $region6: #{albert_classifier_forward.1} parent=0 // pred_check
    _
  $region7: #{albert_classifier_forward.1} parent=0 // pred_check_branch
    %11 = sbr.rel (0) target = $region9
  $region8: #{albert_classifier_forward.1} parent=0 // pred_region
    _
  $region9: #{albert_classifier_forward.1} parent=0 // pred_fallthru
    _
  // Predicated region
  $region10: #{albert_classifier_forward.1} parent=0 // pred_check
    _
  $region11: #{albert_classifier_forward.1} parent=0 // pred_check_branch
    %13 = sbr.rel (0) target = $region13
  $region12: #{albert_classifier_forward.1} parent=0 // pred_region
    _
  $region13: #{albert_classifier_forward.1} parent=0 // pred_fallthru
    _
  %v14 = vld [vmem:[%s0] sm:$0xff]
  %v15 = vld [vmem:[%s0 + $0x8] sm:$0xff]
  %vm16 = vcmask 130048
  %v17 = vsel %vm16, %v14, 0.0
  %18 = vadd.xlane.f32.xlu0 %v17
  %v19 = vpop.xlane.xlu0 %18
  %v20 = vsel %vm16, %v15, 0.0
  %21 = vadd.xlane.f32.xlu0 %v20
  %v22 = vpop.xlane.xlu0 %21
  %v23 = vrcp.pop 16.0
  %v24 = vmul.f32 %v19, %v23
  %v25 = vmul.f32 %v22, %v23
  %v26 = vsub.f32 %v14, %v24
  %v27 = vsub.f32 %v15, %v25
  %v28 = vmul.f32 %v26, %v26
  %v29 = vmul.f32 %v27, %v27
  %v30 = vsel %vm16, %v28, 0.0
  %31 = vadd.xlane.f32.xlu0 %v30
  %v32 = vpop.xlane.xlu0 %31
  %v33 = vsel %vm16, %v29, 0.0
  %34 = vadd.xlane.f32.xlu0 %v33
  %v35 = vpop.xlane.xlu0 %34
  %v36 = vmul.f32 %v32, %v23
  %v37 = vmul.f32 %v35, %v23
  %v38 = vadd.f32 %v36, 1e-12
  %v39 = vadd.f32 %v37, 1e-12
  %v40 = vrsqrt.pop %v38
  %v41 = vrsqrt.pop %v39
  %v42 = vmul.f32 %v26, %v40
  %v43 = vmul.f32 %v27, %v41
  %v44 = vld [vmem:[%s2] sm:$0xff]
  %v45 = vld [vmem:[%s2 + $0x8] sm:$0xff]
  %v46 = vld [vmem:[%s2 + $0x270] sm:$0x1]
  %v47 = vlaneseq
  %v48 = vshrl.u32 %v47, 7
  %v49 = vsub.s32 0, %v48
  %v50 = vrot.slane %v46, %v49
  %v52 = vsel %vm16, %v42, 0
  %v55 = vsel %vm16, %v43, 0
  %57 = vmatprep.subr.mxu0 0.0
  %58 = vmatpush1.msra.mxu0 %v44
  %59 = vmatprep.subr.mxu0 0.0
  %60 = vmatpush1.msra.mxu0 %v45
  %61 = vmatprep.subr.mxu0 0.0
  %62 = vmatpush1.msra.mxu0 0.0
  %63 = vmatprep.subr.mxu0 0.0
  %64 = vmatpush1.msra.mxu0 0.0
  %65 = vmatprep.subr.mxu0 0.0
  %66 = vmatpush1.msra.mxu0 0.0
  %67 = vmatprep.subr.mxu0 0.0
  %68 = vmatpush1.msra.mxu0 0.0
  %69 = vmatprep.subr.mxu0 0.0
  %70 = vmatpush1.msra.mxu0 0.0
  %71 = vmatprep.subr.mxu0 0.0
  %72 = vmatpush1.msra.mxu0 0.0
  %73 = vmatprep.subr.mxu0 0.0
  %74 = vmatpush1.msra.mxu0 0.0
  %75 = vmatprep.subr.mxu0 0.0
  %76 = vmatpush1.msra.mxu0 0.0
  %77 = vmatprep.subr.mxu0 0.0
  %78 = vmatpush1.msra.mxu0 0.0
  %79 = vmatprep.subr.mxu0 0.0
  %80 = vmatpush1.msra.mxu0 0.0
  %81 = vmatprep.subr.mxu0 0.0
  %82 = vmatpush1.msra.mxu0 0.0
  %83 = vmatprep.subr.mxu0 0.0
  %84 = vmatpush1.msra.mxu0 0.0
  %85 = vmatprep.subr.mxu0 0.0
  %86 = vmatpush1.msra.mxu0 0.0
  %87 = vmatprep.subr.mxu0 0.0
  %88 = vmatpush1.msra.mxu0 0.0
  %89 = vmatprep.subr.mxu0 0.0
  %90 = vmatpush1.msra.mxu0 0.0
  %91 = vmatprep.subr.mxu0 0.0
  %92 = vmatpush1.msra.mxu0 0.0
  %93 = vmatprep.subr.mxu0 0.0
  %94 = vmatpush1.msra.mxu0 0.0
  %95 = vmatprep.subr.mxu0 0.0
  %96 = vmatpush1.msra.mxu0 0.0
  %97 = vmatprep.subr.mxu0 0.0
  %98 = vmatpush1.msra.mxu0 0.0
  %99 = vmatprep.subr.mxu0 0.0
  %100 = vmatpush1.msra.mxu0 0.0
  %101 = vmatprep.subr.mxu0 0.0
  %102 = vmatpush1.msra.mxu0 0.0
  %103 = vmatprep.subr.mxu0 0.0
  %104 = vmatpush1.msra.mxu0 0.0
  %105 = vmatprep.subr.mxu0 0.0
  %106 = vmatpush1.msra.mxu0 0.0
  %107 = vmatprep.subr.mxu0 0.0
  %108 = vmatpush1.msra.mxu0 0.0
  %109 = vmatprep.subr.mxu0 0.0
  %110 = vmatpush1.msra.mxu0 0.0
  %111 = vmatprep.subr.mxu0 0.0
  %112 = vmatpush1.msra.mxu0 0.0
  %113 = vmatprep.subr.mxu0 0.0
  %114 = vmatpush1.msra.mxu0 0.0
  %115 = vmatprep.subr.mxu0 0.0
  %116 = vmatpush1.msra.mxu0 0.0
  %117 = vmatprep.subr.mxu0 0.0
  %118 = vmatpush1.msra.mxu0 0.0
  %119 = vmatprep.subr.mxu0 0.0
  %120 = vmatpush1.msra.mxu0 0.0
  %121 = vmatprep.mubr.f32.mxu0 0.0
  %122 = vmatmul.mubr.f32.gmra.mrb[0].mxu0 %v52
  %v123 = vpop.f32.mrb[0].mxu0
  %v124 = vadd.f32 %v50, %v123
  %v125 = vpop.f32.mrb[0].mxu0
  %126 = vmatprep.mubr.f32.mxu0 0.0
  %127 = vmatmul.mubr.f32.gmra.mrb[0].mxu0 %v55
  %v128 = vpop.f32.mrb[0].mxu0
  %v129 = vadd.f32 %v50, %v128
  %v130 = vpop.f32.mrb[0].mxu0
  %131 = vdwg.mxu0
  %v132 = vld [vmem:[%s1] sm:$0x1]
  %v133 = vld [vmem:[%s1 + $0x1] sm:$0x1]
  %v136 = vlaneseq
  %v137 = vshrl.u32 %v136, 7
  %v138 = vsub.s32 0, %v137
  %v139 = vrot.slane %v132, %v138
  %v140 = vlaneseq
  %v141 = vshrl.u32 %v140, 7
  %v142 = vsub.s32 0, %v141
  %v143 = vrot.slane %v133, %v142
  %v146 = vld [vmem:[%s2 + $0x10] sm:$0xff]
  %v147 = vld [vmem:[%s2 + $0x18] sm:$0xff]
  %v148 = vld [vmem:[%s2 + $0x20] sm:$0xff]
  %v149 = vld [vmem:[%s2 + $0x28] sm:$0xff]
  %v150 = vld [vmem:[%s2 + $0x70] sm:$0xff]
  %v151 = vld [vmem:[%s2 + $0x78] sm:$0xff]
  %v152 = vld [vmem:[%s2 + $0x80] sm:$0xff]
  %v153 = vld [vmem:[%s2 + $0x88] sm:$0xff]
  %v154 = vld [vmem:[%s2 + $0xd0] sm:$0xff]
  %v155 = vld [vmem:[%s2 + $0xd8] sm:$0xff]
  %v156 = vld [vmem:[%s2 + $0xe0] sm:$0xff]
  %v157 = vld [vmem:[%s2 + $0xe8] sm:$0xff]
  %v158 = vld [vmem:[%s2 + $0x130] sm:$0xff]
  %v159 = vld [vmem:[%s2 + $0x138] sm:$0xff]
  %v160 = vld [vmem:[%s2 + $0x140] sm:$0xff]
  %v161 = vld [vmem:[%s2 + $0x148] sm:$0xff]
  %v162 = vld [vmem:[%s2 + $0x30] sm:$0xff]
  %v163 = vld [vmem:[%s2 + $0x38] sm:$0xff]
  %v164 = vld [vmem:[%s2 + $0x40] sm:$0xff]
  %v165 = vld [vmem:[%s2 + $0x48] sm:$0xff]
  %v166 = vld [vmem:[%s2 + $0x90] sm:$0xff]
  %v167 = vld [vmem:[%s2 + $0x98] sm:$0xff]
  %v168 = vld [vmem:[%s2 + $0xa0] sm:$0xff]
  %v169 = vld [vmem:[%s2 + $0xa8] sm:$0xff]
  %v170 = vld [vmem:[%s2 + $0xf0] sm:$0xff]
  %v171 = vld [vmem:[%s2 + $0xf8] sm:$0xff]
  %v172 = vld [vmem:[%s2 + $0x100] sm:$0xff]
  %v173 = vld [vmem:[%s2 + $0x108] sm:$0xff]
  %v174 = vld [vmem:[%s2 + $0x150] sm:$0xff]
  %v175 = vld [vmem:[%s2 + $0x158] sm:$0xff]
  %v176 = vld [vmem:[%s2 + $0x160] sm:$0xff]
  %v177 = vld [vmem:[%s2 + $0x168] sm:$0xff]
  %v178 = vld [vmem:[%s2 + $0x50] sm:$0xff]
  %v179 = vld [vmem:[%s2 + $0x58] sm:$0xff]
  %v180 = vld [vmem:[%s2 + $0x60] sm:$0xff]
  %v181 = vld [vmem:[%s2 + $0x68] sm:$0xff]
  %v182 = vld [vmem:[%s2 + $0xb0] sm:$0xff]
  %v183 = vld [vmem:[%s2 + $0xb8] sm:$0xff]
  %v184 = vld [vmem:[%s2 + $0xc0] sm:$0xff]
  %v185 = vld [vmem:[%s2 + $0xc8] sm:$0xff]
  %v186 = vld [vmem:[%s2 + $0x110] sm:$0xff]
  %v187 = vld [vmem:[%s2 + $0x118] sm:$0xff]
  %v188 = vld [vmem:[%s2 + $0x120] sm:$0xff]
  %v189 = vld [vmem:[%s2 + $0x128] sm:$0xff]
  %v190 = vld [vmem:[%s2 + $0x170] sm:$0xff]
  %v191 = vld [vmem:[%s2 + $0x178] sm:$0xff]
  %v192 = vld [vmem:[%s2 + $0x180] sm:$0xff]
  %v193 = vld [vmem:[%s2 + $0x188] sm:$0xff]
  %v194 = vld [vmem:[%s2 + $0x190] sm:$0xff]
  %v195 = vld [vmem:[%s2 + $0x198] sm:$0xff]
  %v196 = vld [vmem:[%s2 + $0x1a0] sm:$0xff]
  %v197 = vld [vmem:[%s2 + $0x1a8] sm:$0xff]
  %v198 = vld [vmem:[%s2 + $0x271] sm:$0x1]
  %v199 = vld [vmem:[%s2 + $0x272] sm:$0x1]
  %v200 = vld [vmem:[%s2 + $0x273] sm:$0x1]
  %v201 = vld [vmem:[%s2 + $0x274] sm:$0x1]
  %v202 = vld [vmem:[%s2 + $0x275] sm:$0x1]
  %v203 = vld [vmem:[%s2 + $0x276] sm:$0x1]
  %v204 = vld [vmem:[%s2 + $0x277] sm:$0x1]
  %v205 = vld [vmem:[%s2 + $0x1b0] sm:$0xff]
  %v206 = vld [vmem:[%s2 + $0x1b8] sm:$0xff]
  %v207 = vld [vmem:[%s2 + $0x1c0] sm:$0xff]
  %v208 = vld [vmem:[%s2 + $0x1c8] sm:$0xff]
  %v209 = vld [vmem:[%s2 + $0x278] sm:$0x1]
  %v210 = vld [vmem:[%s2 + $0x1d0] sm:$0xff]
  %v211 = vld [vmem:[%s2 + $0x1d8] sm:$0xff]
  %v212 = vld [vmem:[%s2 + $0x1e0] sm:$0xff]
  %v213 = vld [vmem:[%s2 + $0x1e8] sm:$0xff]
  %v214 = vld [vmem:[%s2 + $0x1f0] sm:$0xff]
  %v215 = vld [vmem:[%s2 + $0x1f8] sm:$0xff]
  %v216 = vld [vmem:[%s2 + $0x200] sm:$0xff]
  %v217 = vld [vmem:[%s2 + $0x208] sm:$0xff]
  %v218 = vld [vmem:[%s2 + $0x279] sm:$0x1]
  %v219 = vld [vmem:[%s2 + $0x27a] sm:$0x1]
  %v220 = vld [vmem:[%s2 + $0x27b] sm:$0x1]
  %v221 = vlaneseq
  %v222 = vshrl.u32 %v221, 7
  %v223 = vsub.s32 0, %v222
  %v224 = vrot.slane %v198, %v223
  %vm225 = vcmask 261120
  %v227 = vsel %vm225, %v124, 0
  %v230 = vsel %vm225, %v129, 0
  %232 = vmatprep.subr.mxu0 0.0
  %233 = vmatpush1.msra.mxu0 %v146
  %234 = vmatprep.subr.mxu0 0.0
  %235 = vmatpush1.msra.mxu0 %v147
  %236 = vmatprep.subr.mxu0 0.0
  %237 = vmatpush1.msra.mxu0 %v148
  %238 = vmatprep.subr.mxu0 0.0
  %239 = vmatpush1.msra.mxu0 %v149
  %240 = vmatprep.subr.mxu0 0.0
  %241 = vmatpush1.msra.mxu0 0.0
  %242 = vmatprep.subr.mxu0 0.0
  %243 = vmatpush1.msra.mxu0 0.0
  %244 = vmatprep.subr.mxu0 0.0
  %245 = vmatpush1.msra.mxu0 0.0
  %246 = vmatprep.subr.mxu0 0.0
  %247 = vmatpush1.msra.mxu0 0.0
  %248 = vmatprep.subr.mxu0 0.0
  %249 = vmatpush1.msra.mxu0 0.0
  %250 = vmatprep.subr.mxu0 0.0
  %251 = vmatpush1.msra.mxu0 0.0
  %252 = vmatprep.subr.mxu0 0.0
  %253 = vmatpush1.msra.mxu0 0.0
  %254 = vmatprep.subr.mxu0 0.0
  %255 = vmatpush1.msra.mxu0 0.0
  %256 = vmatprep.subr.mxu0 0.0
  %257 = vmatpush1.msra.mxu0 0.0
  %258 = vmatprep.subr.mxu0 0.0
  %259 = vmatpush1.msra.mxu0 0.0
  %260 = vmatprep.subr.mxu0 0.0
  %261 = vmatpush1.msra.mxu0 0.0
  %262 = vmatprep.subr.mxu0 0.0
  %263 = vmatpush1.msra.mxu0 0.0
  %264 = vmatprep.subr.mxu0 0.0
  %265 = vmatpush1.msra.mxu0 0.0
  %266 = vmatprep.subr.mxu0 0.0
  %267 = vmatpush1.msra.mxu0 0.0
  %268 = vmatprep.subr.mxu0 0.0
  %269 = vmatpush1.msra.mxu0 0.0
  %270 = vmatprep.subr.mxu0 0.0
  %271 = vmatpush1.msra.mxu0 0.0
  %272 = vmatprep.subr.mxu0 0.0
  %273 = vmatpush1.msra.mxu0 0.0
  %274 = vmatprep.subr.mxu0 0.0
  %275 = vmatpush1.msra.mxu0 0.0
  %276 = vmatprep.subr.mxu0 0.0
  %277 = vmatpush1.msra.mxu0 0.0
  %278 = vmatprep.subr.mxu0 0.0
  %279 = vmatpush1.msra.mxu0 0.0
  %280 = vmatprep.subr.mxu0 0.0
  %281 = vmatpush1.msra.mxu0 0.0
  %282 = vmatprep.subr.mxu0 0.0
  %283 = vmatpush1.msra.mxu0 0.0
  %284 = vmatprep.subr.mxu0 0.0
  %285 = vmatpush1.msra.mxu0 0.0
  %286 = vmatprep.subr.mxu0 0.0
  %287 = vmatpush1.msra.mxu0 0.0
  %288 = vmatprep.subr.mxu0 0.0
  %289 = vmatpush1.msra.mxu0 0.0
  %290 = vmatprep.subr.mxu0 0.0
  %291 = vmatpush1.msra.mxu0 0.0
  %292 = vmatprep.subr.mxu0 0.0
  %293 = vmatpush1.msra.mxu0 0.0
  %294 = vmatprep.subr.mxu0 0.0
  %295 = vmatpush1.msra.mxu0 0.0
  %296 = vmatprep.mubr.f32.mxu0 0.0
  %297 = vmatmul.mubr.f32.gmra.mrb[0].mxu0 %v227
  %v298 = vpop.f32.mrb[0].mxu0
  %v299 = vadd.f32 %v224, %v298
  %v300 = vpop.f32.mrb[0].mxu0
  %301 = vmatprep.mubr.f32.mxu0 0.0
  %302 = vmatmul.mubr.f32.gmra.mrb[0].mxu0 %v230
  %v303 = vpop.f32.mrb[0].mxu0
  %v304 = vadd.f32 %v224, %v303
  %v305 = vpop.f32.mrb[0].mxu0
  %306 = vdwg.mxu0
  %307 = vmatprep.subr.mxu0 0.0
  %308 = vmatpush1.msra.mxu0 %v162
  %309 = vmatprep.subr.mxu0 0.0
  %310 = vmatpush1.msra.mxu0 %v163
  %311 = vmatprep.subr.mxu0 0.0
  %312 = vmatpush1.msra.mxu0 %v164
  %313 = vmatprep.subr.mxu0 0.0
  %314 = vmatpush1.msra.mxu0 %v165
  %315 = vmatprep.subr.mxu0 0.0
  %316 = vmatpush1.msra.mxu0 0.0
  %317 = vmatprep.subr.mxu0 0.0
  %318 = vmatpush1.msra.mxu0 0.0
  %319 = vmatprep.subr.mxu0 0.0
  %320 = vmatpush1.msra.mxu0 0.0
  %321 = vmatprep.subr.mxu0 0.0
  %322 = vmatpush1.msra.mxu0 0.0
  %323 = vmatprep.subr.mxu0 0.0
  %324 = vmatpush1.msra.mxu0 0.0
  %325 = vmatprep.subr.mxu0 0.0
  %326 = vmatpush1.msra.mxu0 0.0
  %327 = vmatprep.subr.mxu0 0.0
  %328 = vmatpush1.msra.mxu0 0.0
  %329 = vmatprep.subr.mxu0 0.0
  %330 = vmatpush1.msra.mxu0 0.0
  %331 = vmatprep.subr.mxu0 0.0
  %332 = vmatpush1.msra.mxu0 0.0
  %333 = vmatprep.subr.mxu0 0.0
  %334 = vmatpush1.msra.mxu0 0.0
  %335 = vmatprep.subr.mxu0 0.0
  %336 = vmatpush1.msra.mxu0 0.0
  %337 = vmatprep.subr.mxu0 0.0
  %338 = vmatpush1.msra.mxu0 0.0
  %339 = vmatprep.subr.mxu0 0.0
  %340 = vmatpush1.msra.mxu0 0.0
  %341 = vmatprep.subr.mxu0 0.0
  %342 = vmatpush1.msra.mxu0 0.0
  %343 = vmatprep.subr.mxu0 0.0
  %344 = vmatpush1.msra.mxu0 0.0
  %345 = vmatprep.subr.mxu0 0.0
  %346 = vmatpush1.msra.mxu0 0.0
  %347 = vmatprep.subr.mxu0 0.0
  %348 = vmatpush1.msra.mxu0 0.0
  %349 = vmatprep.subr.mxu0 0.0
  %350 = vmatpush1.msra.mxu0 0.0
  %351 = vmatprep.subr.mxu0 0.0
  %352 = vmatpush1.msra.mxu0 0.0
  %353 = vmatprep.subr.mxu0 0.0
  %354 = vmatpush1.msra.mxu0 0.0
  %355 = vmatprep.subr.mxu0 0.0
  %356 = vmatpush1.msra.mxu0 0.0
  %357 = vmatprep.subr.mxu0 0.0
  %358 = vmatpush1.msra.mxu0 0.0
  %359 = vmatprep.subr.mxu0 0.0
  %360 = vmatpush1.msra.mxu0 0.0
  %361 = vmatprep.subr.mxu0 0.0
  %362 = vmatpush1.msra.mxu0 0.0
  %363 = vmatprep.subr.mxu0 0.0
  %364 = vmatpush1.msra.mxu0 0.0
  %365 = vmatprep.subr.mxu0 0.0
  %366 = vmatpush1.msra.mxu0 0.0
  %367 = vmatprep.subr.mxu0 0.0
  %368 = vmatpush1.msra.mxu0 0.0
  %369 = vmatprep.subr.mxu0 0.0
  %370 = vmatpush1.msra.mxu0 0.0
  %371 = vmatprep.mubr.f32.mxu0 0.0
  %372 = vmatmul.mubr.f32.gmra.mrb[0].mxu0 %v227
  %v373 = vpop.f32.mrb[0].mxu0
  %v374 = vadd.f32 0.0, %v373
  %v375 = vpop.f32.mrb[0].mxu0
  %376 = vmatprep.mubr.f32.mxu0 0.0
  %377 = vmatmul.mubr.f32.gmra.mrb[0].mxu0 %v230
  %v378 = vpop.f32.mrb[0].mxu0
  %v379 = vadd.f32 0.0, %v378
  %v380 = vpop.f32.mrb[0].mxu0
  %381 = vdwg.mxu0
  %382 = vmatprep.subr.mxu0 0.0
  %383 = vmatpush1.msra.mxu0 %v178
  %384 = vmatprep.subr.mxu0 0.0
  %385 = vmatpush1.msra.mxu0 %v179
  %386 = vmatprep.subr.mxu0 0.0
  %387 = vmatpush1.msra.mxu0 %v180
  %388 = vmatprep.subr.mxu0 0.0
  %389 = vmatpush1.msra.mxu0 %v181
  %390 = vmatprep.subr.mxu0 0.0
  %391 = vmatpush1.msra.mxu0 0.0
  %392 = vmatprep.subr.mxu0 0.0
  %393 = vmatpush1.msra.mxu0 0.0
  %394 = vmatprep.subr.mxu0 0.0
  %395 = vmatpush1.msra.mxu0 0.0
  %396 = vmatprep.subr.mxu0 0.0
  %397 = vmatpush1.msra.mxu0 0.0
  %398 = vmatprep.subr.mxu0 0.0
  %399 = vmatpush1.msra.mxu0 0.0
  %400 = vmatprep.subr.mxu0 0.0
  %401 = vmatpush1.msra.mxu0 0.0
  %402 = vmatprep.subr.mxu0 0.0
  %403 = vmatpush1.msra.mxu0 0.0
  %404 = vmatprep.subr.mxu0 0.0
  %405 = vmatpush1.msra.mxu0 0.0
  %406 = vmatprep.subr.mxu0 0.0
  %407 = vmatpush1.msra.mxu0 0.0
  %408 = vmatprep.subr.mxu0 0.0
  %409 = vmatpush1.msra.mxu0 0.0
  %410 = vmatprep.subr.mxu0 0.0
  %411 = vmatpush1.msra.mxu0 0.0
  %412 = vmatprep.subr.mxu0 0.0
  %413 = vmatpush1.msra.mxu0 0.0
  %414 = vmatprep.subr.mxu0 0.0
  %415 = vmatpush1.msra.mxu0 0.0
  %416 = vmatprep.subr.mxu0 0.0
  %417 = vmatpush1.msra.mxu0 0.0
  %418 = vmatprep.subr.mxu0 0.0
  %419 = vmatpush1.msra.mxu0 0.0
  %420 = vmatprep.subr.mxu0 0.0
  %421 = vmatpush1.msra.mxu0 0.0
  %422 = vmatprep.subr.mxu0 0.0
  %423 = vmatpush1.msra.mxu0 0.0
  %424 = vmatprep.subr.mxu0 0.0
  %425 = vmatpush1.msra.mxu0 0.0
  %426 = vmatprep.subr.mxu0 0.0
  %427 = vmatpush1.msra.mxu0 0.0
  %428 = vmatprep.subr.mxu0 0.0
  %429 = vmatpush1.msra.mxu0 0.0
  %430 = vmatprep.subr.mxu0 0.0
  %431 = vmatpush1.msra.mxu0 0.0
  %432 = vmatprep.subr.mxu0 0.0
  %433 = vmatpush1.msra.mxu0 0.0
  %434 = vmatprep.subr.mxu0 0.0
  %435 = vmatpush1.msra.mxu0 0.0
  %436 = vmatprep.subr.mxu0 0.0
  %437 = vmatpush1.msra.mxu0 0.0
  %438 = vmatprep.subr.mxu0 0.0
  %439 = vmatpush1.msra.mxu0 0.0
  %440 = vmatprep.subr.mxu0 0.0
  %441 = vmatpush1.msra.mxu0 0.0
  %442 = vmatprep.subr.mxu0 0.0
  %443 = vmatpush1.msra.mxu0 0.0
  %444 = vmatprep.subr.mxu0 0.0
  %445 = vmatpush1.msra.mxu0 0.0
  %446 = vmatprep.mubr.f32.mxu0 0.0
  %447 = vmatmul.mubr.f32.gmra.mrb[0].mxu0 %v227
  %v448 = vpop.f32.mrb[0].mxu0
  %v449 = vadd.f32 0.0, %v448
  %v450 = vpop.f32.mrb[0].mxu0
  %451 = vmatprep.mubr.f32.mxu0 0.0
  %452 = vmatmul.mubr.f32.gmra.mrb[0].mxu0 %v230
  %v453 = vpop.f32.mrb[0].mxu0
  %v454 = vadd.f32 0.0, %v453
  %v455 = vpop.f32.mrb[0].mxu0
  %456 = vdwg.mxu0
  %vm457 = vcmask 64512
  %v459 = vsel %vm457, %v299, 0
  %v462 = vsel %vm457, %v374, 0
  %464 = vmatprep.subr.mxu0 0.0
  %465 = vmatpush1.xpose.msra.mxu0 %v462
  %466 = vmatprep.subr.mxu0 0.0
  %467 = vmatpush1.xpose.msra.mxu0 0.0
  %468 = vmatprep.subr.mxu0 0.0
  %469 = vmatpush1.xpose.msra.mxu0 0.0
  %470 = vmatprep.subr.mxu0 0.0
  %471 = vmatpush1.xpose.msra.mxu0 0.0
  %472 = vmatprep.subr.mxu0 0.0
  %473 = vmatpush1.xpose.msra.mxu0 0.0
  %474 = vmatprep.subr.mxu0 0.0
  %475 = vmatpush1.xpose.msra.mxu0 0.0
  %476 = vmatprep.subr.mxu0 0.0
  %477 = vmatpush1.xpose.msra.mxu0 0.0
  %478 = vmatprep.subr.mxu0 0.0
  %479 = vmatpush1.xpose.msra.mxu0 0.0
  %480 = vmatprep.subr.mxu0 0.0
  %481 = vmatpush1.xpose.msra.mxu0 0.0
  %482 = vmatprep.subr.mxu0 0.0
  %483 = vmatpush1.xpose.msra.mxu0 0.0
  %484 = vmatprep.subr.mxu0 0.0
  %485 = vmatpush1.xpose.msra.mxu0 0.0
  %486 = vmatprep.subr.mxu0 0.0
  %487 = vmatpush1.xpose.msra.mxu0 0.0
  %488 = vmatprep.subr.mxu0 0.0
  %489 = vmatpush1.xpose.msra.mxu0 0.0
  %490 = vmatprep.subr.mxu0 0.0
  %491 = vmatpush1.xpose.msra.mxu0 0.0
  %492 = vmatprep.subr.mxu0 0.0
  %493 = vmatpush1.xpose.msra.mxu0 0.0
  %494 = vmatprep.subr.mxu0 0.0
  %495 = vmatpush1.xpose.msra.mxu0 0.0
  %496 = vmatprep.subr.mxu0 0.0
  %497 = vmatpush1.xpose.msra.mxu0 0.0
  %498 = vmatprep.subr.mxu0 0.0
  %499 = vmatpush1.xpose.msra.mxu0 0.0
  %500 = vmatprep.subr.mxu0 0.0
  %501 = vmatpush1.xpose.msra.mxu0 0.0
  %502 = vmatprep.subr.mxu0 0.0
  %503 = vmatpush1.xpose.msra.mxu0 0.0
  %504 = vmatprep.subr.mxu0 0.0
  %505 = vmatpush1.xpose.msra.mxu0 0.0
  %506 = vmatprep.subr.mxu0 0.0
  %507 = vmatpush1.xpose.msra.mxu0 0.0
  %508 = vmatprep.subr.mxu0 0.0
  %509 = vmatpush1.xpose.msra.mxu0 0.0
  %510 = vmatprep.subr.mxu0 0.0
  %511 = vmatpush1.xpose.msra.mxu0 0.0
  %512 = vmatprep.subr.mxu0 0.0
  %513 = vmatpush1.xpose.msra.mxu0 0.0
  %514 = vmatprep.subr.mxu0 0.0
  %515 = vmatpush1.xpose.msra.mxu0 0.0
  %516 = vmatprep.subr.mxu0 0.0
  %517 = vmatpush1.xpose.msra.mxu0 0.0
  %518 = vmatprep.subr.mxu0 0.0
  %519 = vmatpush1.xpose.msra.mxu0 0.0
  %520 = vmatprep.subr.mxu0 0.0
  %521 = vmatpush1.xpose.msra.mxu0 0.0
  %522 = vmatprep.subr.mxu0 0.0
  %523 = vmatpush1.xpose.msra.mxu0 0.0
  %524 = vmatprep.subr.mxu0 0.0
  %525 = vmatpush1.xpose.msra.mxu0 0.0
  %526 = vmatprep.subr.mxu0 0.0
  %527 = vmatpush1.xpose.msra.mxu0 0.0
  %528 = vmatprep.mubr.f32.mxu0 0.0
  %529 = vmatmul.mubr.f32.gmra.mrb[0].mxu0 %v459
  %v530 = vpop.f32.mrb[0].mxu0
  %v531 = vadd.f32 %v139, %v530
  %v532 = vpop.f32.mrb[0].mxu0
  %533 = vdwg.mxu0
  %v535 = vsel %vm457, %v304, 0
  %v538 = vsel %vm457, %v379, 0
  %540 = vmatprep.subr.mxu0 0.0
  %541 = vmatpush1.xpose.msra.mxu0 %v538
  %542 = vmatprep.subr.mxu0 0.0
  %543 = vmatpush1.xpose.msra.mxu0 0.0
  %544 = vmatprep.subr.mxu0 0.0
  %545 = vmatpush1.xpose.msra.mxu0 0.0
  %546 = vmatprep.subr.mxu0 0.0
  %547 = vmatpush1.xpose.msra.mxu0 0.0
  %548 = vmatprep.subr.mxu0 0.0
  %549 = vmatpush1.xpose.msra.mxu0 0.0
  %550 = vmatprep.subr.mxu0 0.0
  %551 = vmatpush1.xpose.msra.mxu0 0.0
  %552 = vmatprep.subr.mxu0 0.0
  %553 = vmatpush1.xpose.msra.mxu0 0.0
  %554 = vmatprep.subr.mxu0 0.0
  %555 = vmatpush1.xpose.msra.mxu0 0.0
  %556 = vmatprep.subr.mxu0 0.0
  %557 = vmatpush1.xpose.msra.mxu0 0.0
  %558 = vmatprep.subr.mxu0 0.0
  %559 = vmatpush1.xpose.msra.mxu0 0.0
  %560 = vmatprep.subr.mxu0 0.0
  %561 = vmatpush1.xpose.msra.mxu0 0.0
  %562 = vmatprep.subr.mxu0 0.0
  %563 = vmatpush1.xpose.msra.mxu0 0.0
  %564 = vmatprep.subr.mxu0 0.0
  %565 = vmatpush1.xpose.msra.mxu0 0.0
  %566 = vmatprep.subr.mxu0 0.0
  %567 = vmatpush1.xpose.msra.mxu0 0.0
  %568 = vmatprep.subr.mxu0 0.0
  %569 = vmatpush1.xpose.msra.mxu0 0.0
  %570 = vmatprep.subr.mxu0 0.0
  %571 = vmatpush1.xpose.msra.mxu0 0.0
  %572 = vmatprep.subr.mxu0 0.0
  %573 = vmatpush1.xpose.msra.mxu0 0.0
  %574 = vmatprep.subr.mxu0 0.0
  %575 = vmatpush1.xpose.msra.mxu0 0.0
  %576 = vmatprep.subr.mxu0 0.0
  %577 = vmatpush1.xpose.msra.mxu0 0.0
  %578 = vmatprep.subr.mxu0 0.0
  %579 = vmatpush1.xpose.msra.mxu0 0.0
  %580 = vmatprep.subr.mxu0 0.0
  %581 = vmatpush1.xpose.msra.mxu0 0.0
  %582 = vmatprep.subr.mxu0 0.0
  %583 = vmatpush1.xpose.msra.mxu0 0.0
  %584 = vmatprep.subr.mxu0 0.0
  %585 = vmatpush1.xpose.msra.mxu0 0.0
  %586 = vmatprep.subr.mxu0 0.0
  %587 = vmatpush1.xpose.msra.mxu0 0.0
  %588 = vmatprep.subr.mxu0 0.0
  %589 = vmatpush1.xpose.msra.mxu0 0.0
  %590 = vmatprep.subr.mxu0 0.0
  %591 = vmatpush1.xpose.msra.mxu0 0.0
  %592 = vmatprep.subr.mxu0 0.0
  %593 = vmatpush1.xpose.msra.mxu0 0.0
  %594 = vmatprep.subr.mxu0 0.0
  %595 = vmatpush1.xpose.msra.mxu0 0.0
  %596 = vmatprep.subr.mxu0 0.0
  %597 = vmatpush1.xpose.msra.mxu0 0.0
  %598 = vmatprep.subr.mxu0 0.0
  %599 = vmatpush1.xpose.msra.mxu0 0.0
  %600 = vmatprep.subr.mxu0 0.0
  %601 = vmatpush1.xpose.msra.mxu0 0.0
  %602 = vmatprep.subr.mxu0 0.0
  %603 = vmatpush1.xpose.msra.mxu0 0.0
  %604 = vmatprep.mubr.f32.mxu0 0.0
  %605 = vmatmul.mubr.f32.gmra.mrb[0].mxu0 %v535
  %v606 = vpop.f32.mrb[0].mxu0
  %v607 = vadd.f32 %v143, %v606
  %v608 = vpop.f32.mrb[0].mxu0
  %609 = vdwg.mxu0
  %v610 = vmul.f32 %v531, 1.442695
  %v611 = vpow.pop %v610
  %v612 = vmul.f32 %v607, 1.442695
  %v613 = vpow.pop %v612
  %v614 = vsel %vm457, %v611, 0.0
  %615 = vadd.xlane.f32.xlu0 %v614
  %v616 = vpop.xlane.xlu0 %615
  %v617 = vsel %vm457, %v613, 0.0
  %618 = vadd.xlane.f32.xlu0 %v617
  %v619 = vpop.xlane.xlu0 %618
  %v620 = vrcp.pop %v616
  %v621 = vmul.f32 %v611, %v620
  %v622 = vrcp.pop %v619
  %v623 = vmul.f32 %v613, %v622
  %v625 = vsel %vm457, %v621, 0
  %627 = vmatprep.subr.mxu0 0.0
  %628 = vmatpush1.msra.mxu0 %v449
  %629 = vmatprep.subr.mxu0 0.0
  %630 = vmatpush1.msra.mxu0 0.0
  %631 = vmatprep.subr.mxu0 0.0
  %632 = vmatpush1.msra.mxu0 0.0
  %633 = vmatprep.subr.mxu0 0.0
  %634 = vmatpush1.msra.mxu0 0.0
  %635 = vmatprep.subr.mxu0 0.0
  %636 = vmatpush1.msra.mxu0 0.0
  %637 = vmatprep.subr.mxu0 0.0
  %638 = vmatpush1.msra.mxu0 0.0
  %639 = vmatprep.subr.mxu0 0.0
  %640 = vmatpush1.msra.mxu0 0.0
  %641 = vmatprep.subr.mxu0 0.0
  %642 = vmatpush1.msra.mxu0 0.0
  %643 = vmatprep.subr.mxu0 0.0
  %644 = vmatpush1.msra.mxu0 0.0
  %645 = vmatprep.subr.mxu0 0.0
  %646 = vmatpush1.msra.mxu0 0.0
  %647 = vmatprep.subr.mxu0 0.0
  %648 = vmatpush1.msra.mxu0 0.0
  %649 = vmatprep.subr.mxu0 0.0
  %650 = vmatpush1.msra.mxu0 0.0
  %651 = vmatprep.subr.mxu0 0.0
  %652 = vmatpush1.msra.mxu0 0.0
  %653 = vmatprep.subr.mxu0 0.0
  %654 = vmatpush1.msra.mxu0 0.0
  %655 = vmatprep.subr.mxu0 0.0
  %656 = vmatpush1.msra.mxu0 0.0
  %657 = vmatprep.subr.mxu0 0.0
  %658 = vmatpush1.msra.mxu0 0.0
  %659 = vmatprep.subr.mxu0 0.0
  %660 = vmatpush1.msra.mxu0 0.0
  %661 = vmatprep.subr.mxu0 0.0
  %662 = vmatpush1.msra.mxu0 0.0
  %663 = vmatprep.subr.mxu0 0.0
  %664 = vmatpush1.msra.mxu0 0.0
  %665 = vmatprep.subr.mxu0 0.0
  %666 = vmatpush1.msra.mxu0 0.0
  %667 = vmatprep.subr.mxu0 0.0
  %668 = vmatpush1.msra.mxu0 0.0
  %669 = vmatprep.subr.mxu0 0.0
  %670 = vmatpush1.msra.mxu0 0.0
  %671 = vmatprep.subr.mxu0 0.0
  %672 = vmatpush1.msra.mxu0 0.0
  %673 = vmatprep.subr.mxu0 0.0
  %674 = vmatpush1.msra.mxu0 0.0
  %675 = vmatprep.subr.mxu0 0.0
  %676 = vmatpush1.msra.mxu0 0.0
  %677 = vmatprep.subr.mxu0 0.0
  %678 = vmatpush1.msra.mxu0 0.0
  %679 = vmatprep.subr.mxu0 0.0
  %680 = vmatpush1.msra.mxu0 0.0
  %681 = vmatprep.subr.mxu0 0.0
  %682 = vmatpush1.msra.mxu0 0.0
  %683 = vmatprep.subr.mxu0 0.0
  %684 = vmatpush1.msra.mxu0 0.0
  %685 = vmatprep.subr.mxu0 0.0
  %686 = vmatpush1.msra.mxu0 0.0
  %687 = vmatprep.subr.mxu0 0.0
  %688 = vmatpush1.msra.mxu0 0.0
  %689 = vmatprep.subr.mxu0 0.0
  %690 = vmatpush1.msra.mxu0 0.0
  %691 = vmatprep.mubr.f32.mxu0 0.0
  %692 = vmatmul.mubr.f32.gmra.mrb[0].mxu0 %v625
  %v693 = vpop.f32.mrb[0].mxu0
  %v694 = vadd.f32 0.0, %v693
  %v695 = vpop.f32.mrb[0].mxu0
  %696 = vdwg.mxu0
  %v698 = vsel %vm457, %v623, 0
  %700 = vmatprep.subr.mxu0 0.0
  %701 = vmatpush1.msra.mxu0 %v454
  %702 = vmatprep.subr.mxu0 0.0
  %703 = vmatpush1.msra.mxu0 0.0
  %704 = vmatprep.subr.mxu0 0.0
  %705 = vmatpush1.msra.mxu0 0.0
  %706 = vmatprep.subr.mxu0 0.0
  %707 = vmatpush1.msra.mxu0 0.0
  %708 = vmatprep.subr.mxu0 0.0
  %709 = vmatpush1.msra.mxu0 0.0
  %710 = vmatprep.subr.mxu0 0.0
  %711 = vmatpush1.msra.mxu0 0.0
  %712 = vmatprep.subr.mxu0 0.0
  %713 = vmatpush1.msra.mxu0 0.0
  %714 = vmatprep.subr.mxu0 0.0
  %715 = vmatpush1.msra.mxu0 0.0
  %716 = vmatprep.subr.mxu0 0.0
  %717 = vmatpush1.msra.mxu0 0.0
  %718 = vmatprep.subr.mxu0 0.0
  %719 = vmatpush1.msra.mxu0 0.0
  %720 = vmatprep.subr.mxu0 0.0
  %721 = vmatpush1.msra.mxu0 0.0
  %722 = vmatprep.subr.mxu0 0.0
  %723 = vmatpush1.msra.mxu0 0.0
  %724 = vmatprep.subr.mxu0 0.0
  %725 = vmatpush1.msra.mxu0 0.0
  %726 = vmatprep.subr.mxu0 0.0
  %727 = vmatpush1.msra.mxu0 0.0
  %728 = vmatprep.subr.mxu0 0.0
  %729 = vmatpush1.msra.mxu0 0.0
  %730 = vmatprep.subr.mxu0 0.0
  %731 = vmatpush1.msra.mxu0 0.0
  %732 = vmatprep.subr.mxu0 0.0
  %733 = vmatpush1.msra.mxu0 0.0
  %734 = vmatprep.subr.mxu0 0.0
  %735 = vmatpush1.msra.mxu0 0.0
  %736 = vmatprep.subr.mxu0 0.0
  %737 = vmatpush1.msra.mxu0 0.0
  %738 = vmatprep.subr.mxu0 0.0
  %739 = vmatpush1.msra.mxu0 0.0
  %740 = vmatprep.subr.mxu0 0.0
  %741 = vmatpush1.msra.mxu0 0.0
  %742 = vmatprep.subr.mxu0 0.0
  %743 = vmatpush1.msra.mxu0 0.0
  %744 = vmatprep.subr.mxu0 0.0
  %745 = vmatpush1.msra.mxu0 0.0
  %746 = vmatprep.subr.mxu0 0.0
  %747 = vmatpush1.msra.mxu0 0.0
  %748 = vmatprep.subr.mxu0 0.0
  %749 = vmatpush1.msra.mxu0 0.0
  %750 = vmatprep.subr.mxu0 0.0
  %751 = vmatpush1.msra.mxu0 0.0
  %752 = vmatprep.subr.mxu0 0.0
  %753 = vmatpush1.msra.mxu0 0.0
  %754 = vmatprep.subr.mxu0 0.0
  %755 = vmatpush1.msra.mxu0 0.0
  %756 = vmatprep.subr.mxu0 0.0
  %757 = vmatpush1.msra.mxu0 0.0
  %758 = vmatprep.subr.mxu0 0.0
  %759 = vmatpush1.msra.mxu0 0.0
  %760 = vmatprep.subr.mxu0 0.0
  %761 = vmatpush1.msra.mxu0 0.0
  %762 = vmatprep.subr.mxu0 0.0
  %763 = vmatpush1.msra.mxu0 0.0
  %764 = vmatprep.mubr.f32.mxu0 0.0
  %765 = vmatmul.mubr.f32.gmra.mrb[0].mxu0 %v698
  %v766 = vpop.f32.mrb[0].mxu0
  %v767 = vadd.f32 0.0, %v766
  %v768 = vpop.f32.mrb[0].mxu0
  %769 = vdwg.mxu0
  %v770 = vlaneseq
  %v771 = vshrl.u32 %v770, 7
  %v772 = vsub.s32 0, %v771
  %v773 = vrot.slane %v199, %v772
  %774 = vmatprep.subr.mxu0 0.0
  %775 = vmatpush1.msra.mxu0 %v150
  %776 = vmatprep.subr.mxu0 0.0
  %777 = vmatpush1.msra.mxu0 %v151
  %778 = vmatprep.subr.mxu0 0.0
  %779 = vmatpush1.msra.mxu0 %v152
  %780 = vmatprep.subr.mxu0 0.0
  %781 = vmatpush1.msra.mxu0 %v153
  %782 = vmatprep.subr.mxu0 0.0
  %783 = vmatpush1.msra.mxu0 0.0
  %784 = vmatprep.subr.mxu0 0.0
  %785 = vmatpush1.msra.mxu0 0.0
  %786 = vmatprep.subr.mxu0 0.0
  %787 = vmatpush1.msra.mxu0 0.0
  %788 = vmatprep.subr.mxu0 0.0
  %789 = vmatpush1.msra.mxu0 0.0
  %790 = vmatprep.subr.mxu0 0.0
  %791 = vmatpush1.msra.mxu0 0.0
  %792 = vmatprep.subr.mxu0 0.0
  %793 = vmatpush1.msra.mxu0 0.0
  %794 = vmatprep.subr.mxu0 0.0
  %795 = vmatpush1.msra.mxu0 0.0
  %796 = vmatprep.subr.mxu0 0.0
  %797 = vmatpush1.msra.mxu0 0.0
  %798 = vmatprep.subr.mxu0 0.0
  %799 = vmatpush1.msra.mxu0 0.0
  %800 = vmatprep.subr.mxu0 0.0
  %801 = vmatpush1.msra.mxu0 0.0
  %802 = vmatprep.subr.mxu0 0.0
  %803 = vmatpush1.msra.mxu0 0.0
  %804 = vmatprep.subr.mxu0 0.0
  %805 = vmatpush1.msra.mxu0 0.0
  %806 = vmatprep.subr.mxu0 0.0
  %807 = vmatpush1.msra.mxu0 0.0
  %808 = vmatprep.subr.mxu0 0.0
  %809 = vmatpush1.msra.mxu0 0.0
  %810 = vmatprep.subr.mxu0 0.0
  %811 = vmatpush1.msra.mxu0 0.0
  %812 = vmatprep.subr.mxu0 0.0
  %813 = vmatpush1.msra.mxu0 0.0
  %814 = vmatprep.subr.mxu0 0.0
  %815 = vmatpush1.msra.mxu0 0.0
  %816 = vmatprep.subr.mxu0 0.0
  %817 = vmatpush1.msra.mxu0 0.0
  %818 = vmatprep.subr.mxu0 0.0
  %819 = vmatpush1.msra.mxu0 0.0
  %820 = vmatprep.subr.mxu0 0.0
  %821 = vmatpush1.msra.mxu0 0.0
  %822 = vmatprep.subr.mxu0 0.0
  %823 = vmatpush1.msra.mxu0 0.0
  %824 = vmatprep.subr.mxu0 0.0
  %825 = vmatpush1.msra.mxu0 0.0
  %826 = vmatprep.subr.mxu0 0.0
  %827 = vmatpush1.msra.mxu0 0.0
  %828 = vmatprep.subr.mxu0 0.0
  %829 = vmatpush1.msra.mxu0 0.0
  %830 = vmatprep.subr.mxu0 0.0
  %831 = vmatpush1.msra.mxu0 0.0
  %832 = vmatprep.subr.mxu0 0.0
  %833 = vmatpush1.msra.mxu0 0.0
  %834 = vmatprep.subr.mxu0 0.0
  %835 = vmatpush1.msra.mxu0 0.0
  %836 = vmatprep.subr.mxu0 0.0
  %837 = vmatpush1.msra.mxu0 0.0
  %838 = vmatprep.mubr.f32.mxu0 0.0
  %839 = vmatmul.mubr.f32.gmra.mrb[0].mxu0 %v227
  %v840 = vpop.f32.mrb[0].mxu0
  %v841 = vadd.f32 %v773, %v840
  %v842 = vpop.f32.mrb[0].mxu0
  %843 = vmatprep.mubr.f32.mxu0 0.0
  %844 = vmatmul.mubr.f32.gmra.mrb[0].mxu0 %v230
  %v845 = vpop.f32.mrb[0].mxu0
  %v846 = vadd.f32 %v773, %v845
  %v847 = vpop.f32.mrb[0].mxu0
  %848 = vdwg.mxu0
  %849 = vmatprep.subr.mxu0 0.0
  %850 = vmatpush1.msra.mxu0 %v166
  %851 = vmatprep.subr.mxu0 0.0
  %852 = vmatpush1.msra.mxu0 %v167
  %853 = vmatprep.subr.mxu0 0.0
  %854 = vmatpush1.msra.mxu0 %v168
  %855 = vmatprep.subr.mxu0 0.0
  %856 = vmatpush1.msra.mxu0 %v169
  %857 = vmatprep.subr.mxu0 0.0
  %858 = vmatpush1.msra.mxu0 0.0
  %859 = vmatprep.subr.mxu0 0.0
  %860 = vmatpush1.msra.mxu0 0.0
  %861 = vmatprep.subr.mxu0 0.0
  %862 = vmatpush1.msra.mxu0 0.0
  %863 = vmatprep.subr.mxu0 0.0
  %864 = vmatpush1.msra.mxu0 0.0
  %865 = vmatprep.subr.mxu0 0.0
  %866 = vmatpush1.msra.mxu0 0.0
  %867 = vmatprep.subr.mxu0 0.0
  %868 = vmatpush1.msra.mxu0 0.0
  %869 = vmatprep.subr.mxu0 0.0
  %870 = vmatpush1.msra.mxu0 0.0
  %871 = vmatprep.subr.mxu0 0.0
  %872 = vmatpush1.msra.mxu0 0.0
  %873 = vmatprep.subr.mxu0 0.0
  %874 = vmatpush1.msra.mxu0 0.0
  %875 = vmatprep.subr.mxu0 0.0
  %876 = vmatpush1.msra.mxu0 0.0
  %877 = vmatprep.subr.mxu0 0.0
  %878 = vmatpush1.msra.mxu0 0.0
  %879 = vmatprep.subr.mxu0 0.0
  %880 = vmatpush1.msra.mxu0 0.0
  %881 = vmatprep.subr.mxu0 0.0
  %882 = vmatpush1.msra.mxu0 0.0
  %883 = vmatprep.subr.mxu0 0.0
  %884 = vmatpush1.msra.mxu0 0.0
  %885 = vmatprep.subr.mxu0 0.0
  %886 = vmatpush1.msra.mxu0 0.0
  %887 = vmatprep.subr.mxu0 0.0
  %888 = vmatpush1.msra.mxu0 0.0
  %889 = vmatprep.subr.mxu0 0.0
  %890 = vmatpush1.msra.mxu0 0.0
  %891 = vmatprep.subr.mxu0 0.0
  %892 = vmatpush1.msra.mxu0 0.0
  %893 = vmatprep.subr.mxu0 0.0
  %894 = vmatpush1.msra.mxu0 0.0
  %895 = vmatprep.subr.mxu0 0.0
  %896 = vmatpush1.msra.mxu0 0.0
  %897 = vmatprep.subr.mxu0 0.0
  %898 = vmatpush1.msra.mxu0 0.0
  %899 = vmatprep.subr.mxu0 0.0
  %900 = vmatpush1.msra.mxu0 0.0
  %901 = vmatprep.subr.mxu0 0.0
  %902 = vmatpush1.msra.mxu0 0.0
  %903 = vmatprep.subr.mxu0 0.0
  %904 = vmatpush1.msra.mxu0 0.0
  %905 = vmatprep.subr.mxu0 0.0
  %906 = vmatpush1.msra.mxu0 0.0
  %907 = vmatprep.subr.mxu0 0.0
  %908 = vmatpush1.msra.mxu0 0.0
  %909 = vmatprep.subr.mxu0 0.0
  %910 = vmatpush1.msra.mxu0 0.0
  %911 = vmatprep.subr.mxu0 0.0
  %912 = vmatpush1.msra.mxu0 0.0
  %913 = vmatprep.mubr.f32.mxu0 0.0
  %914 = vmatmul.mubr.f32.gmra.mrb[0].mxu0 %v227
  %v915 = vpop.f32.mrb[0].mxu0
  %v916 = vadd.f32 0.0, %v915
  %v917 = vpop.f32.mrb[0].mxu0
  %918 = vmatprep.mubr.f32.mxu0 0.0
  %919 = vmatmul.mubr.f32.gmra.mrb[0].mxu0 %v230
  %v920 = vpop.f32.mrb[0].mxu0
  %v921 = vadd.f32 0.0, %v920
  %v922 = vpop.f32.mrb[0].mxu0
  %923 = vdwg.mxu0
  %924 = vmatprep.subr.mxu0 0.0
  %925 = vmatpush1.msra.mxu0 %v182
  %926 = vmatprep.subr.mxu0 0.0
  %927 = vmatpush1.msra.mxu0 %v183
  %928 = vmatprep.subr.mxu0 0.0
  %929 = vmatpush1.msra.mxu0 %v184
  %930 = vmatprep.subr.mxu0 0.0
  %931 = vmatpush1.msra.mxu0 %v185
  %932 = vmatprep.subr.mxu0 0.0
  %933 = vmatpush1.msra.mxu0 0.0
  %934 = vmatprep.subr.mxu0 0.0
  %935 = vmatpush1.msra.mxu0 0.0
  %936 = vmatprep.subr.mxu0 0.0
  %937 = vmatpush1.msra.mxu0 0.0
  %938 = vmatprep.subr.mxu0 0.0
  %939 = vmatpush1.msra.mxu0 0.0
  %940 = vmatprep.subr.mxu0 0.0
  %941 = vmatpush1.msra.mxu0 0.0
  %942 = vmatprep.subr.mxu0 0.0
  %943 = vmatpush1.msra.mxu0 0.0
  %944 = vmatprep.subr.mxu0 0.0
  %945 = vmatpush1.msra.mxu0 0.0
  %946 = vmatprep.subr.mxu0 0.0
  %947 = vmatpush1.msra.mxu0 0.0
  %948 = vmatprep.subr.mxu0 0.0
  %949 = vmatpush1.msra.mxu0 0.0
  %950 = vmatprep.subr.mxu0 0.0
  %951 = vmatpush1.msra.mxu0 0.0
  %952 = vmatprep.subr.mxu0 0.0
  %953 = vmatpush1.msra.mxu0 0.0
  %954 = vmatprep.subr.mxu0 0.0
  %955 = vmatpush1.msra.mxu0 0.0
  %956 = vmatprep.subr.mxu0 0.0
  %957 = vmatpush1.msra.mxu0 0.0
  %958 = vmatprep.subr.mxu0 0.0
  %959 = vmatpush1.msra.mxu0 0.0
  %960 = vmatprep.subr.mxu0 0.0
  %961 = vmatpush1.msra.mxu0 0.0
  %962 = vmatprep.subr.mxu0 0.0
  %963 = vmatpush1.msra.mxu0 0.0
  %964 = vmatprep.subr.mxu0 0.0
  %965 = vmatpush1.msra.mxu0 0.0
  %966 = vmatprep.subr.mxu0 0.0
  %967 = vmatpush1.msra.mxu0 0.0
  %968 = vmatprep.subr.mxu0 0.0
  %969 = vmatpush1.msra.mxu0 0.0
  %970 = vmatprep.subr.mxu0 0.0
  %971 = vmatpush1.msra.mxu0 0.0
  %972 = vmatprep.subr.mxu0 0.0
  %973 = vmatpush1.msra.mxu0 0.0
  %974 = vmatprep.subr.mxu0 0.0
  %975 = vmatpush1.msra.mxu0 0.0
  %976 = vmatprep.subr.mxu0 0.0
  %977 = vmatpush1.msra.mxu0 0.0
  %978 = vmatprep.subr.mxu0 0.0
  %979 = vmatpush1.msra.mxu0 0.0
  %980 = vmatprep.subr.mxu0 0.0
  %981 = vmatpush1.msra.mxu0 0.0
  %982 = vmatprep.subr.mxu0 0.0
  %983 = vmatpush1.msra.mxu0 0.0
  %984 = vmatprep.subr.mxu0 0.0
  %985 = vmatpush1.msra.mxu0 0.0
  %986 = vmatprep.subr.mxu0 0.0
  %987 = vmatpush1.msra.mxu0 0.0
  %988 = vmatprep.mubr.f32.mxu0 0.0
  %989 = vmatmul.mubr.f32.gmra.mrb[0].mxu0 %v227
  %v990 = vpop.f32.mrb[0].mxu0
  %v991 = vadd.f32 0.0, %v990
  %v992 = vpop.f32.mrb[0].mxu0
  %993 = vmatprep.mubr.f32.mxu0 0.0
  %994 = vmatmul.mubr.f32.gmra.mrb[0].mxu0 %v230
  %v995 = vpop.f32.mrb[0].mxu0
  %v996 = vadd.f32 0.0, %v995
  %v997 = vpop.f32.mrb[0].mxu0
  %998 = vdwg.mxu0
  %v1000 = vsel %vm457, %v841, 0
  %v1003 = vsel %vm457, %v916, 0
  %1005 = vmatprep.subr.mxu0 0.0
  %1006 = vmatpush1.xpose.msra.mxu0 %v1003
  %1007 = vmatprep.subr.mxu0 0.0
  %1008 = vmatpush1.xpose.msra.mxu0 0.0
  %1009 = vmatprep.subr.mxu0 0.0
  %1010 = vmatpush1.xpose.msra.mxu0 0.0
  %1011 = vmatprep.subr.mxu0 0.0
  %1012 = vmatpush1.xpose.msra.mxu0 0.0
  %1013 = vmatprep.subr.mxu0 0.0
  %1014 = vmatpush1.xpose.msra.mxu0 0.0
  %1015 = vmatprep.subr.mxu0 0.0
  %1016 = vmatpush1.xpose.msra.mxu0 0.0
  %1017 = vmatprep.subr.mxu0 0.0
  %1018 = vmatpush1.xpose.msra.mxu0 0.0
  %1019 = vmatprep.subr.mxu0 0.0
  %1020 = vmatpush1.xpose.msra.mxu0 0.0
  %1021 = vmatprep.subr.mxu0 0.0
  %1022 = vmatpush1.xpose.msra.mxu0 0.0
  %1023 = vmatprep.subr.mxu0 0.0
  %1024 = vmatpush1.xpose.msra.mxu0 0.0
  %1025 = vmatprep.subr.mxu0 0.0
  %1026 = vmatpush1.xpose.msra.mxu0 0.0
  %1027 = vmatprep.subr.mxu0 0.0
  %1028 = vmatpush1.xpose.msra.mxu0 0.0
  %1029 = vmatprep.subr.mxu0 0.0
  %1030 = vmatpush1.xpose.msra.mxu0 0.0
  %1031 = vmatprep.subr.mxu0 0.0
  %1032 = vmatpush1.xpose.msra.mxu0 0.0
  %1033 = vmatprep.subr.mxu0 0.0
  %1034 = vmatpush1.xpose.msra.mxu0 0.0
  %1035 = vmatprep.subr.mxu0 0.0
  %1036 = vmatpush1.xpose.msra.mxu0 0.0
  %1037 = vmatprep.subr.mxu0 0.0
  %1038 = vmatpush1.xpose.msra.mxu0 0.0
  %1039 = vmatprep.subr.mxu0 0.0
  %1040 = vmatpush1.xpose.msra.mxu0 0.0
  %1041 = vmatprep.subr.mxu0 0.0
  %1042 = vmatpush1.xpose.msra.mxu0 0.0
  %1043 = vmatprep.subr.mxu0 0.0
  %1044 = vmatpush1.xpose.msra.mxu0 0.0
  %1045 = vmatprep.subr.mxu0 0.0
  %1046 = vmatpush1.xpose.msra.mxu0 0.0
  %1047 = vmatprep.subr.mxu0 0.0
  %1048 = vmatpush1.xpose.msra.mxu0 0.0
  %1049 = vmatprep.subr.mxu0 0.0
  %1050 = vmatpush1.xpose.msra.mxu0 0.0
  %1051 = vmatprep.subr.mxu0 0.0
  %1052 = vmatpush1.xpose.msra.mxu0 0.0
  %1053 = vmatprep.subr.mxu0 0.0
  %1054 = vmatpush1.xpose.msra.mxu0 0.0
  %1055 = vmatprep.subr.mxu0 0.0
  %1056 = vmatpush1.xpose.msra.mxu0 0.0
  %1057 = vmatprep.subr.mxu0 0.0
  %1058 = vmatpush1.xpose.msra.mxu0 0.0
  %1059 = vmatprep.subr.mxu0 0.0
  %1060 = vmatpush1.xpose.msra.mxu0 0.0
  %1061 = vmatprep.subr.mxu0 0.0
  %1062 = vmatpush1.xpose.msra.mxu0 0.0
  %1063 = vmatprep.subr.mxu0 0.0
  %1064 = vmatpush1.xpose.msra.mxu0 0.0
  %1065 = vmatprep.subr.mxu0 0.0
  %1066 = vmatpush1.xpose.msra.mxu0 0.0
  %1067 = vmatprep.subr.mxu0 0.0
  %1068 = vmatpush1.xpose.msra.mxu0 0.0
  %1069 = vmatprep.mubr.f32.mxu0 0.0
  %1070 = vmatmul.mubr.f32.gmra.mrb[0].mxu0 %v1000
  %v1071 = vpop.f32.mrb[0].mxu0
  %v1072 = vadd.f32 %v139, %v1071
  %v1073 = vpop.f32.mrb[0].mxu0
  %1074 = vdwg.mxu0
  %v1076 = vsel %vm457, %v846, 0
  %v1079 = vsel %vm457, %v921, 0
  %1081 = vmatprep.subr.mxu0 0.0
  %1082 = vmatpush1.xpose.msra.mxu0 %v1079
  %1083 = vmatprep.subr.mxu0 0.0
  %1084 = vmatpush1.xpose.msra.mxu0 0.0
  %1085 = vmatprep.subr.mxu0 0.0
  %1086 = vmatpush1.xpose.msra.mxu0 0.0
  %1087 = vmatprep.subr.mxu0 0.0
  %1088 = vmatpush1.xpose.msra.mxu0 0.0
  %1089 = vmatprep.subr.mxu0 0.0
  %1090 = vmatpush1.xpose.msra.mxu0 0.0
  %1091 = vmatprep.subr.mxu0 0.0
  %1092 = vmatpush1.xpose.msra.mxu0 0.0
  %1093 = vmatprep.subr.mxu0 0.0
  %1094 = vmatpush1.xpose.msra.mxu0 0.0
  %1095 = vmatprep.subr.mxu0 0.0
  %1096 = vmatpush1.xpose.msra.mxu0 0.0
  %1097 = vmatprep.subr.mxu0 0.0
  %1098 = vmatpush1.xpose.msra.mxu0 0.0
  %1099 = vmatprep.subr.mxu0 0.0
  %1100 = vmatpush1.xpose.msra.mxu0 0.0
  %1101 = vmatprep.subr.mxu0 0.0
  %1102 = vmatpush1.xpose.msra.mxu0 0.0
  %1103 = vmatprep.subr.mxu0 0.0
  %1104 = vmatpush1.xpose.msra.mxu0 0.0
  %1105 = vmatprep.subr.mxu0 0.0
  %1106 = vmatpush1.xpose.msra.mxu0 0.0
  %1107 = vmatprep.subr.mxu0 0.0
  %1108 = vmatpush1.xpose.msra.mxu0 0.0
  %1109 = vmatprep.subr.mxu0 0.0
  %1110 = vmatpush1.xpose.msra.mxu0 0.0
  %1111 = vmatprep.subr.mxu0 0.0
  %1112 = vmatpush1.xpose.msra.mxu0 0.0
  %1113 = vmatprep.subr.mxu0 0.0
  %1114 = vmatpush1.xpose.msra.mxu0 0.0
  %1115 = vmatprep.subr.mxu0 0.0
  %1116 = vmatpush1.xpose.msra.mxu0 0.0
  %1117 = vmatprep.subr.mxu0 0.0
  %1118 = vmatpush1.xpose.msra.mxu0 0.0
  %1119 = vmatprep.subr.mxu0 0.0
  %1120 = vmatpush1.xpose.msra.mxu0 0.0
  %1121 = vmatprep.subr.mxu0 0.0
  %1122 = vmatpush1.xpose.msra.mxu0 0.0
  %1123 = vmatprep.subr.mxu0 0.0
  %1124 = vmatpush1.xpose.msra.mxu0 0.0
  %1125 = vmatprep.subr.mxu0 0.0
  %1126 = vmatpush1.xpose.msra.mxu0 0.0
  %1127 = vmatprep.subr.mxu0 0.0
  %1128 = vmatpush1.xpose.msra.mxu0 0.0
  %1129 = vmatprep.subr.mxu0 0.0
  %1130 = vmatpush1.xpose.msra.mxu0 0.0
  %1131 = vmatprep.subr.mxu0 0.0
  %1132 = vmatpush1.xpose.msra.mxu0 0.0
  %1133 = vmatprep.subr.mxu0 0.0
  %1134 = vmatpush1.xpose.msra.mxu0 0.0
  %1135 = vmatprep.subr.mxu0 0.0
  %1136 = vmatpush1.xpose.msra.mxu0 0.0
  %1137 = vmatprep.subr.mxu0 0.0
  %1138 = vmatpush1.xpose.msra.mxu0 0.0
  %1139 = vmatprep.subr.mxu0 0.0
  %1140 = vmatpush1.xpose.msra.mxu0 0.0
  %1141 = vmatprep.subr.mxu0 0.0
  %1142 = vmatpush1.xpose.msra.mxu0 0.0
  %1143 = vmatprep.subr.mxu0 0.0
  %1144 = vmatpush1.xpose.msra.mxu0 0.0
  %1145 = vmatprep.mubr.f32.mxu0 0.0
  %1146 = vmatmul.mubr.f32.gmra.mrb[0].mxu0 %v1076
  %v1147 = vpop.f32.mrb[0].mxu0
  %v1148 = vadd.f32 %v143, %v1147
  %v1149 = vpop.f32.mrb[0].mxu0
  %1150 = vdwg.mxu0
  %v1151 = vmul.f32 %v1072, 1.442695
  %v1152 = vpow.pop %v1151
  %v1153 = vmul.f32 %v1148, 1.442695
  %v1154 = vpow.pop %v1153
  %v1155 = vsel %vm457, %v1152, 0.0
  %1156 = vadd.xlane.f32.xlu0 %v1155
  %v1157 = vpop.xlane.xlu0 %1156
  %v1158 = vsel %vm457, %v1154, 0.0
  %1159 = vadd.xlane.f32.xlu0 %v1158
  %v1160 = vpop.xlane.xlu0 %1159
  %v1161 = vrcp.pop %v1157
  %v1162 = vmul.f32 %v1152, %v1161
  %v1163 = vrcp.pop %v1160
  %v1164 = vmul.f32 %v1154, %v1163
  %v1166 = vsel %vm457, %v1162, 0
  %1168 = vmatprep.subr.mxu0 0.0
  %1169 = vmatpush1.msra.mxu0 %v991
  %1170 = vmatprep.subr.mxu0 0.0
  %1171 = vmatpush1.msra.mxu0 0.0
  %1172 = vmatprep.subr.mxu0 0.0
  %1173 = vmatpush1.msra.mxu0 0.0
  %1174 = vmatprep.subr.mxu0 0.0
  %1175 = vmatpush1.msra.mxu0 0.0
  %1176 = vmatprep.subr.mxu0 0.0
  %1177 = vmatpush1.msra.mxu0 0.0
  %1178 = vmatprep.subr.mxu0 0.0
  %1179 = vmatpush1.msra.mxu0 0.0
  %1180 = vmatprep.subr.mxu0 0.0
  %1181 = vmatpush1.msra.mxu0 0.0
  %1182 = vmatprep.subr.mxu0 0.0
  %1183 = vmatpush1.msra.mxu0 0.0
  %1184 = vmatprep.subr.mxu0 0.0
  %1185 = vmatpush1.msra.mxu0 0.0
  %1186 = vmatprep.subr.mxu0 0.0
  %1187 = vmatpush1.msra.mxu0 0.0
  %1188 = vmatprep.subr.mxu0 0.0
  %1189 = vmatpush1.msra.mxu0 0.0
  %1190 = vmatprep.subr.mxu0 0.0
  %1191 = vmatpush1.msra.mxu0 0.0
  %1192 = vmatprep.subr.mxu0 0.0
  %1193 = vmatpush1.msra.mxu0 0.0
  %1194 = vmatprep.subr.mxu0 0.0
  %1195 = vmatpush1.msra.mxu0 0.0
  %1196 = vmatprep.subr.mxu0 0.0
  %1197 = vmatpush1.msra.mxu0 0.0
  %1198 = vmatprep.subr.mxu0 0.0
  %1199 = vmatpush1.msra.mxu0 0.0
  %1200 = vmatprep.subr.mxu0 0.0
  %1201 = vmatpush1.msra.mxu0 0.0
  %1202 = vmatprep.subr.mxu0 0.0
  %1203 = vmatpush1.msra.mxu0 0.0
  %1204 = vmatprep.subr.mxu0 0.0
  %1205 = vmatpush1.msra.mxu0 0.0
  %1206 = vmatprep.subr.mxu0 0.0
  %1207 = vmatpush1.msra.mxu0 0.0
  %1208 = vmatprep.subr.mxu0 0.0
  %1209 = vmatpush1.msra.mxu0 0.0
  %1210 = vmatprep.subr.mxu0 0.0
  %1211 = vmatpush1.msra.mxu0 0.0
  %1212 = vmatprep.subr.mxu0 0.0
  %1213 = vmatpush1.msra.mxu0 0.0
  %1214 = vmatprep.subr.mxu0 0.0
  %1215 = vmatpush1.msra.mxu0 0.0
  %1216 = vmatprep.subr.mxu0 0.0
  %1217 = vmatpush1.msra.mxu0 0.0
  %1218 = vmatprep.subr.mxu0 0.0
  %1219 = vmatpush1.msra.mxu0 0.0
  %1220 = vmatprep.subr.mxu0 0.0
  %1221 = vmatpush1.msra.mxu0 0.0
  %1222 = vmatprep.subr.mxu0 0.0
  %1223 = vmatpush1.msra.mxu0 0.0
  %1224 = vmatprep.subr.mxu0 0.0
  %1225 = vmatpush1.msra.mxu0 0.0
  %1226 = vmatprep.subr.mxu0 0.0
  %1227 = vmatpush1.msra.mxu0 0.0
  %1228 = vmatprep.subr.mxu0 0.0
  %1229 = vmatpush1.msra.mxu0 0.0
  %1230 = vmatprep.subr.mxu0 0.0
  %1231 = vmatpush1.msra.mxu0 0.0
  %1232 = vmatprep.mubr.f32.mxu0 0.0
  %1233 = vmatmul.mubr.f32.gmra.mrb[0].mxu0 %v1166
  %v1234 = vpop.f32.mrb[0].mxu0
  %v1235 = vadd.f32 0.0, %v1234
  %v1236 = vpop.f32.mrb[0].mxu0
  %1237 = vdwg.mxu0
  %v1239 = vsel %vm457, %v1164, 0
  %1241 = vmatprep.subr.mxu0 0.0
  %1242 = vmatpush1.msra.mxu0 %v996
  %1243 = vmatprep.subr.mxu0 0.0
  %1244 = vmatpush1.msra.mxu0 0.0
  %1245 = vmatprep.subr.mxu0 0.0
  %1246 = vmatpush1.msra.mxu0 0.0
  %1247 = vmatprep.subr.mxu0 0.0
  %1248 = vmatpush1.msra.mxu0 0.0
  %1249 = vmatprep.subr.mxu0 0.0
  %1250 = vmatpush1.msra.mxu0 0.0
  %1251 = vmatprep.subr.mxu0 0.0
  %1252 = vmatpush1.msra.mxu0 0.0
  %1253 = vmatprep.subr.mxu0 0.0
  %1254 = vmatpush1.msra.mxu0 0.0
  %1255 = vmatprep.subr.mxu0 0.0
  %1256 = vmatpush1.msra.mxu0 0.0
  %1257 = vmatprep.subr.mxu0 0.0
  %1258 = vmatpush1.msra.mxu0 0.0
  %1259 = vmatprep.subr.mxu0 0.0
  %1260 = vmatpush1.msra.mxu0 0.0
  %1261 = vmatprep.subr.mxu0 0.0
  %1262 = vmatpush1.msra.mxu0 0.0
  %1263 = vmatprep.subr.mxu0 0.0
  %1264 = vmatpush1.msra.mxu0 0.0
  %1265 = vmatprep.subr.mxu0 0.0
  %1266 = vmatpush1.msra.mxu0 0.0
  %1267 = vmatprep.subr.mxu0 0.0
  %1268 = vmatpush1.msra.mxu0 0.0
  %1269 = vmatprep.subr.mxu0 0.0
  %1270 = vmatpush1.msra.mxu0 0.0
  %1271 = vmatprep.subr.mxu0 0.0
  %1272 = vmatpush1.msra.mxu0 0.0
  %1273 = vmatprep.subr.mxu0 0.0
  %1274 = vmatpush1.msra.mxu0 0.0
  %1275 = vmatprep.subr.mxu0 0.0
  %1276 = vmatpush1.msra.mxu0 0.0
  %1277 = vmatprep.subr.mxu0 0.0
  %1278 = vmatpush1.msra.mxu0 0.0
  %1279 = vmatprep.subr.mxu0 0.0
  %1280 = vmatpush1.msra.mxu0 0.0
  %1281 = vmatprep.subr.mxu0 0.0
  %1282 = vmatpush1.msra.mxu0 0.0
  %1283 = vmatprep.subr.mxu0 0.0
  %1284 = vmatpush1.msra.mxu0 0.0
  %1285 = vmatprep.subr.mxu0 0.0
  %1286 = vmatpush1.msra.mxu0 0.0
  %1287 = vmatprep.subr.mxu0 0.0
  %1288 = vmatpush1.msra.mxu0 0.0
  %1289 = vmatprep.subr.mxu0 0.0
  %1290 = vmatpush1.msra.mxu0 0.0
  %1291 = vmatprep.subr.mxu0 0.0
  %1292 = vmatpush1.msra.mxu0 0.0
  %1293 = vmatprep.subr.mxu0 0.0
  %1294 = vmatpush1.msra.mxu0 0.0
  %1295 = vmatprep.subr.mxu0 0.0
  %1296 = vmatpush1.msra.mxu0 0.0
  %1297 = vmatprep.subr.mxu0 0.0
  %1298 = vmatpush1.msra.mxu0 0.0
  %1299 = vmatprep.subr.mxu0 0.0
  %1300 = vmatpush1.msra.mxu0 0.0
  %1301 = vmatprep.subr.mxu0 0.0
  %1302 = vmatpush1.msra.mxu0 0.0
  %1303 = vmatprep.subr.mxu0 0.0
  %1304 = vmatpush1.msra.mxu0 0.0
  %1305 = vmatprep.mubr.f32.mxu0 0.0
  %1306 = vmatmul.mubr.f32.gmra.mrb[0].mxu0 %v1239
  %v1307 = vpop.f32.mrb[0].mxu0
  %v1308 = vadd.f32 0.0, %v1307
  %v1309 = vpop.f32.mrb[0].mxu0
  %1310 = vdwg.mxu0
  %v1312 = vsel %vm457, %v1235, 0
  %v1315 = vsel %vm457, %v1308, 0
  %1317 = vmatprep.subr.mxu0 0.0
  %1318 = vmatpush1.msra.mxu0 %v195
  %1319 = vmatprep.subr.mxu0 0.0
  %1320 = vmatpush1.msra.mxu0 0.0
  %1321 = vmatprep.subr.mxu0 0.0
  %1322 = vmatpush1.msra.mxu0 0.0
  %1323 = vmatprep.subr.mxu0 0.0
  %1324 = vmatpush1.msra.mxu0 0.0
  %1325 = vmatprep.subr.mxu0 0.0
  %1326 = vmatpush1.msra.mxu0 0.0
  %1327 = vmatprep.subr.mxu0 0.0
  %1328 = vmatpush1.msra.mxu0 0.0
  %1329 = vmatprep.subr.mxu0 0.0
  %1330 = vmatpush1.msra.mxu0 0.0
  %1331 = vmatprep.subr.mxu0 0.0
  %1332 = vmatpush1.msra.mxu0 0.0
  %1333 = vmatprep.subr.mxu0 0.0
  %1334 = vmatpush1.msra.mxu0 0.0
  %1335 = vmatprep.subr.mxu0 0.0
  %1336 = vmatpush1.msra.mxu0 0.0
  %1337 = vmatprep.subr.mxu0 0.0
  %1338 = vmatpush1.msra.mxu0 0.0
  %1339 = vmatprep.subr.mxu0 0.0
  %1340 = vmatpush1.msra.mxu0 0.0
  %1341 = vmatprep.subr.mxu0 0.0
  %1342 = vmatpush1.msra.mxu0 0.0
  %1343 = vmatprep.subr.mxu0 0.0
  %1344 = vmatpush1.msra.mxu0 0.0
  %1345 = vmatprep.subr.mxu0 0.0
  %1346 = vmatpush1.msra.mxu0 0.0
  %1347 = vmatprep.subr.mxu0 0.0
  %1348 = vmatpush1.msra.mxu0 0.0
  %1349 = vmatprep.subr.mxu0 0.0
  %1350 = vmatpush1.msra.mxu0 0.0
  %1351 = vmatprep.subr.mxu0 0.0
  %1352 = vmatpush1.msra.mxu0 0.0
  %1353 = vmatprep.subr.mxu0 0.0
  %1354 = vmatpush1.msra.mxu0 0.0
  %1355 = vmatprep.subr.mxu0 0.0
  %1356 = vmatpush1.msra.mxu0 0.0
  %1357 = vmatprep.subr.mxu0 0.0
  %1358 = vmatpush1.msra.mxu0 0.0
  %1359 = vmatprep.subr.mxu0 0.0
  %1360 = vmatpush1.msra.mxu0 0.0
  %1361 = vmatprep.subr.mxu0 0.0
  %1362 = vmatpush1.msra.mxu0 0.0
  %1363 = vmatprep.subr.mxu0 0.0
  %1364 = vmatpush1.msra.mxu0 0.0
  %1365 = vmatprep.subr.mxu0 0.0
  %1366 = vmatpush1.msra.mxu0 0.0
  %1367 = vmatprep.subr.mxu0 0.0
  %1368 = vmatpush1.msra.mxu0 0.0
  %1369 = vmatprep.subr.mxu0 0.0
  %1370 = vmatpush1.msra.mxu0 0.0
  %1371 = vmatprep.subr.mxu0 0.0
  %1372 = vmatpush1.msra.mxu0 0.0
  %1373 = vmatprep.subr.mxu0 0.0
  %1374 = vmatpush1.msra.mxu0 0.0
  %1375 = vmatprep.subr.mxu0 0.0
  %1376 = vmatpush1.msra.mxu0 0.0
  %1377 = vmatprep.subr.mxu0 0.0
  %1378 = vmatpush1.msra.mxu0 0.0
  %1379 = vmatprep.subr.mxu0 0.0
  %1380 = vmatpush1.msra.mxu0 0.0
  %1381 = vmatprep.mubr.f32.mxu0 0.0
  %1382 = vmatmul.mubr.f32.gmra.mrb[0].mxu0 %v1312
  %v1383 = vpop.f32.mrb[0].mxu0
  %v1384 = vadd.f32 0.0, %v1383
  %v1385 = vpop.f32.mrb[0].mxu0
  %1386 = vmatprep.mubr.f32.mxu0 0.0
  %1387 = vmatmul.mubr.f32.gmra.mrb[0].mxu0 %v1315
  %v1388 = vpop.f32.mrb[0].mxu0
  %v1389 = vadd.f32 0.0, %v1388
  %v1390 = vpop.f32.mrb[0].mxu0
  %1391 = vdwg.mxu0
  %v1393 = vsel %vm457, %v694, 0
  %v1396 = vsel %vm457, %v767, 0
  %1398 = vmatprep.subr.mxu0 0.0
  %1399 = vmatpush1.msra.mxu0 %v194
  %1400 = vmatprep.subr.mxu0 0.0
  %1401 = vmatpush1.msra.mxu0 0.0
  %1402 = vmatprep.subr.mxu0 0.0
  %1403 = vmatpush1.msra.mxu0 0.0
  %1404 = vmatprep.subr.mxu0 0.0
  %1405 = vmatpush1.msra.mxu0 0.0
  %1406 = vmatprep.subr.mxu0 0.0
  %1407 = vmatpush1.msra.mxu0 0.0
  %1408 = vmatprep.subr.mxu0 0.0
  %1409 = vmatpush1.msra.mxu0 0.0
  %1410 = vmatprep.subr.mxu0 0.0
  %1411 = vmatpush1.msra.mxu0 0.0
  %1412 = vmatprep.subr.mxu0 0.0
  %1413 = vmatpush1.msra.mxu0 0.0
  %1414 = vmatprep.subr.mxu0 0.0
  %1415 = vmatpush1.msra.mxu0 0.0
  %1416 = vmatprep.subr.mxu0 0.0
  %1417 = vmatpush1.msra.mxu0 0.0
  %1418 = vmatprep.subr.mxu0 0.0
  %1419 = vmatpush1.msra.mxu0 0.0
  %1420 = vmatprep.subr.mxu0 0.0
  %1421 = vmatpush1.msra.mxu0 0.0
  %1422 = vmatprep.subr.mxu0 0.0
  %1423 = vmatpush1.msra.mxu0 0.0
  %1424 = vmatprep.subr.mxu0 0.0
  %1425 = vmatpush1.msra.mxu0 0.0
  %1426 = vmatprep.subr.mxu0 0.0
  %1427 = vmatpush1.msra.mxu0 0.0
  %1428 = vmatprep.subr.mxu0 0.0
  %1429 = vmatpush1.msra.mxu0 0.0
  %1430 = vmatprep.subr.mxu0 0.0
  %1431 = vmatpush1.msra.mxu0 0.0
  %1432 = vmatprep.subr.mxu0 0.0
  %1433 = vmatpush1.msra.mxu0 0.0
  %1434 = vmatprep.subr.mxu0 0.0
  %1435 = vmatpush1.msra.mxu0 0.0
  %1436 = vmatprep.subr.mxu0 0.0
  %1437 = vmatpush1.msra.mxu0 0.0
  %1438 = vmatprep.subr.mxu0 0.0
  %1439 = vmatpush1.msra.mxu0 0.0
  %1440 = vmatprep.subr.mxu0 0.0
  %1441 = vmatpush1.msra.mxu0 0.0
  %1442 = vmatprep.subr.mxu0 0.0
  %1443 = vmatpush1.msra.mxu0 0.0
  %1444 = vmatprep.subr.mxu0 0.0
  %1445 = vmatpush1.msra.mxu0 0.0
  %1446 = vmatprep.subr.mxu0 0.0
  %1447 = vmatpush1.msra.mxu0 0.0
  %1448 = vmatprep.subr.mxu0 0.0
  %1449 = vmatpush1.msra.mxu0 0.0
  %1450 = vmatprep.subr.mxu0 0.0
  %1451 = vmatpush1.msra.mxu0 0.0
  %1452 = vmatprep.subr.mxu0 0.0
  %1453 = vmatpush1.msra.mxu0 0.0
  %1454 = vmatprep.subr.mxu0 0.0
  %1455 = vmatpush1.msra.mxu0 0.0
  %1456 = vmatprep.subr.mxu0 0.0
  %1457 = vmatpush1.msra.mxu0 0.0
  %1458 = vmatprep.subr.mxu0 0.0
  %1459 = vmatpush1.msra.mxu0 0.0
  %1460 = vmatprep.subr.mxu0 0.0
  %1461 = vmatpush1.msra.mxu0 0.0
  %1462 = vmatprep.mubr.f32.mxu0 0.0
  %1463 = vmatmul.mubr.f32.gmra.mrb[0].mxu0 %v1393
  %v1464 = vpop.f32.mrb[0].mxu0
  %v1465 = vadd.f32 %v1384, %v1464
  %v1466 = vpop.f32.mrb[0].mxu0
  %1467 = vmatprep.mubr.f32.mxu0 0.0
  %1468 = vmatmul.mubr.f32.gmra.mrb[0].mxu0 %v1396
  %v1469 = vpop.f32.mrb[0].mxu0
  %v1470 = vadd.f32 %v1389, %v1469
  %v1471 = vpop.f32.mrb[0].mxu0
  %1472 = vdwg.mxu0
  %v1473 = vlaneseq
  %v1474 = vshrl.u32 %v1473, 7
  %v1475 = vsub.s32 0, %v1474
  %v1476 = vrot.slane %v200, %v1475
  %1477 = vmatprep.subr.mxu0 0.0
  %1478 = vmatpush1.msra.mxu0 %v154
  %1479 = vmatprep.subr.mxu0 0.0
  %1480 = vmatpush1.msra.mxu0 %v155
  %1481 = vmatprep.subr.mxu0 0.0
  %1482 = vmatpush1.msra.mxu0 %v156
  %1483 = vmatprep.subr.mxu0 0.0
  %1484 = vmatpush1.msra.mxu0 %v157
  %1485 = vmatprep.subr.mxu0 0.0
  %1486 = vmatpush1.msra.mxu0 0.0
  %1487 = vmatprep.subr.mxu0 0.0
  %1488 = vmatpush1.msra.mxu0 0.0
  %1489 = vmatprep.subr.mxu0 0.0
  %1490 = vmatpush1.msra.mxu0 0.0
  %1491 = vmatprep.subr.mxu0 0.0
  %1492 = vmatpush1.msra.mxu0 0.0
  %1493 = vmatprep.subr.mxu0 0.0
  %1494 = vmatpush1.msra.mxu0 0.0
  %1495 = vmatprep.subr.mxu0 0.0
  %1496 = vmatpush1.msra.mxu0 0.0
  %1497 = vmatprep.subr.mxu0 0.0
  %1498 = vmatpush1.msra.mxu0 0.0
  %1499 = vmatprep.subr.mxu0 0.0
  %1500 = vmatpush1.msra.mxu0 0.0
  %1501 = vmatprep.subr.mxu0 0.0
  %1502 = vmatpush1.msra.mxu0 0.0
  %1503 = vmatprep.subr.mxu0 0.0
  %1504 = vmatpush1.msra.mxu0 0.0
  %1505 = vmatprep.subr.mxu0 0.0
  %1506 = vmatpush1.msra.mxu0 0.0
  %1507 = vmatprep.subr.mxu0 0.0
  %1508 = vmatpush1.msra.mxu0 0.0
  %1509 = vmatprep.subr.mxu0 0.0
  %1510 = vmatpush1.msra.mxu0 0.0
  %1511 = vmatprep.subr.mxu0 0.0
  %1512 = vmatpush1.msra.mxu0 0.0
  %1513 = vmatprep.subr.mxu0 0.0
  %1514 = vmatpush1.msra.mxu0 0.0
  %1515 = vmatprep.subr.mxu0 0.0
  %1516 = vmatpush1.msra.mxu0 0.0
  %1517 = vmatprep.subr.mxu0 0.0
  %1518 = vmatpush1.msra.mxu0 0.0
  %1519 = vmatprep.subr.mxu0 0.0
  %1520 = vmatpush1.msra.mxu0 0.0
  %1521 = vmatprep.subr.mxu0 0.0
  %1522 = vmatpush1.msra.mxu0 0.0
  %1523 = vmatprep.subr.mxu0 0.0
  %1524 = vmatpush1.msra.mxu0 0.0
  %1525 = vmatprep.subr.mxu0 0.0
  %1526 = vmatpush1.msra.mxu0 0.0
  %1527 = vmatprep.subr.mxu0 0.0
  %1528 = vmatpush1.msra.mxu0 0.0
  %1529 = vmatprep.subr.mxu0 0.0
  %1530 = vmatpush1.msra.mxu0 0.0
  %1531 = vmatprep.subr.mxu0 0.0
  %1532 = vmatpush1.msra.mxu0 0.0
  %1533 = vmatprep.subr.mxu0 0.0
  %1534 = vmatpush1.msra.mxu0 0.0
  %1535 = vmatprep.subr.mxu0 0.0
  %1536 = vmatpush1.msra.mxu0 0.0
  %1537 = vmatprep.subr.mxu0 0.0
  %1538 = vmatpush1.msra.mxu0 0.0
  %1539 = vmatprep.subr.mxu0 0.0
  %1540 = vmatpush1.msra.mxu0 0.0
  %1541 = vmatprep.mubr.f32.mxu0 0.0
  %1542 = vmatmul.mubr.f32.gmra.mrb[0].mxu0 %v227
  %v1543 = vpop.f32.mrb[0].mxu0
  %v1544 = vadd.f32 %v1476, %v1543
  %v1545 = vpop.f32.mrb[0].mxu0
  %1546 = vmatprep.mubr.f32.mxu0 0.0
  %1547 = vmatmul.mubr.f32.gmra.mrb[0].mxu0 %v230
  %v1548 = vpop.f32.mrb[0].mxu0
  %v1549 = vadd.f32 %v1476, %v1548
  %v1550 = vpop.f32.mrb[0].mxu0
  %1551 = vdwg.mxu0
  %1552 = vmatprep.subr.mxu0 0.0
  %1553 = vmatpush1.msra.mxu0 %v170
  %1554 = vmatprep.subr.mxu0 0.0
  %1555 = vmatpush1.msra.mxu0 %v171
  %1556 = vmatprep.subr.mxu0 0.0
  %1557 = vmatpush1.msra.mxu0 %v172
  %1558 = vmatprep.subr.mxu0 0.0
  %1559 = vmatpush1.msra.mxu0 %v173
  %1560 = vmatprep.subr.mxu0 0.0
  %1561 = vmatpush1.msra.mxu0 0.0
  %1562 = vmatprep.subr.mxu0 0.0
  %1563 = vmatpush1.msra.mxu0 0.0
  %1564 = vmatprep.subr.mxu0 0.0
  %1565 = vmatpush1.msra.mxu0 0.0
  %1566 = vmatprep.subr.mxu0 0.0
  %1567 = vmatpush1.msra.mxu0 0.0
  %1568 = vmatprep.subr.mxu0 0.0
  %1569 = vmatpush1.msra.mxu0 0.0
  %1570 = vmatprep.subr.mxu0 0.0
  %1571 = vmatpush1.msra.mxu0 0.0
  %1572 = vmatprep.subr.mxu0 0.0
  %1573 = vmatpush1.msra.mxu0 0.0
  %1574 = vmatprep.subr.mxu0 0.0
  %1575 = vmatpush1.msra.mxu0 0.0
  %1576 = vmatprep.subr.mxu0 0.0
  %1577 = vmatpush1.msra.mxu0 0.0
  %1578 = vmatprep.subr.mxu0 0.0
  %1579 = vmatpush1.msra.mxu0 0.0
  %1580 = vmatprep.subr.mxu0 0.0
  %1581 = vmatpush1.msra.mxu0 0.0
  %1582 = vmatprep.subr.mxu0 0.0
  %1583 = vmatpush1.msra.mxu0 0.0
  %1584 = vmatprep.subr.mxu0 0.0
  %1585 = vmatpush1.msra.mxu0 0.0
  %1586 = vmatprep.subr.mxu0 0.0
  %1587 = vmatpush1.msra.mxu0 0.0
  %1588 = vmatprep.subr.mxu0 0.0
  %1589 = vmatpush1.msra.mxu0 0.0
  %1590 = vmatprep.subr.mxu0 0.0
  %1591 = vmatpush1.msra.mxu0 0.0
  %1592 = vmatprep.subr.mxu0 0.0
  %1593 = vmatpush1.msra.mxu0 0.0
  %1594 = vmatprep.subr.mxu0 0.0
  %1595 = vmatpush1.msra.mxu0 0.0
  %1596 = vmatprep.subr.mxu0 0.0
  %1597 = vmatpush1.msra.mxu0 0.0
  %1598 = vmatprep.subr.mxu0 0.0
  %1599 = vmatpush1.msra.mxu0 0.0
  %1600 = vmatprep.subr.mxu0 0.0
  %1601 = vmatpush1.msra.mxu0 0.0
  %1602 = vmatprep.subr.mxu0 0.0
  %1603 = vmatpush1.msra.mxu0 0.0
  %1604 = vmatprep.subr.mxu0 0.0
  %1605 = vmatpush1.msra.mxu0 0.0
  %1606 = vmatprep.subr.mxu0 0.0
  %1607 = vmatpush1.msra.mxu0 0.0
  %1608 = vmatprep.subr.mxu0 0.0
  %1609 = vmatpush1.msra.mxu0 0.0
  %1610 = vmatprep.subr.mxu0 0.0
  %1611 = vmatpush1.msra.mxu0 0.0
  %1612 = vmatprep.subr.mxu0 0.0
  %1613 = vmatpush1.msra.mxu0 0.0
  %1614 = vmatprep.subr.mxu0 0.0
  %1615 = vmatpush1.msra.mxu0 0.0
  %1616 = vmatprep.mubr.f32.mxu0 0.0
  %1617 = vmatmul.mubr.f32.gmra.mrb[0].mxu0 %v227
  %v1618 = vpop.f32.mrb[0].mxu0
  %v1619 = vadd.f32 0.0, %v1618
  %v1620 = vpop.f32.mrb[0].mxu0
  %1621 = vmatprep.mubr.f32.mxu0 0.0
  %1622 = vmatmul.mubr.f32.gmra.mrb[0].mxu0 %v230
  %v1623 = vpop.f32.mrb[0].mxu0
  %v1624 = vadd.f32 0.0, %v1623
  %v1625 = vpop.f32.mrb[0].mxu0
  %1626 = vdwg.mxu0
  %1627 = vmatprep.subr.mxu0 0.0
  %1628 = vmatpush1.msra.mxu0 %v186
  %1629 = vmatprep.subr.mxu0 0.0
  %1630 = vmatpush1.msra.mxu0 %v187
  %1631 = vmatprep.subr.mxu0 0.0
  %1632 = vmatpush1.msra.mxu0 %v188
  %1633 = vmatprep.subr.mxu0 0.0
  %1634 = vmatpush1.msra.mxu0 %v189
  %1635 = vmatprep.subr.mxu0 0.0
  %1636 = vmatpush1.msra.mxu0 0.0
  %1637 = vmatprep.subr.mxu0 0.0
  %1638 = vmatpush1.msra.mxu0 0.0
  %1639 = vmatprep.subr.mxu0 0.0
  %1640 = vmatpush1.msra.mxu0 0.0
  %1641 = vmatprep.subr.mxu0 0.0
  %1642 = vmatpush1.msra.mxu0 0.0
  %1643 = vmatprep.subr.mxu0 0.0
  %1644 = vmatpush1.msra.mxu0 0.0
  %1645 = vmatprep.subr.mxu0 0.0
  %1646 = vmatpush1.msra.mxu0 0.0
  %1647 = vmatprep.subr.mxu0 0.0
  %1648 = vmatpush1.msra.mxu0 0.0
  %1649 = vmatprep.subr.mxu0 0.0
  %1650 = vmatpush1.msra.mxu0 0.0
  %1651 = vmatprep.subr.mxu0 0.0
  %1652 = vmatpush1.msra.mxu0 0.0
  %1653 = vmatprep.subr.mxu0 0.0
  %1654 = vmatpush1.msra.mxu0 0.0
  %1655 = vmatprep.subr.mxu0 0.0
  %1656 = vmatpush1.msra.mxu0 0.0
  %1657 = vmatprep.subr.mxu0 0.0
  %1658 = vmatpush1.msra.mxu0 0.0
  %1659 = vmatprep.subr.mxu0 0.0
  %1660 = vmatpush1.msra.mxu0 0.0
  %1661 = vmatprep.subr.mxu0 0.0
  %1662 = vmatpush1.msra.mxu0 0.0
  %1663 = vmatprep.subr.mxu0 0.0
  %1664 = vmatpush1.msra.mxu0 0.0
  %1665 = vmatprep.subr.mxu0 0.0
  %1666 = vmatpush1.msra.mxu0 0.0
  %1667 = vmatprep.subr.mxu0 0.0
  %1668 = vmatpush1.msra.mxu0 0.0
  %1669 = vmatprep.subr.mxu0 0.0
  %1670 = vmatpush1.msra.mxu0 0.0
  %1671 = vmatprep.subr.mxu0 0.0
  %1672 = vmatpush1.msra.mxu0 0.0
  %1673 = vmatprep.subr.mxu0 0.0
  %1674 = vmatpush1.msra.mxu0 0.0
  %1675 = vmatprep.subr.mxu0 0.0
  %1676 = vmatpush1.msra.mxu0 0.0
  %1677 = vmatprep.subr.mxu0 0.0
  %1678 = vmatpush1.msra.mxu0 0.0
  %1679 = vmatprep.subr.mxu0 0.0
  %1680 = vmatpush1.msra.mxu0 0.0
  %1681 = vmatprep.subr.mxu0 0.0
  %1682 = vmatpush1.msra.mxu0 0.0
  %1683 = vmatprep.subr.mxu0 0.0
  %1684 = vmatpush1.msra.mxu0 0.0
  %1685 = vmatprep.subr.mxu0 0.0
  %1686 = vmatpush1.msra.mxu0 0.0
  %1687 = vmatprep.subr.mxu0 0.0
  %1688 = vmatpush1.msra.mxu0 0.0
  %1689 = vmatprep.subr.mxu0 0.0
  %1690 = vmatpush1.msra.mxu0 0.0
  %1691 = vmatprep.mubr.f32.mxu0 0.0
  %1692 = vmatmul.mubr.f32.gmra.mrb[0].mxu0 %v227
  %v1693 = vpop.f32.mrb[0].mxu0
  %v1694 = vadd.f32 0.0, %v1693
  %v1695 = vpop.f32.mrb[0].mxu0
  %1696 = vmatprep.mubr.f32.mxu0 0.0
  %1697 = vmatmul.mubr.f32.gmra.mrb[0].mxu0 %v230
  %v1698 = vpop.f32.mrb[0].mxu0
  %v1699 = vadd.f32 0.0, %v1698
  %v1700 = vpop.f32.mrb[0].mxu0
  %1701 = vdwg.mxu0
  %v1703 = vsel %vm457, %v1544, 0
  %v1706 = vsel %vm457, %v1619, 0
  %1708 = vmatprep.subr.mxu0 0.0
  %1709 = vmatpush1.xpose.msra.mxu0 %v1706
  %1710 = vmatprep.subr.mxu0 0.0
  %1711 = vmatpush1.xpose.msra.mxu0 0.0
  %1712 = vmatprep.subr.mxu0 0.0
  %1713 = vmatpush1.xpose.msra.mxu0 0.0
  %1714 = vmatprep.subr.mxu0 0.0
  %1715 = vmatpush1.xpose.msra.mxu0 0.0
  %1716 = vmatprep.subr.mxu0 0.0
  %1717 = vmatpush1.xpose.msra.mxu0 0.0
  %1718 = vmatprep.subr.mxu0 0.0
  %1719 = vmatpush1.xpose.msra.mxu0 0.0
  %1720 = vmatprep.subr.mxu0 0.0
  %1721 = vmatpush1.xpose.msra.mxu0 0.0
  %1722 = vmatprep.subr.mxu0 0.0
  %1723 = vmatpush1.xpose.msra.mxu0 0.0
  %1724 = vmatprep.subr.mxu0 0.0
  %1725 = vmatpush1.xpose.msra.mxu0 0.0
  %1726 = vmatprep.subr.mxu0 0.0
  %1727 = vmatpush1.xpose.msra.mxu0 0.0
  %1728 = vmatprep.subr.mxu0 0.0
  %1729 = vmatpush1.xpose.msra.mxu0 0.0
  %1730 = vmatprep.subr.mxu0 0.0
  %1731 = vmatpush1.xpose.msra.mxu0 0.0
  %1732 = vmatprep.subr.mxu0 0.0
  %1733 = vmatpush1.xpose.msra.mxu0 0.0
  %1734 = vmatprep.subr.mxu0 0.0
  %1735 = vmatpush1.xpose.msra.mxu0 0.0
  %1736 = vmatprep.subr.mxu0 0.0
  %1737 = vmatpush1.xpose.msra.mxu0 0.0
  %1738 = vmatprep.subr.mxu0 0.0
  %1739 = vmatpush1.xpose.msra.mxu0 0.0
  %1740 = vmatprep.subr.mxu0 0.0
  %1741 = vmatpush1.xpose.msra.mxu0 0.0
  %1742 = vmatprep.subr.mxu0 0.0
  %1743 = vmatpush1.xpose.msra.mxu0 0.0
  %1744 = vmatprep.subr.mxu0 0.0
  %1745 = vmatpush1.xpose.msra.mxu0 0.0
  %1746 = vmatprep.subr.mxu0 0.0
  %1747 = vmatpush1.xpose.msra.mxu0 0.0
  %1748 = vmatprep.subr.mxu0 0.0
  %1749 = vmatpush1.xpose.msra.mxu0 0.0
  %1750 = vmatprep.subr.mxu0 0.0
  %1751 = vmatpush1.xpose.msra.mxu0 0.0
  %1752 = vmatprep.subr.mxu0 0.0
  %1753 = vmatpush1.xpose.msra.mxu0 0.0
  %1754 = vmatprep.subr.mxu0 0.0
  %1755 = vmatpush1.xpose.msra.mxu0 0.0
  %1756 = vmatprep.subr.mxu0 0.0
  %1757 = vmatpush1.xpose.msra.mxu0 0.0
  %1758 = vmatprep.subr.mxu0 0.0
  %1759 = vmatpush1.xpose.msra.mxu0 0.0
  %1760 = vmatprep.subr.mxu0 0.0
  %1761 = vmatpush1.xpose.msra.mxu0 0.0
  %1762 = vmatprep.subr.mxu0 0.0
  %1763 = vmatpush1.xpose.msra.mxu0 0.0
  %1764 = vmatprep.subr.mxu0 0.0
  %1765 = vmatpush1.xpose.msra.mxu0 0.0
  %1766 = vmatprep.subr.mxu0 0.0
  %1767 = vmatpush1.xpose.msra.mxu0 0.0
  %1768 = vmatprep.subr.mxu0 0.0
  %1769 = vmatpush1.xpose.msra.mxu0 0.0
  %1770 = vmatprep.subr.mxu0 0.0
  %1771 = vmatpush1.xpose.msra.mxu0 0.0
  %1772 = vmatprep.mubr.f32.mxu0 0.0
  %1773 = vmatmul.mubr.f32.gmra.mrb[0].mxu0 %v1703
  %v1774 = vpop.f32.mrb[0].mxu0
  %v1775 = vadd.f32 %v139, %v1774
  %v1776 = vpop.f32.mrb[0].mxu0
  %1777 = vdwg.mxu0
  %v1779 = vsel %vm457, %v1549, 0
  %v1782 = vsel %vm457, %v1624, 0
  %1784 = vmatprep.subr.mxu0 0.0
  %1785 = vmatpush1.xpose.msra.mxu0 %v1782
  %1786 = vmatprep.subr.mxu0 0.0
  %1787 = vmatpush1.xpose.msra.mxu0 0.0
  %1788 = vmatprep.subr.mxu0 0.0
  %1789 = vmatpush1.xpose.msra.mxu0 0.0
  %1790 = vmatprep.subr.mxu0 0.0
  %1791 = vmatpush1.xpose.msra.mxu0 0.0
  %1792 = vmatprep.subr.mxu0 0.0
  %1793 = vmatpush1.xpose.msra.mxu0 0.0
  %1794 = vmatprep.subr.mxu0 0.0
  %1795 = vmatpush1.xpose.msra.mxu0 0.0
  %1796 = vmatprep.subr.mxu0 0.0
  %1797 = vmatpush1.xpose.msra.mxu0 0.0
  %1798 = vmatprep.subr.mxu0 0.0
  %1799 = vmatpush1.xpose.msra.mxu0 0.0
  %1800 = vmatprep.subr.mxu0 0.0
  %1801 = vmatpush1.xpose.msra.mxu0 0.0
  %1802 = vmatprep.subr.mxu0 0.0
  %1803 = vmatpush1.xpose.msra.mxu0 0.0
  %1804 = vmatprep.subr.mxu0 0.0
  %1805 = vmatpush1.xpose.msra.mxu0 0.0
  %1806 = vmatprep.subr.mxu0 0.0
  %1807 = vmatpush1.xpose.msra.mxu0 0.0
  %1808 = vmatprep.subr.mxu0 0.0
  %1809 = vmatpush1.xpose.msra.mxu0 0.0
  %1810 = vmatprep.subr.mxu0 0.0
  %1811 = vmatpush1.xpose.msra.mxu0 0.0
  %1812 = vmatprep.subr.mxu0 0.0
  %1813 = vmatpush1.xpose.msra.mxu0 0.0
  %1814 = vmatprep.subr.mxu0 0.0
  %1815 = vmatpush1.xpose.msra.mxu0 0.0
  %1816 = vmatprep.subr.mxu0 0.0
  %1817 = vmatpush1.xpose.msra.mxu0 0.0
  %1818 = vmatprep.subr.mxu0 0.0
  %1819 = vmatpush1.xpose.msra.mxu0 0.0
  %1820 = vmatprep.subr.mxu0 0.0
  %1821 = vmatpush1.xpose.msra.mxu0 0.0
  %1822 = vmatprep.subr.mxu0 0.0
  %1823 = vmatpush1.xpose.msra.mxu0 0.0
  %1824 = vmatprep.subr.mxu0 0.0
  %1825 = vmatpush1.xpose.msra.mxu0 0.0
  %1826 = vmatprep.subr.mxu0 0.0
  %1827 = vmatpush1.xpose.msra.mxu0 0.0
  %1828 = vmatprep.subr.mxu0 0.0
  %1829 = vmatpush1.xpose.msra.mxu0 0.0
  %1830 = vmatprep.subr.mxu0 0.0
  %1831 = vmatpush1.xpose.msra.mxu0 0.0
  %1832 = vmatprep.subr.mxu0 0.0
  %1833 = vmatpush1.xpose.msra.mxu0 0.0
  %1834 = vmatprep.subr.mxu0 0.0
  %1835 = vmatpush1.xpose.msra.mxu0 0.0
  %1836 = vmatprep.subr.mxu0 0.0
  %1837 = vmatpush1.xpose.msra.mxu0 0.0
  %1838 = vmatprep.subr.mxu0 0.0
  %1839 = vmatpush1.xpose.msra.mxu0 0.0
  %1840 = vmatprep.subr.mxu0 0.0
  %1841 = vmatpush1.xpose.msra.mxu0 0.0
  %1842 = vmatprep.subr.mxu0 0.0
  %1843 = vmatpush1.xpose.msra.mxu0 0.0
  %1844 = vmatprep.subr.mxu0 0.0
  %1845 = vmatpush1.xpose.msra.mxu0 0.0
  %1846 = vmatprep.subr.mxu0 0.0
  %1847 = vmatpush1.xpose.msra.mxu0 0.0
  %1848 = vmatprep.mubr.f32.mxu0 0.0
  %1849 = vmatmul.mubr.f32.gmra.mrb[0].mxu0 %v1779
  %v1850 = vpop.f32.mrb[0].mxu0
  %v1851 = vadd.f32 %v143, %v1850
  %v1852 = vpop.f32.mrb[0].mxu0
  %1853 = vdwg.mxu0
  %v1854 = vmul.f32 %v1775, 1.442695
  %v1855 = vpow.pop %v1854
  %v1856 = vmul.f32 %v1851, 1.442695
  %v1857 = vpow.pop %v1856
  %v1858 = vsel %vm457, %v1855, 0.0
  %1859 = vadd.xlane.f32.xlu0 %v1858
  %v1860 = vpop.xlane.xlu0 %1859
  %v1861 = vsel %vm457, %v1857, 0.0
  %1862 = vadd.xlane.f32.xlu0 %v1861
  %v1863 = vpop.xlane.xlu0 %1862
  %v1864 = vrcp.pop %v1860
  %v1865 = vmul.f32 %v1855, %v1864
  %v1866 = vrcp.pop %v1863
  %v1867 = vmul.f32 %v1857, %v1866
  %v1869 = vsel %vm457, %v1865, 0
  %1871 = vmatprep.subr.mxu0 0.0
  %1872 = vmatpush1.msra.mxu0 %v1694
  %1873 = vmatprep.subr.mxu0 0.0
  %1874 = vmatpush1.msra.mxu0 0.0
  %1875 = vmatprep.subr.mxu0 0.0
  %1876 = vmatpush1.msra.mxu0 0.0
  %1877 = vmatprep.subr.mxu0 0.0
  %1878 = vmatpush1.msra.mxu0 0.0
  %1879 = vmatprep.subr.mxu0 0.0
  %1880 = vmatpush1.msra.mxu0 0.0
  %1881 = vmatprep.subr.mxu0 0.0
  %1882 = vmatpush1.msra.mxu0 0.0
  %1883 = vmatprep.subr.mxu0 0.0
  %1884 = vmatpush1.msra.mxu0 0.0
  %1885 = vmatprep.subr.mxu0 0.0
  %1886 = vmatpush1.msra.mxu0 0.0
  %1887 = vmatprep.subr.mxu0 0.0
  %1888 = vmatpush1.msra.mxu0 0.0
  %1889 = vmatprep.subr.mxu0 0.0
  %1890 = vmatpush1.msra.mxu0 0.0
  %1891 = vmatprep.subr.mxu0 0.0
  %1892 = vmatpush1.msra.mxu0 0.0
  %1893 = vmatprep.subr.mxu0 0.0
  %1894 = vmatpush1.msra.mxu0 0.0
  %1895 = vmatprep.subr.mxu0 0.0
  %1896 = vmatpush1.msra.mxu0 0.0
  %1897 = vmatprep.subr.mxu0 0.0
  %1898 = vmatpush1.msra.mxu0 0.0
  %1899 = vmatprep.subr.mxu0 0.0
  %1900 = vmatpush1.msra.mxu0 0.0
  %1901 = vmatprep.subr.mxu0 0.0
  %1902 = vmatpush1.msra.mxu0 0.0
  %1903 = vmatprep.subr.mxu0 0.0
  %1904 = vmatpush1.msra.mxu0 0.0
  %1905 = vmatprep.subr.mxu0 0.0
  %1906 = vmatpush1.msra.mxu0 0.0
  %1907 = vmatprep.subr.mxu0 0.0
  %1908 = vmatpush1.msra.mxu0 0.0
  %1909 = vmatprep.subr.mxu0 0.0
  %1910 = vmatpush1.msra.mxu0 0.0
  %1911 = vmatprep.subr.mxu0 0.0
  %1912 = vmatpush1.msra.mxu0 0.0
  %1913 = vmatprep.subr.mxu0 0.0
  %1914 = vmatpush1.msra.mxu0 0.0
  %1915 = vmatprep.subr.mxu0 0.0
  %1916 = vmatpush1.msra.mxu0 0.0
  %1917 = vmatprep.subr.mxu0 0.0
  %1918 = vmatpush1.msra.mxu0 0.0
  %1919 = vmatprep.subr.mxu0 0.0
  %1920 = vmatpush1.msra.mxu0 0.0
  %1921 = vmatprep.subr.mxu0 0.0
  %1922 = vmatpush1.msra.mxu0 0.0
  %1923 = vmatprep.subr.mxu0 0.0
  %1924 = vmatpush1.msra.mxu0 0.0
  %1925 = vmatprep.subr.mxu0 0.0
  %1926 = vmatpush1.msra.mxu0 0.0
  %1927 = vmatprep.subr.mxu0 0.0
  %1928 = vmatpush1.msra.mxu0 0.0
  %1929 = vmatprep.subr.mxu0 0.0
  %1930 = vmatpush1.msra.mxu0 0.0
  %1931 = vmatprep.subr.mxu0 0.0
  %1932 = vmatpush1.msra.mxu0 0.0
  %1933 = vmatprep.subr.mxu0 0.0
  %1934 = vmatpush1.msra.mxu0 0.0
  %1935 = vmatprep.mubr.f32.mxu0 0.0
  %1936 = vmatmul.mubr.f32.gmra.mrb[0].mxu0 %v1869
  %v1937 = vpop.f32.mrb[0].mxu0
  %v1938 = vadd.f32 0.0, %v1937
  %v1939 = vpop.f32.mrb[0].mxu0
  %1940 = vdwg.mxu0
  %v1942 = vsel %vm457, %v1867, 0
  %1944 = vmatprep.subr.mxu0 0.0
  %1945 = vmatpush1.msra.mxu0 %v1699
  %1946 = vmatprep.subr.mxu0 0.0
  %1947 = vmatpush1.msra.mxu0 0.0
  %1948 = vmatprep.subr.mxu0 0.0
  %1949 = vmatpush1.msra.mxu0 0.0
  %1950 = vmatprep.subr.mxu0 0.0
  %1951 = vmatpush1.msra.mxu0 0.0
  %1952 = vmatprep.subr.mxu0 0.0
  %1953 = vmatpush1.msra.mxu0 0.0
  %1954 = vmatprep.subr.mxu0 0.0
  %1955 = vmatpush1.msra.mxu0 0.0
  %1956 = vmatprep.subr.mxu0 0.0
  %1957 = vmatpush1.msra.mxu0 0.0
  %1958 = vmatprep.subr.mxu0 0.0
  %1959 = vmatpush1.msra.mxu0 0.0
  %1960 = vmatprep.subr.mxu0 0.0
  %1961 = vmatpush1.msra.mxu0 0.0
  %1962 = vmatprep.subr.mxu0 0.0
  %1963 = vmatpush1.msra.mxu0 0.0
  %1964 = vmatprep.subr.mxu0 0.0
  %1965 = vmatpush1.msra.mxu0 0.0
  %1966 = vmatprep.subr.mxu0 0.0
  %1967 = vmatpush1.msra.mxu0 0.0
  %1968 = vmatprep.subr.mxu0 0.0
  %1969 = vmatpush1.msra.mxu0 0.0
  %1970 = vmatprep.subr.mxu0 0.0
  %1971 = vmatpush1.msra.mxu0 0.0
  %1972 = vmatprep.subr.mxu0 0.0
  %1973 = vmatpush1.msra.mxu0 0.0
  %1974 = vmatprep.subr.mxu0 0.0
  %1975 = vmatpush1.msra.mxu0 0.0
  %1976 = vmatprep.subr.mxu0 0.0
  %1977 = vmatpush1.msra.mxu0 0.0
  %1978 = vmatprep.subr.mxu0 0.0
  %1979 = vmatpush1.msra.mxu0 0.0
  %1980 = vmatprep.subr.mxu0 0.0
  %1981 = vmatpush1.msra.mxu0 0.0
  %1982 = vmatprep.subr.mxu0 0.0
  %1983 = vmatpush1.msra.mxu0 0.0
  %1984 = vmatprep.subr.mxu0 0.0
  %1985 = vmatpush1.msra.mxu0 0.0
  %1986 = vmatprep.subr.mxu0 0.0
  %1987 = vmatpush1.msra.mxu0 0.0
  %1988 = vmatprep.subr.mxu0 0.0
  %1989 = vmatpush1.msra.mxu0 0.0
  %1990 = vmatprep.subr.mxu0 0.0
  %1991 = vmatpush1.msra.mxu0 0.0
  %1992 = vmatprep.subr.mxu0 0.0
  %1993 = vmatpush1.msra.mxu0 0.0
  %1994 = vmatprep.subr.mxu0 0.0
  %1995 = vmatpush1.msra.mxu0 0.0
  %1996 = vmatprep.subr.mxu0 0.0
  %1997 = vmatpush1.msra.mxu0 0.0
  %1998 = vmatprep.subr.mxu0 0.0
  %1999 = vmatpush1.msra.mxu0 0.0
  %2000 = vmatprep.subr.mxu0 0.0
  %2001 = vmatpush1.msra.mxu0 0.0
  %2002 = vmatprep.subr.mxu0 0.0
  %2003 = vmatpush1.msra.mxu0 0.0
  %2004 = vmatprep.subr.mxu0 0.0
  %2005 = vmatpush1.msra.mxu0 0.0
  %2006 = vmatprep.subr.mxu0 0.0
  %2007 = vmatpush1.msra.mxu0 0.0
  %2008 = vmatprep.mubr.f32.mxu0 0.0
  %2009 = vmatmul.mubr.f32.gmra.mrb[0].mxu0 %v1942
  %v2010 = vpop.f32.mrb[0].mxu0
  %v2011 = vadd.f32 0.0, %v2010
  %v2012 = vpop.f32.mrb[0].mxu0
  %2013 = vdwg.mxu0
  %v2015 = vsel %vm457, %v1938, 0
  %v2018 = vsel %vm457, %v2011, 0
  %2020 = vmatprep.subr.mxu0 0.0
  %2021 = vmatpush1.msra.mxu0 %v196
  %2022 = vmatprep.subr.mxu0 0.0
  %2023 = vmatpush1.msra.mxu0 0.0
  %2024 = vmatprep.subr.mxu0 0.0
  %2025 = vmatpush1.msra.mxu0 0.0
  %2026 = vmatprep.subr.mxu0 0.0
  %2027 = vmatpush1.msra.mxu0 0.0
  %2028 = vmatprep.subr.mxu0 0.0
  %2029 = vmatpush1.msra.mxu0 0.0
  %2030 = vmatprep.subr.mxu0 0.0
  %2031 = vmatpush1.msra.mxu0 0.0
  %2032 = vmatprep.subr.mxu0 0.0
  %2033 = vmatpush1.msra.mxu0 0.0
  %2034 = vmatprep.subr.mxu0 0.0
  %2035 = vmatpush1.msra.mxu0 0.0
  %2036 = vmatprep.subr.mxu0 0.0
  %2037 = vmatpush1.msra.mxu0 0.0
  %2038 = vmatprep.subr.mxu0 0.0
  %2039 = vmatpush1.msra.mxu0 0.0
  %2040 = vmatprep.subr.mxu0 0.0
  %2041 = vmatpush1.msra.mxu0 0.0
  %2042 = vmatprep.subr.mxu0 0.0
  %2043 = vmatpush1.msra.mxu0 0.0
  %2044 = vmatprep.subr.mxu0 0.0
  %2045 = vmatpush1.msra.mxu0 0.0
  %2046 = vmatprep.subr.mxu0 0.0
  %2047 = vmatpush1.msra.mxu0 0.0
  %2048 = vmatprep.subr.mxu0 0.0
  %2049 = vmatpush1.msra.mxu0 0.0
  %2050 = vmatprep.subr.mxu0 0.0
  %2051 = vmatpush1.msra.mxu0 0.0
  %2052 = vmatprep.subr.mxu0 0.0
  %2053 = vmatpush1.msra.mxu0 0.0
  %2054 = vmatprep.subr.mxu0 0.0
  %2055 = vmatpush1.msra.mxu0 0.0
  %2056 = vmatprep.subr.mxu0 0.0
  %2057 = vmatpush1.msra.mxu0 0.0
  %2058 = vmatprep.subr.mxu0 0.0
  %2059 = vmatpush1.msra.mxu0 0.0
  %2060 = vmatprep.subr.mxu0 0.0
  %2061 = vmatpush1.msra.mxu0 0.0
  %2062 = vmatprep.subr.mxu0 0.0
  %2063 = vmatpush1.msra.mxu0 0.0
  %2064 = vmatprep.subr.mxu0 0.0
  %2065 = vmatpush1.msra.mxu0 0.0
  %2066 = vmatprep.subr.mxu0 0.0
  %2067 = vmatpush1.msra.mxu0 0.0
  %2068 = vmatprep.subr.mxu0 0.0
  %2069 = vmatpush1.msra.mxu0 0.0
  %2070 = vmatprep.subr.mxu0 0.0
  %2071 = vmatpush1.msra.mxu0 0.0
  %2072 = vmatprep.subr.mxu0 0.0
  %2073 = vmatpush1.msra.mxu0 0.0
  %2074 = vmatprep.subr.mxu0 0.0
  %2075 = vmatpush1.msra.mxu0 0.0
  %2076 = vmatprep.subr.mxu0 0.0
  %2077 = vmatpush1.msra.mxu0 0.0
  %2078 = vmatprep.subr.mxu0 0.0
  %2079 = vmatpush1.msra.mxu0 0.0
  %2080 = vmatprep.subr.mxu0 0.0
  %2081 = vmatpush1.msra.mxu0 0.0
  %2082 = vmatprep.subr.mxu0 0.0
  %2083 = vmatpush1.msra.mxu0 0.0
  %2084 = vmatprep.mubr.f32.mxu0 0.0
  %2085 = vmatmul.mubr.f32.gmra.mrb[0].mxu0 %v2015
  %v2086 = vpop.f32.mrb[0].mxu0
  %v2087 = vadd.f32 0.0, %v2086
  %v2088 = vpop.f32.mrb[0].mxu0
  %2089 = vmatprep.mubr.f32.mxu0 0.0
  %2090 = vmatmul.mubr.f32.gmra.mrb[0].mxu0 %v2018
  %v2091 = vpop.f32.mrb[0].mxu0
  %v2092 = vadd.f32 0.0, %v2091
  %v2093 = vpop.f32.mrb[0].mxu0
  %2094 = vdwg.mxu0
  %v2095 = vadd.f32 %v1465, %v2087
  %v2096 = vadd.f32 %v1470, %v2092
  %v2097 = vlaneseq
  %v2098 = vshrl.u32 %v2097, 7
  %v2099 = vsub.s32 0, %v2098
  %v2100 = vrot.slane %v201, %v2099
  %2101 = vmatprep.subr.mxu0 0.0
  %2102 = vmatpush1.msra.mxu0 %v158
  %2103 = vmatprep.subr.mxu0 0.0
  %2104 = vmatpush1.msra.mxu0 %v159
  %2105 = vmatprep.subr.mxu0 0.0
  %2106 = vmatpush1.msra.mxu0 %v160
  %2107 = vmatprep.subr.mxu0 0.0
  %2108 = vmatpush1.msra.mxu0 %v161
  %2109 = vmatprep.subr.mxu0 0.0
  %2110 = vmatpush1.msra.mxu0 0.0
  %2111 = vmatprep.subr.mxu0 0.0
  %2112 = vmatpush1.msra.mxu0 0.0
  %2113 = vmatprep.subr.mxu0 0.0
  %2114 = vmatpush1.msra.mxu0 0.0
  %2115 = vmatprep.subr.mxu0 0.0
  %2116 = vmatpush1.msra.mxu0 0.0
  %2117 = vmatprep.subr.mxu0 0.0
  %2118 = vmatpush1.msra.mxu0 0.0
  %2119 = vmatprep.subr.mxu0 0.0
  %2120 = vmatpush1.msra.mxu0 0.0
  %2121 = vmatprep.subr.mxu0 0.0
  %2122 = vmatpush1.msra.mxu0 0.0
  %2123 = vmatprep.subr.mxu0 0.0
  %2124 = vmatpush1.msra.mxu0 0.0
  %2125 = vmatprep.subr.mxu0 0.0
  %2126 = vmatpush1.msra.mxu0 0.0
  %2127 = vmatprep.subr.mxu0 0.0
  %2128 = vmatpush1.msra.mxu0 0.0
  %2129 = vmatprep.subr.mxu0 0.0
  %2130 = vmatpush1.msra.mxu0 0.0
  %2131 = vmatprep.subr.mxu0 0.0
  %2132 = vmatpush1.msra.mxu0 0.0
  %2133 = vmatprep.subr.mxu0 0.0
  %2134 = vmatpush1.msra.mxu0 0.0
  %2135 = vmatprep.subr.mxu0 0.0
  %2136 = vmatpush1.msra.mxu0 0.0
  %2137 = vmatprep.subr.mxu0 0.0
  %2138 = vmatpush1.msra.mxu0 0.0
  %2139 = vmatprep.subr.mxu0 0.0
  %2140 = vmatpush1.msra.mxu0 0.0
  %2141 = vmatprep.subr.mxu0 0.0
  %2142 = vmatpush1.msra.mxu0 0.0
  %2143 = vmatprep.subr.mxu0 0.0
  %2144 = vmatpush1.msra.mxu0 0.0
  %2145 = vmatprep.subr.mxu0 0.0
  %2146 = vmatpush1.msra.mxu0 0.0
  %2147 = vmatprep.subr.mxu0 0.0
  %2148 = vmatpush1.msra.mxu0 0.0
  %2149 = vmatprep.subr.mxu0 0.0
  %2150 = vmatpush1.msra.mxu0 0.0
  %2151 = vmatprep.subr.mxu0 0.0
  %2152 = vmatpush1.msra.mxu0 0.0
  %2153 = vmatprep.subr.mxu0 0.0
  %2154 = vmatpush1.msra.mxu0 0.0
  %2155 = vmatprep.subr.mxu0 0.0
  %2156 = vmatpush1.msra.mxu0 0.0
  %2157 = vmatprep.subr.mxu0 0.0
  %2158 = vmatpush1.msra.mxu0 0.0
  %2159 = vmatprep.subr.mxu0 0.0
  %2160 = vmatpush1.msra.mxu0 0.0
  %2161 = vmatprep.subr.mxu0 0.0
  %2162 = vmatpush1.msra.mxu0 0.0
  %2163 = vmatprep.subr.mxu0 0.0
  %2164 = vmatpush1.msra.mxu0 0.0
  %2165 = vmatprep.mubr.f32.mxu0 0.0
  %2166 = vmatmul.mubr.f32.gmra.mrb[0].mxu0 %v227
  %v2167 = vpop.f32.mrb[0].mxu0
  %v2168 = vadd.f32 %v2100, %v2167
  %v2169 = vpop.f32.mrb[0].mxu0
  %2170 = vmatprep.mubr.f32.mxu0 0.0
  %2171 = vmatmul.mubr.f32.gmra.mrb[0].mxu0 %v230
  %v2172 = vpop.f32.mrb[0].mxu0
  %v2173 = vadd.f32 %v2100, %v2172
  %v2174 = vpop.f32.mrb[0].mxu0
  %2175 = vdwg.mxu0
  %2176 = vmatprep.subr.mxu0 0.0
  %2177 = vmatpush1.msra.mxu0 %v174
  %2178 = vmatprep.subr.mxu0 0.0
  %2179 = vmatpush1.msra.mxu0 %v175
  %2180 = vmatprep.subr.mxu0 0.0
  %2181 = vmatpush1.msra.mxu0 %v176
  %2182 = vmatprep.subr.mxu0 0.0
  %2183 = vmatpush1.msra.mxu0 %v177
  %2184 = vmatprep.subr.mxu0 0.0
  %2185 = vmatpush1.msra.mxu0 0.0
  %2186 = vmatprep.subr.mxu0 0.0
  %2187 = vmatpush1.msra.mxu0 0.0
  %2188 = vmatprep.subr.mxu0 0.0
  %2189 = vmatpush1.msra.mxu0 0.0
  %2190 = vmatprep.subr.mxu0 0.0
  %2191 = vmatpush1.msra.mxu0 0.0
  %2192 = vmatprep.subr.mxu0 0.0
  %2193 = vmatpush1.msra.mxu0 0.0
  %2194 = vmatprep.subr.mxu0 0.0
  %2195 = vmatpush1.msra.mxu0 0.0
  %2196 = vmatprep.subr.mxu0 0.0
  %2197 = vmatpush1.msra.mxu0 0.0
  %2198 = vmatprep.subr.mxu0 0.0
  %2199 = vmatpush1.msra.mxu0 0.0
  %2200 = vmatprep.subr.mxu0 0.0
  %2201 = vmatpush1.msra.mxu0 0.0
  %2202 = vmatprep.subr.mxu0 0.0
  %2203 = vmatpush1.msra.mxu0 0.0
  %2204 = vmatprep.subr.mxu0 0.0
  %2205 = vmatpush1.msra.mxu0 0.0
  %2206 = vmatprep.subr.mxu0 0.0
  %2207 = vmatpush1.msra.mxu0 0.0
  %2208 = vmatprep.subr.mxu0 0.0
  %2209 = vmatpush1.msra.mxu0 0.0
  %2210 = vmatprep.subr.mxu0 0.0
  %2211 = vmatpush1.msra.mxu0 0.0
  %2212 = vmatprep.subr.mxu0 0.0
  %2213 = vmatpush1.msra.mxu0 0.0
  %2214 = vmatprep.subr.mxu0 0.0
  %2215 = vmatpush1.msra.mxu0 0.0
  %2216 = vmatprep.subr.mxu0 0.0
  %2217 = vmatpush1.msra.mxu0 0.0
  %2218 = vmatprep.subr.mxu0 0.0
  %2219 = vmatpush1.msra.mxu0 0.0
  %2220 = vmatprep.subr.mxu0 0.0
  %2221 = vmatpush1.msra.mxu0 0.0
  %2222 = vmatprep.subr.mxu0 0.0
  %2223 = vmatpush1.msra.mxu0 0.0
  %2224 = vmatprep.subr.mxu0 0.0
  %2225 = vmatpush1.msra.mxu0 0.0
  %2226 = vmatprep.subr.mxu0 0.0
  %2227 = vmatpush1.msra.mxu0 0.0
  %2228 = vmatprep.subr.mxu0 0.0
  %2229 = vmatpush1.msra.mxu0 0.0
  %2230 = vmatprep.subr.mxu0 0.0
  %2231 = vmatpush1.msra.mxu0 0.0
  %2232 = vmatprep.subr.mxu0 0.0
  %2233 = vmatpush1.msra.mxu0 0.0
  %2234 = vmatprep.subr.mxu0 0.0
  %2235 = vmatpush1.msra.mxu0 0.0
  %2236 = vmatprep.subr.mxu0 0.0
  %2237 = vmatpush1.msra.mxu0 0.0
  %2238 = vmatprep.subr.mxu0 0.0
  %2239 = vmatpush1.msra.mxu0 0.0
  %2240 = vmatprep.mubr.f32.mxu0 0.0
  %2241 = vmatmul.mubr.f32.gmra.mrb[0].mxu0 %v227
  %v2242 = vpop.f32.mrb[0].mxu0
  %v2243 = vadd.f32 0.0, %v2242
  %v2244 = vpop.f32.mrb[0].mxu0
  %2245 = vmatprep.mubr.f32.mxu0 0.0
  %2246 = vmatmul.mubr.f32.gmra.mrb[0].mxu0 %v230
  %v2247 = vpop.f32.mrb[0].mxu0
  %v2248 = vadd.f32 0.0, %v2247
  %v2249 = vpop.f32.mrb[0].mxu0
  %2250 = vdwg.mxu0
  %2251 = vmatprep.subr.mxu0 0.0
  %2252 = vmatpush1.msra.mxu0 %v190
  %2253 = vmatprep.subr.mxu0 0.0
  %2254 = vmatpush1.msra.mxu0 %v191
  %2255 = vmatprep.subr.mxu0 0.0
  %2256 = vmatpush1.msra.mxu0 %v192
  %2257 = vmatprep.subr.mxu0 0.0
  %2258 = vmatpush1.msra.mxu0 %v193
  %2259 = vmatprep.subr.mxu0 0.0
  %2260 = vmatpush1.msra.mxu0 0.0
  %2261 = vmatprep.subr.mxu0 0.0
  %2262 = vmatpush1.msra.mxu0 0.0
  %2263 = vmatprep.subr.mxu0 0.0
  %2264 = vmatpush1.msra.mxu0 0.0
  %2265 = vmatprep.subr.mxu0 0.0
  %2266 = vmatpush1.msra.mxu0 0.0
  %2267 = vmatprep.subr.mxu0 0.0
  %2268 = vmatpush1.msra.mxu0 0.0
  %2269 = vmatprep.subr.mxu0 0.0
  %2270 = vmatpush1.msra.mxu0 0.0
  %2271 = vmatprep.subr.mxu0 0.0
  %2272 = vmatpush1.msra.mxu0 0.0
  %2273 = vmatprep.subr.mxu0 0.0
  %2274 = vmatpush1.msra.mxu0 0.0
  %2275 = vmatprep.subr.mxu0 0.0
  %2276 = vmatpush1.msra.mxu0 0.0
  %2277 = vmatprep.subr.mxu0 0.0
  %2278 = vmatpush1.msra.mxu0 0.0
  %2279 = vmatprep.subr.mxu0 0.0
  %2280 = vmatpush1.msra.mxu0 0.0
  %2281 = vmatprep.subr.mxu0 0.0
  %2282 = vmatpush1.msra.mxu0 0.0
  %2283 = vmatprep.subr.mxu0 0.0
  %2284 = vmatpush1.msra.mxu0 0.0
  %2285 = vmatprep.subr.mxu0 0.0
  %2286 = vmatpush1.msra.mxu0 0.0
  %2287 = vmatprep.subr.mxu0 0.0
  %2288 = vmatpush1.msra.mxu0 0.0
  %2289 = vmatprep.subr.mxu0 0.0
  %2290 = vmatpush1.msra.mxu0 0.0
  %2291 = vmatprep.subr.mxu0 0.0
  %2292 = vmatpush1.msra.mxu0 0.0
  %2293 = vmatprep.subr.mxu0 0.0
  %2294 = vmatpush1.msra.mxu0 0.0
  %2295 = vmatprep.subr.mxu0 0.0
  %2296 = vmatpush1.msra.mxu0 0.0
  %2297 = vmatprep.subr.mxu0 0.0
  %2298 = vmatpush1.msra.mxu0 0.0
  %2299 = vmatprep.subr.mxu0 0.0
  %2300 = vmatpush1.msra.mxu0 0.0
  %2301 = vmatprep.subr.mxu0 0.0
  %2302 = vmatpush1.msra.mxu0 0.0
  %2303 = vmatprep.subr.mxu0 0.0
  %2304 = vmatpush1.msra.mxu0 0.0
  %2305 = vmatprep.subr.mxu0 0.0
  %2306 = vmatpush1.msra.mxu0 0.0
  %2307 = vmatprep.subr.mxu0 0.0
  %2308 = vmatpush1.msra.mxu0 0.0
  %2309 = vmatprep.subr.mxu0 0.0
  %2310 = vmatpush1.msra.mxu0 0.0
  %2311 = vmatprep.subr.mxu0 0.0
  %2312 = vmatpush1.msra.mxu0 0.0
  %2313 = vmatprep.subr.mxu0 0.0
  %2314 = vmatpush1.msra.mxu0 0.0
  %2315 = vmatprep.mubr.f32.mxu0 0.0
  %2316 = vmatmul.mubr.f32.gmra.mrb[0].mxu0 %v227
  %v2317 = vpop.f32.mrb[0].mxu0
  %v2318 = vadd.f32 0.0, %v2317
  %v2319 = vpop.f32.mrb[0].mxu0
  %2320 = vmatprep.mubr.f32.mxu0 0.0
  %2321 = vmatmul.mubr.f32.gmra.mrb[0].mxu0 %v230
  %v2322 = vpop.f32.mrb[0].mxu0
  %v2323 = vadd.f32 0.0, %v2322
  %v2324 = vpop.f32.mrb[0].mxu0
  %2325 = vdwg.mxu0
  %v2327 = vsel %vm457, %v2168, 0
  %v2330 = vsel %vm457, %v2243, 0
  %2332 = vmatprep.subr.mxu0 0.0
  %2333 = vmatpush1.xpose.msra.mxu0 %v2330
  %2334 = vmatprep.subr.mxu0 0.0
  %2335 = vmatpush1.xpose.msra.mxu0 0.0
  %2336 = vmatprep.subr.mxu0 0.0
  %2337 = vmatpush1.xpose.msra.mxu0 0.0
  %2338 = vmatprep.subr.mxu0 0.0
  %2339 = vmatpush1.xpose.msra.mxu0 0.0
  %2340 = vmatprep.subr.mxu0 0.0
  %2341 = vmatpush1.xpose.msra.mxu0 0.0
  %2342 = vmatprep.subr.mxu0 0.0
  %2343 = vmatpush1.xpose.msra.mxu0 0.0
  %2344 = vmatprep.subr.mxu0 0.0
  %2345 = vmatpush1.xpose.msra.mxu0 0.0
  %2346 = vmatprep.subr.mxu0 0.0
  %2347 = vmatpush1.xpose.msra.mxu0 0.0
  %2348 = vmatprep.subr.mxu0 0.0
  %2349 = vmatpush1.xpose.msra.mxu0 0.0
  %2350 = vmatprep.subr.mxu0 0.0
  %2351 = vmatpush1.xpose.msra.mxu0 0.0
  %2352 = vmatprep.subr.mxu0 0.0
  %2353 = vmatpush1.xpose.msra.mxu0 0.0
  %2354 = vmatprep.subr.mxu0 0.0
  %2355 = vmatpush1.xpose.msra.mxu0 0.0
  %2356 = vmatprep.subr.mxu0 0.0
  %2357 = vmatpush1.xpose.msra.mxu0 0.0
  %2358 = vmatprep.subr.mxu0 0.0
  %2359 = vmatpush1.xpose.msra.mxu0 0.0
  %2360 = vmatprep.subr.mxu0 0.0
  %2361 = vmatpush1.xpose.msra.mxu0 0.0
  %2362 = vmatprep.subr.mxu0 0.0
  %2363 = vmatpush1.xpose.msra.mxu0 0.0
  %2364 = vmatprep.subr.mxu0 0.0
  %2365 = vmatpush1.xpose.msra.mxu0 0.0
  %2366 = vmatprep.subr.mxu0 0.0
  %2367 = vmatpush1.xpose.msra.mxu0 0.0
  %2368 = vmatprep.subr.mxu0 0.0
  %2369 = vmatpush1.xpose.msra.mxu0 0.0
  %2370 = vmatprep.subr.mxu0 0.0
  %2371 = vmatpush1.xpose.msra.mxu0 0.0
  %2372 = vmatprep.subr.mxu0 0.0
  %2373 = vmatpush1.xpose.msra.mxu0 0.0
  %2374 = vmatprep.subr.mxu0 0.0
  %2375 = vmatpush1.xpose.msra.mxu0 0.0
  %2376 = vmatprep.subr.mxu0 0.0
  %2377 = vmatpush1.xpose.msra.mxu0 0.0
  %2378 = vmatprep.subr.mxu0 0.0
  %2379 = vmatpush1.xpose.msra.mxu0 0.0
  %2380 = vmatprep.subr.mxu0 0.0
  %2381 = vmatpush1.xpose.msra.mxu0 0.0
  %2382 = vmatprep.subr.mxu0 0.0
  %2383 = vmatpush1.xpose.msra.mxu0 0.0
  %2384 = vmatprep.subr.mxu0 0.0
  %2385 = vmatpush1.xpose.msra.mxu0 0.0
  %2386 = vmatprep.subr.mxu0 0.0
  %2387 = vmatpush1.xpose.msra.mxu0 0.0
  %2388 = vmatprep.subr.mxu0 0.0
  %2389 = vmatpush1.xpose.msra.mxu0 0.0
  %2390 = vmatprep.subr.mxu0 0.0
  %2391 = vmatpush1.xpose.msra.mxu0 0.0
  %2392 = vmatprep.subr.mxu0 0.0
  %2393 = vmatpush1.xpose.msra.mxu0 0.0
  %2394 = vmatprep.subr.mxu0 0.0
  %2395 = vmatpush1.xpose.msra.mxu0 0.0
  %2396 = vmatprep.mubr.f32.mxu0 0.0
  %2397 = vmatmul.mubr.f32.gmra.mrb[0].mxu0 %v2327
  %v2398 = vpop.f32.mrb[0].mxu0
  %v2399 = vadd.f32 %v139, %v2398
  %v2400 = vpop.f32.mrb[0].mxu0
  %2401 = vdwg.mxu0
  %v2403 = vsel %vm457, %v2173, 0
  %v2406 = vsel %vm457, %v2248, 0
  %2408 = vmatprep.subr.mxu0 0.0
  %2409 = vmatpush1.xpose.msra.mxu0 %v2406
  %2410 = vmatprep.subr.mxu0 0.0
  %2411 = vmatpush1.xpose.msra.mxu0 0.0
  %2412 = vmatprep.subr.mxu0 0.0
  %2413 = vmatpush1.xpose.msra.mxu0 0.0
  %2414 = vmatprep.subr.mxu0 0.0
  %2415 = vmatpush1.xpose.msra.mxu0 0.0
  %2416 = vmatprep.subr.mxu0 0.0
  %2417 = vmatpush1.xpose.msra.mxu0 0.0
  %2418 = vmatprep.subr.mxu0 0.0
  %2419 = vmatpush1.xpose.msra.mxu0 0.0
  %2420 = vmatprep.subr.mxu0 0.0
  %2421 = vmatpush1.xpose.msra.mxu0 0.0
  %2422 = vmatprep.subr.mxu0 0.0
  %2423 = vmatpush1.xpose.msra.mxu0 0.0
  %2424 = vmatprep.subr.mxu0 0.0
  %2425 = vmatpush1.xpose.msra.mxu0 0.0
  %2426 = vmatprep.subr.mxu0 0.0
  %2427 = vmatpush1.xpose.msra.mxu0 0.0
  %2428 = vmatprep.subr.mxu0 0.0
  %2429 = vmatpush1.xpose.msra.mxu0 0.0
  %2430 = vmatprep.subr.mxu0 0.0
  %2431 = vmatpush1.xpose.msra.mxu0 0.0
  %2432 = vmatprep.subr.mxu0 0.0
  %2433 = vmatpush1.xpose.msra.mxu0 0.0
  %2434 = vmatprep.subr.mxu0 0.0
  %2435 = vmatpush1.xpose.msra.mxu0 0.0
  %2436 = vmatprep.subr.mxu0 0.0
  %2437 = vmatpush1.xpose.msra.mxu0 0.0
  %2438 = vmatprep.subr.mxu0 0.0
  %2439 = vmatpush1.xpose.msra.mxu0 0.0
  %2440 = vmatprep.subr.mxu0 0.0
  %2441 = vmatpush1.xpose.msra.mxu0 0.0
  %2442 = vmatprep.subr.mxu0 0.0
  %2443 = vmatpush1.xpose.msra.mxu0 0.0
  %2444 = vmatprep.subr.mxu0 0.0
  %2445 = vmatpush1.xpose.msra.mxu0 0.0
  %2446 = vmatprep.subr.mxu0 0.0
  %2447 = vmatpush1.xpose.msra.mxu0 0.0
  %2448 = vmatprep.subr.mxu0 0.0
  %2449 = vmatpush1.xpose.msra.mxu0 0.0
  %2450 = vmatprep.subr.mxu0 0.0
  %2451 = vmatpush1.xpose.msra.mxu0 0.0
  %2452 = vmatprep.subr.mxu0 0.0
  %2453 = vmatpush1.xpose.msra.mxu0 0.0
  %2454 = vmatprep.subr.mxu0 0.0
  %2455 = vmatpush1.xpose.msra.mxu0 0.0
  %2456 = vmatprep.subr.mxu0 0.0
  %2457 = vmatpush1.xpose.msra.mxu0 0.0
  %2458 = vmatprep.subr.mxu0 0.0
  %2459 = vmatpush1.xpose.msra.mxu0 0.0
  %2460 = vmatprep.subr.mxu0 0.0
  %2461 = vmatpush1.xpose.msra.mxu0 0.0
  %2462 = vmatprep.subr.mxu0 0.0
  %2463 = vmatpush1.xpose.msra.mxu0 0.0
  %2464 = vmatprep.subr.mxu0 0.0
  %2465 = vmatpush1.xpose.msra.mxu0 0.0
  %2466 = vmatprep.subr.mxu0 0.0
  %2467 = vmatpush1.xpose.msra.mxu0 0.0
  %2468 = vmatprep.subr.mxu0 0.0
  %2469 = vmatpush1.xpose.msra.mxu0 0.0
  %2470 = vmatprep.subr.mxu0 0.0
  %2471 = vmatpush1.xpose.msra.mxu0 0.0
  %2472 = vmatprep.mubr.f32.mxu0 0.0
  %2473 = vmatmul.mubr.f32.gmra.mrb[0].mxu0 %v2403
  %v2474 = vpop.f32.mrb[0].mxu0
  %v2475 = vadd.f32 %v143, %v2474
  %v2476 = vpop.f32.mrb[0].mxu0
  %2477 = vdwg.mxu0
  %v2478 = vmul.f32 %v2399, 1.442695
  %v2479 = vpow.pop %v2478
  %v2480 = vmul.f32 %v2475, 1.442695
  %v2481 = vpow.pop %v2480
  %v2482 = vsel %vm457, %v2479, 0.0
  %2483 = vadd.xlane.f32.xlu0 %v2482
  %v2484 = vpop.xlane.xlu0 %2483
  %v2485 = vsel %vm457, %v2481, 0.0
  %2486 = vadd.xlane.f32.xlu0 %v2485
  %v2487 = vpop.xlane.xlu0 %2486
  %v2488 = vrcp.pop %v2484
  %v2489 = vmul.f32 %v2479, %v2488
  %v2490 = vrcp.pop %v2487
  %v2491 = vmul.f32 %v2481, %v2490
  %v2493 = vsel %vm457, %v2489, 0
  %2495 = vmatprep.subr.mxu0 0.0
  %2496 = vmatpush1.msra.mxu0 %v2318
  %2497 = vmatprep.subr.mxu0 0.0
  %2498 = vmatpush1.msra.mxu0 0.0
  %2499 = vmatprep.subr.mxu0 0.0
  %2500 = vmatpush1.msra.mxu0 0.0
  %2501 = vmatprep.subr.mxu0 0.0
  %2502 = vmatpush1.msra.mxu0 0.0
  %2503 = vmatprep.subr.mxu0 0.0
  %2504 = vmatpush1.msra.mxu0 0.0
  %2505 = vmatprep.subr.mxu0 0.0
  %2506 = vmatpush1.msra.mxu0 0.0
  %2507 = vmatprep.subr.mxu0 0.0
  %2508 = vmatpush1.msra.mxu0 0.0
  %2509 = vmatprep.subr.mxu0 0.0
  %2510 = vmatpush1.msra.mxu0 0.0
  %2511 = vmatprep.subr.mxu0 0.0
  %2512 = vmatpush1.msra.mxu0 0.0
  %2513 = vmatprep.subr.mxu0 0.0
  %2514 = vmatpush1.msra.mxu0 0.0
  %2515 = vmatprep.subr.mxu0 0.0
  %2516 = vmatpush1.msra.mxu0 0.0
  %2517 = vmatprep.subr.mxu0 0.0
  %2518 = vmatpush1.msra.mxu0 0.0
  %2519 = vmatprep.subr.mxu0 0.0
  %2520 = vmatpush1.msra.mxu0 0.0
  %2521 = vmatprep.subr.mxu0 0.0
  %2522 = vmatpush1.msra.mxu0 0.0
  %2523 = vmatprep.subr.mxu0 0.0
  %2524 = vmatpush1.msra.mxu0 0.0
  %2525 = vmatprep.subr.mxu0 0.0
  %2526 = vmatpush1.msra.mxu0 0.0
  %2527 = vmatprep.subr.mxu0 0.0
  %2528 = vmatpush1.msra.mxu0 0.0
  %2529 = vmatprep.subr.mxu0 0.0
  %2530 = vmatpush1.msra.mxu0 0.0
  %2531 = vmatprep.subr.mxu0 0.0
  %2532 = vmatpush1.msra.mxu0 0.0
  %2533 = vmatprep.subr.mxu0 0.0
  %2534 = vmatpush1.msra.mxu0 0.0
  %2535 = vmatprep.subr.mxu0 0.0
  %2536 = vmatpush1.msra.mxu0 0.0
  %2537 = vmatprep.subr.mxu0 0.0
  %2538 = vmatpush1.msra.mxu0 0.0
  %2539 = vmatprep.subr.mxu0 0.0
  %2540 = vmatpush1.msra.mxu0 0.0
  %2541 = vmatprep.subr.mxu0 0.0
  %2542 = vmatpush1.msra.mxu0 0.0
  %2543 = vmatprep.subr.mxu0 0.0
  %2544 = vmatpush1.msra.mxu0 0.0
  %2545 = vmatprep.subr.mxu0 0.0
  %2546 = vmatpush1.msra.mxu0 0.0
  %2547 = vmatprep.subr.mxu0 0.0
  %2548 = vmatpush1.msra.mxu0 0.0
  %2549 = vmatprep.subr.mxu0 0.0
  %2550 = vmatpush1.msra.mxu0 0.0
  %2551 = vmatprep.subr.mxu0 0.0
  %2552 = vmatpush1.msra.mxu0 0.0
  %2553 = vmatprep.subr.mxu0 0.0
  %2554 = vmatpush1.msra.mxu0 0.0
  %2555 = vmatprep.subr.mxu0 0.0
  %2556 = vmatpush1.msra.mxu0 0.0
  %2557 = vmatprep.subr.mxu0 0.0
  %2558 = vmatpush1.msra.mxu0 0.0
  %2559 = vmatprep.mubr.f32.mxu0 0.0
  %2560 = vmatmul.mubr.f32.gmra.mrb[0].mxu0 %v2493
  %v2561 = vpop.f32.mrb[0].mxu0
  %v2562 = vadd.f32 0.0, %v2561
  %v2563 = vpop.f32.mrb[0].mxu0
  %2564 = vdwg.mxu0
  %v2566 = vsel %vm457, %v2491, 0
  %2568 = vmatprep.subr.mxu0 0.0
  %2569 = vmatpush1.msra.mxu0 %v2323
  %2570 = vmatprep.subr.mxu0 0.0
  %2571 = vmatpush1.msra.mxu0 0.0
  %2572 = vmatprep.subr.mxu0 0.0
  %2573 = vmatpush1.msra.mxu0 0.0
  %2574 = vmatprep.subr.mxu0 0.0
  %2575 = vmatpush1.msra.mxu0 0.0
  %2576 = vmatprep.subr.mxu0 0.0
  %2577 = vmatpush1.msra.mxu0 0.0
  %2578 = vmatprep.subr.mxu0 0.0
  %2579 = vmatpush1.msra.mxu0 0.0
  %2580 = vmatprep.subr.mxu0 0.0
  %2581 = vmatpush1.msra.mxu0 0.0
  %2582 = vmatprep.subr.mxu0 0.0
  %2583 = vmatpush1.msra.mxu0 0.0
  %2584 = vmatprep.subr.mxu0 0.0
  %2585 = vmatpush1.msra.mxu0 0.0
  %2586 = vmatprep.subr.mxu0 0.0
  %2587 = vmatpush1.msra.mxu0 0.0
  %2588 = vmatprep.subr.mxu0 0.0
  %2589 = vmatpush1.msra.mxu0 0.0
  %2590 = vmatprep.subr.mxu0 0.0
  %2591 = vmatpush1.msra.mxu0 0.0
  %2592 = vmatprep.subr.mxu0 0.0
  %2593 = vmatpush1.msra.mxu0 0.0
  %2594 = vmatprep.subr.mxu0 0.0
  %2595 = vmatpush1.msra.mxu0 0.0
  %2596 = vmatprep.subr.mxu0 0.0
  %2597 = vmatpush1.msra.mxu0 0.0
  %2598 = vmatprep.subr.mxu0 0.0
  %2599 = vmatpush1.msra.mxu0 0.0
  %2600 = vmatprep.subr.mxu0 0.0
  %2601 = vmatpush1.msra.mxu0 0.0
  %2602 = vmatprep.subr.mxu0 0.0
  %2603 = vmatpush1.msra.mxu0 0.0
  %2604 = vmatprep.subr.mxu0 0.0
  %2605 = vmatpush1.msra.mxu0 0.0
  %2606 = vmatprep.subr.mxu0 0.0
  %2607 = vmatpush1.msra.mxu0 0.0
  %2608 = vmatprep.subr.mxu0 0.0
  %2609 = vmatpush1.msra.mxu0 0.0
  %2610 = vmatprep.subr.mxu0 0.0
  %2611 = vmatpush1.msra.mxu0 0.0
  %2612 = vmatprep.subr.mxu0 0.0
  %2613 = vmatpush1.msra.mxu0 0.0
  %2614 = vmatprep.subr.mxu0 0.0
  %2615 = vmatpush1.msra.mxu0 0.0
  %2616 = vmatprep.subr.mxu0 0.0
  %2617 = vmatpush1.msra.mxu0 0.0
  %2618 = vmatprep.subr.mxu0 0.0
  %2619 = vmatpush1.msra.mxu0 0.0
  %2620 = vmatprep.subr.mxu0 0.0
  %2621 = vmatpush1.msra.mxu0 0.0
  %2622 = vmatprep.subr.mxu0 0.0
  %2623 = vmatpush1.msra.mxu0 0.0
  %2624 = vmatprep.subr.mxu0 0.0
  %2625 = vmatpush1.msra.mxu0 0.0
  %2626 = vmatprep.subr.mxu0 0.0
  %2627 = vmatpush1.msra.mxu0 0.0
  %2628 = vmatprep.subr.mxu0 0.0
  %2629 = vmatpush1.msra.mxu0 0.0
  %2630 = vmatprep.subr.mxu0 0.0
  %2631 = vmatpush1.msra.mxu0 0.0
  %2632 = vmatprep.mubr.f32.mxu0 0.0
  %2633 = vmatmul.mubr.f32.gmra.mrb[0].mxu0 %v2566
  %v2634 = vpop.f32.mrb[0].mxu0
  %v2635 = vadd.f32 0.0, %v2634
  %v2636 = vpop.f32.mrb[0].mxu0
  %2637 = vdwg.mxu0
  %v2639 = vsel %vm457, %v2562, 0
  %v2642 = vsel %vm457, %v2635, 0
  %2644 = vmatprep.subr.mxu0 0.0
  %2645 = vmatpush1.msra.mxu0 %v197
  %2646 = vmatprep.subr.mxu0 0.0
  %2647 = vmatpush1.msra.mxu0 0.0
  %2648 = vmatprep.subr.mxu0 0.0
  %2649 = vmatpush1.msra.mxu0 0.0
  %2650 = vmatprep.subr.mxu0 0.0
  %2651 = vmatpush1.msra.mxu0 0.0
  %2652 = vmatprep.subr.mxu0 0.0
  %2653 = vmatpush1.msra.mxu0 0.0
  %2654 = vmatprep.subr.mxu0 0.0
  %2655 = vmatpush1.msra.mxu0 0.0
  %2656 = vmatprep.subr.mxu0 0.0
  %2657 = vmatpush1.msra.mxu0 0.0
  %2658 = vmatprep.subr.mxu0 0.0
  %2659 = vmatpush1.msra.mxu0 0.0
  %2660 = vmatprep.subr.mxu0 0.0
  %2661 = vmatpush1.msra.mxu0 0.0
  %2662 = vmatprep.subr.mxu0 0.0
  %2663 = vmatpush1.msra.mxu0 0.0
  %2664 = vmatprep.subr.mxu0 0.0
  %2665 = vmatpush1.msra.mxu0 0.0
  %2666 = vmatprep.subr.mxu0 0.0
  %2667 = vmatpush1.msra.mxu0 0.0
  %2668 = vmatprep.subr.mxu0 0.0
  %2669 = vmatpush1.msra.mxu0 0.0
  %2670 = vmatprep.subr.mxu0 0.0
  %2671 = vmatpush1.msra.mxu0 0.0
  %2672 = vmatprep.subr.mxu0 0.0
  %2673 = vmatpush1.msra.mxu0 0.0
  %2674 = vmatprep.subr.mxu0 0.0
  %2675 = vmatpush1.msra.mxu0 0.0
  %2676 = vmatprep.subr.mxu0 0.0
  %2677 = vmatpush1.msra.mxu0 0.0
  %2678 = vmatprep.subr.mxu0 0.0
  %2679 = vmatpush1.msra.mxu0 0.0
  %2680 = vmatprep.subr.mxu0 0.0
  %2681 = vmatpush1.msra.mxu0 0.0
  %2682 = vmatprep.subr.mxu0 0.0
  %2683 = vmatpush1.msra.mxu0 0.0
  %2684 = vmatprep.subr.mxu0 0.0
  %2685 = vmatpush1.msra.mxu0 0.0
  %2686 = vmatprep.subr.mxu0 0.0
  %2687 = vmatpush1.msra.mxu0 0.0
  %2688 = vmatprep.subr.mxu0 0.0
  %2689 = vmatpush1.msra.mxu0 0.0
  %2690 = vmatprep.subr.mxu0 0.0
  %2691 = vmatpush1.msra.mxu0 0.0
  %2692 = vmatprep.subr.mxu0 0.0
  %2693 = vmatpush1.msra.mxu0 0.0
  %2694 = vmatprep.subr.mxu0 0.0
  %2695 = vmatpush1.msra.mxu0 0.0
  %2696 = vmatprep.subr.mxu0 0.0
  %2697 = vmatpush1.msra.mxu0 0.0
  %2698 = vmatprep.subr.mxu0 0.0
  %2699 = vmatpush1.msra.mxu0 0.0
  %2700 = vmatprep.subr.mxu0 0.0
  %2701 = vmatpush1.msra.mxu0 0.0
  %2702 = vmatprep.subr.mxu0 0.0
  %2703 = vmatpush1.msra.mxu0 0.0
  %2704 = vmatprep.subr.mxu0 0.0
  %2705 = vmatpush1.msra.mxu0 0.0
  %2706 = vmatprep.subr.mxu0 0.0
  %2707 = vmatpush1.msra.mxu0 0.0
  %2708 = vmatprep.mubr.f32.mxu0 0.0
  %2709 = vmatmul.mubr.f32.gmra.mrb[0].mxu0 %v2639
  %v2710 = vpop.f32.mrb[0].mxu0
  %v2711 = vadd.f32 0.0, %v2710
  %v2712 = vpop.f32.mrb[0].mxu0
  %2713 = vmatprep.mubr.f32.mxu0 0.0
  %2714 = vmatmul.mubr.f32.gmra.mrb[0].mxu0 %v2642
  %v2715 = vpop.f32.mrb[0].mxu0
  %v2716 = vadd.f32 0.0, %v2715
  %v2717 = vpop.f32.mrb[0].mxu0
  %2718 = vdwg.mxu0
  %v2719 = vadd.f32 %v2095, %v2711
  %v2720 = vadd.f32 %v2096, %v2716
  %v2721 = vlaneseq
  %v2722 = vshrl.u32 %v2721, 7
  %v2723 = vsub.s32 0, %v2722
  %v2724 = vrot.slane %v202, %v2723
  %v2725 = vadd.f32 %v2719, %v2724
  %v2726 = vadd.f32 %v2720, %v2724
  %v2727 = vadd.f32 %v2725, %v124
  %v2728 = vadd.f32 %v2726, %v129
  %v2729 = vsel %vm225, %v2727, 0.0
  %2730 = vadd.xlane.f32.xlu0 %v2729
  %v2731 = vpop.xlane.xlu0 %2730
  %v2732 = vsel %vm225, %v2728, 0.0
  %2733 = vadd.xlane.f32.xlu0 %v2732
  %v2734 = vpop.xlane.xlu0 %2733
  %v2735 = vrcp.pop 32.0
  %v2736 = vmul.f32 %v2731, %v2735
  %v2737 = vmul.f32 %v2734, %v2735
  %v2738 = vsub.f32 %v2727, %v2736
  %v2739 = vsub.f32 %v2728, %v2737
  %v2740 = vmul.f32 %v2738, %v2738
  %v2741 = vmul.f32 %v2739, %v2739
  %v2742 = vsel %vm225, %v2740, 0.0
  %2743 = vadd.xlane.f32.xlu0 %v2742
  %v2744 = vpop.xlane.xlu0 %2743
  %v2745 = vsel %vm225, %v2741, 0.0
  %2746 = vadd.xlane.f32.xlu0 %v2745
  %v2747 = vpop.xlane.xlu0 %2746
  %v2748 = vmul.f32 %v2744, %v2735
  %v2749 = vmul.f32 %v2747, %v2735
  %v2750 = vadd.f32 %v2748, 1e-12
  %v2751 = vadd.f32 %v2749, 1e-12
  %v2752 = vrsqrt.pop %v2750
  %v2753 = vrsqrt.pop %v2751
  %v2754 = vmul.f32 %v2738, %v2752
  %v2755 = vmul.f32 %v2739, %v2753
  %v2756 = vlaneseq
  %v2757 = vshrl.u32 %v2756, 7
  %v2758 = vsub.s32 0, %v2757
  %v2759 = vrot.slane %v203, %v2758
  %v2760 = vmul.f32 %v2754, %v2759
  %v2761 = vmul.f32 %v2755, %v2759
  %v2762 = vlaneseq
  %v2763 = vshrl.u32 %v2762, 7
  %v2764 = vsub.s32 0, %v2763
  %v2765 = vrot.slane %v204, %v2764
  %v2766 = vadd.f32 %v2760, %v2765
  %v2767 = vadd.f32 %v2761, %v2765
  %v2768 = vlaneseq
  %v2769 = vshrl.u32 %v2768, 7
  %v2770 = vsub.s32 0, %v2769
  %v2771 = vrot.slane %v209, %v2770
  %v2773 = vsel %vm225, %v2766, 0
  %v2776 = vsel %vm225, %v2767, 0
  %2778 = vmatprep.subr.mxu0 0.0
  %2779 = vmatpush1.msra.mxu0 %v205
  %2780 = vmatprep.subr.mxu0 0.0
  %2781 = vmatpush1.msra.mxu0 %v206
  %2782 = vmatprep.subr.mxu0 0.0
  %2783 = vmatpush1.msra.mxu0 %v207
  %2784 = vmatprep.subr.mxu0 0.0
  %2785 = vmatpush1.msra.mxu0 %v208
  %2786 = vmatprep.subr.mxu0 0.0
  %2787 = vmatpush1.msra.mxu0 0.0
  %2788 = vmatprep.subr.mxu0 0.0
  %2789 = vmatpush1.msra.mxu0 0.0
  %2790 = vmatprep.subr.mxu0 0.0
  %2791 = vmatpush1.msra.mxu0 0.0
  %2792 = vmatprep.subr.mxu0 0.0
  %2793 = vmatpush1.msra.mxu0 0.0
  %2794 = vmatprep.subr.mxu0 0.0
  %2795 = vmatpush1.msra.mxu0 0.0
  %2796 = vmatprep.subr.mxu0 0.0
  %2797 = vmatpush1.msra.mxu0 0.0
  %2798 = vmatprep.subr.mxu0 0.0
  %2799 = vmatpush1.msra.mxu0 0.0
  %2800 = vmatprep.subr.mxu0 0.0
  %2801 = vmatpush1.msra.mxu0 0.0
  %2802 = vmatprep.subr.mxu0 0.0
  %2803 = vmatpush1.msra.mxu0 0.0
  %2804 = vmatprep.subr.mxu0 0.0
  %2805 = vmatpush1.msra.mxu0 0.0
  %2806 = vmatprep.subr.mxu0 0.0
  %2807 = vmatpush1.msra.mxu0 0.0
  %2808 = vmatprep.subr.mxu0 0.0
  %2809 = vmatpush1.msra.mxu0 0.0
  %2810 = vmatprep.subr.mxu0 0.0
  %2811 = vmatpush1.msra.mxu0 0.0
  %2812 = vmatprep.subr.mxu0 0.0
  %2813 = vmatpush1.msra.mxu0 0.0
  %2814 = vmatprep.subr.mxu0 0.0
  %2815 = vmatpush1.msra.mxu0 0.0
  %2816 = vmatprep.subr.mxu0 0.0
  %2817 = vmatpush1.msra.mxu0 0.0
  %2818 = vmatprep.subr.mxu0 0.0
  %2819 = vmatpush1.msra.mxu0 0.0
  %2820 = vmatprep.subr.mxu0 0.0
  %2821 = vmatpush1.msra.mxu0 0.0
  %2822 = vmatprep.subr.mxu0 0.0
  %2823 = vmatpush1.msra.mxu0 0.0
  %2824 = vmatprep.subr.mxu0 0.0
  %2825 = vmatpush1.msra.mxu0 0.0
  %2826 = vmatprep.subr.mxu0 0.0
  %2827 = vmatpush1.msra.mxu0 0.0
  %2828 = vmatprep.subr.mxu0 0.0
  %2829 = vmatpush1.msra.mxu0 0.0
  %2830 = vmatprep.subr.mxu0 0.0
  %2831 = vmatpush1.msra.mxu0 0.0
  %2832 = vmatprep.subr.mxu0 0.0
  %2833 = vmatpush1.msra.mxu0 0.0
  %2834 = vmatprep.subr.mxu0 0.0
  %2835 = vmatpush1.msra.mxu0 0.0
  %2836 = vmatprep.subr.mxu0 0.0
  %2837 = vmatpush1.msra.mxu0 0.0
  %2838 = vmatprep.subr.mxu0 0.0
  %2839 = vmatpush1.msra.mxu0 0.0
  %2840 = vmatprep.subr.mxu0 0.0
  %2841 = vmatpush1.msra.mxu0 0.0
  %2842 = vmatprep.mubr.f32.mxu0 0.0
  %2843 = vmatmul.mubr.f32.gmra.mrb[0].mxu0 %v2773
  %v2844 = vpop.f32.mrb[0].mxu0
  %v2845 = vadd.f32 %v2771, %v2844
  %v2846 = vpop.f32.mrb[0].mxu0
  %2847 = vmatprep.mubr.f32.mxu0 0.0
  %2848 = vmatmul.mubr.f32.gmra.mrb[0].mxu0 %v2776
  %v2849 = vpop.f32.mrb[0].mxu0
  %v2850 = vadd.f32 %v2771, %v2849
  %v2851 = vpop.f32.mrb[0].mxu0
  %2852 = vdwg.mxu0
  %v2853 = vmul.f32 %v2845, %v2845
  %v2854 = vmul.f32 %v2850, %v2850
  %v2855 = vmul.f32 %v2845, %v2853
  %v2856 = vmul.f32 %v2850, %v2854
  %v2857 = vmul.f32 %v2855, 0.044715
  %v2858 = vmul.f32 %v2856, 0.044715
  %v2859 = vadd.f32 %v2845, %v2857
  %v2860 = vadd.f32 %v2850, %v2858
  %v2861 = vmul.f32 %v2859, 0.7978846
  %v2862 = vmul.f32 %v2860, 0.7978846
  %v2863 = vtanh.pop %v2861
  %v2864 = vtanh.pop %v2862
  %v2865 = vadd.f32 %v2863, 1.0
  %v2866 = vadd.f32 %v2864, 1.0
  %v2867 = vmul.f32 %v2865, 0.5
  %v2868 = vmul.f32 %v2866, 0.5
  %v2869 = vmul.f32 %v2845, %v2867
  %v2870 = vmul.f32 %v2850, %v2868
  %v2871 = vlaneseq
  %v2872 = vshrl.u32 %v2871, 7
  %v2873 = vsub.s32 0, %v2872
  %v2874 = vrot.slane %v218, %v2873
  %vm2875 = vcmask 523264
  %v2877 = vsel %vm2875, %v2869, 0
  %v2880 = vsel %vm2875, %v2870, 0
  %2882 = vmatprep.subr.mxu0 0.0
  %2883 = vmatpush1.msra.mxu0 %v210
  %2884 = vmatprep.subr.mxu0 0.0
  %2885 = vmatpush1.msra.mxu0 %v211
  %2886 = vmatprep.subr.mxu0 0.0
  %2887 = vmatpush1.msra.mxu0 %v212
  %2888 = vmatprep.subr.mxu0 0.0
  %2889 = vmatpush1.msra.mxu0 %v213
  %2890 = vmatprep.subr.mxu0 0.0
  %2891 = vmatpush1.msra.mxu0 %v214
  %2892 = vmatprep.subr.mxu0 0.0
  %2893 = vmatpush1.msra.mxu0 %v215
  %2894 = vmatprep.subr.mxu0 0.0
  %2895 = vmatpush1.msra.mxu0 %v216
  %2896 = vmatprep.subr.mxu0 0.0
  %2897 = vmatpush1.msra.mxu0 %v217
  %2898 = vmatprep.subr.mxu0 0.0
  %2899 = vmatpush1.msra.mxu0 0.0
  %2900 = vmatprep.subr.mxu0 0.0
  %2901 = vmatpush1.msra.mxu0 0.0
  %2902 = vmatprep.subr.mxu0 0.0
  %2903 = vmatpush1.msra.mxu0 0.0
  %2904 = vmatprep.subr.mxu0 0.0
  %2905 = vmatpush1.msra.mxu0 0.0
  %2906 = vmatprep.subr.mxu0 0.0
  %2907 = vmatpush1.msra.mxu0 0.0
  %2908 = vmatprep.subr.mxu0 0.0
  %2909 = vmatpush1.msra.mxu0 0.0
  %2910 = vmatprep.subr.mxu0 0.0
  %2911 = vmatpush1.msra.mxu0 0.0
  %2912 = vmatprep.subr.mxu0 0.0
  %2913 = vmatpush1.msra.mxu0 0.0
  %2914 = vmatprep.subr.mxu0 0.0
  %2915 = vmatpush1.msra.mxu0 0.0
  %2916 = vmatprep.subr.mxu0 0.0
  %2917 = vmatpush1.msra.mxu0 0.0
  %2918 = vmatprep.subr.mxu0 0.0
  %2919 = vmatpush1.msra.mxu0 0.0
  %2920 = vmatprep.subr.mxu0 0.0
  %2921 = vmatpush1.msra.mxu0 0.0
  %2922 = vmatprep.subr.mxu0 0.0
  %2923 = vmatpush1.msra.mxu0 0.0
  %2924 = vmatprep.subr.mxu0 0.0
  %2925 = vmatpush1.msra.mxu0 0.0
  %2926 = vmatprep.subr.mxu0 0.0
  %2927 = vmatpush1.msra.mxu0 0.0
  %2928 = vmatprep.subr.mxu0 0.0
  %2929 = vmatpush1.msra.mxu0 0.0
  %2930 = vmatprep.subr.mxu0 0.0
  %2931 = vmatpush1.msra.mxu0 0.0
  %2932 = vmatprep.subr.mxu0 0.0
  %2933 = vmatpush1.msra.mxu0 0.0
  %2934 = vmatprep.subr.mxu0 0.0
  %2935 = vmatpush1.msra.mxu0 0.0
  %2936 = vmatprep.subr.mxu0 0.0
  %2937 = vmatpush1.msra.mxu0 0.0
  %2938 = vmatprep.subr.mxu0 0.0
  %2939 = vmatpush1.msra.mxu0 0.0
  %2940 = vmatprep.subr.mxu0 0.0
  %2941 = vmatpush1.msra.mxu0 0.0
  %2942 = vmatprep.subr.mxu0 0.0
  %2943 = vmatpush1.msra.mxu0 0.0
  %2944 = vmatprep.subr.mxu0 0.0
  %2945 = vmatpush1.msra.mxu0 0.0
  %2946 = vmatprep.mubr.f32.mxu0 0.0
  %2947 = vmatmul.mubr.f32.gmra.mrb[0].mxu0 %v2877
  %v2948 = vpop.f32.mrb[0].mxu0
  %v2949 = vadd.f32 %v2874, %v2948
  %v2950 = vpop.f32.mrb[0].mxu0
  %2951 = vmatprep.mubr.f32.mxu0 0.0
  %2952 = vmatmul.mubr.f32.gmra.mrb[0].mxu0 %v2880
  %v2953 = vpop.f32.mrb[0].mxu0
  %v2954 = vadd.f32 %v2874, %v2953
  %v2955 = vpop.f32.mrb[0].mxu0
  %2956 = vdwg.mxu0
  %v2957 = vadd.f32 %v2949, %v2766
  %v2958 = vadd.f32 %v2954, %v2767
  %v2959 = vsel %vm225, %v2957, 0.0
  %2960 = vadd.xlane.f32.xlu0 %v2959
  %v2961 = vpop.xlane.xlu0 %2960
  %v2962 = vsel %vm225, %v2958, 0.0
  %2963 = vadd.xlane.f32.xlu0 %v2962
  %v2964 = vpop.xlane.xlu0 %2963
  %v2965 = vmul.f32 %v2961, %v2735
  %v2966 = vmul.f32 %v2964, %v2735
  %v2967 = vsub.f32 %v2957, %v2965
  %v2968 = vsub.f32 %v2958, %v2966
  %v2969 = vmul.f32 %v2967, %v2967
  %v2970 = vmul.f32 %v2968, %v2968
  %v2971 = vsel %vm225, %v2969, 0.0
  %2972 = vadd.xlane.f32.xlu0 %v2971
  %v2973 = vpop.xlane.xlu0 %2972
  %v2974 = vsel %vm225, %v2970, 0.0
  %2975 = vadd.xlane.f32.xlu0 %v2974
  %v2976 = vpop.xlane.xlu0 %2975
  %v2977 = vmul.f32 %v2973, %v2735
  %v2978 = vmul.f32 %v2976, %v2735
  %v2979 = vadd.f32 %v2977, 1e-12
  %v2980 = vadd.f32 %v2978, 1e-12
  %v2981 = vrsqrt.pop %v2979
  %v2982 = vrsqrt.pop %v2980
  %v2983 = vmul.f32 %v2967, %v2981
  %v2984 = vmul.f32 %v2968, %v2982
  %v2985 = vlaneseq
  %v2986 = vshrl.u32 %v2985, 7
  %v2987 = vsub.s32 0, %v2986
  %v2988 = vrot.slane %v219, %v2987
  %v2989 = vmul.f32 %v2983, %v2988
  %v2990 = vmul.f32 %v2984, %v2988
  %v2991 = vlaneseq
  %v2992 = vshrl.u32 %v2991, 7
  %v2993 = vsub.s32 0, %v2992
  %v2994 = vrot.slane %v220, %v2993
  %v2995 = vadd.f32 %v2989, %v2994
  %v2996 = vadd.f32 %v2990, %v2994
  %v2998 = vsel %vm225, %v2995, 0
  %v3001 = vsel %vm225, %v2996, 0
  %3003 = vmatprep.subr.mxu0 0.0
  %3004 = vmatpush1.msra.mxu0 %v146
  %3005 = vmatprep.subr.mxu0 0.0
  %3006 = vmatpush1.msra.mxu0 %v147
  %3007 = vmatprep.subr.mxu0 0.0
  %3008 = vmatpush1.msra.mxu0 %v148
  %3009 = vmatprep.subr.mxu0 0.0
  %3010 = vmatpush1.msra.mxu0 %v149
  %3011 = vmatprep.subr.mxu0 0.0
  %3012 = vmatpush1.msra.mxu0 0.0
  %3013 = vmatprep.subr.mxu0 0.0
  %3014 = vmatpush1.msra.mxu0 0.0
  %3015 = vmatprep.subr.mxu0 0.0
  %3016 = vmatpush1.msra.mxu0 0.0
  %3017 = vmatprep.subr.mxu0 0.0
  %3018 = vmatpush1.msra.mxu0 0.0
  %3019 = vmatprep.subr.mxu0 0.0
  %3020 = vmatpush1.msra.mxu0 0.0
  %3021 = vmatprep.subr.mxu0 0.0
  %3022 = vmatpush1.msra.mxu0 0.0
  %3023 = vmatprep.subr.mxu0 0.0
  %3024 = vmatpush1.msra.mxu0 0.0
  %3025 = vmatprep.subr.mxu0 0.0
  %3026 = vmatpush1.msra.mxu0 0.0
  %3027 = vmatprep.subr.mxu0 0.0
  %3028 = vmatpush1.msra.mxu0 0.0
  %3029 = vmatprep.subr.mxu0 0.0
  %3030 = vmatpush1.msra.mxu0 0.0
  %3031 = vmatprep.subr.mxu0 0.0
  %3032 = vmatpush1.msra.mxu0 0.0
  %3033 = vmatprep.subr.mxu0 0.0
  %3034 = vmatpush1.msra.mxu0 0.0
  %3035 = vmatprep.subr.mxu0 0.0
  %3036 = vmatpush1.msra.mxu0 0.0
  %3037 = vmatprep.subr.mxu0 0.0
  %3038 = vmatpush1.msra.mxu0 0.0
  %3039 = vmatprep.subr.mxu0 0.0
  %3040 = vmatpush1.msra.mxu0 0.0
  %3041 = vmatprep.subr.mxu0 0.0
  %3042 = vmatpush1.msra.mxu0 0.0
  %3043 = vmatprep.subr.mxu0 0.0
  %3044 = vmatpush1.msra.mxu0 0.0
  %3045 = vmatprep.subr.mxu0 0.0
  %3046 = vmatpush1.msra.mxu0 0.0
  %3047 = vmatprep.subr.mxu0 0.0
  %3048 = vmatpush1.msra.mxu0 0.0
  %3049 = vmatprep.subr.mxu0 0.0
  %3050 = vmatpush1.msra.mxu0 0.0
  %3051 = vmatprep.subr.mxu0 0.0
  %3052 = vmatpush1.msra.mxu0 0.0
  %3053 = vmatprep.subr.mxu0 0.0
  %3054 = vmatpush1.msra.mxu0 0.0
  %3055 = vmatprep.subr.mxu0 0.0
  %3056 = vmatpush1.msra.mxu0 0.0
  %3057 = vmatprep.subr.mxu0 0.0
  %3058 = vmatpush1.msra.mxu0 0.0
  %3059 = vmatprep.subr.mxu0 0.0
  %3060 = vmatpush1.msra.mxu0 0.0
  %3061 = vmatprep.subr.mxu0 0.0
  %3062 = vmatpush1.msra.mxu0 0.0
  %3063 = vmatprep.subr.mxu0 0.0
  %3064 = vmatpush1.msra.mxu0 0.0
  %3065 = vmatprep.subr.mxu0 0.0
  %3066 = vmatpush1.msra.mxu0 0.0
  %3067 = vmatprep.mubr.f32.mxu0 0.0
  %3068 = vmatmul.mubr.f32.gmra.mrb[0].mxu0 %v2998
  %v3069 = vpop.f32.mrb[0].mxu0
  %v3070 = vadd.f32 %v224, %v3069
  %v3071 = vpop.f32.mrb[0].mxu0
  %3072 = vmatprep.mubr.f32.mxu0 0.0
  %3073 = vmatmul.mubr.f32.gmra.mrb[0].mxu0 %v3001
  %v3074 = vpop.f32.mrb[0].mxu0
  %v3075 = vadd.f32 %v224, %v3074
  %v3076 = vpop.f32.mrb[0].mxu0
  %3077 = vdwg.mxu0
  %3078 = vmatprep.subr.mxu0 0.0
  %3079 = vmatpush1.msra.mxu0 %v162
  %3080 = vmatprep.subr.mxu0 0.0
  %3081 = vmatpush1.msra.mxu0 %v163
  %3082 = vmatprep.subr.mxu0 0.0
  %3083 = vmatpush1.msra.mxu0 %v164
  %3084 = vmatprep.subr.mxu0 0.0
  %3085 = vmatpush1.msra.mxu0 %v165
  %3086 = vmatprep.subr.mxu0 0.0
  %3087 = vmatpush1.msra.mxu0 0.0
  %3088 = vmatprep.subr.mxu0 0.0
  %3089 = vmatpush1.msra.mxu0 0.0
  %3090 = vmatprep.subr.mxu0 0.0
  %3091 = vmatpush1.msra.mxu0 0.0
  %3092 = vmatprep.subr.mxu0 0.0
  %3093 = vmatpush1.msra.mxu0 0.0
  %3094 = vmatprep.subr.mxu0 0.0
  %3095 = vmatpush1.msra.mxu0 0.0
  %3096 = vmatprep.subr.mxu0 0.0
  %3097 = vmatpush1.msra.mxu0 0.0
  %3098 = vmatprep.subr.mxu0 0.0
  %3099 = vmatpush1.msra.mxu0 0.0
  %3100 = vmatprep.subr.mxu0 0.0
  %3101 = vmatpush1.msra.mxu0 0.0
  %3102 = vmatprep.subr.mxu0 0.0
  %3103 = vmatpush1.msra.mxu0 0.0
  %3104 = vmatprep.subr.mxu0 0.0
  %3105 = vmatpush1.msra.mxu0 0.0
  %3106 = vmatprep.subr.mxu0 0.0
  %3107 = vmatpush1.msra.mxu0 0.0
  %3108 = vmatprep.subr.mxu0 0.0
  %3109 = vmatpush1.msra.mxu0 0.0
  %3110 = vmatprep.subr.mxu0 0.0
  %3111 = vmatpush1.msra.mxu0 0.0
  %3112 = vmatprep.subr.mxu0 0.0
  %3113 = vmatpush1.msra.mxu0 0.0
  %3114 = vmatprep.subr.mxu0 0.0
  %3115 = vmatpush1.msra.mxu0 0.0
  %3116 = vmatprep.subr.mxu0 0.0
  %3117 = vmatpush1.msra.mxu0 0.0
  %3118 = vmatprep.subr.mxu0 0.0
  %3119 = vmatpush1.msra.mxu0 0.0
  %3120 = vmatprep.subr.mxu0 0.0
  %3121 = vmatpush1.msra.mxu0 0.0
  %3122 = vmatprep.subr.mxu0 0.0
  %3123 = vmatpush1.msra.mxu0 0.0
  %3124 = vmatprep.subr.mxu0 0.0
  %3125 = vmatpush1.msra.mxu0 0.0
  %3126 = vmatprep.subr.mxu0 0.0
  %3127 = vmatpush1.msra.mxu0 0.0
  %3128 = vmatprep.subr.mxu0 0.0
  %3129 = vmatpush1.msra.mxu0 0.0
  %3130 = vmatprep.subr.mxu0 0.0
  %3131 = vmatpush1.msra.mxu0 0.0
  %3132 = vmatprep.subr.mxu0 0.0
  %3133 = vmatpush1.msra.mxu0 0.0
  %3134 = vmatprep.subr.mxu0 0.0
  %3135 = vmatpush1.msra.mxu0 0.0
  %3136 = vmatprep.subr.mxu0 0.0
  %3137 = vmatpush1.msra.mxu0 0.0
  %3138 = vmatprep.subr.mxu0 0.0
  %3139 = vmatpush1.msra.mxu0 0.0
  %3140 = vmatprep.subr.mxu0 0.0
  %3141 = vmatpush1.msra.mxu0 0.0
  %3142 = vmatprep.mubr.f32.mxu0 0.0
  %3143 = vmatmul.mubr.f32.gmra.mrb[0].mxu0 %v2998
  %v3144 = vpop.f32.mrb[0].mxu0
  %v3145 = vadd.f32 0.0, %v3144
  %v3146 = vpop.f32.mrb[0].mxu0
  %3147 = vmatprep.mubr.f32.mxu0 0.0
  %3148 = vmatmul.mubr.f32.gmra.mrb[0].mxu0 %v3001
  %v3149 = vpop.f32.mrb[0].mxu0
  %v3150 = vadd.f32 0.0, %v3149
  %v3151 = vpop.f32.mrb[0].mxu0
  %3152 = vdwg.mxu0
  %3153 = vmatprep.subr.mxu0 0.0
  %3154 = vmatpush1.msra.mxu0 %v178
  %3155 = vmatprep.subr.mxu0 0.0
  %3156 = vmatpush1.msra.mxu0 %v179
  %3157 = vmatprep.subr.mxu0 0.0
  %3158 = vmatpush1.msra.mxu0 %v180
  %3159 = vmatprep.subr.mxu0 0.0
  %3160 = vmatpush1.msra.mxu0 %v181
  %3161 = vmatprep.subr.mxu0 0.0
  %3162 = vmatpush1.msra.mxu0 0.0
  %3163 = vmatprep.subr.mxu0 0.0
  %3164 = vmatpush1.msra.mxu0 0.0
  %3165 = vmatprep.subr.mxu0 0.0
  %3166 = vmatpush1.msra.mxu0 0.0
  %3167 = vmatprep.subr.mxu0 0.0
  %3168 = vmatpush1.msra.mxu0 0.0
  %3169 = vmatprep.subr.mxu0 0.0
  %3170 = vmatpush1.msra.mxu0 0.0
  %3171 = vmatprep.subr.mxu0 0.0
  %3172 = vmatpush1.msra.mxu0 0.0
  %3173 = vmatprep.subr.mxu0 0.0
  %3174 = vmatpush1.msra.mxu0 0.0
  %3175 = vmatprep.subr.mxu0 0.0
  %3176 = vmatpush1.msra.mxu0 0.0
  %3177 = vmatprep.subr.mxu0 0.0
  %3178 = vmatpush1.msra.mxu0 0.0
  %3179 = vmatprep.subr.mxu0 0.0
  %3180 = vmatpush1.msra.mxu0 0.0
  %3181 = vmatprep.subr.mxu0 0.0
  %3182 = vmatpush1.msra.mxu0 0.0
  %3183 = vmatprep.subr.mxu0 0.0
  %3184 = vmatpush1.msra.mxu0 0.0
  %3185 = vmatprep.subr.mxu0 0.0
  %3186 = vmatpush1.msra.mxu0 0.0
  %3187 = vmatprep.subr.mxu0 0.0
  %3188 = vmatpush1.msra.mxu0 0.0
  %3189 = vmatprep.subr.mxu0 0.0
  %3190 = vmatpush1.msra.mxu0 0.0
  %3191 = vmatprep.subr.mxu0 0.0
  %3192 = vmatpush1.msra.mxu0 0.0
  %3193 = vmatprep.subr.mxu0 0.0
  %3194 = vmatpush1.msra.mxu0 0.0
  %3195 = vmatprep.subr.mxu0 0.0
  %3196 = vmatpush1.msra.mxu0 0.0
  %3197 = vmatprep.subr.mxu0 0.0
  %3198 = vmatpush1.msra.mxu0 0.0
  %3199 = vmatprep.subr.mxu0 0.0
  %3200 = vmatpush1.msra.mxu0 0.0
  %3201 = vmatprep.subr.mxu0 0.0
  %3202 = vmatpush1.msra.mxu0 0.0
  %3203 = vmatprep.subr.mxu0 0.0
  %3204 = vmatpush1.msra.mxu0 0.0
  %3205 = vmatprep.subr.mxu0 0.0
  %3206 = vmatpush1.msra.mxu0 0.0
  %3207 = vmatprep.subr.mxu0 0.0
  %3208 = vmatpush1.msra.mxu0 0.0
  %3209 = vmatprep.subr.mxu0 0.0
  %3210 = vmatpush1.msra.mxu0 0.0
  %3211 = vmatprep.subr.mxu0 0.0
  %3212 = vmatpush1.msra.mxu0 0.0
  %3213 = vmatprep.subr.mxu0 0.0
  %3214 = vmatpush1.msra.mxu0 0.0
  %3215 = vmatprep.subr.mxu0 0.0
  %3216 = vmatpush1.msra.mxu0 0.0
  %3217 = vmatprep.mubr.f32.mxu0 0.0
  %3218 = vmatmul.mubr.f32.gmra.mrb[0].mxu0 %v2998
  %v3219 = vpop.f32.mrb[0].mxu0
  %v3220 = vadd.f32 0.0, %v3219
  %v3221 = vpop.f32.mrb[0].mxu0
  %3222 = vmatprep.mubr.f32.mxu0 0.0
  %3223 = vmatmul.mubr.f32.gmra.mrb[0].mxu0 %v3001
  %v3224 = vpop.f32.mrb[0].mxu0
  %v3225 = vadd.f32 0.0, %v3224
  %v3226 = vpop.f32.mrb[0].mxu0
  %3227 = vdwg.mxu0
  %v3229 = vsel %vm457, %v3070, 0
  %v3232 = vsel %vm457, %v3145, 0
  %3234 = vmatprep.subr.mxu0 0.0
  %3235 = vmatpush1.xpose.msra.mxu0 %v3232
  %3236 = vmatprep.subr.mxu0 0.0
  %3237 = vmatpush1.xpose.msra.mxu0 0.0
  %3238 = vmatprep.subr.mxu0 0.0
  %3239 = vmatpush1.xpose.msra.mxu0 0.0
  %3240 = vmatprep.subr.mxu0 0.0
  %3241 = vmatpush1.xpose.msra.mxu0 0.0
  %3242 = vmatprep.subr.mxu0 0.0
  %3243 = vmatpush1.xpose.msra.mxu0 0.0
  %3244 = vmatprep.subr.mxu0 0.0
  %3245 = vmatpush1.xpose.msra.mxu0 0.0
  %3246 = vmatprep.subr.mxu0 0.0
  %3247 = vmatpush1.xpose.msra.mxu0 0.0
  %3248 = vmatprep.subr.mxu0 0.0
  %3249 = vmatpush1.xpose.msra.mxu0 0.0
  %3250 = vmatprep.subr.mxu0 0.0
  %3251 = vmatpush1.xpose.msra.mxu0 0.0
  %3252 = vmatprep.subr.mxu0 0.0
  %3253 = vmatpush1.xpose.msra.mxu0 0.0
  %3254 = vmatprep.subr.mxu0 0.0
  %3255 = vmatpush1.xpose.msra.mxu0 0.0
  %3256 = vmatprep.subr.mxu0 0.0
  %3257 = vmatpush1.xpose.msra.mxu0 0.0
  %3258 = vmatprep.subr.mxu0 0.0
  %3259 = vmatpush1.xpose.msra.mxu0 0.0
  %3260 = vmatprep.subr.mxu0 0.0
  %3261 = vmatpush1.xpose.msra.mxu0 0.0
  %3262 = vmatprep.subr.mxu0 0.0
  %3263 = vmatpush1.xpose.msra.mxu0 0.0
  %3264 = vmatprep.subr.mxu0 0.0
  %3265 = vmatpush1.xpose.msra.mxu0 0.0
  %3266 = vmatprep.subr.mxu0 0.0
  %3267 = vmatpush1.xpose.msra.mxu0 0.0
  %3268 = vmatprep.subr.mxu0 0.0
  %3269 = vmatpush1.xpose.msra.mxu0 0.0
  %3270 = vmatprep.subr.mxu0 0.0
  %3271 = vmatpush1.xpose.msra.mxu0 0.0
  %3272 = vmatprep.subr.mxu0 0.0
  %3273 = vmatpush1.xpose.msra.mxu0 0.0
  %3274 = vmatprep.subr.mxu0 0.0
  %3275 = vmatpush1.xpose.msra.mxu0 0.0
  %3276 = vmatprep.subr.mxu0 0.0
  %3277 = vmatpush1.xpose.msra.mxu0 0.0
  %3278 = vmatprep.subr.mxu0 0.0
  %3279 = vmatpush1.xpose.msra.mxu0 0.0
  %3280 = vmatprep.subr.mxu0 0.0
  %3281 = vmatpush1.xpose.msra.mxu0 0.0
  %3282 = vmatprep.subr.mxu0 0.0
  %3283 = vmatpush1.xpose.msra.mxu0 0.0
  %3284 = vmatprep.subr.mxu0 0.0
  %3285 = vmatpush1.xpose.msra.mxu0 0.0
  %3286 = vmatprep.subr.mxu0 0.0
  %3287 = vmatpush1.xpose.msra.mxu0 0.0
  %3288 = vmatprep.subr.mxu0 0.0
  %3289 = vmatpush1.xpose.msra.mxu0 0.0
  %3290 = vmatprep.subr.mxu0 0.0
  %3291 = vmatpush1.xpose.msra.mxu0 0.0
  %3292 = vmatprep.subr.mxu0 0.0
  %3293 = vmatpush1.xpose.msra.mxu0 0.0
  %3294 = vmatprep.subr.mxu0 0.0
  %3295 = vmatpush1.xpose.msra.mxu0 0.0
  %3296 = vmatprep.subr.mxu0 0.0
  %3297 = vmatpush1.xpose.msra.mxu0 0.0
  %3298 = vmatprep.mubr.f32.mxu0 0.0
  %3299 = vmatmul.mubr.f32.gmra.mrb[0].mxu0 %v3229
  %v3300 = vpop.f32.mrb[0].mxu0
  %v3301 = vadd.f32 %v139, %v3300
  %v3302 = vpop.f32.mrb[0].mxu0
  %3303 = vdwg.mxu0
  %v3305 = vsel %vm457, %v3075, 0
  %v3308 = vsel %vm457, %v3150, 0
  %3310 = vmatprep.subr.mxu0 0.0
  %3311 = vmatpush1.xpose.msra.mxu0 %v3308
  %3312 = vmatprep.subr.mxu0 0.0
  %3313 = vmatpush1.xpose.msra.mxu0 0.0
  %3314 = vmatprep.subr.mxu0 0.0
  %3315 = vmatpush1.xpose.msra.mxu0 0.0
  %3316 = vmatprep.subr.mxu0 0.0
  %3317 = vmatpush1.xpose.msra.mxu0 0.0
  %3318 = vmatprep.subr.mxu0 0.0
  %3319 = vmatpush1.xpose.msra.mxu0 0.0
  %3320 = vmatprep.subr.mxu0 0.0
  %3321 = vmatpush1.xpose.msra.mxu0 0.0
  %3322 = vmatprep.subr.mxu0 0.0
  %3323 = vmatpush1.xpose.msra.mxu0 0.0
  %3324 = vmatprep.subr.mxu0 0.0
  %3325 = vmatpush1.xpose.msra.mxu0 0.0
  %3326 = vmatprep.subr.mxu0 0.0
  %3327 = vmatpush1.xpose.msra.mxu0 0.0
  %3328 = vmatprep.subr.mxu0 0.0
  %3329 = vmatpush1.xpose.msra.mxu0 0.0
  %3330 = vmatprep.subr.mxu0 0.0
  %3331 = vmatpush1.xpose.msra.mxu0 0.0
  %3332 = vmatprep.subr.mxu0 0.0
  %3333 = vmatpush1.xpose.msra.mxu0 0.0
  %3334 = vmatprep.subr.mxu0 0.0
  %3335 = vmatpush1.xpose.msra.mxu0 0.0
  %3336 = vmatprep.subr.mxu0 0.0
  %3337 = vmatpush1.xpose.msra.mxu0 0.0
  %3338 = vmatprep.subr.mxu0 0.0
  %3339 = vmatpush1.xpose.msra.mxu0 0.0
  %3340 = vmatprep.subr.mxu0 0.0
  %3341 = vmatpush1.xpose.msra.mxu0 0.0
  %3342 = vmatprep.subr.mxu0 0.0
  %3343 = vmatpush1.xpose.msra.mxu0 0.0
  %3344 = vmatprep.subr.mxu0 0.0
  %3345 = vmatpush1.xpose.msra.mxu0 0.0
  %3346 = vmatprep.subr.mxu0 0.0
  %3347 = vmatpush1.xpose.msra.mxu0 0.0
  %3348 = vmatprep.subr.mxu0 0.0
  %3349 = vmatpush1.xpose.msra.mxu0 0.0
  %3350 = vmatprep.subr.mxu0 0.0
  %3351 = vmatpush1.xpose.msra.mxu0 0.0
  %3352 = vmatprep.subr.mxu0 0.0
  %3353 = vmatpush1.xpose.msra.mxu0 0.0
  %3354 = vmatprep.subr.mxu0 0.0
  %3355 = vmatpush1.xpose.msra.mxu0 0.0
  %3356 = vmatprep.subr.mxu0 0.0
  %3357 = vmatpush1.xpose.msra.mxu0 0.0
  %3358 = vmatprep.subr.mxu0 0.0
  %3359 = vmatpush1.xpose.msra.mxu0 0.0
  %3360 = vmatprep.subr.mxu0 0.0
  %3361 = vmatpush1.xpose.msra.mxu0 0.0
  %3362 = vmatprep.subr.mxu0 0.0
  %3363 = vmatpush1.xpose.msra.mxu0 0.0
  %3364 = vmatprep.subr.mxu0 0.0
  %3365 = vmatpush1.xpose.msra.mxu0 0.0
  %3366 = vmatprep.subr.mxu0 0.0
  %3367 = vmatpush1.xpose.msra.mxu0 0.0
  %3368 = vmatprep.subr.mxu0 0.0
  %3369 = vmatpush1.xpose.msra.mxu0 0.0
  %3370 = vmatprep.subr.mxu0 0.0
  %3371 = vmatpush1.xpose.msra.mxu0 0.0
  %3372 = vmatprep.subr.mxu0 0.0
  %3373 = vmatpush1.xpose.msra.mxu0 0.0
  %3374 = vmatprep.mubr.f32.mxu0 0.0
  %3375 = vmatmul.mubr.f32.gmra.mrb[0].mxu0 %v3305
  %v3376 = vpop.f32.mrb[0].mxu0
  %v3377 = vadd.f32 %v143, %v3376
  %v3378 = vpop.f32.mrb[0].mxu0
  %3379 = vdwg.mxu0
  %v3380 = vmul.f32 %v3301, 1.442695
  %v3381 = vpow.pop %v3380
  %v3382 = vmul.f32 %v3377, 1.442695
  %v3383 = vpow.pop %v3382
  %v3384 = vsel %vm457, %v3381, 0.0
  %3385 = vadd.xlane.f32.xlu0 %v3384
  %v3386 = vpop.xlane.xlu0 %3385
  %v3387 = vsel %vm457, %v3383, 0.0
  %3388 = vadd.xlane.f32.xlu0 %v3387
  %v3389 = vpop.xlane.xlu0 %3388
  %v3390 = vrcp.pop %v3386
  %v3391 = vmul.f32 %v3381, %v3390
  %v3392 = vrcp.pop %v3389
  %v3393 = vmul.f32 %v3383, %v3392
  %v3395 = vsel %vm457, %v3391, 0
  %3397 = vmatprep.subr.mxu0 0.0
  %3398 = vmatpush1.msra.mxu0 %v3220
  %3399 = vmatprep.subr.mxu0 0.0
  %3400 = vmatpush1.msra.mxu0 0.0
  %3401 = vmatprep.subr.mxu0 0.0
  %3402 = vmatpush1.msra.mxu0 0.0
  %3403 = vmatprep.subr.mxu0 0.0
  %3404 = vmatpush1.msra.mxu0 0.0
  %3405 = vmatprep.subr.mxu0 0.0
  %3406 = vmatpush1.msra.mxu0 0.0
  %3407 = vmatprep.subr.mxu0 0.0
  %3408 = vmatpush1.msra.mxu0 0.0
  %3409 = vmatprep.subr.mxu0 0.0
  %3410 = vmatpush1.msra.mxu0 0.0
  %3411 = vmatprep.subr.mxu0 0.0
  %3412 = vmatpush1.msra.mxu0 0.0
  %3413 = vmatprep.subr.mxu0 0.0
  %3414 = vmatpush1.msra.mxu0 0.0
  %3415 = vmatprep.subr.mxu0 0.0
  %3416 = vmatpush1.msra.mxu0 0.0
  %3417 = vmatprep.subr.mxu0 0.0
  %3418 = vmatpush1.msra.mxu0 0.0
  %3419 = vmatprep.subr.mxu0 0.0
  %3420 = vmatpush1.msra.mxu0 0.0
  %3421 = vmatprep.subr.mxu0 0.0
  %3422 = vmatpush1.msra.mxu0 0.0
  %3423 = vmatprep.subr.mxu0 0.0
  %3424 = vmatpush1.msra.mxu0 0.0
  %3425 = vmatprep.subr.mxu0 0.0
  %3426 = vmatpush1.msra.mxu0 0.0
  %3427 = vmatprep.subr.mxu0 0.0
  %3428 = vmatpush1.msra.mxu0 0.0
  %3429 = vmatprep.subr.mxu0 0.0
  %3430 = vmatpush1.msra.mxu0 0.0
  %3431 = vmatprep.subr.mxu0 0.0
  %3432 = vmatpush1.msra.mxu0 0.0
  %3433 = vmatprep.subr.mxu0 0.0
  %3434 = vmatpush1.msra.mxu0 0.0
  %3435 = vmatprep.subr.mxu0 0.0
  %3436 = vmatpush1.msra.mxu0 0.0
  %3437 = vmatprep.subr.mxu0 0.0
  %3438 = vmatpush1.msra.mxu0 0.0
  %3439 = vmatprep.subr.mxu0 0.0
  %3440 = vmatpush1.msra.mxu0 0.0
  %3441 = vmatprep.subr.mxu0 0.0
  %3442 = vmatpush1.msra.mxu0 0.0
  %3443 = vmatprep.subr.mxu0 0.0
  %3444 = vmatpush1.msra.mxu0 0.0
  %3445 = vmatprep.subr.mxu0 0.0
  %3446 = vmatpush1.msra.mxu0 0.0
  %3447 = vmatprep.subr.mxu0 0.0
  %3448 = vmatpush1.msra.mxu0 0.0
  %3449 = vmatprep.subr.mxu0 0.0
  %3450 = vmatpush1.msra.mxu0 0.0
  %3451 = vmatprep.subr.mxu0 0.0
  %3452 = vmatpush1.msra.mxu0 0.0
  %3453 = vmatprep.subr.mxu0 0.0
  %3454 = vmatpush1.msra.mxu0 0.0
  %3455 = vmatprep.subr.mxu0 0.0
  %3456 = vmatpush1.msra.mxu0 0.0
  %3457 = vmatprep.subr.mxu0 0.0
  %3458 = vmatpush1.msra.mxu0 0.0
  %3459 = vmatprep.subr.mxu0 0.0
  %3460 = vmatpush1.msra.mxu0 0.0
  %3461 = vmatprep.mubr.f32.mxu0 0.0
  %3462 = vmatmul.mubr.f32.gmra.mrb[0].mxu0 %v3395
  %v3463 = vpop.f32.mrb[0].mxu0
  %v3464 = vadd.f32 0.0, %v3463
  %v3465 = vpop.f32.mrb[0].mxu0
  %3466 = vdwg.mxu0
  %v3468 = vsel %vm457, %v3393, 0
  %3470 = vmatprep.subr.mxu0 0.0
  %3471 = vmatpush1.msra.mxu0 %v3225
  %3472 = vmatprep.subr.mxu0 0.0
  %3473 = vmatpush1.msra.mxu0 0.0
  %3474 = vmatprep.subr.mxu0 0.0
  %3475 = vmatpush1.msra.mxu0 0.0
  %3476 = vmatprep.subr.mxu0 0.0
  %3477 = vmatpush1.msra.mxu0 0.0
  %3478 = vmatprep.subr.mxu0 0.0
  %3479 = vmatpush1.msra.mxu0 0.0
  %3480 = vmatprep.subr.mxu0 0.0
  %3481 = vmatpush1.msra.mxu0 0.0
  %3482 = vmatprep.subr.mxu0 0.0
  %3483 = vmatpush1.msra.mxu0 0.0
  %3484 = vmatprep.subr.mxu0 0.0
  %3485 = vmatpush1.msra.mxu0 0.0
  %3486 = vmatprep.subr.mxu0 0.0
  %3487 = vmatpush1.msra.mxu0 0.0
  %3488 = vmatprep.subr.mxu0 0.0
  %3489 = vmatpush1.msra.mxu0 0.0
  %3490 = vmatprep.subr.mxu0 0.0
  %3491 = vmatpush1.msra.mxu0 0.0
  %3492 = vmatprep.subr.mxu0 0.0
  %3493 = vmatpush1.msra.mxu0 0.0
  %3494 = vmatprep.subr.mxu0 0.0
  %3495 = vmatpush1.msra.mxu0 0.0
  %3496 = vmatprep.subr.mxu0 0.0
  %3497 = vmatpush1.msra.mxu0 0.0
  %3498 = vmatprep.subr.mxu0 0.0
  %3499 = vmatpush1.msra.mxu0 0.0
  %3500 = vmatprep.subr.mxu0 0.0
  %3501 = vmatpush1.msra.mxu0 0.0
  %3502 = vmatprep.subr.mxu0 0.0
  %3503 = vmatpush1.msra.mxu0 0.0
  %3504 = vmatprep.subr.mxu0 0.0
  %3505 = vmatpush1.msra.mxu0 0.0
  %3506 = vmatprep.subr.mxu0 0.0
  %3507 = vmatpush1.msra.mxu0 0.0
  %3508 = vmatprep.subr.mxu0 0.0
  %3509 = vmatpush1.msra.mxu0 0.0
  %3510 = vmatprep.subr.mxu0 0.0
  %3511 = vmatpush1.msra.mxu0 0.0
  %3512 = vmatprep.subr.mxu0 0.0
  %3513 = vmatpush1.msra.mxu0 0.0
  %3514 = vmatprep.subr.mxu0 0.0
  %3515 = vmatpush1.msra.mxu0 0.0
  %3516 = vmatprep.subr.mxu0 0.0
  %3517 = vmatpush1.msra.mxu0 0.0
  %3518 = vmatprep.subr.mxu0 0.0
  %3519 = vmatpush1.msra.mxu0 0.0
  %3520 = vmatprep.subr.mxu0 0.0
  %3521 = vmatpush1.msra.mxu0 0.0
  %3522 = vmatprep.subr.mxu0 0.0
  %3523 = vmatpush1.msra.mxu0 0.0
  %3524 = vmatprep.subr.mxu0 0.0
  %3525 = vmatpush1.msra.mxu0 0.0
  %3526 = vmatprep.subr.mxu0 0.0
  %3527 = vmatpush1.msra.mxu0 0.0
  %3528 = vmatprep.subr.mxu0 0.0
  %3529 = vmatpush1.msra.mxu0 0.0
  %3530 = vmatprep.subr.mxu0 0.0
  %3531 = vmatpush1.msra.mxu0 0.0
  %3532 = vmatprep.subr.mxu0 0.0
  %3533 = vmatpush1.msra.mxu0 0.0
  %3534 = vmatprep.mubr.f32.mxu0 0.0
  %3535 = vmatmul.mubr.f32.gmra.mrb[0].mxu0 %v3468
  %v3536 = vpop.f32.mrb[0].mxu0
  %v3537 = vadd.f32 0.0, %v3536
  %v3538 = vpop.f32.mrb[0].mxu0
  %3539 = vdwg.mxu0
  %3540 = vmatprep.subr.mxu0 0.0
  %3541 = vmatpush1.msra.mxu0 %v150
  %3542 = vmatprep.subr.mxu0 0.0
  %3543 = vmatpush1.msra.mxu0 %v151
  %3544 = vmatprep.subr.mxu0 0.0
  %3545 = vmatpush1.msra.mxu0 %v152
  %3546 = vmatprep.subr.mxu0 0.0
  %3547 = vmatpush1.msra.mxu0 %v153
  %3548 = vmatprep.subr.mxu0 0.0
  %3549 = vmatpush1.msra.mxu0 0.0
  %3550 = vmatprep.subr.mxu0 0.0
  %3551 = vmatpush1.msra.mxu0 0.0
  %3552 = vmatprep.subr.mxu0 0.0
  %3553 = vmatpush1.msra.mxu0 0.0
  %3554 = vmatprep.subr.mxu0 0.0
  %3555 = vmatpush1.msra.mxu0 0.0
  %3556 = vmatprep.subr.mxu0 0.0
  %3557 = vmatpush1.msra.mxu0 0.0
  %3558 = vmatprep.subr.mxu0 0.0
  %3559 = vmatpush1.msra.mxu0 0.0
  %3560 = vmatprep.subr.mxu0 0.0
  %3561 = vmatpush1.msra.mxu0 0.0
  %3562 = vmatprep.subr.mxu0 0.0
  %3563 = vmatpush1.msra.mxu0 0.0
  %3564 = vmatprep.subr.mxu0 0.0
  %3565 = vmatpush1.msra.mxu0 0.0
  %3566 = vmatprep.subr.mxu0 0.0
  %3567 = vmatpush1.msra.mxu0 0.0
  %3568 = vmatprep.subr.mxu0 0.0
  %3569 = vmatpush1.msra.mxu0 0.0
  %3570 = vmatprep.subr.mxu0 0.0
  %3571 = vmatpush1.msra.mxu0 0.0
  %3572 = vmatprep.subr.mxu0 0.0
  %3573 = vmatpush1.msra.mxu0 0.0
  %3574 = vmatprep.subr.mxu0 0.0
  %3575 = vmatpush1.msra.mxu0 0.0
  %3576 = vmatprep.subr.mxu0 0.0
  %3577 = vmatpush1.msra.mxu0 0.0
  %3578 = vmatprep.subr.mxu0 0.0
  %3579 = vmatpush1.msra.mxu0 0.0
  %3580 = vmatprep.subr.mxu0 0.0
  %3581 = vmatpush1.msra.mxu0 0.0
  %3582 = vmatprep.subr.mxu0 0.0
  %3583 = vmatpush1.msra.mxu0 0.0
  %3584 = vmatprep.subr.mxu0 0.0
  %3585 = vmatpush1.msra.mxu0 0.0
  %3586 = vmatprep.subr.mxu0 0.0
  %3587 = vmatpush1.msra.mxu0 0.0
  %3588 = vmatprep.subr.mxu0 0.0
  %3589 = vmatpush1.msra.mxu0 0.0
  %3590 = vmatprep.subr.mxu0 0.0
  %3591 = vmatpush1.msra.mxu0 0.0
  %3592 = vmatprep.subr.mxu0 0.0
  %3593 = vmatpush1.msra.mxu0 0.0
  %3594 = vmatprep.subr.mxu0 0.0
  %3595 = vmatpush1.msra.mxu0 0.0
  %3596 = vmatprep.subr.mxu0 0.0
  %3597 = vmatpush1.msra.mxu0 0.0
  %3598 = vmatprep.subr.mxu0 0.0
  %3599 = vmatpush1.msra.mxu0 0.0
  %3600 = vmatprep.subr.mxu0 0.0
  %3601 = vmatpush1.msra.mxu0 0.0
  %3602 = vmatprep.subr.mxu0 0.0
  %3603 = vmatpush1.msra.mxu0 0.0
  %3604 = vmatprep.mubr.f32.mxu0 0.0
  %3605 = vmatmul.mubr.f32.gmra.mrb[0].mxu0 %v2998
  %v3606 = vpop.f32.mrb[0].mxu0
  %v3607 = vadd.f32 %v773, %v3606
  %v3608 = vpop.f32.mrb[0].mxu0
  %3609 = vmatprep.mubr.f32.mxu0 0.0
  %3610 = vmatmul.mubr.f32.gmra.mrb[0].mxu0 %v3001
  %v3611 = vpop.f32.mrb[0].mxu0
  %v3612 = vadd.f32 %v773, %v3611
  %v3613 = vpop.f32.mrb[0].mxu0
  %3614 = vdwg.mxu0
  %3615 = vmatprep.subr.mxu0 0.0
  %3616 = vmatpush1.msra.mxu0 %v166
  %3617 = vmatprep.subr.mxu0 0.0
  %3618 = vmatpush1.msra.mxu0 %v167
  %3619 = vmatprep.subr.mxu0 0.0
  %3620 = vmatpush1.msra.mxu0 %v168
  %3621 = vmatprep.subr.mxu0 0.0
  %3622 = vmatpush1.msra.mxu0 %v169
  %3623 = vmatprep.subr.mxu0 0.0
  %3624 = vmatpush1.msra.mxu0 0.0
  %3625 = vmatprep.subr.mxu0 0.0
  %3626 = vmatpush1.msra.mxu0 0.0
  %3627 = vmatprep.subr.mxu0 0.0
  %3628 = vmatpush1.msra.mxu0 0.0
  %3629 = vmatprep.subr.mxu0 0.0
  %3630 = vmatpush1.msra.mxu0 0.0
  %3631 = vmatprep.subr.mxu0 0.0
  %3632 = vmatpush1.msra.mxu0 0.0
  %3633 = vmatprep.subr.mxu0 0.0
  %3634 = vmatpush1.msra.mxu0 0.0
  %3635 = vmatprep.subr.mxu0 0.0
  %3636 = vmatpush1.msra.mxu0 0.0
  %3637 = vmatprep.subr.mxu0 0.0
  %3638 = vmatpush1.msra.mxu0 0.0
  %3639 = vmatprep.subr.mxu0 0.0
  %3640 = vmatpush1.msra.mxu0 0.0
  %3641 = vmatprep.subr.mxu0 0.0
  %3642 = vmatpush1.msra.mxu0 0.0
  %3643 = vmatprep.subr.mxu0 0.0
  %3644 = vmatpush1.msra.mxu0 0.0
  %3645 = vmatprep.subr.mxu0 0.0
  %3646 = vmatpush1.msra.mxu0 0.0
  %3647 = vmatprep.subr.mxu0 0.0
  %3648 = vmatpush1.msra.mxu0 0.0
  %3649 = vmatprep.subr.mxu0 0.0
  %3650 = vmatpush1.msra.mxu0 0.0
  %3651 = vmatprep.subr.mxu0 0.0
  %3652 = vmatpush1.msra.mxu0 0.0
  %3653 = vmatprep.subr.mxu0 0.0
  %3654 = vmatpush1.msra.mxu0 0.0
  %3655 = vmatprep.subr.mxu0 0.0
  %3656 = vmatpush1.msra.mxu0 0.0
  %3657 = vmatprep.subr.mxu0 0.0
  %3658 = vmatpush1.msra.mxu0 0.0
  %3659 = vmatprep.subr.mxu0 0.0
  %3660 = vmatpush1.msra.mxu0 0.0
  %3661 = vmatprep.subr.mxu0 0.0
  %3662 = vmatpush1.msra.mxu0 0.0
  %3663 = vmatprep.subr.mxu0 0.0
  %3664 = vmatpush1.msra.mxu0 0.0
  %3665 = vmatprep.subr.mxu0 0.0
  %3666 = vmatpush1.msra.mxu0 0.0
  %3667 = vmatprep.subr.mxu0 0.0
  %3668 = vmatpush1.msra.mxu0 0.0
  %3669 = vmatprep.subr.mxu0 0.0
  %3670 = vmatpush1.msra.mxu0 0.0
  %3671 = vmatprep.subr.mxu0 0.0
  %3672 = vmatpush1.msra.mxu0 0.0
  %3673 = vmatprep.subr.mxu0 0.0
  %3674 = vmatpush1.msra.mxu0 0.0
  %3675 = vmatprep.subr.mxu0 0.0
  %3676 = vmatpush1.msra.mxu0 0.0
  %3677 = vmatprep.subr.mxu0 0.0
  %3678 = vmatpush1.msra.mxu0 0.0
  %3679 = vmatprep.mubr.f32.mxu0 0.0
  %3680 = vmatmul.mubr.f32.gmra.mrb[0].mxu0 %v2998
  %v3681 = vpop.f32.mrb[0].mxu0
  %v3682 = vadd.f32 0.0, %v3681
  %v3683 = vpop.f32.mrb[0].mxu0
  %3684 = vmatprep.mubr.f32.mxu0 0.0
  %3685 = vmatmul.mubr.f32.gmra.mrb[0].mxu0 %v3001
  %v3686 = vpop.f32.mrb[0].mxu0
  %v3687 = vadd.f32 0.0, %v3686
  %v3688 = vpop.f32.mrb[0].mxu0
  %3689 = vdwg.mxu0
  %3690 = vmatprep.subr.mxu0 0.0
  %3691 = vmatpush1.msra.mxu0 %v182
  %3692 = vmatprep.subr.mxu0 0.0
  %3693 = vmatpush1.msra.mxu0 %v183
  %3694 = vmatprep.subr.mxu0 0.0
  %3695 = vmatpush1.msra.mxu0 %v184
  %3696 = vmatprep.subr.mxu0 0.0
  %3697 = vmatpush1.msra.mxu0 %v185
  %3698 = vmatprep.subr.mxu0 0.0
  %3699 = vmatpush1.msra.mxu0 0.0
  %3700 = vmatprep.subr.mxu0 0.0
  %3701 = vmatpush1.msra.mxu0 0.0
  %3702 = vmatprep.subr.mxu0 0.0
  %3703 = vmatpush1.msra.mxu0 0.0
  %3704 = vmatprep.subr.mxu0 0.0
  %3705 = vmatpush1.msra.mxu0 0.0
  %3706 = vmatprep.subr.mxu0 0.0
  %3707 = vmatpush1.msra.mxu0 0.0
  %3708 = vmatprep.subr.mxu0 0.0
  %3709 = vmatpush1.msra.mxu0 0.0
  %3710 = vmatprep.subr.mxu0 0.0
  %3711 = vmatpush1.msra.mxu0 0.0
  %3712 = vmatprep.subr.mxu0 0.0
  %3713 = vmatpush1.msra.mxu0 0.0
  %3714 = vmatprep.subr.mxu0 0.0
  %3715 = vmatpush1.msra.mxu0 0.0
  %3716 = vmatprep.subr.mxu0 0.0
  %3717 = vmatpush1.msra.mxu0 0.0
  %3718 = vmatprep.subr.mxu0 0.0
  %3719 = vmatpush1.msra.mxu0 0.0
  %3720 = vmatprep.subr.mxu0 0.0
  %3721 = vmatpush1.msra.mxu0 0.0
  %3722 = vmatprep.subr.mxu0 0.0
  %3723 = vmatpush1.msra.mxu0 0.0
  %3724 = vmatprep.subr.mxu0 0.0
  %3725 = vmatpush1.msra.mxu0 0.0
  %3726 = vmatprep.subr.mxu0 0.0
  %3727 = vmatpush1.msra.mxu0 0.0
  %3728 = vmatprep.subr.mxu0 0.0
  %3729 = vmatpush1.msra.mxu0 0.0
  %3730 = vmatprep.subr.mxu0 0.0
  %3731 = vmatpush1.msra.mxu0 0.0
  %3732 = vmatprep.subr.mxu0 0.0
  %3733 = vmatpush1.msra.mxu0 0.0
  %3734 = vmatprep.subr.mxu0 0.0
  %3735 = vmatpush1.msra.mxu0 0.0
  %3736 = vmatprep.subr.mxu0 0.0
  %3737 = vmatpush1.msra.mxu0 0.0
  %3738 = vmatprep.subr.mxu0 0.0
  %3739 = vmatpush1.msra.mxu0 0.0
  %3740 = vmatprep.subr.mxu0 0.0
  %3741 = vmatpush1.msra.mxu0 0.0
  %3742 = vmatprep.subr.mxu0 0.0
  %3743 = vmatpush1.msra.mxu0 0.0
  %3744 = vmatprep.subr.mxu0 0.0
  %3745 = vmatpush1.msra.mxu0 0.0
  %3746 = vmatprep.subr.mxu0 0.0
  %3747 = vmatpush1.msra.mxu0 0.0
  %3748 = vmatprep.subr.mxu0 0.0
  %3749 = vmatpush1.msra.mxu0 0.0
  %3750 = vmatprep.subr.mxu0 0.0
  %3751 = vmatpush1.msra.mxu0 0.0
  %3752 = vmatprep.subr.mxu0 0.0
  %3753 = vmatpush1.msra.mxu0 0.0
  %3754 = vmatprep.mubr.f32.mxu0 0.0
  %3755 = vmatmul.mubr.f32.gmra.mrb[0].mxu0 %v2998
  %v3756 = vpop.f32.mrb[0].mxu0
  %v3757 = vadd.f32 0.0, %v3756
  %v3758 = vpop.f32.mrb[0].mxu0
  %3759 = vmatprep.mubr.f32.mxu0 0.0
  %3760 = vmatmul.mubr.f32.gmra.mrb[0].mxu0 %v3001
  %v3761 = vpop.f32.mrb[0].mxu0
  %v3762 = vadd.f32 0.0, %v3761
  %v3763 = vpop.f32.mrb[0].mxu0
  %3764 = vdwg.mxu0
  %v3766 = vsel %vm457, %v3607, 0
  %v3769 = vsel %vm457, %v3682, 0
  %3771 = vmatprep.subr.mxu0 0.0
  %3772 = vmatpush1.xpose.msra.mxu0 %v3769
  %3773 = vmatprep.subr.mxu0 0.0
  %3774 = vmatpush1.xpose.msra.mxu0 0.0
  %3775 = vmatprep.subr.mxu0 0.0
  %3776 = vmatpush1.xpose.msra.mxu0 0.0
  %3777 = vmatprep.subr.mxu0 0.0
  %3778 = vmatpush1.xpose.msra.mxu0 0.0
  %3779 = vmatprep.subr.mxu0 0.0
  %3780 = vmatpush1.xpose.msra.mxu0 0.0
  %3781 = vmatprep.subr.mxu0 0.0
  %3782 = vmatpush1.xpose.msra.mxu0 0.0
  %3783 = vmatprep.subr.mxu0 0.0
  %3784 = vmatpush1.xpose.msra.mxu0 0.0
  %3785 = vmatprep.subr.mxu0 0.0
  %3786 = vmatpush1.xpose.msra.mxu0 0.0
  %3787 = vmatprep.subr.mxu0 0.0
  %3788 = vmatpush1.xpose.msra.mxu0 0.0
  %3789 = vmatprep.subr.mxu0 0.0
  %3790 = vmatpush1.xpose.msra.mxu0 0.0
  %3791 = vmatprep.subr.mxu0 0.0
  %3792 = vmatpush1.xpose.msra.mxu0 0.0
  %3793 = vmatprep.subr.mxu0 0.0
  %3794 = vmatpush1.xpose.msra.mxu0 0.0
  %3795 = vmatprep.subr.mxu0 0.0
  %3796 = vmatpush1.xpose.msra.mxu0 0.0
  %3797 = vmatprep.subr.mxu0 0.0
  %3798 = vmatpush1.xpose.msra.mxu0 0.0
  %3799 = vmatprep.subr.mxu0 0.0
  %3800 = vmatpush1.xpose.msra.mxu0 0.0
  %3801 = vmatprep.subr.mxu0 0.0
  %3802 = vmatpush1.xpose.msra.mxu0 0.0
  %3803 = vmatprep.subr.mxu0 0.0
  %3804 = vmatpush1.xpose.msra.mxu0 0.0
  %3805 = vmatprep.subr.mxu0 0.0
  %3806 = vmatpush1.xpose.msra.mxu0 0.0
  %3807 = vmatprep.subr.mxu0 0.0
  %3808 = vmatpush1.xpose.msra.mxu0 0.0
  %3809 = vmatprep.subr.mxu0 0.0
  %3810 = vmatpush1.xpose.msra.mxu0 0.0
  %3811 = vmatprep.subr.mxu0 0.0
  %3812 = vmatpush1.xpose.msra.mxu0 0.0
  %3813 = vmatprep.subr.mxu0 0.0
  %3814 = vmatpush1.xpose.msra.mxu0 0.0
  %3815 = vmatprep.subr.mxu0 0.0
  %3816 = vmatpush1.xpose.msra.mxu0 0.0
  %3817 = vmatprep.subr.mxu0 0.0
  %3818 = vmatpush1.xpose.msra.mxu0 0.0
  %3819 = vmatprep.subr.mxu0 0.0
  %3820 = vmatpush1.xpose.msra.mxu0 0.0
  %3821 = vmatprep.subr.mxu0 0.0
  %3822 = vmatpush1.xpose.msra.mxu0 0.0
  %3823 = vmatprep.subr.mxu0 0.0
  %3824 = vmatpush1.xpose.msra.mxu0 0.0
  %3825 = vmatprep.subr.mxu0 0.0
  %3826 = vmatpush1.xpose.msra.mxu0 0.0
  %3827 = vmatprep.subr.mxu0 0.0
  %3828 = vmatpush1.xpose.msra.mxu0 0.0
  %3829 = vmatprep.subr.mxu0 0.0
  %3830 = vmatpush1.xpose.msra.mxu0 0.0
  %3831 = vmatprep.subr.mxu0 0.0
  %3832 = vmatpush1.xpose.msra.mxu0 0.0
  %3833 = vmatprep.subr.mxu0 0.0
  %3834 = vmatpush1.xpose.msra.mxu0 0.0
  %3835 = vmatprep.mubr.f32.mxu0 0.0
  %3836 = vmatmul.mubr.f32.gmra.mrb[0].mxu0 %v3766
  %v3837 = vpop.f32.mrb[0].mxu0
  %v3838 = vadd.f32 %v139, %v3837
  %v3839 = vpop.f32.mrb[0].mxu0
  %3840 = vdwg.mxu0
  %v3842 = vsel %vm457, %v3612, 0
  %v3845 = vsel %vm457, %v3687, 0
  %3847 = vmatprep.subr.mxu0 0.0
  %3848 = vmatpush1.xpose.msra.mxu0 %v3845
  %3849 = vmatprep.subr.mxu0 0.0
  %3850 = vmatpush1.xpose.msra.mxu0 0.0
  %3851 = vmatprep.subr.mxu0 0.0
  %3852 = vmatpush1.xpose.msra.mxu0 0.0
  %3853 = vmatprep.subr.mxu0 0.0
  %3854 = vmatpush1.xpose.msra.mxu0 0.0
  %3855 = vmatprep.subr.mxu0 0.0
  %3856 = vmatpush1.xpose.msra.mxu0 0.0
  %3857 = vmatprep.subr.mxu0 0.0
  %3858 = vmatpush1.xpose.msra.mxu0 0.0
  %3859 = vmatprep.subr.mxu0 0.0
  %3860 = vmatpush1.xpose.msra.mxu0 0.0
  %3861 = vmatprep.subr.mxu0 0.0
  %3862 = vmatpush1.xpose.msra.mxu0 0.0
  %3863 = vmatprep.subr.mxu0 0.0
  %3864 = vmatpush1.xpose.msra.mxu0 0.0
  %3865 = vmatprep.subr.mxu0 0.0
  %3866 = vmatpush1.xpose.msra.mxu0 0.0
  %3867 = vmatprep.subr.mxu0 0.0
  %3868 = vmatpush1.xpose.msra.mxu0 0.0
  %3869 = vmatprep.subr.mxu0 0.0
  %3870 = vmatpush1.xpose.msra.mxu0 0.0
  %3871 = vmatprep.subr.mxu0 0.0
  %3872 = vmatpush1.xpose.msra.mxu0 0.0
  %3873 = vmatprep.subr.mxu0 0.0
  %3874 = vmatpush1.xpose.msra.mxu0 0.0
  %3875 = vmatprep.subr.mxu0 0.0
  %3876 = vmatpush1.xpose.msra.mxu0 0.0
  %3877 = vmatprep.subr.mxu0 0.0
  %3878 = vmatpush1.xpose.msra.mxu0 0.0
  %3879 = vmatprep.subr.mxu0 0.0
  %3880 = vmatpush1.xpose.msra.mxu0 0.0
  %3881 = vmatprep.subr.mxu0 0.0
  %3882 = vmatpush1.xpose.msra.mxu0 0.0
  %3883 = vmatprep.subr.mxu0 0.0
  %3884 = vmatpush1.xpose.msra.mxu0 0.0
  %3885 = vmatprep.subr.mxu0 0.0
  %3886 = vmatpush1.xpose.msra.mxu0 0.0
  %3887 = vmatprep.subr.mxu0 0.0
  %3888 = vmatpush1.xpose.msra.mxu0 0.0
  %3889 = vmatprep.subr.mxu0 0.0
  %3890 = vmatpush1.xpose.msra.mxu0 0.0
  %3891 = vmatprep.subr.mxu0 0.0
  %3892 = vmatpush1.xpose.msra.mxu0 0.0
  %3893 = vmatprep.subr.mxu0 0.0
  %3894 = vmatpush1.xpose.msra.mxu0 0.0
  %3895 = vmatprep.subr.mxu0 0.0
  %3896 = vmatpush1.xpose.msra.mxu0 0.0
  %3897 = vmatprep.subr.mxu0 0.0
  %3898 = vmatpush1.xpose.msra.mxu0 0.0
  %3899 = vmatprep.subr.mxu0 0.0
  %3900 = vmatpush1.xpose.msra.mxu0 0.0
  %3901 = vmatprep.subr.mxu0 0.0
  %3902 = vmatpush1.xpose.msra.mxu0 0.0
  %3903 = vmatprep.subr.mxu0 0.0
  %3904 = vmatpush1.xpose.msra.mxu0 0.0
  %3905 = vmatprep.subr.mxu0 0.0
  %3906 = vmatpush1.xpose.msra.mxu0 0.0
  %3907 = vmatprep.subr.mxu0 0.0
  %3908 = vmatpush1.xpose.msra.mxu0 0.0
  %3909 = vmatprep.subr.mxu0 0.0
  %3910 = vmatpush1.xpose.msra.mxu0 0.0
  %3911 = vmatprep.mubr.f32.mxu0 0.0
  %3912 = vmatmul.mubr.f32.gmra.mrb[0].mxu0 %v3842
  %v3913 = vpop.f32.mrb[0].mxu0
  %v3914 = vadd.f32 %v143, %v3913
  %v3915 = vpop.f32.mrb[0].mxu0
  %3916 = vdwg.mxu0
  %v3917 = vmul.f32 %v3838, 1.442695
  %v3918 = vpow.pop %v3917
  %v3919 = vmul.f32 %v3914, 1.442695
  %v3920 = vpow.pop %v3919
  %v3921 = vsel %vm457, %v3918, 0.0
  %3922 = vadd.xlane.f32.xlu0 %v3921
  %v3923 = vpop.xlane.xlu0 %3922
  %v3924 = vsel %vm457, %v3920, 0.0
  %3925 = vadd.xlane.f32.xlu0 %v3924
  %v3926 = vpop.xlane.xlu0 %3925
  %v3927 = vrcp.pop %v3923
  %v3928 = vmul.f32 %v3918, %v3927
  %v3929 = vrcp.pop %v3926
  %v3930 = vmul.f32 %v3920, %v3929
  %v3932 = vsel %vm457, %v3928, 0
  %3934 = vmatprep.subr.mxu0 0.0
  %3935 = vmatpush1.msra.mxu0 %v3757
  %3936 = vmatprep.subr.mxu0 0.0
  %3937 = vmatpush1.msra.mxu0 0.0
  %3938 = vmatprep.subr.mxu0 0.0
  %3939 = vmatpush1.msra.mxu0 0.0
  %3940 = vmatprep.subr.mxu0 0.0
  %3941 = vmatpush1.msra.mxu0 0.0
  %3942 = vmatprep.subr.mxu0 0.0
  %3943 = vmatpush1.msra.mxu0 0.0
  %3944 = vmatprep.subr.mxu0 0.0
  %3945 = vmatpush1.msra.mxu0 0.0
  %3946 = vmatprep.subr.mxu0 0.0
  %3947 = vmatpush1.msra.mxu0 0.0
  %3948 = vmatprep.subr.mxu0 0.0
  %3949 = vmatpush1.msra.mxu0 0.0
  %3950 = vmatprep.subr.mxu0 0.0
  %3951 = vmatpush1.msra.mxu0 0.0
  %3952 = vmatprep.subr.mxu0 0.0
  %3953 = vmatpush1.msra.mxu0 0.0
  %3954 = vmatprep.subr.mxu0 0.0
  %3955 = vmatpush1.msra.mxu0 0.0
  %3956 = vmatprep.subr.mxu0 0.0
  %3957 = vmatpush1.msra.mxu0 0.0
  %3958 = vmatprep.subr.mxu0 0.0
  %3959 = vmatpush1.msra.mxu0 0.0
  %3960 = vmatprep.subr.mxu0 0.0
  %3961 = vmatpush1.msra.mxu0 0.0
  %3962 = vmatprep.subr.mxu0 0.0
  %3963 = vmatpush1.msra.mxu0 0.0
  %3964 = vmatprep.subr.mxu0 0.0
  %3965 = vmatpush1.msra.mxu0 0.0
  %3966 = vmatprep.subr.mxu0 0.0
  %3967 = vmatpush1.msra.mxu0 0.0
  %3968 = vmatprep.subr.mxu0 0.0
  %3969 = vmatpush1.msra.mxu0 0.0
  %3970 = vmatprep.subr.mxu0 0.0
  %3971 = vmatpush1.msra.mxu0 0.0
  %3972 = vmatprep.subr.mxu0 0.0
  %3973 = vmatpush1.msra.mxu0 0.0
  %3974 = vmatprep.subr.mxu0 0.0
  %3975 = vmatpush1.msra.mxu0 0.0
  %3976 = vmatprep.subr.mxu0 0.0
  %3977 = vmatpush1.msra.mxu0 0.0
  %3978 = vmatprep.subr.mxu0 0.0
  %3979 = vmatpush1.msra.mxu0 0.0
  %3980 = vmatprep.subr.mxu0 0.0
  %3981 = vmatpush1.msra.mxu0 0.0
  %3982 = vmatprep.subr.mxu0 0.0
  %3983 = vmatpush1.msra.mxu0 0.0
  %3984 = vmatprep.subr.mxu0 0.0
  %3985 = vmatpush1.msra.mxu0 0.0
  %3986 = vmatprep.subr.mxu0 0.0
  %3987 = vmatpush1.msra.mxu0 0.0
  %3988 = vmatprep.subr.mxu0 0.0
  %3989 = vmatpush1.msra.mxu0 0.0
  %3990 = vmatprep.subr.mxu0 0.0
  %3991 = vmatpush1.msra.mxu0 0.0
  %3992 = vmatprep.subr.mxu0 0.0
  %3993 = vmatpush1.msra.mxu0 0.0
  %3994 = vmatprep.subr.mxu0 0.0
  %3995 = vmatpush1.msra.mxu0 0.0
  %3996 = vmatprep.subr.mxu0 0.0
  %3997 = vmatpush1.msra.mxu0 0.0
  %3998 = vmatprep.mubr.f32.mxu0 0.0
  %3999 = vmatmul.mubr.f32.gmra.mrb[0].mxu0 %v3932
  %v4000 = vpop.f32.mrb[0].mxu0
  %v4001 = vadd.f32 0.0, %v4000
  %v4002 = vpop.f32.mrb[0].mxu0
  %4003 = vdwg.mxu0
  %v4005 = vsel %vm457, %v3930, 0
  %4007 = vmatprep.subr.mxu0 0.0
  %4008 = vmatpush1.msra.mxu0 %v3762
  %4009 = vmatprep.subr.mxu0 0.0
  %4010 = vmatpush1.msra.mxu0 0.0
  %4011 = vmatprep.subr.mxu0 0.0
  %4012 = vmatpush1.msra.mxu0 0.0
  %4013 = vmatprep.subr.mxu0 0.0
  %4014 = vmatpush1.msra.mxu0 0.0
  %4015 = vmatprep.subr.mxu0 0.0
  %4016 = vmatpush1.msra.mxu0 0.0
  %4017 = vmatprep.subr.mxu0 0.0
  %4018 = vmatpush1.msra.mxu0 0.0
  %4019 = vmatprep.subr.mxu0 0.0
  %4020 = vmatpush1.msra.mxu0 0.0
  %4021 = vmatprep.subr.mxu0 0.0
  %4022 = vmatpush1.msra.mxu0 0.0
  %4023 = vmatprep.subr.mxu0 0.0
  %4024 = vmatpush1.msra.mxu0 0.0
  %4025 = vmatprep.subr.mxu0 0.0
  %4026 = vmatpush1.msra.mxu0 0.0
  %4027 = vmatprep.subr.mxu0 0.0
  %4028 = vmatpush1.msra.mxu0 0.0
  %4029 = vmatprep.subr.mxu0 0.0
  %4030 = vmatpush1.msra.mxu0 0.0
  %4031 = vmatprep.subr.mxu0 0.0
  %4032 = vmatpush1.msra.mxu0 0.0
  %4033 = vmatprep.subr.mxu0 0.0
  %4034 = vmatpush1.msra.mxu0 0.0
  %4035 = vmatprep.subr.mxu0 0.0
  %4036 = vmatpush1.msra.mxu0 0.0
  %4037 = vmatprep.subr.mxu0 0.0
  %4038 = vmatpush1.msra.mxu0 0.0
  %4039 = vmatprep.subr.mxu0 0.0
  %4040 = vmatpush1.msra.mxu0 0.0
  %4041 = vmatprep.subr.mxu0 0.0
  %4042 = vmatpush1.msra.mxu0 0.0
  %4043 = vmatprep.subr.mxu0 0.0
  %4044 = vmatpush1.msra.mxu0 0.0
  %4045 = vmatprep.subr.mxu0 0.0
  %4046 = vmatpush1.msra.mxu0 0.0
  %4047 = vmatprep.subr.mxu0 0.0
  %4048 = vmatpush1.msra.mxu0 0.0
  %4049 = vmatprep.subr.mxu0 0.0
  %4050 = vmatpush1.msra.mxu0 0.0
  %4051 = vmatprep.subr.mxu0 0.0
  %4052 = vmatpush1.msra.mxu0 0.0
  %4053 = vmatprep.subr.mxu0 0.0
  %4054 = vmatpush1.msra.mxu0 0.0
  %4055 = vmatprep.subr.mxu0 0.0
  %4056 = vmatpush1.msra.mxu0 0.0
  %4057 = vmatprep.subr.mxu0 0.0
  %4058 = vmatpush1.msra.mxu0 0.0
  %4059 = vmatprep.subr.mxu0 0.0
  %4060 = vmatpush1.msra.mxu0 0.0
  %4061 = vmatprep.subr.mxu0 0.0
  %4062 = vmatpush1.msra.mxu0 0.0
  %4063 = vmatprep.subr.mxu0 0.0
  %4064 = vmatpush1.msra.mxu0 0.0
  %4065 = vmatprep.subr.mxu0 0.0
  %4066 = vmatpush1.msra.mxu0 0.0
  %4067 = vmatprep.subr.mxu0 0.0
  %4068 = vmatpush1.msra.mxu0 0.0
  %4069 = vmatprep.subr.mxu0 0.0
  %4070 = vmatpush1.msra.mxu0 0.0
  %4071 = vmatprep.mubr.f32.mxu0 0.0
  %4072 = vmatmul.mubr.f32.gmra.mrb[0].mxu0 %v4005
  %v4073 = vpop.f32.mrb[0].mxu0
  %v4074 = vadd.f32 0.0, %v4073
  %v4075 = vpop.f32.mrb[0].mxu0
  %4076 = vdwg.mxu0
  %v4078 = vsel %vm457, %v4001, 0
  %v4081 = vsel %vm457, %v4074, 0
  %4083 = vmatprep.subr.mxu0 0.0
  %4084 = vmatpush1.msra.mxu0 %v195
  %4085 = vmatprep.subr.mxu0 0.0
  %4086 = vmatpush1.msra.mxu0 0.0
  %4087 = vmatprep.subr.mxu0 0.0
  %4088 = vmatpush1.msra.mxu0 0.0
  %4089 = vmatprep.subr.mxu0 0.0
  %4090 = vmatpush1.msra.mxu0 0.0
  %4091 = vmatprep.subr.mxu0 0.0
  %4092 = vmatpush1.msra.mxu0 0.0
  %4093 = vmatprep.subr.mxu0 0.0
  %4094 = vmatpush1.msra.mxu0 0.0
  %4095 = vmatprep.subr.mxu0 0.0
  %4096 = vmatpush1.msra.mxu0 0.0
  %4097 = vmatprep.subr.mxu0 0.0
  %4098 = vmatpush1.msra.mxu0 0.0
  %4099 = vmatprep.subr.mxu0 0.0
  %4100 = vmatpush1.msra.mxu0 0.0
  %4101 = vmatprep.subr.mxu0 0.0
  %4102 = vmatpush1.msra.mxu0 0.0
  %4103 = vmatprep.subr.mxu0 0.0
  %4104 = vmatpush1.msra.mxu0 0.0
  %4105 = vmatprep.subr.mxu0 0.0
  %4106 = vmatpush1.msra.mxu0 0.0
  %4107 = vmatprep.subr.mxu0 0.0
  %4108 = vmatpush1.msra.mxu0 0.0
  %4109 = vmatprep.subr.mxu0 0.0
  %4110 = vmatpush1.msra.mxu0 0.0
  %4111 = vmatprep.subr.mxu0 0.0
  %4112 = vmatpush1.msra.mxu0 0.0
  %4113 = vmatprep.subr.mxu0 0.0
  %4114 = vmatpush1.msra.mxu0 0.0
  %4115 = vmatprep.subr.mxu0 0.0
  %4116 = vmatpush1.msra.mxu0 0.0
  %4117 = vmatprep.subr.mxu0 0.0
  %4118 = vmatpush1.msra.mxu0 0.0
  %4119 = vmatprep.subr.mxu0 0.0
  %4120 = vmatpush1.msra.mxu0 0.0
  %4121 = vmatprep.subr.mxu0 0.0
  %4122 = vmatpush1.msra.mxu0 0.0
  %4123 = vmatprep.subr.mxu0 0.0
  %4124 = vmatpush1.msra.mxu0 0.0
  %4125 = vmatprep.subr.mxu0 0.0
  %4126 = vmatpush1.msra.mxu0 0.0
  %4127 = vmatprep.subr.mxu0 0.0
  %4128 = vmatpush1.msra.mxu0 0.0
  %4129 = vmatprep.subr.mxu0 0.0
  %4130 = vmatpush1.msra.mxu0 0.0
  %4131 = vmatprep.subr.mxu0 0.0
  %4132 = vmatpush1.msra.mxu0 0.0
  %4133 = vmatprep.subr.mxu0 0.0
  %4134 = vmatpush1.msra.mxu0 0.0
  %4135 = vmatprep.subr.mxu0 0.0
  %4136 = vmatpush1.msra.mxu0 0.0
  %4137 = vmatprep.subr.mxu0 0.0
  %4138 = vmatpush1.msra.mxu0 0.0
  %4139 = vmatprep.subr.mxu0 0.0
  %4140 = vmatpush1.msra.mxu0 0.0
  %4141 = vmatprep.subr.mxu0 0.0
  %4142 = vmatpush1.msra.mxu0 0.0
  %4143 = vmatprep.subr.mxu0 0.0
  %4144 = vmatpush1.msra.mxu0 0.0
  %4145 = vmatprep.subr.mxu0 0.0
  %4146 = vmatpush1.msra.mxu0 0.0
  %4147 = vmatprep.mubr.f32.mxu0 0.0
  %4148 = vmatmul.mubr.f32.gmra.mrb[0].mxu0 %v4078
  %v4149 = vpop.f32.mrb[0].mxu0
  %v4150 = vadd.f32 0.0, %v4149
  %v4151 = vpop.f32.mrb[0].mxu0
  %4152 = vmatprep.mubr.f32.mxu0 0.0
  %4153 = vmatmul.mubr.f32.gmra.mrb[0].mxu0 %v4081
  %v4154 = vpop.f32.mrb[0].mxu0
  %v4155 = vadd.f32 0.0, %v4154
  %v4156 = vpop.f32.mrb[0].mxu0
  %4157 = vdwg.mxu0
  %v4159 = vsel %vm457, %v3464, 0
  %v4162 = vsel %vm457, %v3537, 0
  %4164 = vmatprep.subr.mxu0 0.0
  %4165 = vmatpush1.msra.mxu0 %v194
  %4166 = vmatprep.subr.mxu0 0.0
  %4167 = vmatpush1.msra.mxu0 0.0
  %4168 = vmatprep.subr.mxu0 0.0
  %4169 = vmatpush1.msra.mxu0 0.0
  %4170 = vmatprep.subr.mxu0 0.0
  %4171 = vmatpush1.msra.mxu0 0.0
  %4172 = vmatprep.subr.mxu0 0.0
  %4173 = vmatpush1.msra.mxu0 0.0
  %4174 = vmatprep.subr.mxu0 0.0
  %4175 = vmatpush1.msra.mxu0 0.0
  %4176 = vmatprep.subr.mxu0 0.0
  %4177 = vmatpush1.msra.mxu0 0.0
  %4178 = vmatprep.subr.mxu0 0.0
  %4179 = vmatpush1.msra.mxu0 0.0
  %4180 = vmatprep.subr.mxu0 0.0
  %4181 = vmatpush1.msra.mxu0 0.0
  %4182 = vmatprep.subr.mxu0 0.0
  %4183 = vmatpush1.msra.mxu0 0.0
  %4184 = vmatprep.subr.mxu0 0.0
  %4185 = vmatpush1.msra.mxu0 0.0
  %4186 = vmatprep.subr.mxu0 0.0
  %4187 = vmatpush1.msra.mxu0 0.0
  %4188 = vmatprep.subr.mxu0 0.0
  %4189 = vmatpush1.msra.mxu0 0.0
  %4190 = vmatprep.subr.mxu0 0.0
  %4191 = vmatpush1.msra.mxu0 0.0
  %4192 = vmatprep.subr.mxu0 0.0
  %4193 = vmatpush1.msra.mxu0 0.0
  %4194 = vmatprep.subr.mxu0 0.0
  %4195 = vmatpush1.msra.mxu0 0.0
  %4196 = vmatprep.subr.mxu0 0.0
  %4197 = vmatpush1.msra.mxu0 0.0
  %4198 = vmatprep.subr.mxu0 0.0
  %4199 = vmatpush1.msra.mxu0 0.0
  %4200 = vmatprep.subr.mxu0 0.0
  %4201 = vmatpush1.msra.mxu0 0.0
  %4202 = vmatprep.subr.mxu0 0.0
  %4203 = vmatpush1.msra.mxu0 0.0
  %4204 = vmatprep.subr.mxu0 0.0
  %4205 = vmatpush1.msra.mxu0 0.0
  %4206 = vmatprep.subr.mxu0 0.0
  %4207 = vmatpush1.msra.mxu0 0.0
  %4208 = vmatprep.subr.mxu0 0.0
  %4209 = vmatpush1.msra.mxu0 0.0
  %4210 = vmatprep.subr.mxu0 0.0
  %4211 = vmatpush1.msra.mxu0 0.0
  %4212 = vmatprep.subr.mxu0 0.0
  %4213 = vmatpush1.msra.mxu0 0.0
  %4214 = vmatprep.subr.mxu0 0.0
  %4215 = vmatpush1.msra.mxu0 0.0
  %4216 = vmatprep.subr.mxu0 0.0
  %4217 = vmatpush1.msra.mxu0 0.0
  %4218 = vmatprep.subr.mxu0 0.0
  %4219 = vmatpush1.msra.mxu0 0.0
  %4220 = vmatprep.subr.mxu0 0.0
  %4221 = vmatpush1.msra.mxu0 0.0
  %4222 = vmatprep.subr.mxu0 0.0
  %4223 = vmatpush1.msra.mxu0 0.0
  %4224 = vmatprep.subr.mxu0 0.0
  %4225 = vmatpush1.msra.mxu0 0.0
  %4226 = vmatprep.subr.mxu0 0.0
  %4227 = vmatpush1.msra.mxu0 0.0
  %4228 = vmatprep.mubr.f32.mxu0 0.0
  %4229 = vmatmul.mubr.f32.gmra.mrb[0].mxu0 %v4159
  %v4230 = vpop.f32.mrb[0].mxu0
  %v4231 = vadd.f32 %v4150, %v4230
  %v4232 = vpop.f32.mrb[0].mxu0
  %4233 = vmatprep.mubr.f32.mxu0 0.0
  %4234 = vmatmul.mubr.f32.gmra.mrb[0].mxu0 %v4162
  %v4235 = vpop.f32.mrb[0].mxu0
  %v4236 = vadd.f32 %v4155, %v4235
  %v4237 = vpop.f32.mrb[0].mxu0
  %4238 = vdwg.mxu0
  %4239 = vmatprep.subr.mxu0 0.0
  %4240 = vmatpush1.msra.mxu0 %v154
  %4241 = vmatprep.subr.mxu0 0.0
  %4242 = vmatpush1.msra.mxu0 %v155
  %4243 = vmatprep.subr.mxu0 0.0
  %4244 = vmatpush1.msra.mxu0 %v156
  %4245 = vmatprep.subr.mxu0 0.0
  %4246 = vmatpush1.msra.mxu0 %v157
  %4247 = vmatprep.subr.mxu0 0.0
  %4248 = vmatpush1.msra.mxu0 0.0
  %4249 = vmatprep.subr.mxu0 0.0
  %4250 = vmatpush1.msra.mxu0 0.0
  %4251 = vmatprep.subr.mxu0 0.0
  %4252 = vmatpush1.msra.mxu0 0.0
  %4253 = vmatprep.subr.mxu0 0.0
  %4254 = vmatpush1.msra.mxu0 0.0
  %4255 = vmatprep.subr.mxu0 0.0
  %4256 = vmatpush1.msra.mxu0 0.0
  %4257 = vmatprep.subr.mxu0 0.0
  %4258 = vmatpush1.msra.mxu0 0.0
  %4259 = vmatprep.subr.mxu0 0.0
  %4260 = vmatpush1.msra.mxu0 0.0
  %4261 = vmatprep.subr.mxu0 0.0
  %4262 = vmatpush1.msra.mxu0 0.0
  %4263 = vmatprep.subr.mxu0 0.0
  %4264 = vmatpush1.msra.mxu0 0.0
  %4265 = vmatprep.subr.mxu0 0.0
  %4266 = vmatpush1.msra.mxu0 0.0
  %4267 = vmatprep.subr.mxu0 0.0
  %4268 = vmatpush1.msra.mxu0 0.0
  %4269 = vmatprep.subr.mxu0 0.0
  %4270 = vmatpush1.msra.mxu0 0.0
  %4271 = vmatprep.subr.mxu0 0.0
  %4272 = vmatpush1.msra.mxu0 0.0
  %4273 = vmatprep.subr.mxu0 0.0
  %4274 = vmatpush1.msra.mxu0 0.0
  %4275 = vmatprep.subr.mxu0 0.0
  %4276 = vmatpush1.msra.mxu0 0.0
  %4277 = vmatprep.subr.mxu0 0.0
  %4278 = vmatpush1.msra.mxu0 0.0
  %4279 = vmatprep.subr.mxu0 0.0
  %4280 = vmatpush1.msra.mxu0 0.0
  %4281 = vmatprep.subr.mxu0 0.0
  %4282 = vmatpush1.msra.mxu0 0.0
  %4283 = vmatprep.subr.mxu0 0.0
  %4284 = vmatpush1.msra.mxu0 0.0
  %4285 = vmatprep.subr.mxu0 0.0
  %4286 = vmatpush1.msra.mxu0 0.0
  %4287 = vmatprep.subr.mxu0 0.0
  %4288 = vmatpush1.msra.mxu0 0.0
  %4289 = vmatprep.subr.mxu0 0.0
  %4290 = vmatpush1.msra.mxu0 0.0
  %4291 = vmatprep.subr.mxu0 0.0
  %4292 = vmatpush1.msra.mxu0 0.0
  %4293 = vmatprep.subr.mxu0 0.0
  %4294 = vmatpush1.msra.mxu0 0.0
  %4295 = vmatprep.subr.mxu0 0.0
  %4296 = vmatpush1.msra.mxu0 0.0
  %4297 = vmatprep.subr.mxu0 0.0
  %4298 = vmatpush1.msra.mxu0 0.0
  %4299 = vmatprep.subr.mxu0 0.0
  %4300 = vmatpush1.msra.mxu0 0.0
  %4301 = vmatprep.subr.mxu0 0.0
  %4302 = vmatpush1.msra.mxu0 0.0
  %4303 = vmatprep.mubr.f32.mxu0 0.0
  %4304 = vmatmul.mubr.f32.gmra.mrb[0].mxu0 %v2998
  %v4305 = vpop.f32.mrb[0].mxu0
  %v4306 = vadd.f32 %v1476, %v4305
  %v4307 = vpop.f32.mrb[0].mxu0
  %4308 = vmatprep.mubr.f32.mxu0 0.0
  %4309 = vmatmul.mubr.f32.gmra.mrb[0].mxu0 %v3001
  %v4310 = vpop.f32.mrb[0].mxu0
  %v4311 = vadd.f32 %v1476, %v4310
  %v4312 = vpop.f32.mrb[0].mxu0
  %4313 = vdwg.mxu0
  %4314 = vmatprep.subr.mxu0 0.0
  %4315 = vmatpush1.msra.mxu0 %v170
  %4316 = vmatprep.subr.mxu0 0.0
  %4317 = vmatpush1.msra.mxu0 %v171
  %4318 = vmatprep.subr.mxu0 0.0
  %4319 = vmatpush1.msra.mxu0 %v172
  %4320 = vmatprep.subr.mxu0 0.0
  %4321 = vmatpush1.msra.mxu0 %v173
  %4322 = vmatprep.subr.mxu0 0.0
  %4323 = vmatpush1.msra.mxu0 0.0
  %4324 = vmatprep.subr.mxu0 0.0
  %4325 = vmatpush1.msra.mxu0 0.0
  %4326 = vmatprep.subr.mxu0 0.0
  %4327 = vmatpush1.msra.mxu0 0.0
  %4328 = vmatprep.subr.mxu0 0.0
  %4329 = vmatpush1.msra.mxu0 0.0
  %4330 = vmatprep.subr.mxu0 0.0
  %4331 = vmatpush1.msra.mxu0 0.0
  %4332 = vmatprep.subr.mxu0 0.0
  %4333 = vmatpush1.msra.mxu0 0.0
  %4334 = vmatprep.subr.mxu0 0.0
  %4335 = vmatpush1.msra.mxu0 0.0
  %4336 = vmatprep.subr.mxu0 0.0
  %4337 = vmatpush1.msra.mxu0 0.0
  %4338 = vmatprep.subr.mxu0 0.0
  %4339 = vmatpush1.msra.mxu0 0.0
  %4340 = vmatprep.subr.mxu0 0.0
  %4341 = vmatpush1.msra.mxu0 0.0
  %4342 = vmatprep.subr.mxu0 0.0
  %4343 = vmatpush1.msra.mxu0 0.0
  %4344 = vmatprep.subr.mxu0 0.0
  %4345 = vmatpush1.msra.mxu0 0.0
  %4346 = vmatprep.subr.mxu0 0.0
  %4347 = vmatpush1.msra.mxu0 0.0
  %4348 = vmatprep.subr.mxu0 0.0
  %4349 = vmatpush1.msra.mxu0 0.0
  %4350 = vmatprep.subr.mxu0 0.0
  %4351 = vmatpush1.msra.mxu0 0.0
  %4352 = vmatprep.subr.mxu0 0.0
  %4353 = vmatpush1.msra.mxu0 0.0
  %4354 = vmatprep.subr.mxu0 0.0
  %4355 = vmatpush1.msra.mxu0 0.0
  %4356 = vmatprep.subr.mxu0 0.0
  %4357 = vmatpush1.msra.mxu0 0.0
  %4358 = vmatprep.subr.mxu0 0.0
  %4359 = vmatpush1.msra.mxu0 0.0
  %4360 = vmatprep.subr.mxu0 0.0
  %4361 = vmatpush1.msra.mxu0 0.0
  %4362 = vmatprep.subr.mxu0 0.0
  %4363 = vmatpush1.msra.mxu0 0.0
  %4364 = vmatprep.subr.mxu0 0.0
  %4365 = vmatpush1.msra.mxu0 0.0
  %4366 = vmatprep.subr.mxu0 0.0
  %4367 = vmatpush1.msra.mxu0 0.0
  %4368 = vmatprep.subr.mxu0 0.0
  %4369 = vmatpush1.msra.mxu0 0.0
  %4370 = vmatprep.subr.mxu0 0.0
  %4371 = vmatpush1.msra.mxu0 0.0
  %4372 = vmatprep.subr.mxu0 0.0
  %4373 = vmatpush1.msra.mxu0 0.0
  %4374 = vmatprep.subr.mxu0 0.0
  %4375 = vmatpush1.msra.mxu0 0.0
  %4376 = vmatprep.subr.mxu0 0.0
  %4377 = vmatpush1.msra.mxu0 0.0
  %4378 = vmatprep.mubr.f32.mxu0 0.0
  %4379 = vmatmul.mubr.f32.gmra.mrb[0].mxu0 %v2998
  %v4380 = vpop.f32.mrb[0].mxu0
  %v4381 = vadd.f32 0.0, %v4380
  %v4382 = vpop.f32.mrb[0].mxu0
  %4383 = vmatprep.mubr.f32.mxu0 0.0
  %4384 = vmatmul.mubr.f32.gmra.mrb[0].mxu0 %v3001
  %v4385 = vpop.f32.mrb[0].mxu0
  %v4386 = vadd.f32 0.0, %v4385
  %v4387 = vpop.f32.mrb[0].mxu0
  %4388 = vdwg.mxu0
  %4389 = vmatprep.subr.mxu0 0.0
  %4390 = vmatpush1.msra.mxu0 %v186
  %4391 = vmatprep.subr.mxu0 0.0
  %4392 = vmatpush1.msra.mxu0 %v187
  %4393 = vmatprep.subr.mxu0 0.0
  %4394 = vmatpush1.msra.mxu0 %v188
  %4395 = vmatprep.subr.mxu0 0.0
  %4396 = vmatpush1.msra.mxu0 %v189
  %4397 = vmatprep.subr.mxu0 0.0
  %4398 = vmatpush1.msra.mxu0 0.0
  %4399 = vmatprep.subr.mxu0 0.0
  %4400 = vmatpush1.msra.mxu0 0.0
  %4401 = vmatprep.subr.mxu0 0.0
  %4402 = vmatpush1.msra.mxu0 0.0
  %4403 = vmatprep.subr.mxu0 0.0
  %4404 = vmatpush1.msra.mxu0 0.0
  %4405 = vmatprep.subr.mxu0 0.0
  %4406 = vmatpush1.msra.mxu0 0.0
  %4407 = vmatprep.subr.mxu0 0.0
  %4408 = vmatpush1.msra.mxu0 0.0
  %4409 = vmatprep.subr.mxu0 0.0
  %4410 = vmatpush1.msra.mxu0 0.0
  %4411 = vmatprep.subr.mxu0 0.0
  %4412 = vmatpush1.msra.mxu0 0.0
  %4413 = vmatprep.subr.mxu0 0.0
  %4414 = vmatpush1.msra.mxu0 0.0
  %4415 = vmatprep.subr.mxu0 0.0
  %4416 = vmatpush1.msra.mxu0 0.0
  %4417 = vmatprep.subr.mxu0 0.0
  %4418 = vmatpush1.msra.mxu0 0.0
  %4419 = vmatprep.subr.mxu0 0.0
  %4420 = vmatpush1.msra.mxu0 0.0
  %4421 = vmatprep.subr.mxu0 0.0
  %4422 = vmatpush1.msra.mxu0 0.0
  %4423 = vmatprep.subr.mxu0 0.0
  %4424 = vmatpush1.msra.mxu0 0.0
  %4425 = vmatprep.subr.mxu0 0.0
  %4426 = vmatpush1.msra.mxu0 0.0
  %4427 = vmatprep.subr.mxu0 0.0
  %4428 = vmatpush1.msra.mxu0 0.0
  %4429 = vmatprep.subr.mxu0 0.0
  %4430 = vmatpush1.msra.mxu0 0.0
  %4431 = vmatprep.subr.mxu0 0.0
  %4432 = vmatpush1.msra.mxu0 0.0
  %4433 = vmatprep.subr.mxu0 0.0
  %4434 = vmatpush1.msra.mxu0 0.0
  %4435 = vmatprep.subr.mxu0 0.0
  %4436 = vmatpush1.msra.mxu0 0.0
  %4437 = vmatprep.subr.mxu0 0.0
  %4438 = vmatpush1.msra.mxu0 0.0
  %4439 = vmatprep.subr.mxu0 0.0
  %4440 = vmatpush1.msra.mxu0 0.0
  %4441 = vmatprep.subr.mxu0 0.0
  %4442 = vmatpush1.msra.mxu0 0.0
  %4443 = vmatprep.subr.mxu0 0.0
  %4444 = vmatpush1.msra.mxu0 0.0
  %4445 = vmatprep.subr.mxu0 0.0
  %4446 = vmatpush1.msra.mxu0 0.0
  %4447 = vmatprep.subr.mxu0 0.0
  %4448 = vmatpush1.msra.mxu0 0.0
  %4449 = vmatprep.subr.mxu0 0.0
  %4450 = vmatpush1.msra.mxu0 0.0
  %4451 = vmatprep.subr.mxu0 0.0
  %4452 = vmatpush1.msra.mxu0 0.0
  %4453 = vmatprep.mubr.f32.mxu0 0.0
  %4454 = vmatmul.mubr.f32.gmra.mrb[0].mxu0 %v2998
  %v4455 = vpop.f32.mrb[0].mxu0
  %v4456 = vadd.f32 0.0, %v4455
  %v4457 = vpop.f32.mrb[0].mxu0
  %4458 = vmatprep.mubr.f32.mxu0 0.0
  %4459 = vmatmul.mubr.f32.gmra.mrb[0].mxu0 %v3001
  %v4460 = vpop.f32.mrb[0].mxu0
  %v4461 = vadd.f32 0.0, %v4460
  %v4462 = vpop.f32.mrb[0].mxu0
  %4463 = vdwg.mxu0
  %v4465 = vsel %vm457, %v4306, 0
  %v4468 = vsel %vm457, %v4381, 0
  %4470 = vmatprep.subr.mxu0 0.0
  %4471 = vmatpush1.xpose.msra.mxu0 %v4468
  %4472 = vmatprep.subr.mxu0 0.0
  %4473 = vmatpush1.xpose.msra.mxu0 0.0
  %4474 = vmatprep.subr.mxu0 0.0
  %4475 = vmatpush1.xpose.msra.mxu0 0.0
  %4476 = vmatprep.subr.mxu0 0.0
  %4477 = vmatpush1.xpose.msra.mxu0 0.0
  %4478 = vmatprep.subr.mxu0 0.0
  %4479 = vmatpush1.xpose.msra.mxu0 0.0
  %4480 = vmatprep.subr.mxu0 0.0
  %4481 = vmatpush1.xpose.msra.mxu0 0.0
  %4482 = vmatprep.subr.mxu0 0.0
  %4483 = vmatpush1.xpose.msra.mxu0 0.0
  %4484 = vmatprep.subr.mxu0 0.0
  %4485 = vmatpush1.xpose.msra.mxu0 0.0
  %4486 = vmatprep.subr.mxu0 0.0
  %4487 = vmatpush1.xpose.msra.mxu0 0.0
  %4488 = vmatprep.subr.mxu0 0.0
  %4489 = vmatpush1.xpose.msra.mxu0 0.0
  %4490 = vmatprep.subr.mxu0 0.0
  %4491 = vmatpush1.xpose.msra.mxu0 0.0
  %4492 = vmatprep.subr.mxu0 0.0
  %4493 = vmatpush1.xpose.msra.mxu0 0.0
  %4494 = vmatprep.subr.mxu0 0.0
  %4495 = vmatpush1.xpose.msra.mxu0 0.0
  %4496 = vmatprep.subr.mxu0 0.0
  %4497 = vmatpush1.xpose.msra.mxu0 0.0
  %4498 = vmatprep.subr.mxu0 0.0
  %4499 = vmatpush1.xpose.msra.mxu0 0.0
  %4500 = vmatprep.subr.mxu0 0.0
  %4501 = vmatpush1.xpose.msra.mxu0 0.0
  %4502 = vmatprep.subr.mxu0 0.0
  %4503 = vmatpush1.xpose.msra.mxu0 0.0
  %4504 = vmatprep.subr.mxu0 0.0
  %4505 = vmatpush1.xpose.msra.mxu0 0.0
  %4506 = vmatprep.subr.mxu0 0.0
  %4507 = vmatpush1.xpose.msra.mxu0 0.0
  %4508 = vmatprep.subr.mxu0 0.0
  %4509 = vmatpush1.xpose.msra.mxu0 0.0
  %4510 = vmatprep.subr.mxu0 0.0
  %4511 = vmatpush1.xpose.msra.mxu0 0.0
  %4512 = vmatprep.subr.mxu0 0.0
  %4513 = vmatpush1.xpose.msra.mxu0 0.0
  %4514 = vmatprep.subr.mxu0 0.0
  %4515 = vmatpush1.xpose.msra.mxu0 0.0
  %4516 = vmatprep.subr.mxu0 0.0
  %4517 = vmatpush1.xpose.msra.mxu0 0.0
  %4518 = vmatprep.subr.mxu0 0.0
  %4519 = vmatpush1.xpose.msra.mxu0 0.0
  %4520 = vmatprep.subr.mxu0 0.0
  %4521 = vmatpush1.xpose.msra.mxu0 0.0
  %4522 = vmatprep.subr.mxu0 0.0
  %4523 = vmatpush1.xpose.msra.mxu0 0.0
  %4524 = vmatprep.subr.mxu0 0.0
  %4525 = vmatpush1.xpose.msra.mxu0 0.0
  %4526 = vmatprep.subr.mxu0 0.0
  %4527 = vmatpush1.xpose.msra.mxu0 0.0
  %4528 = vmatprep.subr.mxu0 0.0
  %4529 = vmatpush1.xpose.msra.mxu0 0.0
  %4530 = vmatprep.subr.mxu0 0.0
  %4531 = vmatpush1.xpose.msra.mxu0 0.0
  %4532 = vmatprep.subr.mxu0 0.0
  %4533 = vmatpush1.xpose.msra.mxu0 0.0
  %4534 = vmatprep.mubr.f32.mxu0 0.0
  %4535 = vmatmul.mubr.f32.gmra.mrb[0].mxu0 %v4465
  %v4536 = vpop.f32.mrb[0].mxu0
  %v4537 = vadd.f32 %v139, %v4536
  %v4538 = vpop.f32.mrb[0].mxu0
  %4539 = vdwg.mxu0
  %v4541 = vsel %vm457, %v4311, 0
  %v4544 = vsel %vm457, %v4386, 0
  %4546 = vmatprep.subr.mxu0 0.0
  %4547 = vmatpush1.xpose.msra.mxu0 %v4544
  %4548 = vmatprep.subr.mxu0 0.0
  %4549 = vmatpush1.xpose.msra.mxu0 0.0
  %4550 = vmatprep.subr.mxu0 0.0
  %4551 = vmatpush1.xpose.msra.mxu0 0.0
  %4552 = vmatprep.subr.mxu0 0.0
  %4553 = vmatpush1.xpose.msra.mxu0 0.0
  %4554 = vmatprep.subr.mxu0 0.0
  %4555 = vmatpush1.xpose.msra.mxu0 0.0
  %4556 = vmatprep.subr.mxu0 0.0
  %4557 = vmatpush1.xpose.msra.mxu0 0.0
  %4558 = vmatprep.subr.mxu0 0.0
  %4559 = vmatpush1.xpose.msra.mxu0 0.0
  %4560 = vmatprep.subr.mxu0 0.0
  %4561 = vmatpush1.xpose.msra.mxu0 0.0
  %4562 = vmatprep.subr.mxu0 0.0
  %4563 = vmatpush1.xpose.msra.mxu0 0.0
  %4564 = vmatprep.subr.mxu0 0.0
  %4565 = vmatpush1.xpose.msra.mxu0 0.0
  %4566 = vmatprep.subr.mxu0 0.0
  %4567 = vmatpush1.xpose.msra.mxu0 0.0
  %4568 = vmatprep.subr.mxu0 0.0
  %4569 = vmatpush1.xpose.msra.mxu0 0.0
  %4570 = vmatprep.subr.mxu0 0.0
  %4571 = vmatpush1.xpose.msra.mxu0 0.0
  %4572 = vmatprep.subr.mxu0 0.0
  %4573 = vmatpush1.xpose.msra.mxu0 0.0
  %4574 = vmatprep.subr.mxu0 0.0
  %4575 = vmatpush1.xpose.msra.mxu0 0.0
  %4576 = vmatprep.subr.mxu0 0.0
  %4577 = vmatpush1.xpose.msra.mxu0 0.0
  %4578 = vmatprep.subr.mxu0 0.0
  %4579 = vmatpush1.xpose.msra.mxu0 0.0
  %4580 = vmatprep.subr.mxu0 0.0
  %4581 = vmatpush1.xpose.msra.mxu0 0.0
  %4582 = vmatprep.subr.mxu0 0.0
  %4583 = vmatpush1.xpose.msra.mxu0 0.0
  %4584 = vmatprep.subr.mxu0 0.0
  %4585 = vmatpush1.xpose.msra.mxu0 0.0
  %4586 = vmatprep.subr.mxu0 0.0
  %4587 = vmatpush1.xpose.msra.mxu0 0.0
  %4588 = vmatprep.subr.mxu0 0.0
  %4589 = vmatpush1.xpose.msra.mxu0 0.0
  %4590 = vmatprep.subr.mxu0 0.0
  %4591 = vmatpush1.xpose.msra.mxu0 0.0
  %4592 = vmatprep.subr.mxu0 0.0
  %4593 = vmatpush1.xpose.msra.mxu0 0.0
  %4594 = vmatprep.subr.mxu0 0.0
  %4595 = vmatpush1.xpose.msra.mxu0 0.0
  %4596 = vmatprep.subr.mxu0 0.0
  %4597 = vmatpush1.xpose.msra.mxu0 0.0
  %4598 = vmatprep.subr.mxu0 0.0
  %4599 = vmatpush1.xpose.msra.mxu0 0.0
  %4600 = vmatprep.subr.mxu0 0.0
  %4601 = vmatpush1.xpose.msra.mxu0 0.0
  %4602 = vmatprep.subr.mxu0 0.0
  %4603 = vmatpush1.xpose.msra.mxu0 0.0
  %4604 = vmatprep.subr.mxu0 0.0
  %4605 = vmatpush1.xpose.msra.mxu0 0.0
  %4606 = vmatprep.subr.mxu0 0.0
  %4607 = vmatpush1.xpose.msra.mxu0 0.0
  %4608 = vmatprep.subr.mxu0 0.0
  %4609 = vmatpush1.xpose.msra.mxu0 0.0
  %4610 = vmatprep.mubr.f32.mxu0 0.0
  %4611 = vmatmul.mubr.f32.gmra.mrb[0].mxu0 %v4541
  %v4612 = vpop.f32.mrb[0].mxu0
  %v4613 = vadd.f32 %v143, %v4612
  %v4614 = vpop.f32.mrb[0].mxu0
  %4615 = vdwg.mxu0
  %v4616 = vmul.f32 %v4537, 1.442695
  %v4617 = vpow.pop %v4616
  %v4618 = vmul.f32 %v4613, 1.442695
  %v4619 = vpow.pop %v4618
  %v4620 = vsel %vm457, %v4617, 0.0
  %4621 = vadd.xlane.f32.xlu0 %v4620
  %v4622 = vpop.xlane.xlu0 %4621
  %v4623 = vsel %vm457, %v4619, 0.0
  %4624 = vadd.xlane.f32.xlu0 %v4623
  %v4625 = vpop.xlane.xlu0 %4624
  %v4626 = vrcp.pop %v4622
  %v4627 = vmul.f32 %v4617, %v4626
  %v4628 = vrcp.pop %v4625
  %v4629 = vmul.f32 %v4619, %v4628
  %v4631 = vsel %vm457, %v4627, 0
  %4633 = vmatprep.subr.mxu0 0.0
  %4634 = vmatpush1.msra.mxu0 %v4456
  %4635 = vmatprep.subr.mxu0 0.0
  %4636 = vmatpush1.msra.mxu0 0.0
  %4637 = vmatprep.subr.mxu0 0.0
  %4638 = vmatpush1.msra.mxu0 0.0
  %4639 = vmatprep.subr.mxu0 0.0
  %4640 = vmatpush1.msra.mxu0 0.0
  %4641 = vmatprep.subr.mxu0 0.0
  %4642 = vmatpush1.msra.mxu0 0.0
  %4643 = vmatprep.subr.mxu0 0.0
  %4644 = vmatpush1.msra.mxu0 0.0
  %4645 = vmatprep.subr.mxu0 0.0
  %4646 = vmatpush1.msra.mxu0 0.0
  %4647 = vmatprep.subr.mxu0 0.0
  %4648 = vmatpush1.msra.mxu0 0.0
  %4649 = vmatprep.subr.mxu0 0.0
  %4650 = vmatpush1.msra.mxu0 0.0
  %4651 = vmatprep.subr.mxu0 0.0
  %4652 = vmatpush1.msra.mxu0 0.0
  %4653 = vmatprep.subr.mxu0 0.0
  %4654 = vmatpush1.msra.mxu0 0.0
  %4655 = vmatprep.subr.mxu0 0.0
  %4656 = vmatpush1.msra.mxu0 0.0
  %4657 = vmatprep.subr.mxu0 0.0
  %4658 = vmatpush1.msra.mxu0 0.0
  %4659 = vmatprep.subr.mxu0 0.0
  %4660 = vmatpush1.msra.mxu0 0.0
  %4661 = vmatprep.subr.mxu0 0.0
  %4662 = vmatpush1.msra.mxu0 0.0
  %4663 = vmatprep.subr.mxu0 0.0
  %4664 = vmatpush1.msra.mxu0 0.0
  %4665 = vmatprep.subr.mxu0 0.0
  %4666 = vmatpush1.msra.mxu0 0.0
  %4667 = vmatprep.subr.mxu0 0.0
  %4668 = vmatpush1.msra.mxu0 0.0
  %4669 = vmatprep.subr.mxu0 0.0
  %4670 = vmatpush1.msra.mxu0 0.0
  %4671 = vmatprep.subr.mxu0 0.0
  %4672 = vmatpush1.msra.mxu0 0.0
  %4673 = vmatprep.subr.mxu0 0.0
  %4674 = vmatpush1.msra.mxu0 0.0
  %4675 = vmatprep.subr.mxu0 0.0
  %4676 = vmatpush1.msra.mxu0 0.0
  %4677 = vmatprep.subr.mxu0 0.0
  %4678 = vmatpush1.msra.mxu0 0.0
  %4679 = vmatprep.subr.mxu0 0.0
  %4680 = vmatpush1.msra.mxu0 0.0
  %4681 = vmatprep.subr.mxu0 0.0
  %4682 = vmatpush1.msra.mxu0 0.0
  %4683 = vmatprep.subr.mxu0 0.0
  %4684 = vmatpush1.msra.mxu0 0.0
  %4685 = vmatprep.subr.mxu0 0.0
  %4686 = vmatpush1.msra.mxu0 0.0
  %4687 = vmatprep.subr.mxu0 0.0
  %4688 = vmatpush1.msra.mxu0 0.0
  %4689 = vmatprep.subr.mxu0 0.0
  %4690 = vmatpush1.msra.mxu0 0.0
  %4691 = vmatprep.subr.mxu0 0.0
  %4692 = vmatpush1.msra.mxu0 0.0
  %4693 = vmatprep.subr.mxu0 0.0
  %4694 = vmatpush1.msra.mxu0 0.0
  %4695 = vmatprep.subr.mxu0 0.0
  %4696 = vmatpush1.msra.mxu0 0.0
  %4697 = vmatprep.mubr.f32.mxu0 0.0
  %4698 = vmatmul.mubr.f32.gmra.mrb[0].mxu0 %v4631
  %v4699 = vpop.f32.mrb[0].mxu0
  %v4700 = vadd.f32 0.0, %v4699
  %v4701 = vpop.f32.mrb[0].mxu0
  %4702 = vdwg.mxu0
  %v4704 = vsel %vm457, %v4629, 0
  %4706 = vmatprep.subr.mxu0 0.0
  %4707 = vmatpush1.msra.mxu0 %v4461
  %4708 = vmatprep.subr.mxu0 0.0
  %4709 = vmatpush1.msra.mxu0 0.0
  %4710 = vmatprep.subr.mxu0 0.0
  %4711 = vmatpush1.msra.mxu0 0.0
  %4712 = vmatprep.subr.mxu0 0.0
  %4713 = vmatpush1.msra.mxu0 0.0
  %4714 = vmatprep.subr.mxu0 0.0
  %4715 = vmatpush1.msra.mxu0 0.0
  %4716 = vmatprep.subr.mxu0 0.0
  %4717 = vmatpush1.msra.mxu0 0.0
  %4718 = vmatprep.subr.mxu0 0.0
  %4719 = vmatpush1.msra.mxu0 0.0
  %4720 = vmatprep.subr.mxu0 0.0
  %4721 = vmatpush1.msra.mxu0 0.0
  %4722 = vmatprep.subr.mxu0 0.0
  %4723 = vmatpush1.msra.mxu0 0.0
  %4724 = vmatprep.subr.mxu0 0.0
  %4725 = vmatpush1.msra.mxu0 0.0
  %4726 = vmatprep.subr.mxu0 0.0
  %4727 = vmatpush1.msra.mxu0 0.0
  %4728 = vmatprep.subr.mxu0 0.0
  %4729 = vmatpush1.msra.mxu0 0.0
  %4730 = vmatprep.subr.mxu0 0.0
  %4731 = vmatpush1.msra.mxu0 0.0
  %4732 = vmatprep.subr.mxu0 0.0
  %4733 = vmatpush1.msra.mxu0 0.0
  %4734 = vmatprep.subr.mxu0 0.0
  %4735 = vmatpush1.msra.mxu0 0.0
  %4736 = vmatprep.subr.mxu0 0.0
  %4737 = vmatpush1.msra.mxu0 0.0
  %4738 = vmatprep.subr.mxu0 0.0
  %4739 = vmatpush1.msra.mxu0 0.0
  %4740 = vmatprep.subr.mxu0 0.0
  %4741 = vmatpush1.msra.mxu0 0.0
  %4742 = vmatprep.subr.mxu0 0.0
  %4743 = vmatpush1.msra.mxu0 0.0
  %4744 = vmatprep.subr.mxu0 0.0
  %4745 = vmatpush1.msra.mxu0 0.0
  %4746 = vmatprep.subr.mxu0 0.0
  %4747 = vmatpush1.msra.mxu0 0.0
  %4748 = vmatprep.subr.mxu0 0.0
  %4749 = vmatpush1.msra.mxu0 0.0
  %4750 = vmatprep.subr.mxu0 0.0
  %4751 = vmatpush1.msra.mxu0 0.0
  %4752 = vmatprep.subr.mxu0 0.0
  %4753 = vmatpush1.msra.mxu0 0.0
  %4754 = vmatprep.subr.mxu0 0.0
  %4755 = vmatpush1.msra.mxu0 0.0
  %4756 = vmatprep.subr.mxu0 0.0
  %4757 = vmatpush1.msra.mxu0 0.0
  %4758 = vmatprep.subr.mxu0 0.0
  %4759 = vmatpush1.msra.mxu0 0.0
  %4760 = vmatprep.subr.mxu0 0.0
  %4761 = vmatpush1.msra.mxu0 0.0
  %4762 = vmatprep.subr.mxu0 0.0
  %4763 = vmatpush1.msra.mxu0 0.0
  %4764 = vmatprep.subr.mxu0 0.0
  %4765 = vmatpush1.msra.mxu0 0.0
  %4766 = vmatprep.subr.mxu0 0.0
  %4767 = vmatpush1.msra.mxu0 0.0
  %4768 = vmatprep.subr.mxu0 0.0
  %4769 = vmatpush1.msra.mxu0 0.0
  %4770 = vmatprep.mubr.f32.mxu0 0.0
  %4771 = vmatmul.mubr.f32.gmra.mrb[0].mxu0 %v4704
  %v4772 = vpop.f32.mrb[0].mxu0
  %v4773 = vadd.f32 0.0, %v4772
  %v4774 = vpop.f32.mrb[0].mxu0
  %4775 = vdwg.mxu0
  %v4777 = vsel %vm457, %v4700, 0
  %v4780 = vsel %vm457, %v4773, 0
  %4782 = vmatprep.subr.mxu0 0.0
  %4783 = vmatpush1.msra.mxu0 %v196
  %4784 = vmatprep.subr.mxu0 0.0
  %4785 = vmatpush1.msra.mxu0 0.0
  %4786 = vmatprep.subr.mxu0 0.0
  %4787 = vmatpush1.msra.mxu0 0.0
  %4788 = vmatprep.subr.mxu0 0.0
  %4789 = vmatpush1.msra.mxu0 0.0
  %4790 = vmatprep.subr.mxu0 0.0
  %4791 = vmatpush1.msra.mxu0 0.0
  %4792 = vmatprep.subr.mxu0 0.0
  %4793 = vmatpush1.msra.mxu0 0.0
  %4794 = vmatprep.subr.mxu0 0.0
  %4795 = vmatpush1.msra.mxu0 0.0
  %4796 = vmatprep.subr.mxu0 0.0
  %4797 = vmatpush1.msra.mxu0 0.0
  %4798 = vmatprep.subr.mxu0 0.0
  %4799 = vmatpush1.msra.mxu0 0.0
  %4800 = vmatprep.subr.mxu0 0.0
  %4801 = vmatpush1.msra.mxu0 0.0
  %4802 = vmatprep.subr.mxu0 0.0
  %4803 = vmatpush1.msra.mxu0 0.0
  %4804 = vmatprep.subr.mxu0 0.0
  %4805 = vmatpush1.msra.mxu0 0.0
  %4806 = vmatprep.subr.mxu0 0.0
  %4807 = vmatpush1.msra.mxu0 0.0
  %4808 = vmatprep.subr.mxu0 0.0
  %4809 = vmatpush1.msra.mxu0 0.0
  %4810 = vmatprep.subr.mxu0 0.0
  %4811 = vmatpush1.msra.mxu0 0.0
  %4812 = vmatprep.subr.mxu0 0.0
  %4813 = vmatpush1.msra.mxu0 0.0
  %4814 = vmatprep.subr.mxu0 0.0
  %4815 = vmatpush1.msra.mxu0 0.0
  %4816 = vmatprep.subr.mxu0 0.0
  %4817 = vmatpush1.msra.mxu0 0.0
  %4818 = vmatprep.subr.mxu0 0.0
  %4819 = vmatpush1.msra.mxu0 0.0
  %4820 = vmatprep.subr.mxu0 0.0
  %4821 = vmatpush1.msra.mxu0 0.0
  %4822 = vmatprep.subr.mxu0 0.0
  %4823 = vmatpush1.msra.mxu0 0.0
  %4824 = vmatprep.subr.mxu0 0.0
  %4825 = vmatpush1.msra.mxu0 0.0
  %4826 = vmatprep.subr.mxu0 0.0
  %4827 = vmatpush1.msra.mxu0 0.0
  %4828 = vmatprep.subr.mxu0 0.0
  %4829 = vmatpush1.msra.mxu0 0.0
  %4830 = vmatprep.subr.mxu0 0.0
  %4831 = vmatpush1.msra.mxu0 0.0
  %4832 = vmatprep.subr.mxu0 0.0
  %4833 = vmatpush1.msra.mxu0 0.0
  %4834 = vmatprep.subr.mxu0 0.0
  %4835 = vmatpush1.msra.mxu0 0.0
  %4836 = vmatprep.subr.mxu0 0.0
  %4837 = vmatpush1.msra.mxu0 0.0
  %4838 = vmatprep.subr.mxu0 0.0
  %4839 = vmatpush1.msra.mxu0 0.0
  %4840 = vmatprep.subr.mxu0 0.0
  %4841 = vmatpush1.msra.mxu0 0.0
  %4842 = vmatprep.subr.mxu0 0.0
  %4843 = vmatpush1.msra.mxu0 0.0
  %4844 = vmatprep.subr.mxu0 0.0
  %4845 = vmatpush1.msra.mxu0 0.0
  %4846 = vmatprep.mubr.f32.mxu0 0.0
  %4847 = vmatmul.mubr.f32.gmra.mrb[0].mxu0 %v4777
  %v4848 = vpop.f32.mrb[0].mxu0
  %v4849 = vadd.f32 0.0, %v4848
  %v4850 = vpop.f32.mrb[0].mxu0
  %4851 = vmatprep.mubr.f32.mxu0 0.0
  %4852 = vmatmul.mubr.f32.gmra.mrb[0].mxu0 %v4780
  %v4853 = vpop.f32.mrb[0].mxu0
  %v4854 = vadd.f32 0.0, %v4853
  %v4855 = vpop.f32.mrb[0].mxu0
  %4856 = vdwg.mxu0
  %v4857 = vadd.f32 %v4231, %v4849
  %v4858 = vadd.f32 %v4236, %v4854
  %4859 = vmatprep.subr.mxu0 0.0
  %4860 = vmatpush1.msra.mxu0 %v158
  %4861 = vmatprep.subr.mxu0 0.0
  %4862 = vmatpush1.msra.mxu0 %v159
  %4863 = vmatprep.subr.mxu0 0.0
  %4864 = vmatpush1.msra.mxu0 %v160
  %4865 = vmatprep.subr.mxu0 0.0
  %4866 = vmatpush1.msra.mxu0 %v161
  %4867 = vmatprep.subr.mxu0 0.0
  %4868 = vmatpush1.msra.mxu0 0.0
  %4869 = vmatprep.subr.mxu0 0.0
  %4870 = vmatpush1.msra.mxu0 0.0
  %4871 = vmatprep.subr.mxu0 0.0
  %4872 = vmatpush1.msra.mxu0 0.0
  %4873 = vmatprep.subr.mxu0 0.0
  %4874 = vmatpush1.msra.mxu0 0.0
  %4875 = vmatprep.subr.mxu0 0.0
  %4876 = vmatpush1.msra.mxu0 0.0
  %4877 = vmatprep.subr.mxu0 0.0
  %4878 = vmatpush1.msra.mxu0 0.0
  %4879 = vmatprep.subr.mxu0 0.0
  %4880 = vmatpush1.msra.mxu0 0.0
  %4881 = vmatprep.subr.mxu0 0.0
  %4882 = vmatpush1.msra.mxu0 0.0
  %4883 = vmatprep.subr.mxu0 0.0
  %4884 = vmatpush1.msra.mxu0 0.0
  %4885 = vmatprep.subr.mxu0 0.0
  %4886 = vmatpush1.msra.mxu0 0.0
  %4887 = vmatprep.subr.mxu0 0.0
  %4888 = vmatpush1.msra.mxu0 0.0
  %4889 = vmatprep.subr.mxu0 0.0
  %4890 = vmatpush1.msra.mxu0 0.0
  %4891 = vmatprep.subr.mxu0 0.0
  %4892 = vmatpush1.msra.mxu0 0.0
  %4893 = vmatprep.subr.mxu0 0.0
  %4894 = vmatpush1.msra.mxu0 0.0
  %4895 = vmatprep.subr.mxu0 0.0
  %4896 = vmatpush1.msra.mxu0 0.0
  %4897 = vmatprep.subr.mxu0 0.0
  %4898 = vmatpush1.msra.mxu0 0.0
  %4899 = vmatprep.subr.mxu0 0.0
  %4900 = vmatpush1.msra.mxu0 0.0
  %4901 = vmatprep.subr.mxu0 0.0
  %4902 = vmatpush1.msra.mxu0 0.0
  %4903 = vmatprep.subr.mxu0 0.0
  %4904 = vmatpush1.msra.mxu0 0.0
  %4905 = vmatprep.subr.mxu0 0.0
  %4906 = vmatpush1.msra.mxu0 0.0
  %4907 = vmatprep.subr.mxu0 0.0
  %4908 = vmatpush1.msra.mxu0 0.0
  %4909 = vmatprep.subr.mxu0 0.0
  %4910 = vmatpush1.msra.mxu0 0.0
  %4911 = vmatprep.subr.mxu0 0.0
  %4912 = vmatpush1.msra.mxu0 0.0
  %4913 = vmatprep.subr.mxu0 0.0
  %4914 = vmatpush1.msra.mxu0 0.0
  %4915 = vmatprep.subr.mxu0 0.0
  %4916 = vmatpush1.msra.mxu0 0.0
  %4917 = vmatprep.subr.mxu0 0.0
  %4918 = vmatpush1.msra.mxu0 0.0
  %4919 = vmatprep.subr.mxu0 0.0
  %4920 = vmatpush1.msra.mxu0 0.0
  %4921 = vmatprep.subr.mxu0 0.0
  %4922 = vmatpush1.msra.mxu0 0.0
  %4923 = vmatprep.mubr.f32.mxu0 0.0
  %4924 = vmatmul.mubr.f32.gmra.mrb[0].mxu0 %v2998
  %v4925 = vpop.f32.mrb[0].mxu0
  %v4926 = vadd.f32 %v2100, %v4925
  %v4927 = vpop.f32.mrb[0].mxu0
  %4928 = vmatprep.mubr.f32.mxu0 0.0
  %4929 = vmatmul.mubr.f32.gmra.mrb[0].mxu0 %v3001
  %v4930 = vpop.f32.mrb[0].mxu0
  %v4931 = vadd.f32 %v2100, %v4930
  %v4932 = vpop.f32.mrb[0].mxu0
  %4933 = vdwg.mxu0
  %4934 = vmatprep.subr.mxu0 0.0
  %4935 = vmatpush1.msra.mxu0 %v174
  %4936 = vmatprep.subr.mxu0 0.0
  %4937 = vmatpush1.msra.mxu0 %v175
  %4938 = vmatprep.subr.mxu0 0.0
  %4939 = vmatpush1.msra.mxu0 %v176
  %4940 = vmatprep.subr.mxu0 0.0
  %4941 = vmatpush1.msra.mxu0 %v177
  %4942 = vmatprep.subr.mxu0 0.0
  %4943 = vmatpush1.msra.mxu0 0.0
  %4944 = vmatprep.subr.mxu0 0.0
  %4945 = vmatpush1.msra.mxu0 0.0
  %4946 = vmatprep.subr.mxu0 0.0
  %4947 = vmatpush1.msra.mxu0 0.0
  %4948 = vmatprep.subr.mxu0 0.0
  %4949 = vmatpush1.msra.mxu0 0.0
  %4950 = vmatprep.subr.mxu0 0.0
  %4951 = vmatpush1.msra.mxu0 0.0
  %4952 = vmatprep.subr.mxu0 0.0
  %4953 = vmatpush1.msra.mxu0 0.0
  %4954 = vmatprep.subr.mxu0 0.0
  %4955 = vmatpush1.msra.mxu0 0.0
  %4956 = vmatprep.subr.mxu0 0.0
  %4957 = vmatpush1.msra.mxu0 0.0
  %4958 = vmatprep.subr.mxu0 0.0
  %4959 = vmatpush1.msra.mxu0 0.0
  %4960 = vmatprep.subr.mxu0 0.0
  %4961 = vmatpush1.msra.mxu0 0.0
  %4962 = vmatprep.subr.mxu0 0.0
  %4963 = vmatpush1.msra.mxu0 0.0
  %4964 = vmatprep.subr.mxu0 0.0
  %4965 = vmatpush1.msra.mxu0 0.0
  %4966 = vmatprep.subr.mxu0 0.0
  %4967 = vmatpush1.msra.mxu0 0.0
  %4968 = vmatprep.subr.mxu0 0.0
  %4969 = vmatpush1.msra.mxu0 0.0
  %4970 = vmatprep.subr.mxu0 0.0
  %4971 = vmatpush1.msra.mxu0 0.0
  %4972 = vmatprep.subr.mxu0 0.0
  %4973 = vmatpush1.msra.mxu0 0.0
  %4974 = vmatprep.subr.mxu0 0.0
  %4975 = vmatpush1.msra.mxu0 0.0
  %4976 = vmatprep.subr.mxu0 0.0
  %4977 = vmatpush1.msra.mxu0 0.0
  %4978 = vmatprep.subr.mxu0 0.0
  %4979 = vmatpush1.msra.mxu0 0.0
  %4980 = vmatprep.subr.mxu0 0.0
  %4981 = vmatpush1.msra.mxu0 0.0
  %4982 = vmatprep.subr.mxu0 0.0
  %4983 = vmatpush1.msra.mxu0 0.0
  %4984 = vmatprep.subr.mxu0 0.0
  %4985 = vmatpush1.msra.mxu0 0.0
  %4986 = vmatprep.subr.mxu0 0.0
  %4987 = vmatpush1.msra.mxu0 0.0
  %4988 = vmatprep.subr.mxu0 0.0
  %4989 = vmatpush1.msra.mxu0 0.0
  %4990 = vmatprep.subr.mxu0 0.0
  %4991 = vmatpush1.msra.mxu0 0.0
  %4992 = vmatprep.subr.mxu0 0.0
  %4993 = vmatpush1.msra.mxu0 0.0
  %4994 = vmatprep.subr.mxu0 0.0
  %4995 = vmatpush1.msra.mxu0 0.0
  %4996 = vmatprep.subr.mxu0 0.0
  %4997 = vmatpush1.msra.mxu0 0.0
  %4998 = vmatprep.mubr.f32.mxu0 0.0
  %4999 = vmatmul.mubr.f32.gmra.mrb[0].mxu0 %v2998
  %v5000 = vpop.f32.mrb[0].mxu0
  %v5001 = vadd.f32 0.0, %v5000
  %v5002 = vpop.f32.mrb[0].mxu0
  %5003 = vmatprep.mubr.f32.mxu0 0.0
  %5004 = vmatmul.mubr.f32.gmra.mrb[0].mxu0 %v3001
  %v5005 = vpop.f32.mrb[0].mxu0
  %v5006 = vadd.f32 0.0, %v5005
  %v5007 = vpop.f32.mrb[0].mxu0
  %5008 = vdwg.mxu0
  %5009 = vmatprep.subr.mxu0 0.0
  %5010 = vmatpush1.msra.mxu0 %v190
  %5011 = vmatprep.subr.mxu0 0.0
  %5012 = vmatpush1.msra.mxu0 %v191
  %5013 = vmatprep.subr.mxu0 0.0
  %5014 = vmatpush1.msra.mxu0 %v192
  %5015 = vmatprep.subr.mxu0 0.0
  %5016 = vmatpush1.msra.mxu0 %v193
  %5017 = vmatprep.subr.mxu0 0.0
  %5018 = vmatpush1.msra.mxu0 0.0
  %5019 = vmatprep.subr.mxu0 0.0
  %5020 = vmatpush1.msra.mxu0 0.0
  %5021 = vmatprep.subr.mxu0 0.0
  %5022 = vmatpush1.msra.mxu0 0.0
  %5023 = vmatprep.subr.mxu0 0.0
  %5024 = vmatpush1.msra.mxu0 0.0
  %5025 = vmatprep.subr.mxu0 0.0
  %5026 = vmatpush1.msra.mxu0 0.0
  %5027 = vmatprep.subr.mxu0 0.0
  %5028 = vmatpush1.msra.mxu0 0.0
  %5029 = vmatprep.subr.mxu0 0.0
  %5030 = vmatpush1.msra.mxu0 0.0
  %5031 = vmatprep.subr.mxu0 0.0
  %5032 = vmatpush1.msra.mxu0 0.0
  %5033 = vmatprep.subr.mxu0 0.0
  %5034 = vmatpush1.msra.mxu0 0.0
  %5035 = vmatprep.subr.mxu0 0.0
  %5036 = vmatpush1.msra.mxu0 0.0
  %5037 = vmatprep.subr.mxu0 0.0
  %5038 = vmatpush1.msra.mxu0 0.0
  %5039 = vmatprep.subr.mxu0 0.0
  %5040 = vmatpush1.msra.mxu0 0.0
  %5041 = vmatprep.subr.mxu0 0.0
  %5042 = vmatpush1.msra.mxu0 0.0
  %5043 = vmatprep.subr.mxu0 0.0
  %5044 = vmatpush1.msra.mxu0 0.0
  %5045 = vmatprep.subr.mxu0 0.0
  %5046 = vmatpush1.msra.mxu0 0.0
  %5047 = vmatprep.subr.mxu0 0.0
  %5048 = vmatpush1.msra.mxu0 0.0
  %5049 = vmatprep.subr.mxu0 0.0
  %5050 = vmatpush1.msra.mxu0 0.0
  %5051 = vmatprep.subr.mxu0 0.0
  %5052 = vmatpush1.msra.mxu0 0.0
  %5053 = vmatprep.subr.mxu0 0.0
  %5054 = vmatpush1.msra.mxu0 0.0
  %5055 = vmatprep.subr.mxu0 0.0
  %5056 = vmatpush1.msra.mxu0 0.0
  %5057 = vmatprep.subr.mxu0 0.0
  %5058 = vmatpush1.msra.mxu0 0.0
  %5059 = vmatprep.subr.mxu0 0.0
  %5060 = vmatpush1.msra.mxu0 0.0
  %5061 = vmatprep.subr.mxu0 0.0
  %5062 = vmatpush1.msra.mxu0 0.0
  %5063 = vmatprep.subr.mxu0 0.0
  %5064 = vmatpush1.msra.mxu0 0.0
  %5065 = vmatprep.subr.mxu0 0.0
  %5066 = vmatpush1.msra.mxu0 0.0
  %5067 = vmatprep.subr.mxu0 0.0
  %5068 = vmatpush1.msra.mxu0 0.0
  %5069 = vmatprep.subr.mxu0 0.0
  %5070 = vmatpush1.msra.mxu0 0.0
  %5071 = vmatprep.subr.mxu0 0.0
  %5072 = vmatpush1.msra.mxu0 0.0
  %5073 = vmatprep.mubr.f32.mxu0 0.0
  %5074 = vmatmul.mubr.f32.gmra.mrb[0].mxu0 %v2998
  %v5075 = vpop.f32.mrb[0].mxu0
  %v5076 = vadd.f32 0.0, %v5075
  %v5077 = vpop.f32.mrb[0].mxu0
  %5078 = vmatprep.mubr.f32.mxu0 0.0
  %5079 = vmatmul.mubr.f32.gmra.mrb[0].mxu0 %v3001
  %v5080 = vpop.f32.mrb[0].mxu0
  %v5081 = vadd.f32 0.0, %v5080
  %v5082 = vpop.f32.mrb[0].mxu0
  %5083 = vdwg.mxu0
  %v5085 = vsel %vm457, %v4926, 0
  %v5088 = vsel %vm457, %v5001, 0
  %5090 = vmatprep.subr.mxu0 0.0
  %5091 = vmatpush1.xpose.msra.mxu0 %v5088
  %5092 = vmatprep.subr.mxu0 0.0
  %5093 = vmatpush1.xpose.msra.mxu0 0.0
  %5094 = vmatprep.subr.mxu0 0.0
  %5095 = vmatpush1.xpose.msra.mxu0 0.0
  %5096 = vmatprep.subr.mxu0 0.0
  %5097 = vmatpush1.xpose.msra.mxu0 0.0
  %5098 = vmatprep.subr.mxu0 0.0
  %5099 = vmatpush1.xpose.msra.mxu0 0.0
  %5100 = vmatprep.subr.mxu0 0.0
  %5101 = vmatpush1.xpose.msra.mxu0 0.0
  %5102 = vmatprep.subr.mxu0 0.0
  %5103 = vmatpush1.xpose.msra.mxu0 0.0
  %5104 = vmatprep.subr.mxu0 0.0
  %5105 = vmatpush1.xpose.msra.mxu0 0.0
  %5106 = vmatprep.subr.mxu0 0.0
  %5107 = vmatpush1.xpose.msra.mxu0 0.0
  %5108 = vmatprep.subr.mxu0 0.0
  %5109 = vmatpush1.xpose.msra.mxu0 0.0
  %5110 = vmatprep.subr.mxu0 0.0
  %5111 = vmatpush1.xpose.msra.mxu0 0.0
  %5112 = vmatprep.subr.mxu0 0.0
  %5113 = vmatpush1.xpose.msra.mxu0 0.0
  %5114 = vmatprep.subr.mxu0 0.0
  %5115 = vmatpush1.xpose.msra.mxu0 0.0
  %5116 = vmatprep.subr.mxu0 0.0
  %5117 = vmatpush1.xpose.msra.mxu0 0.0
  %5118 = vmatprep.subr.mxu0 0.0
  %5119 = vmatpush1.xpose.msra.mxu0 0.0
  %5120 = vmatprep.subr.mxu0 0.0
  %5121 = vmatpush1.xpose.msra.mxu0 0.0
  %5122 = vmatprep.subr.mxu0 0.0
  %5123 = vmatpush1.xpose.msra.mxu0 0.0
  %5124 = vmatprep.subr.mxu0 0.0
  %5125 = vmatpush1.xpose.msra.mxu0 0.0
  %5126 = vmatprep.subr.mxu0 0.0
  %5127 = vmatpush1.xpose.msra.mxu0 0.0
  %5128 = vmatprep.subr.mxu0 0.0
  %5129 = vmatpush1.xpose.msra.mxu0 0.0
  %5130 = vmatprep.subr.mxu0 0.0
  %5131 = vmatpush1.xpose.msra.mxu0 0.0
  %5132 = vmatprep.subr.mxu0 0.0
  %5133 = vmatpush1.xpose.msra.mxu0 0.0
  %5134 = vmatprep.subr.mxu0 0.0
  %5135 = vmatpush1.xpose.msra.mxu0 0.0
  %5136 = vmatprep.subr.mxu0 0.0
  %5137 = vmatpush1.xpose.msra.mxu0 0.0
  %5138 = vmatprep.subr.mxu0 0.0
  %5139 = vmatpush1.xpose.msra.mxu0 0.0
  %5140 = vmatprep.subr.mxu0 0.0
  %5141 = vmatpush1.xpose.msra.mxu0 0.0
  %5142 = vmatprep.subr.mxu0 0.0
  %5143 = vmatpush1.xpose.msra.mxu0 0.0
  %5144 = vmatprep.subr.mxu0 0.0
  %5145 = vmatpush1.xpose.msra.mxu0 0.0
  %5146 = vmatprep.subr.mxu0 0.0
  %5147 = vmatpush1.xpose.msra.mxu0 0.0
  %5148 = vmatprep.subr.mxu0 0.0
  %5149 = vmatpush1.xpose.msra.mxu0 0.0
  %5150 = vmatprep.subr.mxu0 0.0
  %5151 = vmatpush1.xpose.msra.mxu0 0.0
  %5152 = vmatprep.subr.mxu0 0.0
  %5153 = vmatpush1.xpose.msra.mxu0 0.0
  %5154 = vmatprep.mubr.f32.mxu0 0.0
  %5155 = vmatmul.mubr.f32.gmra.mrb[0].mxu0 %v5085
  %v5156 = vpop.f32.mrb[0].mxu0
  %v5157 = vadd.f32 %v139, %v5156
  %v5158 = vpop.f32.mrb[0].mxu0
  %5159 = vdwg.mxu0
  %v5161 = vsel %vm457, %v4931, 0
  %v5164 = vsel %vm457, %v5006, 0
  %5166 = vmatprep.subr.mxu0 0.0
  %5167 = vmatpush1.xpose.msra.mxu0 %v5164
  %5168 = vmatprep.subr.mxu0 0.0
  %5169 = vmatpush1.xpose.msra.mxu0 0.0
  %5170 = vmatprep.subr.mxu0 0.0
  %5171 = vmatpush1.xpose.msra.mxu0 0.0
  %5172 = vmatprep.subr.mxu0 0.0
  %5173 = vmatpush1.xpose.msra.mxu0 0.0
  %5174 = vmatprep.subr.mxu0 0.0
  %5175 = vmatpush1.xpose.msra.mxu0 0.0
  %5176 = vmatprep.subr.mxu0 0.0
  %5177 = vmatpush1.xpose.msra.mxu0 0.0
  %5178 = vmatprep.subr.mxu0 0.0
  %5179 = vmatpush1.xpose.msra.mxu0 0.0
  %5180 = vmatprep.subr.mxu0 0.0
  %5181 = vmatpush1.xpose.msra.mxu0 0.0
  %5182 = vmatprep.subr.mxu0 0.0
  %5183 = vmatpush1.xpose.msra.mxu0 0.0
  %5184 = vmatprep.subr.mxu0 0.0
  %5185 = vmatpush1.xpose.msra.mxu0 0.0
  %5186 = vmatprep.subr.mxu0 0.0
  %5187 = vmatpush1.xpose.msra.mxu0 0.0
  %5188 = vmatprep.subr.mxu0 0.0
  %5189 = vmatpush1.xpose.msra.mxu0 0.0
  %5190 = vmatprep.subr.mxu0 0.0
  %5191 = vmatpush1.xpose.msra.mxu0 0.0
  %5192 = vmatprep.subr.mxu0 0.0
  %5193 = vmatpush1.xpose.msra.mxu0 0.0
  %5194 = vmatprep.subr.mxu0 0.0
  %5195 = vmatpush1.xpose.msra.mxu0 0.0
  %5196 = vmatprep.subr.mxu0 0.0
  %5197 = vmatpush1.xpose.msra.mxu0 0.0
  %5198 = vmatprep.subr.mxu0 0.0
  %5199 = vmatpush1.xpose.msra.mxu0 0.0
  %5200 = vmatprep.subr.mxu0 0.0
  %5201 = vmatpush1.xpose.msra.mxu0 0.0
  %5202 = vmatprep.subr.mxu0 0.0
  %5203 = vmatpush1.xpose.msra.mxu0 0.0
  %5204 = vmatprep.subr.mxu0 0.0
  %5205 = vmatpush1.xpose.msra.mxu0 0.0
  %5206 = vmatprep.subr.mxu0 0.0
  %5207 = vmatpush1.xpose.msra.mxu0 0.0
  %5208 = vmatprep.subr.mxu0 0.0
  %5209 = vmatpush1.xpose.msra.mxu0 0.0
  %5210 = vmatprep.subr.mxu0 0.0
  %5211 = vmatpush1.xpose.msra.mxu0 0.0
  %5212 = vmatprep.subr.mxu0 0.0
  %5213 = vmatpush1.xpose.msra.mxu0 0.0
  %5214 = vmatprep.subr.mxu0 0.0
  %5215 = vmatpush1.xpose.msra.mxu0 0.0
  %5216 = vmatprep.subr.mxu0 0.0
  %5217 = vmatpush1.xpose.msra.mxu0 0.0
  %5218 = vmatprep.subr.mxu0 0.0
  %5219 = vmatpush1.xpose.msra.mxu0 0.0
  %5220 = vmatprep.subr.mxu0 0.0
  %5221 = vmatpush1.xpose.msra.mxu0 0.0
  %5222 = vmatprep.subr.mxu0 0.0
  %5223 = vmatpush1.xpose.msra.mxu0 0.0
  %5224 = vmatprep.subr.mxu0 0.0
  %5225 = vmatpush1.xpose.msra.mxu0 0.0
  %5226 = vmatprep.subr.mxu0 0.0
  %5227 = vmatpush1.xpose.msra.mxu0 0.0
  %5228 = vmatprep.subr.mxu0 0.0
  %5229 = vmatpush1.xpose.msra.mxu0 0.0
  %5230 = vmatprep.mubr.f32.mxu0 0.0
  %5231 = vmatmul.mubr.f32.gmra.mrb[0].mxu0 %v5161
  %v5232 = vpop.f32.mrb[0].mxu0
  %v5233 = vadd.f32 %v143, %v5232
  %v5234 = vpop.f32.mrb[0].mxu0
  %5235 = vdwg.mxu0
  %v5236 = vmul.f32 %v5157, 1.442695
  %v5237 = vpow.pop %v5236
  %v5238 = vmul.f32 %v5233, 1.442695
  %v5239 = vpow.pop %v5238
  %v5240 = vsel %vm457, %v5237, 0.0
  %5241 = vadd.xlane.f32.xlu0 %v5240
  %v5242 = vpop.xlane.xlu0 %5241
  %v5243 = vsel %vm457, %v5239, 0.0
  %5244 = vadd.xlane.f32.xlu0 %v5243
  %v5245 = vpop.xlane.xlu0 %5244
  %v5246 = vrcp.pop %v5242
  %v5247 = vmul.f32 %v5237, %v5246
  %v5248 = vrcp.pop %v5245
  %v5249 = vmul.f32 %v5239, %v5248
  %v5251 = vsel %vm457, %v5247, 0
  %5253 = vmatprep.subr.mxu0 0.0
  %5254 = vmatpush1.msra.mxu0 %v5076
  %5255 = vmatprep.subr.mxu0 0.0
  %5256 = vmatpush1.msra.mxu0 0.0
  %5257 = vmatprep.subr.mxu0 0.0
  %5258 = vmatpush1.msra.mxu0 0.0
  %5259 = vmatprep.subr.mxu0 0.0
  %5260 = vmatpush1.msra.mxu0 0.0
  %5261 = vmatprep.subr.mxu0 0.0
  %5262 = vmatpush1.msra.mxu0 0.0
  %5263 = vmatprep.subr.mxu0 0.0
  %5264 = vmatpush1.msra.mxu0 0.0
  %5265 = vmatprep.subr.mxu0 0.0
  %5266 = vmatpush1.msra.mxu0 0.0
  %5267 = vmatprep.subr.mxu0 0.0
  %5268 = vmatpush1.msra.mxu0 0.0
  %5269 = vmatprep.subr.mxu0 0.0
  %5270 = vmatpush1.msra.mxu0 0.0
  %5271 = vmatprep.subr.mxu0 0.0
  %5272 = vmatpush1.msra.mxu0 0.0
  %5273 = vmatprep.subr.mxu0 0.0
  %5274 = vmatpush1.msra.mxu0 0.0
  %5275 = vmatprep.subr.mxu0 0.0
  %5276 = vmatpush1.msra.mxu0 0.0
  %5277 = vmatprep.subr.mxu0 0.0
  %5278 = vmatpush1.msra.mxu0 0.0
  %5279 = vmatprep.subr.mxu0 0.0
  %5280 = vmatpush1.msra.mxu0 0.0
  %5281 = vmatprep.subr.mxu0 0.0
  %5282 = vmatpush1.msra.mxu0 0.0
  %5283 = vmatprep.subr.mxu0 0.0
  %5284 = vmatpush1.msra.mxu0 0.0
  %5285 = vmatprep.subr.mxu0 0.0
  %5286 = vmatpush1.msra.mxu0 0.0
  %5287 = vmatprep.subr.mxu0 0.0
  %5288 = vmatpush1.msra.mxu0 0.0
  %5289 = vmatprep.subr.mxu0 0.0
  %5290 = vmatpush1.msra.mxu0 0.0
  %5291 = vmatprep.subr.mxu0 0.0
  %5292 = vmatpush1.msra.mxu0 0.0
  %5293 = vmatprep.subr.mxu0 0.0
  %5294 = vmatpush1.msra.mxu0 0.0
  %5295 = vmatprep.subr.mxu0 0.0
  %5296 = vmatpush1.msra.mxu0 0.0
  %5297 = vmatprep.subr.mxu0 0.0
  %5298 = vmatpush1.msra.mxu0 0.0
  %5299 = vmatprep.subr.mxu0 0.0
  %5300 = vmatpush1.msra.mxu0 0.0
  %5301 = vmatprep.subr.mxu0 0.0
  %5302 = vmatpush1.msra.mxu0 0.0
  %5303 = vmatprep.subr.mxu0 0.0
  %5304 = vmatpush1.msra.mxu0 0.0
  %5305 = vmatprep.subr.mxu0 0.0
  %5306 = vmatpush1.msra.mxu0 0.0
  %5307 = vmatprep.subr.mxu0 0.0
  %5308 = vmatpush1.msra.mxu0 0.0
  %5309 = vmatprep.subr.mxu0 0.0
  %5310 = vmatpush1.msra.mxu0 0.0
  %5311 = vmatprep.subr.mxu0 0.0
  %5312 = vmatpush1.msra.mxu0 0.0
  %5313 = vmatprep.subr.mxu0 0.0
  %5314 = vmatpush1.msra.mxu0 0.0
  %5315 = vmatprep.subr.mxu0 0.0
  %5316 = vmatpush1.msra.mxu0 0.0
  %5317 = vmatprep.mubr.f32.mxu0 0.0
  %5318 = vmatmul.mubr.f32.gmra.mrb[0].mxu0 %v5251
  %v5319 = vpop.f32.mrb[0].mxu0
  %v5320 = vadd.f32 0.0, %v5319
  %v5321 = vpop.f32.mrb[0].mxu0
  %5322 = vdwg.mxu0
  %v5324 = vsel %vm457, %v5249, 0
  %5326 = vmatprep.subr.mxu0 0.0
  %5327 = vmatpush1.msra.mxu0 %v5081
  %5328 = vmatprep.subr.mxu0 0.0
  %5329 = vmatpush1.msra.mxu0 0.0
  %5330 = vmatprep.subr.mxu0 0.0
  %5331 = vmatpush1.msra.mxu0 0.0
  %5332 = vmatprep.subr.mxu0 0.0
  %5333 = vmatpush1.msra.mxu0 0.0
  %5334 = vmatprep.subr.mxu0 0.0
  %5335 = vmatpush1.msra.mxu0 0.0
  %5336 = vmatprep.subr.mxu0 0.0
  %5337 = vmatpush1.msra.mxu0 0.0
  %5338 = vmatprep.subr.mxu0 0.0
  %5339 = vmatpush1.msra.mxu0 0.0
  %5340 = vmatprep.subr.mxu0 0.0
  %5341 = vmatpush1.msra.mxu0 0.0
  %5342 = vmatprep.subr.mxu0 0.0
  %5343 = vmatpush1.msra.mxu0 0.0
  %5344 = vmatprep.subr.mxu0 0.0
  %5345 = vmatpush1.msra.mxu0 0.0
  %5346 = vmatprep.subr.mxu0 0.0
  %5347 = vmatpush1.msra.mxu0 0.0
  %5348 = vmatprep.subr.mxu0 0.0
  %5349 = vmatpush1.msra.mxu0 0.0
  %5350 = vmatprep.subr.mxu0 0.0
  %5351 = vmatpush1.msra.mxu0 0.0
  %5352 = vmatprep.subr.mxu0 0.0
  %5353 = vmatpush1.msra.mxu0 0.0
  %5354 = vmatprep.subr.mxu0 0.0
  %5355 = vmatpush1.msra.mxu0 0.0
  %5356 = vmatprep.subr.mxu0 0.0
  %5357 = vmatpush1.msra.mxu0 0.0
  %5358 = vmatprep.subr.mxu0 0.0
  %5359 = vmatpush1.msra.mxu0 0.0
  %5360 = vmatprep.subr.mxu0 0.0
  %5361 = vmatpush1.msra.mxu0 0.0
  %5362 = vmatprep.subr.mxu0 0.0
  %5363 = vmatpush1.msra.mxu0 0.0
  %5364 = vmatprep.subr.mxu0 0.0
  %5365 = vmatpush1.msra.mxu0 0.0
  %5366 = vmatprep.subr.mxu0 0.0
  %5367 = vmatpush1.msra.mxu0 0.0
  %5368 = vmatprep.subr.mxu0 0.0
  %5369 = vmatpush1.msra.mxu0 0.0
  %5370 = vmatprep.subr.mxu0 0.0
  %5371 = vmatpush1.msra.mxu0 0.0
  %5372 = vmatprep.subr.mxu0 0.0
  %5373 = vmatpush1.msra.mxu0 0.0
  %5374 = vmatprep.subr.mxu0 0.0
  %5375 = vmatpush1.msra.mxu0 0.0
  %5376 = vmatprep.subr.mxu0 0.0
  %5377 = vmatpush1.msra.mxu0 0.0
  %5378 = vmatprep.subr.mxu0 0.0
  %5379 = vmatpush1.msra.mxu0 0.0
  %5380 = vmatprep.subr.mxu0 0.0
  %5381 = vmatpush1.msra.mxu0 0.0
  %5382 = vmatprep.subr.mxu0 0.0
  %5383 = vmatpush1.msra.mxu0 0.0
  %5384 = vmatprep.subr.mxu0 0.0
  %5385 = vmatpush1.msra.mxu0 0.0
  %5386 = vmatprep.subr.mxu0 0.0
  %5387 = vmatpush1.msra.mxu0 0.0
  %5388 = vmatprep.subr.mxu0 0.0
  %5389 = vmatpush1.msra.mxu0 0.0
  %5390 = vmatprep.mubr.f32.mxu0 0.0
  %5391 = vmatmul.mubr.f32.gmra.mrb[0].mxu0 %v5324
  %v5392 = vpop.f32.mrb[0].mxu0
  %v5393 = vadd.f32 0.0, %v5392
  %v5394 = vpop.f32.mrb[0].mxu0
  %5395 = vdwg.mxu0
  %v5397 = vsel %vm457, %v5320, 0
  %v5400 = vsel %vm457, %v5393, 0
  %5402 = vmatprep.subr.mxu0 0.0
  %5403 = vmatpush1.msra.mxu0 %v197
  %5404 = vmatprep.subr.mxu0 0.0
  %5405 = vmatpush1.msra.mxu0 0.0
  %5406 = vmatprep.subr.mxu0 0.0
  %5407 = vmatpush1.msra.mxu0 0.0
  %5408 = vmatprep.subr.mxu0 0.0
  %5409 = vmatpush1.msra.mxu0 0.0
  %5410 = vmatprep.subr.mxu0 0.0
  %5411 = vmatpush1.msra.mxu0 0.0
  %5412 = vmatprep.subr.mxu0 0.0
  %5413 = vmatpush1.msra.mxu0 0.0
  %5414 = vmatprep.subr.mxu0 0.0
  %5415 = vmatpush1.msra.mxu0 0.0
  %5416 = vmatprep.subr.mxu0 0.0
  %5417 = vmatpush1.msra.mxu0 0.0
  %5418 = vmatprep.subr.mxu0 0.0
  %5419 = vmatpush1.msra.mxu0 0.0
  %5420 = vmatprep.subr.mxu0 0.0
  %5421 = vmatpush1.msra.mxu0 0.0
  %5422 = vmatprep.subr.mxu0 0.0
  %5423 = vmatpush1.msra.mxu0 0.0
  %5424 = vmatprep.subr.mxu0 0.0
  %5425 = vmatpush1.msra.mxu0 0.0
  %5426 = vmatprep.subr.mxu0 0.0
  %5427 = vmatpush1.msra.mxu0 0.0
  %5428 = vmatprep.subr.mxu0 0.0
  %5429 = vmatpush1.msra.mxu0 0.0
  %5430 = vmatprep.subr.mxu0 0.0
  %5431 = vmatpush1.msra.mxu0 0.0
  %5432 = vmatprep.subr.mxu0 0.0
  %5433 = vmatpush1.msra.mxu0 0.0
  %5434 = vmatprep.subr.mxu0 0.0
  %5435 = vmatpush1.msra.mxu0 0.0
  %5436 = vmatprep.subr.mxu0 0.0
  %5437 = vmatpush1.msra.mxu0 0.0
  %5438 = vmatprep.subr.mxu0 0.0
  %5439 = vmatpush1.msra.mxu0 0.0
  %5440 = vmatprep.subr.mxu0 0.0
  %5441 = vmatpush1.msra.mxu0 0.0
  %5442 = vmatprep.subr.mxu0 0.0
  %5443 = vmatpush1.msra.mxu0 0.0
  %5444 = vmatprep.subr.mxu0 0.0
  %5445 = vmatpush1.msra.mxu0 0.0
  %5446 = vmatprep.subr.mxu0 0.0
  %5447 = vmatpush1.msra.mxu0 0.0
  %5448 = vmatprep.subr.mxu0 0.0
  %5449 = vmatpush1.msra.mxu0 0.0
  %5450 = vmatprep.subr.mxu0 0.0
  %5451 = vmatpush1.msra.mxu0 0.0
  %5452 = vmatprep.subr.mxu0 0.0
  %5453 = vmatpush1.msra.mxu0 0.0
  %5454 = vmatprep.subr.mxu0 0.0
  %5455 = vmatpush1.msra.mxu0 0.0
  %5456 = vmatprep.subr.mxu0 0.0
  %5457 = vmatpush1.msra.mxu0 0.0
  %5458 = vmatprep.subr.mxu0 0.0
  %5459 = vmatpush1.msra.mxu0 0.0
  %5460 = vmatprep.subr.mxu0 0.0
  %5461 = vmatpush1.msra.mxu0 0.0
  %5462 = vmatprep.subr.mxu0 0.0
  %5463 = vmatpush1.msra.mxu0 0.0
  %5464 = vmatprep.subr.mxu0 0.0
  %5465 = vmatpush1.msra.mxu0 0.0
  %5466 = vmatprep.mubr.f32.mxu0 0.0
  %5467 = vmatmul.mubr.f32.gmra.mrb[0].mxu0 %v5397
  %v5468 = vpop.f32.mrb[0].mxu0
  %v5469 = vadd.f32 0.0, %v5468
  %v5470 = vpop.f32.mrb[0].mxu0
  %5471 = vmatprep.mubr.f32.mxu0 0.0
  %5472 = vmatmul.mubr.f32.gmra.mrb[0].mxu0 %v5400
  %v5473 = vpop.f32.mrb[0].mxu0
  %v5474 = vadd.f32 0.0, %v5473
  %v5475 = vpop.f32.mrb[0].mxu0
  %5476 = vdwg.mxu0
  %v5477 = vadd.f32 %v4857, %v5469
  %v5478 = vadd.f32 %v4858, %v5474
  %v5479 = vadd.f32 %v5477, %v2724
  %v5480 = vadd.f32 %v5478, %v2724
  %v5481 = vadd.f32 %v5479, %v2995
  %v5482 = vadd.f32 %v5480, %v2996
  %v5483 = vsel %vm225, %v5481, 0.0
  %5484 = vadd.xlane.f32.xlu0 %v5483
  %v5485 = vpop.xlane.xlu0 %5484
  %v5486 = vsel %vm225, %v5482, 0.0
  %5487 = vadd.xlane.f32.xlu0 %v5486
  %v5488 = vpop.xlane.xlu0 %5487
  %v5489 = vmul.f32 %v5485, %v2735
  %v5490 = vmul.f32 %v5488, %v2735
  %v5491 = vsub.f32 %v5481, %v5489
  %v5492 = vsub.f32 %v5482, %v5490
  %v5493 = vmul.f32 %v5491, %v5491
  %v5494 = vmul.f32 %v5492, %v5492
  %v5495 = vsel %vm225, %v5493, 0.0
  %5496 = vadd.xlane.f32.xlu0 %v5495
  %v5497 = vpop.xlane.xlu0 %5496
  %v5498 = vsel %vm225, %v5494, 0.0
  %5499 = vadd.xlane.f32.xlu0 %v5498
  %v5500 = vpop.xlane.xlu0 %5499
  %v5501 = vmul.f32 %v5497, %v2735
  %v5502 = vmul.f32 %v5500, %v2735
  %v5503 = vadd.f32 %v5501, 1e-12
  %v5504 = vadd.f32 %v5502, 1e-12
  %v5505 = vrsqrt.pop %v5503
  %v5506 = vrsqrt.pop %v5504
  %v5507 = vmul.f32 %v5491, %v5505
  %v5508 = vmul.f32 %v5492, %v5506
  %v5509 = vmul.f32 %v5507, %v2759
  %v5510 = vmul.f32 %v5508, %v2759
  %v5511 = vadd.f32 %v5509, %v2765
  %v5512 = vadd.f32 %v5510, %v2765
  %v5514 = vsel %vm225, %v5511, 0
  %v5517 = vsel %vm225, %v5512, 0
  %5519 = vmatprep.subr.mxu0 0.0
  %5520 = vmatpush1.msra.mxu0 %v205
  %5521 = vmatprep.subr.mxu0 0.0
  %5522 = vmatpush1.msra.mxu0 %v206
  %5523 = vmatprep.subr.mxu0 0.0
  %5524 = vmatpush1.msra.mxu0 %v207
  %5525 = vmatprep.subr.mxu0 0.0
  %5526 = vmatpush1.msra.mxu0 %v208
  %5527 = vmatprep.subr.mxu0 0.0
  %5528 = vmatpush1.msra.mxu0 0.0
  %5529 = vmatprep.subr.mxu0 0.0
  %5530 = vmatpush1.msra.mxu0 0.0
  %5531 = vmatprep.subr.mxu0 0.0
  %5532 = vmatpush1.msra.mxu0 0.0
  %5533 = vmatprep.subr.mxu0 0.0
  %5534 = vmatpush1.msra.mxu0 0.0
  %5535 = vmatprep.subr.mxu0 0.0
  %5536 = vmatpush1.msra.mxu0 0.0
  %5537 = vmatprep.subr.mxu0 0.0
  %5538 = vmatpush1.msra.mxu0 0.0
  %5539 = vmatprep.subr.mxu0 0.0
  %5540 = vmatpush1.msra.mxu0 0.0
  %5541 = vmatprep.subr.mxu0 0.0
  %5542 = vmatpush1.msra.mxu0 0.0
  %5543 = vmatprep.subr.mxu0 0.0
  %5544 = vmatpush1.msra.mxu0 0.0
  %5545 = vmatprep.subr.mxu0 0.0
  %5546 = vmatpush1.msra.mxu0 0.0
  %5547 = vmatprep.subr.mxu0 0.0
  %5548 = vmatpush1.msra.mxu0 0.0
  %5549 = vmatprep.subr.mxu0 0.0
  %5550 = vmatpush1.msra.mxu0 0.0
  %5551 = vmatprep.subr.mxu0 0.0
  %5552 = vmatpush1.msra.mxu0 0.0
  %5553 = vmatprep.subr.mxu0 0.0
  %5554 = vmatpush1.msra.mxu0 0.0
  %5555 = vmatprep.subr.mxu0 0.0
  %5556 = vmatpush1.msra.mxu0 0.0
  %5557 = vmatprep.subr.mxu0 0.0
  %5558 = vmatpush1.msra.mxu0 0.0
  %5559 = vmatprep.subr.mxu0 0.0
  %5560 = vmatpush1.msra.mxu0 0.0
  %5561 = vmatprep.subr.mxu0 0.0
  %5562 = vmatpush1.msra.mxu0 0.0
  %5563 = vmatprep.subr.mxu0 0.0
  %5564 = vmatpush1.msra.mxu0 0.0
  %5565 = vmatprep.subr.mxu0 0.0
  %5566 = vmatpush1.msra.mxu0 0.0
  %5567 = vmatprep.subr.mxu0 0.0
  %5568 = vmatpush1.msra.mxu0 0.0
  %5569 = vmatprep.subr.mxu0 0.0
  %5570 = vmatpush1.msra.mxu0 0.0
  %5571 = vmatprep.subr.mxu0 0.0
  %5572 = vmatpush1.msra.mxu0 0.0
  %5573 = vmatprep.subr.mxu0 0.0
  %5574 = vmatpush1.msra.mxu0 0.0
  %5575 = vmatprep.subr.mxu0 0.0
  %5576 = vmatpush1.msra.mxu0 0.0
  %5577 = vmatprep.subr.mxu0 0.0
  %5578 = vmatpush1.msra.mxu0 0.0
  %5579 = vmatprep.subr.mxu0 0.0
  %5580 = vmatpush1.msra.mxu0 0.0
  %5581 = vmatprep.subr.mxu0 0.0
  %5582 = vmatpush1.msra.mxu0 0.0
  %5583 = vmatprep.mubr.f32.mxu0 0.0
  %5584 = vmatmul.mubr.f32.gmra.mrb[0].mxu0 %v5514
  %v5585 = vpop.f32.mrb[0].mxu0
  %v5586 = vadd.f32 %v2771, %v5585
  %v5587 = vpop.f32.mrb[0].mxu0
  %5588 = vmatprep.mubr.f32.mxu0 0.0
  %5589 = vmatmul.mubr.f32.gmra.mrb[0].mxu0 %v5517
  %v5590 = vpop.f32.mrb[0].mxu0
  %v5591 = vadd.f32 %v2771, %v5590
  %v5592 = vpop.f32.mrb[0].mxu0
  %5593 = vdwg.mxu0
  %v5594 = vmul.f32 %v5586, %v5586
  %v5595 = vmul.f32 %v5591, %v5591
  %v5596 = vmul.f32 %v5586, %v5594
  %v5597 = vmul.f32 %v5591, %v5595
  %v5598 = vmul.f32 %v5596, 0.044715
  %v5599 = vmul.f32 %v5597, 0.044715
  %v5600 = vadd.f32 %v5586, %v5598
  %v5601 = vadd.f32 %v5591, %v5599
  %v5602 = vmul.f32 %v5600, 0.7978846
  %v5603 = vmul.f32 %v5601, 0.7978846
  %v5604 = vtanh.pop %v5602
  %v5605 = vtanh.pop %v5603
  %v5606 = vadd.f32 %v5604, 1.0
  %v5607 = vadd.f32 %v5605, 1.0
  %v5608 = vmul.f32 %v5606, 0.5
  %v5609 = vmul.f32 %v5607, 0.5
  %v5610 = vmul.f32 %v5586, %v5608
  %v5611 = vmul.f32 %v5591, %v5609
  %v5613 = vsel %vm2875, %v5610, 0
  %v5616 = vsel %vm2875, %v5611, 0
  %5618 = vmatprep.subr.mxu0 0.0
  %5619 = vmatpush1.msra.mxu0 %v210
  %5620 = vmatprep.subr.mxu0 0.0
  %5621 = vmatpush1.msra.mxu0 %v211
  %5622 = vmatprep.subr.mxu0 0.0
  %5623 = vmatpush1.msra.mxu0 %v212
  %5624 = vmatprep.subr.mxu0 0.0
  %5625 = vmatpush1.msra.mxu0 %v213
  %5626 = vmatprep.subr.mxu0 0.0
  %5627 = vmatpush1.msra.mxu0 %v214
  %5628 = vmatprep.subr.mxu0 0.0
  %5629 = vmatpush1.msra.mxu0 %v215
  %5630 = vmatprep.subr.mxu0 0.0
  %5631 = vmatpush1.msra.mxu0 %v216
  %5632 = vmatprep.subr.mxu0 0.0
  %5633 = vmatpush1.msra.mxu0 %v217
  %5634 = vmatprep.subr.mxu0 0.0
  %5635 = vmatpush1.msra.mxu0 0.0
  %5636 = vmatprep.subr.mxu0 0.0
  %5637 = vmatpush1.msra.mxu0 0.0
  %5638 = vmatprep.subr.mxu0 0.0
  %5639 = vmatpush1.msra.mxu0 0.0
  %5640 = vmatprep.subr.mxu0 0.0
  %5641 = vmatpush1.msra.mxu0 0.0
  %5642 = vmatprep.subr.mxu0 0.0
  %5643 = vmatpush1.msra.mxu0 0.0
  %5644 = vmatprep.subr.mxu0 0.0
  %5645 = vmatpush1.msra.mxu0 0.0
  %5646 = vmatprep.subr.mxu0 0.0
  %5647 = vmatpush1.msra.mxu0 0.0
  %5648 = vmatprep.subr.mxu0 0.0
  %5649 = vmatpush1.msra.mxu0 0.0
  %5650 = vmatprep.subr.mxu0 0.0
  %5651 = vmatpush1.msra.mxu0 0.0
  %5652 = vmatprep.subr.mxu0 0.0
  %5653 = vmatpush1.msra.mxu0 0.0
  %5654 = vmatprep.subr.mxu0 0.0
  %5655 = vmatpush1.msra.mxu0 0.0
  %5656 = vmatprep.subr.mxu0 0.0
  %5657 = vmatpush1.msra.mxu0 0.0
  %5658 = vmatprep.subr.mxu0 0.0
  %5659 = vmatpush1.msra.mxu0 0.0
  %5660 = vmatprep.subr.mxu0 0.0
  %5661 = vmatpush1.msra.mxu0 0.0
  %5662 = vmatprep.subr.mxu0 0.0
  %5663 = vmatpush1.msra.mxu0 0.0
  %5664 = vmatprep.subr.mxu0 0.0
  %5665 = vmatpush1.msra.mxu0 0.0
  %5666 = vmatprep.subr.mxu0 0.0
  %5667 = vmatpush1.msra.mxu0 0.0
  %5668 = vmatprep.subr.mxu0 0.0
  %5669 = vmatpush1.msra.mxu0 0.0
  %5670 = vmatprep.subr.mxu0 0.0
  %5671 = vmatpush1.msra.mxu0 0.0
  %5672 = vmatprep.subr.mxu0 0.0
  %5673 = vmatpush1.msra.mxu0 0.0
  %5674 = vmatprep.subr.mxu0 0.0
  %5675 = vmatpush1.msra.mxu0 0.0
  %5676 = vmatprep.subr.mxu0 0.0
  %5677 = vmatpush1.msra.mxu0 0.0
  %5678 = vmatprep.subr.mxu0 0.0
  %5679 = vmatpush1.msra.mxu0 0.0
  %5680 = vmatprep.subr.mxu0 0.0
  %5681 = vmatpush1.msra.mxu0 0.0
  %5682 = vmatprep.mubr.f32.mxu0 0.0
  %5683 = vmatmul.mubr.f32.gmra.mrb[0].mxu0 %v5613
  %v5684 = vpop.f32.mrb[0].mxu0
  %v5685 = vadd.f32 %v2874, %v5684
  %v5686 = vpop.f32.mrb[0].mxu0
  %5687 = vmatprep.mubr.f32.mxu0 0.0
  %5688 = vmatmul.mubr.f32.gmra.mrb[0].mxu0 %v5616
  %v5689 = vpop.f32.mrb[0].mxu0
  %v5690 = vadd.f32 %v2874, %v5689
  %v5691 = vpop.f32.mrb[0].mxu0
  %5692 = vdwg.mxu0
  %v5693 = vadd.f32 %v5685, %v5511
  %v5694 = vadd.f32 %v5690, %v5512
  %v5695 = vsel %vm225, %v5693, 0.0
  %5696 = vadd.xlane.f32.xlu0 %v5695
  %v5697 = vpop.xlane.xlu0 %5696
  %v5698 = vsel %vm225, %v5694, 0.0
  %5699 = vadd.xlane.f32.xlu0 %v5698
  %v5700 = vpop.xlane.xlu0 %5699
  %v5701 = vmul.f32 %v5697, %v2735
  %v5702 = vmul.f32 %v5700, %v2735
  %v5703 = vsub.f32 %v5693, %v5701
  %v5704 = vsub.f32 %v5694, %v5702
  %v5705 = vmul.f32 %v5703, %v5703
  %v5706 = vmul.f32 %v5704, %v5704
  %v5707 = vsel %vm225, %v5705, 0.0
  %5708 = vadd.xlane.f32.xlu0 %v5707
  %v5709 = vpop.xlane.xlu0 %5708
  %v5710 = vsel %vm225, %v5706, 0.0
  %5711 = vadd.xlane.f32.xlu0 %v5710
  %v5712 = vpop.xlane.xlu0 %5711
  %v5713 = vmul.f32 %v5709, %v2735
  %v5714 = vmul.f32 %v5712, %v2735
  %v5715 = vadd.f32 %v5713, 1e-12
  %v5716 = vadd.f32 %v5714, 1e-12
  %v5717 = vrsqrt.pop %v5715
  %v5718 = vrsqrt.pop %v5716
  %v5719 = vmul.f32 %v5703, %v5717
  %v5720 = vmul.f32 %v5704, %v5718
  %v5721 = vmul.f32 %v5719, %v2988
  %v5722 = vmul.f32 %v5720, %v2988
  %v5723 = vadd.f32 %v5721, %v2994
  %v5724 = vadd.f32 %v5722, %v2994
  %v5725 = vld [vmem:[%s2 + $0x210] sm:$0xff]
  %v5726 = vld [vmem:[%s2 + $0x218] sm:$0xff]
  %v5727 = vld [vmem:[%s2 + $0x220] sm:$0xff]
  %v5728 = vld [vmem:[%s2 + $0x228] sm:$0xff]
  %v5729 = vld [vmem:[%s2 + $0x27c] sm:$0x1]
  %v5730 = vlaneseq
  %v5731 = vshrl.u32 %v5730, 7
  %v5732 = vsub.s32 0, %v5731
  %v5733 = vrot.slane %v5729, %v5732
  %v5735 = vsel %vm225, %v5723, 0
  %v5738 = vsel %vm225, %v5724, 0
  %5740 = vmatprep.subr.mxu0 0.0
  %5741 = vmatpush1.msra.mxu0 %v5725
  %5742 = vmatprep.subr.mxu0 0.0
  %5743 = vmatpush1.msra.mxu0 %v5726
  %5744 = vmatprep.subr.mxu0 0.0
  %5745 = vmatpush1.msra.mxu0 %v5727
  %5746 = vmatprep.subr.mxu0 0.0
  %5747 = vmatpush1.msra.mxu0 %v5728
  %5748 = vmatprep.subr.mxu0 0.0
  %5749 = vmatpush1.msra.mxu0 0.0
  %5750 = vmatprep.subr.mxu0 0.0
  %5751 = vmatpush1.msra.mxu0 0.0
  %5752 = vmatprep.subr.mxu0 0.0
  %5753 = vmatpush1.msra.mxu0 0.0
  %5754 = vmatprep.subr.mxu0 0.0
  %5755 = vmatpush1.msra.mxu0 0.0
  %5756 = vmatprep.subr.mxu0 0.0
  %5757 = vmatpush1.msra.mxu0 0.0
  %5758 = vmatprep.subr.mxu0 0.0
  %5759 = vmatpush1.msra.mxu0 0.0
  %5760 = vmatprep.subr.mxu0 0.0
  %5761 = vmatpush1.msra.mxu0 0.0
  %5762 = vmatprep.subr.mxu0 0.0
  %5763 = vmatpush1.msra.mxu0 0.0
  %5764 = vmatprep.subr.mxu0 0.0
  %5765 = vmatpush1.msra.mxu0 0.0
  %5766 = vmatprep.subr.mxu0 0.0
  %5767 = vmatpush1.msra.mxu0 0.0
  %5768 = vmatprep.subr.mxu0 0.0
  %5769 = vmatpush1.msra.mxu0 0.0
  %5770 = vmatprep.subr.mxu0 0.0
  %5771 = vmatpush1.msra.mxu0 0.0
  %5772 = vmatprep.subr.mxu0 0.0
  %5773 = vmatpush1.msra.mxu0 0.0
  %5774 = vmatprep.subr.mxu0 0.0
  %5775 = vmatpush1.msra.mxu0 0.0
  %5776 = vmatprep.subr.mxu0 0.0
  %5777 = vmatpush1.msra.mxu0 0.0
  %5778 = vmatprep.subr.mxu0 0.0
  %5779 = vmatpush1.msra.mxu0 0.0
  %5780 = vmatprep.subr.mxu0 0.0
  %5781 = vmatpush1.msra.mxu0 0.0
  %5782 = vmatprep.subr.mxu0 0.0
  %5783 = vmatpush1.msra.mxu0 0.0
  %5784 = vmatprep.subr.mxu0 0.0
  %5785 = vmatpush1.msra.mxu0 0.0
  %5786 = vmatprep.subr.mxu0 0.0
  %5787 = vmatpush1.msra.mxu0 0.0
  %5788 = vmatprep.subr.mxu0 0.0
  %5789 = vmatpush1.msra.mxu0 0.0
  %5790 = vmatprep.subr.mxu0 0.0
  %5791 = vmatpush1.msra.mxu0 0.0
  %5792 = vmatprep.subr.mxu0 0.0
  %5793 = vmatpush1.msra.mxu0 0.0
  %5794 = vmatprep.subr.mxu0 0.0
  %5795 = vmatpush1.msra.mxu0 0.0
  %5796 = vmatprep.subr.mxu0 0.0
  %5797 = vmatpush1.msra.mxu0 0.0
  %5798 = vmatprep.subr.mxu0 0.0
  %5799 = vmatpush1.msra.mxu0 0.0
  %5800 = vmatprep.subr.mxu0 0.0
  %5801 = vmatpush1.msra.mxu0 0.0
  %5802 = vmatprep.subr.mxu0 0.0
  %5803 = vmatpush1.msra.mxu0 0.0
  %5804 = vmatprep.mubr.f32.mxu0 0.0
  %5805 = vmatmul.mubr.f32.gmra.mrb[0].mxu0 %v5735
  %v5806 = vpop.f32.mrb[0].mxu0
  %v5807 = vadd.f32 %v5733, %v5806
  %v5808 = vpop.f32.mrb[0].mxu0
  %5809 = vmatprep.mubr.f32.mxu0 0.0
  %5810 = vmatmul.mubr.f32.gmra.mrb[0].mxu0 %v5738
  %v5811 = vpop.f32.mrb[0].mxu0
  %v5812 = vadd.f32 %v5733, %v5811
  %v5813 = vpop.f32.mrb[0].mxu0
  %5814 = vdwg.mxu0
  %v5815 = vtanh.pop %v5807
  %v5816 = vtanh.pop %v5812
  %v5817 = vld [vmem:[%s2 + $0x230] sm:$0xff]
  %v5818 = vld [vmem:[%s2 + $0x238] sm:$0xff]
  %v5819 = vld [vmem:[%s2 + $0x240] sm:$0xff]
  %v5820 = vld [vmem:[%s2 + $0x248] sm:$0xff]
  %v5821 = vld [vmem:[%s2 + $0x27d] sm:$0x1]
  %v5822 = vlaneseq
  %v5823 = vshrl.u32 %v5822, 7
  %v5824 = vsub.s32 0, %v5823
  %v5825 = vrot.slane %v5821, %v5824
  %v5827 = vsel %vm225, %v5815, 0
  %v5830 = vsel %vm225, %v5816, 0
  %5832 = vmatprep.subr.mxu0 0.0
  %5833 = vmatpush1.msra.mxu0 %v5817
  %5834 = vmatprep.subr.mxu0 0.0
  %5835 = vmatpush1.msra.mxu0 %v5818
  %5836 = vmatprep.subr.mxu0 0.0
  %5837 = vmatpush1.msra.mxu0 %v5819
  %5838 = vmatprep.subr.mxu0 0.0
  %5839 = vmatpush1.msra.mxu0 %v5820
  %5840 = vmatprep.subr.mxu0 0.0
  %5841 = vmatpush1.msra.mxu0 0.0
  %5842 = vmatprep.subr.mxu0 0.0
  %5843 = vmatpush1.msra.mxu0 0.0
  %5844 = vmatprep.subr.mxu0 0.0
  %5845 = vmatpush1.msra.mxu0 0.0
  %5846 = vmatprep.subr.mxu0 0.0
  %5847 = vmatpush1.msra.mxu0 0.0
  %5848 = vmatprep.subr.mxu0 0.0
  %5849 = vmatpush1.msra.mxu0 0.0
  %5850 = vmatprep.subr.mxu0 0.0
  %5851 = vmatpush1.msra.mxu0 0.0
  %5852 = vmatprep.subr.mxu0 0.0
  %5853 = vmatpush1.msra.mxu0 0.0
  %5854 = vmatprep.subr.mxu0 0.0
  %5855 = vmatpush1.msra.mxu0 0.0
  %5856 = vmatprep.subr.mxu0 0.0
  %5857 = vmatpush1.msra.mxu0 0.0
  %5858 = vmatprep.subr.mxu0 0.0
  %5859 = vmatpush1.msra.mxu0 0.0
  %5860 = vmatprep.subr.mxu0 0.0
  %5861 = vmatpush1.msra.mxu0 0.0
  %5862 = vmatprep.subr.mxu0 0.0
  %5863 = vmatpush1.msra.mxu0 0.0
  %5864 = vmatprep.subr.mxu0 0.0
  %5865 = vmatpush1.msra.mxu0 0.0
  %5866 = vmatprep.subr.mxu0 0.0
  %5867 = vmatpush1.msra.mxu0 0.0
  %5868 = vmatprep.subr.mxu0 0.0
  %5869 = vmatpush1.msra.mxu0 0.0
  %5870 = vmatprep.subr.mxu0 0.0
  %5871 = vmatpush1.msra.mxu0 0.0
  %5872 = vmatprep.subr.mxu0 0.0
  %5873 = vmatpush1.msra.mxu0 0.0
  %5874 = vmatprep.subr.mxu0 0.0
  %5875 = vmatpush1.msra.mxu0 0.0
  %5876 = vmatprep.subr.mxu0 0.0
  %5877 = vmatpush1.msra.mxu0 0.0
  %5878 = vmatprep.subr.mxu0 0.0
  %5879 = vmatpush1.msra.mxu0 0.0
  %5880 = vmatprep.subr.mxu0 0.0
  %5881 = vmatpush1.msra.mxu0 0.0
  %5882 = vmatprep.subr.mxu0 0.0
  %5883 = vmatpush1.msra.mxu0 0.0
  %5884 = vmatprep.subr.mxu0 0.0
  %5885 = vmatpush1.msra.mxu0 0.0
  %5886 = vmatprep.subr.mxu0 0.0
  %5887 = vmatpush1.msra.mxu0 0.0
  %5888 = vmatprep.subr.mxu0 0.0
  %5889 = vmatpush1.msra.mxu0 0.0
  %5890 = vmatprep.subr.mxu0 0.0
  %5891 = vmatpush1.msra.mxu0 0.0
  %5892 = vmatprep.subr.mxu0 0.0
  %5893 = vmatpush1.msra.mxu0 0.0
  %5894 = vmatprep.subr.mxu0 0.0
  %5895 = vmatpush1.msra.mxu0 0.0
  %5896 = vmatprep.mubr.f32.mxu0 0.0
  %5897 = vmatmul.mubr.f32.gmra.mrb[0].mxu0 %v5827
  %v5898 = vpop.f32.mrb[0].mxu0
  %v5899 = vadd.f32 %v5825, %v5898
  %v5900 = vpop.f32.mrb[0].mxu0
  %5901 = vmatprep.mubr.f32.mxu0 0.0
  %5902 = vmatmul.mubr.f32.gmra.mrb[0].mxu0 %v5830
  %v5903 = vpop.f32.mrb[0].mxu0
  %v5904 = vadd.f32 %v5825, %v5903
  %v5905 = vpop.f32.mrb[0].mxu0
  %5906 = vdwg.mxu0
  %v5907 = vld [vmem:[%s2 + $0x250] sm:$0xff]
  %v5908 = vld [vmem:[%s2 + $0x258] sm:$0xff]
  %v5909 = vld [vmem:[%s2 + $0x260] sm:$0xff]
  %v5910 = vld [vmem:[%s2 + $0x268] sm:$0xff]
  %v5911 = vld [vmem:[%s2 + $0x27e] sm:$0x1]
  %v5912 = vlaneseq
  %v5913 = vshrl.u32 %v5912, 7
  %v5914 = vsub.s32 0, %v5913
  %v5915 = vrot.slane %v5911, %v5914
  %v5917 = vsel %vm225, %v5899, 0
  %v5920 = vsel %vm225, %v5904, 0
  %5922 = vmatprep.subr.mxu0 0.0
  %5923 = vmatpush1.msra.mxu0 %v5907
  %5924 = vmatprep.subr.mxu0 0.0
  %5925 = vmatpush1.msra.mxu0 %v5908
  %5926 = vmatprep.subr.mxu0 0.0
  %5927 = vmatpush1.msra.mxu0 %v5909
  %5928 = vmatprep.subr.mxu0 0.0
  %5929 = vmatpush1.msra.mxu0 %v5910
  %5930 = vmatprep.subr.mxu0 0.0
  %5931 = vmatpush1.msra.mxu0 0.0
  %5932 = vmatprep.subr.mxu0 0.0
  %5933 = vmatpush1.msra.mxu0 0.0
  %5934 = vmatprep.subr.mxu0 0.0
  %5935 = vmatpush1.msra.mxu0 0.0
  %5936 = vmatprep.subr.mxu0 0.0
  %5937 = vmatpush1.msra.mxu0 0.0
  %5938 = vmatprep.subr.mxu0 0.0
  %5939 = vmatpush1.msra.mxu0 0.0
  %5940 = vmatprep.subr.mxu0 0.0
  %5941 = vmatpush1.msra.mxu0 0.0
  %5942 = vmatprep.subr.mxu0 0.0
  %5943 = vmatpush1.msra.mxu0 0.0
  %5944 = vmatprep.subr.mxu0 0.0
  %5945 = vmatpush1.msra.mxu0 0.0
  %5946 = vmatprep.subr.mxu0 0.0
  %5947 = vmatpush1.msra.mxu0 0.0
  %5948 = vmatprep.subr.mxu0 0.0
  %5949 = vmatpush1.msra.mxu0 0.0
  %5950 = vmatprep.subr.mxu0 0.0
  %5951 = vmatpush1.msra.mxu0 0.0
  %5952 = vmatprep.subr.mxu0 0.0
  %5953 = vmatpush1.msra.mxu0 0.0
  %5954 = vmatprep.subr.mxu0 0.0
  %5955 = vmatpush1.msra.mxu0 0.0
  %5956 = vmatprep.subr.mxu0 0.0
  %5957 = vmatpush1.msra.mxu0 0.0
  %5958 = vmatprep.subr.mxu0 0.0
  %5959 = vmatpush1.msra.mxu0 0.0
  %5960 = vmatprep.subr.mxu0 0.0
  %5961 = vmatpush1.msra.mxu0 0.0
  %5962 = vmatprep.subr.mxu0 0.0
  %5963 = vmatpush1.msra.mxu0 0.0
  %5964 = vmatprep.subr.mxu0 0.0
  %5965 = vmatpush1.msra.mxu0 0.0
  %5966 = vmatprep.subr.mxu0 0.0
  %5967 = vmatpush1.msra.mxu0 0.0
  %5968 = vmatprep.subr.mxu0 0.0
  %5969 = vmatpush1.msra.mxu0 0.0
  %5970 = vmatprep.subr.mxu0 0.0
  %5971 = vmatpush1.msra.mxu0 0.0
  %5972 = vmatprep.subr.mxu0 0.0
  %5973 = vmatpush1.msra.mxu0 0.0
  %5974 = vmatprep.subr.mxu0 0.0
  %5975 = vmatpush1.msra.mxu0 0.0
  %5976 = vmatprep.subr.mxu0 0.0
  %5977 = vmatpush1.msra.mxu0 0.0
  %5978 = vmatprep.subr.mxu0 0.0
  %5979 = vmatpush1.msra.mxu0 0.0
  %5980 = vmatprep.subr.mxu0 0.0
  %5981 = vmatpush1.msra.mxu0 0.0
  %5982 = vmatprep.subr.mxu0 0.0
  %5983 = vmatpush1.msra.mxu0 0.0
  %5984 = vmatprep.subr.mxu0 0.0
  %5985 = vmatpush1.msra.mxu0 0.0
  %5986 = vmatprep.mubr.f32.mxu0 0.0
  %5987 = vmatmul.mubr.f32.gmra.mrb[0].mxu0 %v5917
  %v5988 = vpop.f32.mrb[0].mxu0
  %v5989 = vadd.f32 %v5915, %v5988
  %v5990 = vpop.f32.mrb[0].mxu0
  %5991 = vmatprep.mubr.f32.mxu0 0.0
  %5992 = vmatmul.mubr.f32.gmra.mrb[0].mxu0 %v5920
  %v5993 = vpop.f32.mrb[0].mxu0
  %v5994 = vadd.f32 %v5915, %v5993
  %v5995 = vpop.f32.mrb[0].mxu0
  %5996 = vdwg.mxu0
  %5997 = vst [vmem:[%s3] sm:$0xff] %v5989
  %5998 = vst [vmem:[%s3 + $0x8] sm:$0xff] %v5994
  // Predicated region
  $region14: #{albert_classifier_forward.1} parent=0 // pred_check
    _
  $region15: #{albert_classifier_forward.1} parent=0 // pred_check_branch
    %6000 = sbr.rel (0) target = $region17
  $region16: #{albert_classifier_forward.1} parent=0 // pred_region
    _
  $region17: #{albert_classifier_forward.1} parent=0 // pred_fallthru
    _
  // Predicated region
  $region18: #{albert_classifier_forward.1} parent=0 // pred_check
    _
  $region19: #{albert_classifier_forward.1} parent=0 // pred_check_branch
    %6002 = sbr.rel (0) target = $region21
  $region20: #{albert_classifier_forward.1} parent=0 // pred_region
    _
  $region21: #{albert_classifier_forward.1} parent=0 // pred_fallthru
    _

</llo_original>
